<compile_context>
chip_gen: v6e
topology: v6e:2x2x1
jax: 0.10.0
libtpu: 0.0.40
codegen_flags: <defaults>
</compile_context>

<pallas_src>
import jax
import jax.numpy as jnp
import numpy as np
from jax.experimental import pallas as pl
from jax.experimental.pallas import tpu as pltpu

SEQ = 20          # padded title length
HID = 768         # bert hidden size
K, STRIDE, PAD = 7, 4, 3
LOUT = (SEQ + 2 * PAD - K) // STRIDE + 1   # = 5
FLAT = HID * LOUT                          # = 3840
D2, D3, D4, D5 = 512, 128, 64, 19


def fused_head_kernel(ct_ref, h_ref, w2_ref, b2_ref, w3_ref, b3_ref,
                      w4_ref, b4_ref, w5_ref, b5_ref, out_ref):
    # Conv1d(k=7,s=4,p=3) over each of the HID length-SEQ rows, as one matmul:
    #   yT[j, p] = sum_s Ct[j, s] * h[s, p]                    -> (LOUT, HID)
    yT = jnp.dot(ct_ref[...], h_ref[...], preferred_element_type=jnp.float32)
    yT_bf = yT.astype(jnp.bfloat16)     # single cast; conv bias folded into b2

    # lin2: h1[n] = sum_{j,p} yT[j,p] * W2stack[j,p,n]   (f32 MXU accumulation)
    acc = jnp.zeros((1, D2), jnp.float32)
    for j in range(LOUT):               # static unroll (5)
        acc = acc + jnp.dot(yT_bf[j:j + 1, :], w2_ref[j],
                            preferred_element_type=jnp.float32)
    h1 = jnp.maximum(acc + b2_ref[...], 0.0).astype(jnp.bfloat16)

    # Fused ReLU-MLP tail 512 -> 128 -> 64 -> 19.
    h2 = jnp.maximum(
        jnp.dot(h1, w3_ref[...], preferred_element_type=jnp.float32) + b3_ref[...],
        0.0)
    h3 = jnp.maximum(
        jnp.dot(h2, w4_ref[...], preferred_element_type=jnp.float32) + b4_ref[...],
        0.0)
    out_ref[...] = (
        jnp.dot(h3, w5_ref[...], preferred_element_type=jnp.float32) + b5_ref[...])


def conv_as_matrix(conv_w):
    """C (SEQ, LOUT) such that (x @ C)[i, j] == conv1d(x[i], w, stride=4, pad=3)[j]."""
    sel = np.zeros((K, SEQ, LOUT), dtype=np.float32)
    for j in range(LOUT):
        for k in range(K):
            p = STRIDE * j + k - PAD
            if 0 <= p < SEQ:
                sel[k, p, j] = 1.0
    return jnp.tensordot(conv_w.astype(jnp.float32), jnp.asarray(sel), axes=1)


def prepare_params(params):
    """One-time (parameter-load-time) weight prep; keep OUT of the hot path."""
    conv_w, conv_b, W2, b2, W3, b3, W4, b4, W5, b5 = params
    Ct = conv_as_matrix(conv_w).T                                   # (5, 20) f32
    # Restack W2 (FLAT, D2) so slab j holds the rows multiplying yT[j, :];
    # big weight goes to bf16 (f32 accumulation in-kernel).
    W2stack = jnp.transpose(W2.reshape(HID, LOUT, D2), (1, 0, 2)).astype(jnp.bfloat16)
    # Fold conv bias into b2 (exact): every flattened conv output gets +conv_b.
    b2_eff = (b2 + conv_b * jnp.sum(W2, axis=0)).reshape(1, D2).astype(jnp.float32)
    return (Ct, W2stack, b2_eff,
            W3.astype(jnp.bfloat16), b3.reshape(1, D3),
            W4, b4.reshape(1, D4),
            W5, b5.reshape(1, D5))


def bert_only_head(h, prepped):
    """h: (SEQ, HID) BERT last_hidden_state; prepped: output of prepare_params."""
    Ct, W2stack, b2_eff, W3b, b3r, W4, b4r, W5, b5r = prepped
    vmem = pl.BlockSpec(memory_space=pltpu.MemorySpace.VMEM)
    cost = pl.CostEstimate(
        flops=2 * (LOUT * SEQ * HID + FLAT * D2 + D2 * D3 + D3 * D4 + D4 * D5),
        transcendentals=0,
        bytes_accessed=(FLAT * D2 * 2 + SEQ * HID * 4 + D2 * D3 * 2
                        + D3 * D4 * 4 + D4 * D5 * 4
                        + (LOUT * SEQ + D2 + D3 + D4 + 2 * D5) * 4))
    out = pl.pallas_call(
        fused_head_kernel,
        out_shape=jax.ShapeDtypeStruct((1, D5), jnp.float32),
        in_specs=[vmem] * 10,
        out_specs=vmem,
        compiler_params=pltpu.CompilerParams(vmem_limit_bytes=16 * 1024 * 1024),
        cost_estimate=cost,
    )(Ct, h, W2stack, b2_eff, W3b, b3r, W4, b4r, W5, b5r)
    return out[0]                                                   # (19,)


def reference(h, params):
    """Pure-JAX f32 reference of the PyTorch forward (post-BERT part)."""
    conv_w, conv_b, W2, b2, W3, b3, W4, b4, W5, b5 = params
    x = h.T                                                         # (768, 20)
    xp = jnp.pad(x, ((0, 0), (PAD, PAD)))
    y = jnp.stack(
        [(xp[:, STRIDE * j:STRIDE * j + K] * conv_w).sum(-1) for j in range(LOUT)],
        axis=1) + conv_b                                            # (768, 5)
    v = y.reshape(-1)                                               # (3840,)
    h1 = jax.nn.relu(v @ W2 + b2)
    h2 = jax.nn.relu(h1 @ W3 + b3)
    h3 = jax.nn.relu(h2 @ W4 + b4)
    return h3 @ W5 + b5


def init_params(key):
    ks = jax.random.split(key, 10)
    s = 0.02
    conv_w = jax.random.normal(ks[0], (K,), jnp.float32) * s
    conv_b = jax.random.normal(ks[1], (), jnp.float32) * s
    W2 = jax.random.normal(ks[2], (FLAT, D2), jnp.float32) * s
    b2 = jax.random.normal(ks[3], (D2,), jnp.float32) * s
    W3 = jax.random.normal(ks[4], (D2, D3), jnp.float32) * s
    b3 = jax.random.normal(ks[5], (D3,), jnp.float32) * s
    W4 = jax.random.normal(ks[6], (D3, D4), jnp.float32) * s
    b4 = jax.random.normal(ks[7], (D4,), jnp.float32) * s
    W5 = jax.random.normal(ks[8], (D4, D5), jnp.float32) * s
    b5 = jax.random.normal(ks[9], (D5,), jnp.float32) * s
    return (conv_w, conv_b, W2, b2, W3, b3, W4, b4, W5, b5)


if __name__ == "__main__":
    key = jax.random.PRNGKey(0)
    k_h, k_p = jax.random.split(key)
    # Synthetic BERT last_hidden_state for a 20-token (padded) title.
    h = jax.random.normal(k_h, (SEQ, HID), jnp.float32)
    params = init_params(k_p)

    # One-time weight prep (restack/cast/bias-fold) -- NOT in the forward path.
    prepped = jax.block_until_ready(prepare_params(params))

    head = jax.jit(bert_only_head)
    out = jax.block_until_ready(head(h, prepped))
    ref = jax.block_until_ready(reference(h, params))

    assert out.shape == (D5,), out.shape
    # bf16 weights for the K=3840 / K=512 contractions (f32 accumulation):
    # tolerance relaxed accordingly vs the f32 reference.
    np.testing.assert_allclose(np.asarray(out), np.asarray(ref),
                               rtol=2e-2, atol=5e-3)
    print("KERNEL_OK")
</pallas_src>

<mosaic_0001>
module attributes {stable_mosaic.version = 11 : i64} {
  func.func @fused_head_kernel(%arg0: memref<5x20xf32, #tpu.memory_space<vmem>>, %arg1: memref<20x768xf32, #tpu.memory_space<vmem>>, %arg2: memref<5x768x512xbf16, #tpu.memory_space<vmem>>, %arg3: memref<1x512xf32, #tpu.memory_space<vmem>>, %arg4: memref<512x128xbf16, #tpu.memory_space<vmem>>, %arg5: memref<1x128xf32, #tpu.memory_space<vmem>>, %arg6: memref<128x64xf32, #tpu.memory_space<vmem>>, %arg7: memref<1x64xf32, #tpu.memory_space<vmem>>, %arg8: memref<64x19xf32, #tpu.memory_space<vmem>>, %arg9: memref<1x19xf32, #tpu.memory_space<vmem>>, %arg10: memref<1x19xf32, #tpu.memory_space<vmem>>) attributes {dimension_semantics = [], scalar_prefetch = 0 : i64, scratch_operands = 0 : i64, tpu.core_type = #tpu.core_type<tc>} {
    %c0 = arith.constant 0 : index
    %c0_0 = arith.constant 0 : index
    %0 = vector.load %arg0[%c0, %c0_0] : memref<5x20xf32, #tpu.memory_space<vmem>>, vector<5x20xf32>
    %c0_1 = arith.constant 0 : index
    %c0_2 = arith.constant 0 : index
    %1 = vector.load %arg1[%c0_1, %c0_2] : memref<20x768xf32, #tpu.memory_space<vmem>>, vector<20x768xf32>
    %cst = arith.constant dense<0.000000e+00> : vector<5x768xf32>
    %2 = tpu.matmul %0, %1, %cst {dimension_numbers = #tpu.dot_dimension_numbers<[1], [0], [0], [1], [0, 0, 1, 1], [], []>} : vector<5x20xf32>, vector<20x768xf32>, vector<5x768xf32> -> vector<5x768xf32>
    %3 = arith.truncf %2 : vector<5x768xf32> to vector<5x768xbf16>
    %cst_3 = arith.constant 0.000000e+00 : f32
    %4 = vector.broadcast %cst_3 : f32 to vector<1x512xf32>
    %5 = vector.extract_strided_slice %3 {offsets = [0, 0], sizes = [1, 768], strides = [1, 1]} : vector<5x768xbf16> to vector<1x768xbf16>
    %c0_4 = arith.constant 0 : index
    %c0_5 = arith.constant 0 : index
    %c0_6 = arith.constant 0 : index
    %6 = vector.load %arg2[%c0_4, %c0_5, %c0_6] : memref<5x768x512xbf16, #tpu.memory_space<vmem>>, vector<1x768x512xbf16>
    %7 = vector.shape_cast %6 : vector<1x768x512xbf16> to vector<768x512xbf16>
    %cst_7 = arith.constant dense<0.000000e+00> : vector<1x512xf32>
    %8 = tpu.matmul %5, %7, %cst_7 {dimension_numbers = #tpu.dot_dimension_numbers<[1], [0], [0], [1], [0, 0, 1, 1], [], []>} : vector<1x768xbf16>, vector<768x512xbf16>, vector<1x512xf32> -> vector<1x512xf32>
    %9 = arith.addf %4, %8 : vector<1x512xf32>
    %10 = vector.extract_strided_slice %3 {offsets = [1, 0], sizes = [1, 768], strides = [1, 1]} : vector<5x768xbf16> to vector<1x768xbf16>
    %c1 = arith.constant 1 : index
    %c0_8 = arith.constant 0 : index
    %c0_9 = arith.constant 0 : index
    %11 = vector.load %arg2[%c1, %c0_8, %c0_9] : memref<5x768x512xbf16, #tpu.memory_space<vmem>>, vector<1x768x512xbf16>
    %12 = vector.shape_cast %11 : vector<1x768x512xbf16> to vector<768x512xbf16>
    %cst_10 = arith.constant dense<0.000000e+00> : vector<1x512xf32>
    %13 = tpu.matmul %10, %12, %cst_10 {dimension_numbers = #tpu.dot_dimension_numbers<[1], [0], [0], [1], [0, 0, 1, 1], [], []>} : vector<1x768xbf16>, vector<768x512xbf16>, vector<1x512xf32> -> vector<1x512xf32>
    %14 = arith.addf %9, %13 : vector<1x512xf32>
    %15 = vector.extract_strided_slice %3 {offsets = [2, 0], sizes = [1, 768], strides = [1, 1]} : vector<5x768xbf16> to vector<1x768xbf16>
    %c2 = arith.constant 2 : index
    %c0_11 = arith.constant 0 : index
    %c0_12 = arith.constant 0 : index
    %16 = vector.load %arg2[%c2, %c0_11, %c0_12] : memref<5x768x512xbf16, #tpu.memory_space<vmem>>, vector<1x768x512xbf16>
    %17 = vector.shape_cast %16 : vector<1x768x512xbf16> to vector<768x512xbf16>
    %cst_13 = arith.constant dense<0.000000e+00> : vector<1x512xf32>
    %18 = tpu.matmul %15, %17, %cst_13 {dimension_numbers = #tpu.dot_dimension_numbers<[1], [0], [0], [1], [0, 0, 1, 1], [], []>} : vector<1x768xbf16>, vector<768x512xbf16>, vector<1x512xf32> -> vector<1x512xf32>
    %19 = arith.addf %14, %18 : vector<1x512xf32>
    %20 = vector.extract_strided_slice %3 {offsets = [3, 0], sizes = [1, 768], strides = [1, 1]} : vector<5x768xbf16> to vector<1x768xbf16>
    %c3 = arith.constant 3 : index
    %c0_14 = arith.constant 0 : index
    %c0_15 = arith.constant 0 : index
    %21 = vector.load %arg2[%c3, %c0_14, %c0_15] : memref<5x768x512xbf16, #tpu.memory_space<vmem>>, vector<1x768x512xbf16>
    %22 = vector.shape_cast %21 : vector<1x768x512xbf16> to vector<768x512xbf16>
    %cst_16 = arith.constant dense<0.000000e+00> : vector<1x512xf32>
    %23 = tpu.matmul %20, %22, %cst_16 {dimension_numbers = #tpu.dot_dimension_numbers<[1], [0], [0], [1], [0, 0, 1, 1], [], []>} : vector<1x768xbf16>, vector<768x512xbf16>, vector<1x512xf32> -> vector<1x512xf32>
    %24 = arith.addf %19, %23 : vector<1x512xf32>
    %25 = vector.extract_strided_slice %3 {offsets = [4, 0], sizes = [1, 768], strides = [1, 1]} : vector<5x768xbf16> to vector<1x768xbf16>
    %c4 = arith.constant 4 : index
    %c0_17 = arith.constant 0 : index
    %c0_18 = arith.constant 0 : index
    %26 = vector.load %arg2[%c4, %c0_17, %c0_18] : memref<5x768x512xbf16, #tpu.memory_space<vmem>>, vector<1x768x512xbf16>
    %27 = vector.shape_cast %26 : vector<1x768x512xbf16> to vector<768x512xbf16>
    %cst_19 = arith.constant dense<0.000000e+00> : vector<1x512xf32>
    %28 = tpu.matmul %25, %27, %cst_19 {dimension_numbers = #tpu.dot_dimension_numbers<[1], [0], [0], [1], [0, 0, 1, 1], [], []>} : vector<1x768xbf16>, vector<768x512xbf16>, vector<1x512xf32> -> vector<1x512xf32>
    %29 = arith.addf %24, %28 : vector<1x512xf32>
    %c0_20 = arith.constant 0 : index
    %c0_21 = arith.constant 0 : index
    %30 = vector.load %arg3[%c0_20, %c0_21] : memref<1x512xf32, #tpu.memory_space<vmem>>, vector<1x512xf32>
    %31 = arith.addf %29, %30 : vector<1x512xf32>
    %cst_22 = arith.constant 0.000000e+00 : f32
    %32 = vector.broadcast %cst_22 : f32 to vector<1x512xf32>
    %33 = arith.maximumf %31, %32 : vector<1x512xf32>
    %34 = arith.truncf %33 : vector<1x512xf32> to vector<1x512xbf16>
    %c0_23 = arith.constant 0 : index
    %c0_24 = arith.constant 0 : index
    %35 = vector.load %arg4[%c0_23, %c0_24] : memref<512x128xbf16, #tpu.memory_space<vmem>>, vector<512x128xbf16>
    %cst_25 = arith.constant dense<0.000000e+00> : vector<1x128xf32>
    %36 = tpu.matmul %34, %35, %cst_25 {dimension_numbers = #tpu.dot_dimension_numbers<[1], [0], [0], [1], [0, 0, 1, 1], [], []>} : vector<1x512xbf16>, vector<512x128xbf16>, vector<1x128xf32> -> vector<1x128xf32>
    %c0_26 = arith.constant 0 : index
    %c0_27 = arith.constant 0 : index
    %37 = vector.load %arg5[%c0_26, %c0_27] : memref<1x128xf32, #tpu.memory_space<vmem>>, vector<1x128xf32>
    %38 = arith.addf %36, %37 : vector<1x128xf32>
    %cst_28 = arith.constant 0.000000e+00 : f32
    %39 = vector.broadcast %cst_28 : f32 to vector<1x128xf32>
    %40 = arith.maximumf %38, %39 : vector<1x128xf32>
    %c0_29 = arith.constant 0 : index
    %c0_30 = arith.constant 0 : index
    %41 = vector.load %arg6[%c0_29, %c0_30] : memref<128x64xf32, #tpu.memory_space<vmem>>, vector<128x64xf32>
    %cst_31 = arith.constant dense<0.000000e+00> : vector<1x64xf32>
    %42 = tpu.matmul %40, %41, %cst_31 {dimension_numbers = #tpu.dot_dimension_numbers<[1], [0], [0], [1], [0, 0, 1, 1], [], []>} : vector<1x128xf32>, vector<128x64xf32>, vector<1x64xf32> -> vector<1x64xf32>
    %c0_32 = arith.constant 0 : index
    %c0_33 = arith.constant 0 : index
    %43 = vector.load %arg7[%c0_32, %c0_33] : memref<1x64xf32, #tpu.memory_space<vmem>>, vector<1x64xf32>
    %44 = arith.addf %42, %43 : vector<1x64xf32>
    %cst_34 = arith.constant 0.000000e+00 : f32
    %45 = vector.broadcast %cst_34 : f32 to vector<1x64xf32>
    %46 = arith.maximumf %44, %45 : vector<1x64xf32>
    %c0_35 = arith.constant 0 : index
    %c0_36 = arith.constant 0 : index
    %47 = vector.load %arg8[%c0_35, %c0_36] : memref<64x19xf32, #tpu.memory_space<vmem>>, vector<64x19xf32>
    %cst_37 = arith.constant dense<0.000000e+00> : vector<1x19xf32>
    %48 = tpu.matmul %46, %47, %cst_37 {dimension_numbers = #tpu.dot_dimension_numbers<[1], [0], [0], [1], [0, 0, 1, 1], [], []>} : vector<1x64xf32>, vector<64x19xf32>, vector<1x19xf32> -> vector<1x19xf32>
    %c0_38 = arith.constant 0 : index
    %c0_39 = arith.constant 0 : index
    %49 = vector.load %arg9[%c0_38, %c0_39] : memref<1x19xf32, #tpu.memory_space<vmem>>, vector<1x19xf32>
    %50 = arith.addf %48, %49 : vector<1x19xf32>
    %c0_40 = arith.constant 0 : index
    %c0_41 = arith.constant 0 : index
    %51 = vector.load %arg10[%c0_40, %c0_41] : memref<1x19xf32, #tpu.memory_space<vmem>>, vector<1x19xf32>
    tpu.vector_store %arg10[%c0_40, %c0_41], %50 {strides = array<i32>} : memref<1x19xf32, #tpu.memory_space<vmem>>, vector<1x19xf32>,
    return
  }
}

</mosaic_0001>

<llo_original>
// kernel: bert_only_head.1
$region0: #{bert_only_head.1}
  #allocation0 [shape = 'u32[]', space=smem, size = 0x4, offset = 0x4, fixed_abs, tag = 'smem constant byte address 0x4 - core index']
  #allocation1 [shape = 'u32[144,128]{1,0:T(1,128)}', space=vmem, size = 0x12000, scoped, tag = 'internal scratch']
  %s0 = inlined_call_operand.hbm [shape: f32[5,20], index: 0, kind: input, shape index: {}]
  %s1 = inlined_call_operand.hbm [shape: f32[20,768], index: 1, kind: input, shape index: {}]
  %s2 = inlined_call_operand.hbm [shape: bf16[5,768,512], index: 2, kind: input, shape index: {}]
  %s3 = inlined_call_operand.hbm [shape: f32[1,512], index: 3, kind: input, shape index: {}]
  %s4 = inlined_call_operand.hbm [shape: bf16[512,128], index: 4, kind: input, shape index: {}]
  %s5 = inlined_call_operand.hbm [shape: f32[1,128], index: 5, kind: input, shape index: {}]
  %s6 = inlined_call_operand.vmem [shape: f32[128,64], index: 6, kind: input, shape index: {}]
  %s7 = inlined_call_operand.hbm [shape: f32[1,64], index: 7, kind: input, shape index: {}]
  %s8 = inlined_call_operand.vmem [shape: f32[64,19], index: 8, kind: input, shape index: {}]
  %s9 = inlined_call_operand.hbm [shape: f32[1,19], index: 9, kind: input, shape index: {}]
  %s10 = inlined_call_operand.hbm [shape: f32[1,19], index: 10, kind: output, shape index: {}]
  %s11 = sld [smem:[#allocation0]]
  $region82: #{bert_only_head.1} parent=0
    _
  %s13 = ssub.s32 1, %s11
  %s14 = scalar_select 0, %s13, %s11
  $region1: #{bert_only_head.1} parent=0
    #allocation2 [shape = 'u8[4096]{0}', space=vmem, size = 0x1000, scoped, tag = 'input window, operand 0, single buffered']
    #allocation3 [shape = 's32[1]{0}', space=sflag, size = 0x4, scoped, tag = 'scoped memory for bert_only_head.1']
    #allocation4 [shape = 's32[1]{0}', space=sflag, size = 0x4, scoped, tag = 'scoped memory for bert_only_head.1']
    #allocation5 [shape = 'u8[73728]{0}', space=vmem, size = 0x12000, scoped, tag = 'input window, operand 1, single buffered']
    #allocation6 [shape = 's32[1]{0}', space=sflag, size = 0x4, scoped, tag = 'scoped memory for bert_only_head.1']
    #allocation7 [shape = 'u8[3932160]{0}', space=vmem, size = 0x3c0000, scoped, tag = 'input window, operand 2, single buffered']
    #allocation8 [shape = 'u8[2048]{0}', space=vmem, size = 0x800, scoped, tag = 'input window, operand 3, single buffered']
    #allocation9 [shape = 's32[1]{0}', space=sflag, size = 0x4, scoped, tag = 'scoped memory for bert_only_head.1']
    #allocation10 [shape = 'u8[131072]{0}', space=vmem, size = 0x20000, scoped, tag = 'input window, operand 4, single buffered']
    #allocation11 [shape = 'u8[512]{0}', space=vmem, size = 0x400, scoped, tag = 'input window, operand 5, single buffered']
    #allocation12 [shape = 's32[1]{0}', space=sflag, size = 0x4, scoped, tag = 'scoped memory for bert_only_head.1']
    #allocation13 [shape = 'u8[512]{0}', space=vmem, size = 0x400, scoped, tag = 'input window, operand 7, single buffered']
    #allocation14 [shape = 'u8[512]{0}', space=vmem, size = 0x400, scoped, tag = 'input window, operand 9, single buffered']
    #allocation15 [shape = 's32[1]{0}', space=sflag, size = 0x4, scoped, tag = 'scoped memory for bert_only_head.1']
    #allocation16 [shape = 'u8[512]{0}', space=vmem, size = 0x400, scoped, tag = 'output window, operand 0, single buffered']
    %15 = vsyncpa [#allocation3], 0
    %16 = vsyncpa [#allocation6], 0
    %17 = vsyncpa [#allocation9], 0
    %18 = vsyncpa [#allocation12], 0
    %19 = vsyncpa [#allocation15], 0
    %20 = vsyncpa [#allocation4], 0
    // Predicated region
    $region2: #{bert_only_head.1} parent=1 // pred_check
      _
    $region3: #{bert_only_head.1} parent=1 // pred_check_branch
      %22 = sbr.rel (0) target = $region5
    $region4: #{bert_only_head.1} parent=1 // pred_region
      %s24 = ssub.s32 128, 128
      %25 = vsyncadd [#allocation3], %s24
      %s27 = sshll.u32 [#allocation2], 4
      %s28 = int_to_ptr.vmem [resolvable:$true] %s27
      %30 = dma.hbm_to_vmem [thread:$0]  %s0, 128, %s28, [#allocation3]
    $region5: #{bert_only_head.1} parent=1 // pred_fallthru
      _
    // Predicated region
    $region6: #{bert_only_head.1} parent=1 // pred_check
      _
    $region7: #{bert_only_head.1} parent=1 // pred_check_branch
      %32 = sbr.rel (0) target = $region9
    $region8: #{bert_only_head.1} parent=1 // pred_region
      %s34 = ssub.s32 2304, 2304
      %35 = vsyncadd [#allocation6], %s34
      %s36 = sshll.u32 [#allocation5], 4
      %s37 = int_to_ptr.vmem [resolvable:$true] %s36
      %42 = dma.hbm_to_vmem [thread:$0]  %s1, 2304, %s37, [#allocation6], 768, 768, 48
    $region9: #{bert_only_head.1} parent=1 // pred_fallthru
      _
    // Predicated region
    $region10: #{bert_only_head.1} parent=1 // pred_check
      _
    $region11: #{bert_only_head.1} parent=1 // pred_check_branch
      %44 = sbr.rel (0) target = $region13
    $region12: #{bert_only_head.1} parent=1 // pred_region
      %s46 = ssub.s32 122880, 122880
      %47 = vsyncadd [#allocation6], %s46
      %s48 = sshll.u32 [#allocation7], 4
      %s49 = int_to_ptr.vmem [resolvable:$true] %s48
      %54 = dma.hbm_to_vmem [thread:$0]  %s2, 122880, %s49, [#allocation6], 256, 256, 16
    $region13: #{bert_only_head.1} parent=1 // pred_fallthru
      _
    // Predicated region
    $region14: #{bert_only_head.1} parent=1 // pred_check
      _
    $region15: #{bert_only_head.1} parent=1 // pred_check_branch
      %56 = sbr.rel (0) target = $region17
    $region16: #{bert_only_head.1} parent=1 // pred_region
      %s58 = ssub.s32 64, 64
      %59 = vsyncadd [#allocation9], %s58
      %s61 = sshll.u32 [#allocation8], 4
      %s62 = int_to_ptr.vmem [resolvable:$true] %s61
      %64 = dma.hbm_to_vmem [thread:$0]  %s3, 64, %s62, [#allocation9]
    $region17: #{bert_only_head.1} parent=1 // pred_fallthru
      _
    // Predicated region
    $region18: #{bert_only_head.1} parent=1 // pred_check
      _
    $region19: #{bert_only_head.1} parent=1 // pred_check_branch
      %66 = sbr.rel (0) target = $region21
    $region20: #{bert_only_head.1} parent=1 // pred_region
      %s68 = ssub.s32 4096, 4096
      %69 = vsyncadd [#allocation9], %s68
      %s70 = sshll.u32 [#allocation10], 4
      %s71 = int_to_ptr.vmem [resolvable:$true] %s70
      %76 = dma.hbm_to_vmem [thread:$0]  %s4, 4096, %s71, [#allocation9], 64, 64, 4
    $region21: #{bert_only_head.1} parent=1 // pred_fallthru
      _
    // Predicated region
    $region22: #{bert_only_head.1} parent=1 // pred_check
      _
    $region23: #{bert_only_head.1} parent=1 // pred_check_branch
      %78 = sbr.rel (0) target = $region25
    $region24: #{bert_only_head.1} parent=1 // pred_region
      %s80 = ssub.s32 16, 16
      %81 = vsyncadd [#allocation12], %s80
      %s83 = sshll.u32 [#allocation11], 4
      %s84 = int_to_ptr.vmem [resolvable:$true] %s83
      %86 = dma.hbm_to_vmem [thread:$0]  %s5, 16, %s84, [#allocation12]
    $region25: #{bert_only_head.1} parent=1 // pred_fallthru
      _
    // Predicated region
    $region26: #{bert_only_head.1} parent=1 // pred_check
      _
    $region27: #{bert_only_head.1} parent=1 // pred_check_branch
      %88 = sbr.rel (0) target = $region29
    $region28: #{bert_only_head.1} parent=1 // pred_region
      _
    $region29: #{bert_only_head.1} parent=1 // pred_fallthru
      _
    // Predicated region
    $region30: #{bert_only_head.1} parent=1 // pred_check
      _
    $region31: #{bert_only_head.1} parent=1 // pred_check_branch
      %90 = sbr.rel (0) target = $region33
    $region32: #{bert_only_head.1} parent=1 // pred_region
      %s92 = ssub.s32 16, 16
      %93 = vsyncadd [#allocation12], %s92
      %s95 = sshll.u32 [#allocation13], 4
      %s96 = int_to_ptr.vmem [resolvable:$true] %s95
      %98 = dma.hbm_to_vmem [thread:$0]  %s7, 16, %s96, [#allocation12]
    $region33: #{bert_only_head.1} parent=1 // pred_fallthru
      _
    // Predicated region
    $region34: #{bert_only_head.1} parent=1 // pred_check
      _
    $region35: #{bert_only_head.1} parent=1 // pred_check_branch
      %100 = sbr.rel (0) target = $region37
    $region36: #{bert_only_head.1} parent=1 // pred_region
      _
    $region37: #{bert_only_head.1} parent=1 // pred_fallthru
      _
    // Predicated region
    $region38: #{bert_only_head.1} parent=1 // pred_check
      _
    $region39: #{bert_only_head.1} parent=1 // pred_check_branch
      %102 = sbr.rel (0) target = $region41
    $region40: #{bert_only_head.1} parent=1 // pred_region
      %s104 = ssub.s32 16, 16
      %105 = vsyncadd [#allocation15], %s104
      %s107 = sshll.u32 [#allocation14], 4
      %s108 = int_to_ptr.vmem [resolvable:$true] %s107
      %110 = dma.hbm_to_vmem [thread:$0]  %s9, 16, %s108, [#allocation15]
    $region41: #{bert_only_head.1} parent=1 // pred_fallthru
      _
    // Predicated region
    $region42: #{bert_only_head.1} parent=1 // pred_check
      _
    $region43: #{bert_only_head.1} parent=1 // pred_check_branch
      %112 = sbr.rel (0) target = $region45
    $region44: #{bert_only_head.1} parent=1 // pred_region
      %113 = dma.done [#allocation3], 128
    $region45: #{bert_only_head.1} parent=1 // pred_fallthru
      _
    // Predicated region
    $region46: #{bert_only_head.1} parent=1 // pred_check
      _
    $region47: #{bert_only_head.1} parent=1 // pred_check_branch
      %115 = sbr.rel (0) target = $region49
    $region48: #{bert_only_head.1} parent=1 // pred_region
      %116 = dma.done [#allocation6], 2304
    $region49: #{bert_only_head.1} parent=1 // pred_fallthru
      _
    // Predicated region
    $region50: #{bert_only_head.1} parent=1 // pred_check
      _
    $region51: #{bert_only_head.1} parent=1 // pred_check_branch
      %118 = sbr.rel (0) target = $region53
    $region52: #{bert_only_head.1} parent=1 // pred_region
      %119 = dma.done [#allocation6], 122880
    $region53: #{bert_only_head.1} parent=1 // pred_fallthru
      _
    // Predicated region
    $region54: #{bert_only_head.1} parent=1 // pred_check
      _
    $region55: #{bert_only_head.1} parent=1 // pred_check_branch
      %121 = sbr.rel (0) target = $region57
    $region56: #{bert_only_head.1} parent=1 // pred_region
      %122 = dma.done [#allocation9], 64
    $region57: #{bert_only_head.1} parent=1 // pred_fallthru
      _
    // Predicated region
    $region58: #{bert_only_head.1} parent=1 // pred_check
      _
    $region59: #{bert_only_head.1} parent=1 // pred_check_branch
      %124 = sbr.rel (0) target = $region61
    $region60: #{bert_only_head.1} parent=1 // pred_region
      %125 = dma.done [#allocation9], 4096
    $region61: #{bert_only_head.1} parent=1 // pred_fallthru
      _
    // Predicated region
    $region62: #{bert_only_head.1} parent=1 // pred_check
      _
    $region63: #{bert_only_head.1} parent=1 // pred_check_branch
      %127 = sbr.rel (0) target = $region65
    $region64: #{bert_only_head.1} parent=1 // pred_region
      %128 = dma.done [#allocation12], 16
    $region65: #{bert_only_head.1} parent=1 // pred_fallthru
      _
    // Predicated region
    $region66: #{bert_only_head.1} parent=1 // pred_check
      _
    $region67: #{bert_only_head.1} parent=1 // pred_check_branch
      %130 = sbr.rel (0) target = $region69
    $region68: #{bert_only_head.1} parent=1 // pred_region
      %131 = dma.done [#allocation12], 16
    $region69: #{bert_only_head.1} parent=1 // pred_fallthru
      _
    // Predicated region
    $region70: #{bert_only_head.1} parent=1 // pred_check
      _
    $region71: #{bert_only_head.1} parent=1 // pred_check_branch
      %133 = sbr.rel (0) target = $region73
    $region72: #{bert_only_head.1} parent=1 // pred_region
      %134 = dma.done [#allocation15], 16
    $region73: #{bert_only_head.1} parent=1 // pred_fallthru
      _
    %v136 = vld [vmem:[#allocation2] sm:$0x1f]
    %v137 = vld [vmem:[#allocation5] sm:$0xff]
    %v138 = vld [vmem:[#allocation5 + $0x8] sm:$0xff]
    %v139 = vld [vmem:[#allocation5 + $0x10] sm:$0xff]
    %v140 = vld [vmem:[#allocation5 + $0x18] sm:$0xff]
    %v141 = vld [vmem:[#allocation5 + $0x20] sm:$0xff]
    %v142 = vld [vmem:[#allocation5 + $0x28] sm:$0xff]
    %v143 = vld [vmem:[#allocation5 + $0x30] sm:$0xff]
    %v144 = vld [vmem:[#allocation5 + $0x38] sm:$0xff]
    %v145 = vld [vmem:[#allocation5 + $0x40] sm:$0xff]
    %v146 = vld [vmem:[#allocation5 + $0x48] sm:$0xff]
    %v147 = vld [vmem:[#allocation5 + $0x50] sm:$0xff]
    %v148 = vld [vmem:[#allocation5 + $0x58] sm:$0xff]
    %v149 = vld [vmem:[#allocation5 + $0x60] sm:$0xf]
    %v150 = vld [vmem:[#allocation5 + $0x68] sm:$0xf]
    %v151 = vld [vmem:[#allocation5 + $0x70] sm:$0xf]
    %v152 = vld [vmem:[#allocation5 + $0x78] sm:$0xf]
    %v153 = vld [vmem:[#allocation5 + $0x80] sm:$0xf]
    %v154 = vld [vmem:[#allocation5 + $0x88] sm:$0xf]
    %vm155 = vcmask 162816
    %v157 = vsel %vm155, %v136, 0
    %vm159 = vcmask 1043456
    %v161 = vsel %vm159, %v149, 0
    %v164 = vsel %vm159, %v150, 0
    %v167 = vsel %vm159, %v151, 0
    %v170 = vsel %vm159, %v152, 0
    %v173 = vsel %vm159, %v153, 0
    %v176 = vsel %vm159, %v154, 0
    %178 = vmatprep.subr.mxu0 0.0
    %179 = vmatpush1.msra.mxu0 0.0
    %180 = vmatprep.subr.mxu0 0.0
    %181 = vmatpush1.msra.mxu0 0.0
    %182 = vmatprep.subr.mxu0 0.0
    %183 = vmatpush1.msra.mxu0 0.0
    %184 = vmatprep.subr.mxu0 0.0
    %185 = vmatpush1.msra.mxu0 0.0
    %186 = vmatprep.subr.mxu0 0.0
    %187 = vmatpush1.msra.mxu0 0.0
    %188 = vmatprep.subr.mxu0 0.0
    %189 = vmatpush1.msra.mxu0 0.0
    %190 = vmatprep.subr.mxu0 0.0
    %191 = vmatpush1.msra.mxu0 0.0
    %192 = vmatprep.subr.mxu0 0.0
    %193 = vmatpush1.msra.mxu0 0.0
    %194 = vmatprep.subr.mxu0 0.0
    %195 = vmatpush1.msra.mxu0 0.0
    %196 = vmatprep.subr.mxu0 0.0
    %197 = vmatpush1.msra.mxu0 0.0
    %198 = vmatprep.subr.mxu0 0.0
    %199 = vmatpush1.msra.mxu0 0.0
    %200 = vmatprep.subr.mxu0 0.0
    %201 = vmatpush1.msra.mxu0 0.0
    %202 = vmatprep.subr.mxu0 0.0
    %203 = vmatpush1.msra.mxu0 0.0
    %204 = vmatprep.subr.mxu0 %v164
    %205 = vmatpush1.msra.mxu0 %v161
    %206 = vmatprep.subr.mxu0 %v144
    %207 = vmatpush1.msra.mxu0 %v143
    %208 = vmatprep.subr.mxu0 %v138
    %209 = vmatpush1.msra.mxu0 %v137
    %210 = vmatprep.subr.mxu0 0.0
    %211 = vmatpush2.msra.mxu0 0.0
    %212 = vmatprep.subr.mxu0 0.0
    %213 = vmatpush2.msra.mxu0 0.0
    %214 = vmatprep.subr.mxu0 0.0
    %215 = vmatpush2.msra.mxu0 0.0
    %216 = vmatprep.subr.mxu0 0.0
    %217 = vmatpush2.msra.mxu0 0.0
    %218 = vmatprep.subr.mxu0 0.0
    %219 = vmatpush2.msra.mxu0 0.0
    %220 = vmatprep.subr.mxu0 0.0
    %221 = vmatpush2.msra.mxu0 0.0
    %222 = vmatprep.subr.mxu0 0.0
    %223 = vmatpush2.msra.mxu0 0.0
    %224 = vmatprep.subr.mxu0 0.0
    %225 = vmatpush2.msra.mxu0 0.0
    %226 = vmatprep.subr.mxu0 0.0
    %227 = vmatpush2.msra.mxu0 0.0
    %228 = vmatprep.subr.mxu0 0.0
    %229 = vmatpush2.msra.mxu0 0.0
    %230 = vmatprep.subr.mxu0 0.0
    %231 = vmatpush2.msra.mxu0 0.0
    %232 = vmatprep.subr.mxu0 0.0
    %233 = vmatpush2.msra.mxu0 0.0
    %234 = vmatprep.subr.mxu0 0.0
    %235 = vmatpush2.msra.mxu0 0.0
    %236 = vmatprep.subr.mxu0 0.0
    %237 = vmatpush2.msra.mxu0 0.0
    %238 = vmatprep.subr.mxu0 0.0
    %239 = vmatpush2.msra.mxu0 0.0
    %240 = vmatprep.subr.mxu0 0.0
    %241 = vmatpush2.msra.mxu0 0.0
    %242 = vmatprep.mubr.f32.mxu0 0.0
    %243 = vmatmul.mubr.f32.gmra.mxu0 %v157
    %v244 = vpop.f32.mrf.mxu0
    %v245 = vadd.f32 0.0, %v244
    %v246 = vpop.f32.mrf.mxu0
    %v247 = vadd.f32 0.0, %v246
    %248 = vdwg.mxu0
    %249 = vmatprep.subr.mxu0 0.0
    %250 = vmatpush1.msra.mxu0 0.0
    %251 = vmatprep.subr.mxu0 0.0
    %252 = vmatpush1.msra.mxu0 0.0
    %253 = vmatprep.subr.mxu0 0.0
    %254 = vmatpush1.msra.mxu0 0.0
    %255 = vmatprep.subr.mxu0 0.0
    %256 = vmatpush1.msra.mxu0 0.0
    %257 = vmatprep.subr.mxu0 0.0
    %258 = vmatpush1.msra.mxu0 0.0
    %259 = vmatprep.subr.mxu0 0.0
    %260 = vmatpush1.msra.mxu0 0.0
    %261 = vmatprep.subr.mxu0 0.0
    %262 = vmatpush1.msra.mxu0 0.0
    %263 = vmatprep.subr.mxu0 0.0
    %264 = vmatpush1.msra.mxu0 0.0
    %265 = vmatprep.subr.mxu0 0.0
    %266 = vmatpush1.msra.mxu0 0.0
    %267 = vmatprep.subr.mxu0 0.0
    %268 = vmatpush1.msra.mxu0 0.0
    %269 = vmatprep.subr.mxu0 0.0
    %270 = vmatpush1.msra.mxu0 0.0
    %271 = vmatprep.subr.mxu0 0.0
    %272 = vmatpush1.msra.mxu0 0.0
    %273 = vmatprep.subr.mxu0 0.0
    %274 = vmatpush1.msra.mxu0 0.0
    %275 = vmatprep.subr.mxu0 %v170
    %276 = vmatpush1.msra.mxu0 %v167
    %277 = vmatprep.subr.mxu0 %v146
    %278 = vmatpush1.msra.mxu0 %v145
    %279 = vmatprep.subr.mxu0 %v140
    %280 = vmatpush1.msra.mxu0 %v139
    %281 = vmatprep.subr.mxu0 0.0
    %282 = vmatpush2.msra.mxu0 0.0
    %283 = vmatprep.subr.mxu0 0.0
    %284 = vmatpush2.msra.mxu0 0.0
    %285 = vmatprep.subr.mxu0 0.0
    %286 = vmatpush2.msra.mxu0 0.0
    %287 = vmatprep.subr.mxu0 0.0
    %288 = vmatpush2.msra.mxu0 0.0
    %289 = vmatprep.subr.mxu0 0.0
    %290 = vmatpush2.msra.mxu0 0.0
    %291 = vmatprep.subr.mxu0 0.0
    %292 = vmatpush2.msra.mxu0 0.0
    %293 = vmatprep.subr.mxu0 0.0
    %294 = vmatpush2.msra.mxu0 0.0
    %295 = vmatprep.subr.mxu0 0.0
    %296 = vmatpush2.msra.mxu0 0.0
    %297 = vmatprep.subr.mxu0 0.0
    %298 = vmatpush2.msra.mxu0 0.0
    %299 = vmatprep.subr.mxu0 0.0
    %300 = vmatpush2.msra.mxu0 0.0
    %301 = vmatprep.subr.mxu0 0.0
    %302 = vmatpush2.msra.mxu0 0.0
    %303 = vmatprep.subr.mxu0 0.0
    %304 = vmatpush2.msra.mxu0 0.0
    %305 = vmatprep.subr.mxu0 0.0
    %306 = vmatpush2.msra.mxu0 0.0
    %307 = vmatprep.subr.mxu0 0.0
    %308 = vmatpush2.msra.mxu0 0.0
    %309 = vmatprep.subr.mxu0 0.0
    %310 = vmatpush2.msra.mxu0 0.0
    %311 = vmatprep.subr.mxu0 0.0
    %312 = vmatpush2.msra.mxu0 0.0
    %313 = vmatprep.mubr.f32.mxu0 0.0
    %314 = vmatmul.mubr.f32.gmra.mxu0 %v157
    %v315 = vpop.f32.mrf.mxu0
    %v316 = vadd.f32 0.0, %v315
    %v317 = vpop.f32.mrf.mxu0
    %v318 = vadd.f32 0.0, %v317
    %319 = vdwg.mxu0
    %320 = vmatprep.subr.mxu0 0.0
    %321 = vmatpush1.msra.mxu0 0.0
    %322 = vmatprep.subr.mxu0 0.0
    %323 = vmatpush1.msra.mxu0 0.0
    %324 = vmatprep.subr.mxu0 0.0
    %325 = vmatpush1.msra.mxu0 0.0
    %326 = vmatprep.subr.mxu0 0.0
    %327 = vmatpush1.msra.mxu0 0.0
    %328 = vmatprep.subr.mxu0 0.0
    %329 = vmatpush1.msra.mxu0 0.0
    %330 = vmatprep.subr.mxu0 0.0
    %331 = vmatpush1.msra.mxu0 0.0
    %332 = vmatprep.subr.mxu0 0.0
    %333 = vmatpush1.msra.mxu0 0.0
    %334 = vmatprep.subr.mxu0 0.0
    %335 = vmatpush1.msra.mxu0 0.0
    %336 = vmatprep.subr.mxu0 0.0
    %337 = vmatpush1.msra.mxu0 0.0
    %338 = vmatprep.subr.mxu0 0.0
    %339 = vmatpush1.msra.mxu0 0.0
    %340 = vmatprep.subr.mxu0 0.0
    %341 = vmatpush1.msra.mxu0 0.0
    %342 = vmatprep.subr.mxu0 0.0
    %343 = vmatpush1.msra.mxu0 0.0
    %344 = vmatprep.subr.mxu0 0.0
    %345 = vmatpush1.msra.mxu0 0.0
    %346 = vmatprep.subr.mxu0 %v176
    %347 = vmatpush1.msra.mxu0 %v173
    %348 = vmatprep.subr.mxu0 %v148
    %349 = vmatpush1.msra.mxu0 %v147
    %350 = vmatprep.subr.mxu0 %v142
    %351 = vmatpush1.msra.mxu0 %v141
    %352 = vmatprep.subr.mxu0 0.0
    %353 = vmatpush2.msra.mxu0 0.0
    %354 = vmatprep.subr.mxu0 0.0
    %355 = vmatpush2.msra.mxu0 0.0
    %356 = vmatprep.subr.mxu0 0.0
    %357 = vmatpush2.msra.mxu0 0.0
    %358 = vmatprep.subr.mxu0 0.0
    %359 = vmatpush2.msra.mxu0 0.0
    %360 = vmatprep.subr.mxu0 0.0
    %361 = vmatpush2.msra.mxu0 0.0
    %362 = vmatprep.subr.mxu0 0.0
    %363 = vmatpush2.msra.mxu0 0.0
    %364 = vmatprep.subr.mxu0 0.0
    %365 = vmatpush2.msra.mxu0 0.0
    %366 = vmatprep.subr.mxu0 0.0
    %367 = vmatpush2.msra.mxu0 0.0
    %368 = vmatprep.subr.mxu0 0.0
    %369 = vmatpush2.msra.mxu0 0.0
    %370 = vmatprep.subr.mxu0 0.0
    %371 = vmatpush2.msra.mxu0 0.0
    %372 = vmatprep.subr.mxu0 0.0
    %373 = vmatpush2.msra.mxu0 0.0
    %374 = vmatprep.subr.mxu0 0.0
    %375 = vmatpush2.msra.mxu0 0.0
    %376 = vmatprep.subr.mxu0 0.0
    %377 = vmatpush2.msra.mxu0 0.0
    %378 = vmatprep.subr.mxu0 0.0
    %379 = vmatpush2.msra.mxu0 0.0
    %380 = vmatprep.subr.mxu0 0.0
    %381 = vmatpush2.msra.mxu0 0.0
    %382 = vmatprep.subr.mxu0 0.0
    %383 = vmatpush2.msra.mxu0 0.0
    %384 = vmatprep.mubr.f32.mxu0 0.0
    %385 = vmatmul.mubr.f32.gmra.mxu0 %v157
    %v386 = vpop.f32.mrf.mxu0
    %v387 = vadd.f32 0.0, %v386
    %v388 = vpop.f32.mrf.mxu0
    %v389 = vadd.f32 0.0, %v388
    %390 = vdwg.mxu0
    %v391 = vpack.c.bf16 %v245, %v245
    %v392 = vpack.c.bf16 %v247, %v247
    %v393 = vpack.c.bf16 %v316, %v316
    %v394 = vpack.c.bf16 %v318, %v318
    %v395 = vpack.c.bf16 %v387, %v387
    %v396 = vpack.c.bf16 %v389, %v389
    %v397 = vld [vmem:[#allocation7] sm:$0xff]
    %v398 = vld [vmem:[#allocation7 + $0x8] sm:$0xff]
    %v399 = vld [vmem:[#allocation7 + $0x10] sm:$0xff]
    %v400 = vld [vmem:[#allocation7 + $0x18] sm:$0xff]
    %v401 = vld [vmem:[#allocation7 + $0x20] sm:$0xff]
    %v402 = vld [vmem:[#allocation7 + $0x28] sm:$0xff]
    %v403 = vld [vmem:[#allocation7 + $0x30] sm:$0xff]
    %v404 = vld [vmem:[#allocation7 + $0x38] sm:$0xff]
    %v405 = vld [vmem:[#allocation7 + $0x40] sm:$0xff]
    %v406 = vld [vmem:[#allocation7 + $0x48] sm:$0xff]
    %v407 = vld [vmem:[#allocation7 + $0x50] sm:$0xff]
    %v408 = vld [vmem:[#allocation7 + $0x58] sm:$0xff]
    %v409 = vld [vmem:[#allocation7 + $0x60] sm:$0xff]
    %v410 = vld [vmem:[#allocation7 + $0x68] sm:$0xff]
    %v411 = vld [vmem:[#allocation7 + $0x70] sm:$0xff]
    %v412 = vld [vmem:[#allocation7 + $0x78] sm:$0xff]
    %v413 = vld [vmem:[#allocation7 + $0x80] sm:$0xff]
    %v414 = vld [vmem:[#allocation7 + $0x88] sm:$0xff]
    %v415 = vld [vmem:[#allocation7 + $0x90] sm:$0xff]
    %v416 = vld [vmem:[#allocation7 + $0x98] sm:$0xff]
    %v417 = vld [vmem:[#allocation7 + $0xa0] sm:$0xff]
    %v418 = vld [vmem:[#allocation7 + $0xa8] sm:$0xff]
    %v419 = vld [vmem:[#allocation7 + $0xb0] sm:$0xff]
    %v420 = vld [vmem:[#allocation7 + $0xb8] sm:$0xff]
    %v421 = vld [vmem:[#allocation7 + $0xc0] sm:$0xff]
    %v422 = vld [vmem:[#allocation7 + $0xc8] sm:$0xff]
    %v423 = vld [vmem:[#allocation7 + $0xd0] sm:$0xff]
    %v424 = vld [vmem:[#allocation7 + $0xd8] sm:$0xff]
    %v425 = vld [vmem:[#allocation7 + $0xe0] sm:$0xff]
    %v426 = vld [vmem:[#allocation7 + $0xe8] sm:$0xff]
    %v427 = vld [vmem:[#allocation7 + $0xf0] sm:$0xff]
    %v428 = vld [vmem:[#allocation7 + $0xf8] sm:$0xff]
    %v429 = vld [vmem:[#allocation7 + $0x100] sm:$0xff]
    %v430 = vld [vmem:[#allocation7 + $0x108] sm:$0xff]
    %v431 = vld [vmem:[#allocation7 + $0x110] sm:$0xff]
    %v432 = vld [vmem:[#allocation7 + $0x118] sm:$0xff]
    %v433 = vld [vmem:[#allocation7 + $0x120] sm:$0xff]
    %v434 = vld [vmem:[#allocation7 + $0x128] sm:$0xff]
    %v435 = vld [vmem:[#allocation7 + $0x130] sm:$0xff]
    %v436 = vld [vmem:[#allocation7 + $0x138] sm:$0xff]
    %v437 = vld [vmem:[#allocation7 + $0x140] sm:$0xff]
    %v438 = vld [vmem:[#allocation7 + $0x148] sm:$0xff]
    %v439 = vld [vmem:[#allocation7 + $0x150] sm:$0xff]
    %v440 = vld [vmem:[#allocation7 + $0x158] sm:$0xff]
    %v441 = vld [vmem:[#allocation7 + $0x160] sm:$0xff]
    %v442 = vld [vmem:[#allocation7 + $0x168] sm:$0xff]
    %v443 = vld [vmem:[#allocation7 + $0x170] sm:$0xff]
    %v444 = vld [vmem:[#allocation7 + $0x178] sm:$0xff]
    %v445 = vld [vmem:[#allocation7 + $0x180] sm:$0xff]
    %v446 = vld [vmem:[#allocation7 + $0x188] sm:$0xff]
    %v447 = vld [vmem:[#allocation7 + $0x190] sm:$0xff]
    %v448 = vld [vmem:[#allocation7 + $0x198] sm:$0xff]
    %v449 = vld [vmem:[#allocation7 + $0x1a0] sm:$0xff]
    %v450 = vld [vmem:[#allocation7 + $0x1a8] sm:$0xff]
    %v451 = vld [vmem:[#allocation7 + $0x1b0] sm:$0xff]
    %v452 = vld [vmem:[#allocation7 + $0x1b8] sm:$0xff]
    %v453 = vld [vmem:[#allocation7 + $0x1c0] sm:$0xff]
    %v454 = vld [vmem:[#allocation7 + $0x1c8] sm:$0xff]
    %v455 = vld [vmem:[#allocation7 + $0x1d0] sm:$0xff]
    %v456 = vld [vmem:[#allocation7 + $0x1d8] sm:$0xff]
    %v457 = vld [vmem:[#allocation7 + $0x1e0] sm:$0xff]
    %v458 = vld [vmem:[#allocation7 + $0x1e8] sm:$0xff]
    %v459 = vld [vmem:[#allocation7 + $0x1f0] sm:$0xff]
    %v460 = vld [vmem:[#allocation7 + $0x1f8] sm:$0xff]
    %v461 = vld [vmem:[#allocation7 + $0x200] sm:$0xff]
    %v462 = vld [vmem:[#allocation7 + $0x208] sm:$0xff]
    %v463 = vld [vmem:[#allocation7 + $0x210] sm:$0xff]
    %v464 = vld [vmem:[#allocation7 + $0x218] sm:$0xff]
    %v465 = vld [vmem:[#allocation7 + $0x220] sm:$0xff]
    %v466 = vld [vmem:[#allocation7 + $0x228] sm:$0xff]
    %v467 = vld [vmem:[#allocation7 + $0x230] sm:$0xff]
    %v468 = vld [vmem:[#allocation7 + $0x238] sm:$0xff]
    %v469 = vld [vmem:[#allocation7 + $0x240] sm:$0xff]
    %v470 = vld [vmem:[#allocation7 + $0x248] sm:$0xff]
    %v471 = vld [vmem:[#allocation7 + $0x250] sm:$0xff]
    %v472 = vld [vmem:[#allocation7 + $0x258] sm:$0xff]
    %v473 = vld [vmem:[#allocation7 + $0x260] sm:$0xff]
    %v474 = vld [vmem:[#allocation7 + $0x268] sm:$0xff]
    %v475 = vld [vmem:[#allocation7 + $0x270] sm:$0xff]
    %v476 = vld [vmem:[#allocation7 + $0x278] sm:$0xff]
    %v477 = vld [vmem:[#allocation7 + $0x280] sm:$0xff]
    %v478 = vld [vmem:[#allocation7 + $0x288] sm:$0xff]
    %v479 = vld [vmem:[#allocation7 + $0x290] sm:$0xff]
    %v480 = vld [vmem:[#allocation7 + $0x298] sm:$0xff]
    %v481 = vld [vmem:[#allocation7 + $0x2a0] sm:$0xff]
    %v482 = vld [vmem:[#allocation7 + $0x2a8] sm:$0xff]
    %v483 = vld [vmem:[#allocation7 + $0x2b0] sm:$0xff]
    %v484 = vld [vmem:[#allocation7 + $0x2b8] sm:$0xff]
    %v485 = vld [vmem:[#allocation7 + $0x2c0] sm:$0xff]
    %v486 = vld [vmem:[#allocation7 + $0x2c8] sm:$0xff]
    %v487 = vld [vmem:[#allocation7 + $0x2d0] sm:$0xff]
    %v488 = vld [vmem:[#allocation7 + $0x2d8] sm:$0xff]
    %v489 = vld [vmem:[#allocation7 + $0x2e0] sm:$0xff]
    %v490 = vld [vmem:[#allocation7 + $0x2e8] sm:$0xff]
    %v491 = vld [vmem:[#allocation7 + $0x2f0] sm:$0xff]
    %v492 = vld [vmem:[#allocation7 + $0x2f8] sm:$0xff]
    %v493 = vld [vmem:[#allocation7 + $0x300] sm:$0xff]
    %v494 = vld [vmem:[#allocation7 + $0x308] sm:$0xff]
    %v495 = vld [vmem:[#allocation7 + $0x310] sm:$0xff]
    %v496 = vld [vmem:[#allocation7 + $0x318] sm:$0xff]
    %v497 = vld [vmem:[#allocation7 + $0x320] sm:$0xff]
    %v498 = vld [vmem:[#allocation7 + $0x328] sm:$0xff]
    %v499 = vld [vmem:[#allocation7 + $0x330] sm:$0xff]
    %v500 = vld [vmem:[#allocation7 + $0x338] sm:$0xff]
    %v501 = vld [vmem:[#allocation7 + $0x340] sm:$0xff]
    %v502 = vld [vmem:[#allocation7 + $0x348] sm:$0xff]
    %v503 = vld [vmem:[#allocation7 + $0x350] sm:$0xff]
    %v504 = vld [vmem:[#allocation7 + $0x358] sm:$0xff]
    %v505 = vld [vmem:[#allocation7 + $0x360] sm:$0xff]
    %v506 = vld [vmem:[#allocation7 + $0x368] sm:$0xff]
    %v507 = vld [vmem:[#allocation7 + $0x370] sm:$0xff]
    %v508 = vld [vmem:[#allocation7 + $0x378] sm:$0xff]
    %v509 = vld [vmem:[#allocation7 + $0x380] sm:$0xff]
    %v510 = vld [vmem:[#allocation7 + $0x388] sm:$0xff]
    %v511 = vld [vmem:[#allocation7 + $0x390] sm:$0xff]
    %v512 = vld [vmem:[#allocation7 + $0x398] sm:$0xff]
    %v513 = vld [vmem:[#allocation7 + $0x3a0] sm:$0xff]
    %v514 = vld [vmem:[#allocation7 + $0x3a8] sm:$0xff]
    %v515 = vld [vmem:[#allocation7 + $0x3b0] sm:$0xff]
    %v516 = vld [vmem:[#allocation7 + $0x3b8] sm:$0xff]
    %v517 = vld [vmem:[#allocation7 + $0x3c0] sm:$0xff]
    %v518 = vld [vmem:[#allocation7 + $0x3c8] sm:$0xff]
    %v519 = vld [vmem:[#allocation7 + $0x3d0] sm:$0xff]
    %v520 = vld [vmem:[#allocation7 + $0x3d8] sm:$0xff]
    %v521 = vld [vmem:[#allocation7 + $0x3e0] sm:$0xff]
    %v522 = vld [vmem:[#allocation7 + $0x3e8] sm:$0xff]
    %v523 = vld [vmem:[#allocation7 + $0x3f0] sm:$0xff]
    %v524 = vld [vmem:[#allocation7 + $0x3f8] sm:$0xff]
    %v525 = vld [vmem:[#allocation7 + $0x400] sm:$0xff]
    %v526 = vld [vmem:[#allocation7 + $0x408] sm:$0xff]
    %v527 = vld [vmem:[#allocation7 + $0x410] sm:$0xff]
    %v528 = vld [vmem:[#allocation7 + $0x418] sm:$0xff]
    %v529 = vld [vmem:[#allocation7 + $0x420] sm:$0xff]
    %v530 = vld [vmem:[#allocation7 + $0x428] sm:$0xff]
    %v531 = vld [vmem:[#allocation7 + $0x430] sm:$0xff]
    %v532 = vld [vmem:[#allocation7 + $0x438] sm:$0xff]
    %v533 = vld [vmem:[#allocation7 + $0x440] sm:$0xff]
    %v534 = vld [vmem:[#allocation7 + $0x448] sm:$0xff]
    %v535 = vld [vmem:[#allocation7 + $0x450] sm:$0xff]
    %v536 = vld [vmem:[#allocation7 + $0x458] sm:$0xff]
    %v537 = vld [vmem:[#allocation7 + $0x460] sm:$0xff]
    %v538 = vld [vmem:[#allocation7 + $0x468] sm:$0xff]
    %v539 = vld [vmem:[#allocation7 + $0x470] sm:$0xff]
    %v540 = vld [vmem:[#allocation7 + $0x478] sm:$0xff]
    %v541 = vld [vmem:[#allocation7 + $0x480] sm:$0xff]
    %v542 = vld [vmem:[#allocation7 + $0x488] sm:$0xff]
    %v543 = vld [vmem:[#allocation7 + $0x490] sm:$0xff]
    %v544 = vld [vmem:[#allocation7 + $0x498] sm:$0xff]
    %v545 = vld [vmem:[#allocation7 + $0x4a0] sm:$0xff]
    %v546 = vld [vmem:[#allocation7 + $0x4a8] sm:$0xff]
    %v547 = vld [vmem:[#allocation7 + $0x4b0] sm:$0xff]
    %v548 = vld [vmem:[#allocation7 + $0x4b8] sm:$0xff]
    %v549 = vld [vmem:[#allocation7 + $0x4c0] sm:$0xff]
    %v550 = vld [vmem:[#allocation7 + $0x4c8] sm:$0xff]
    %v551 = vld [vmem:[#allocation7 + $0x4d0] sm:$0xff]
    %v552 = vld [vmem:[#allocation7 + $0x4d8] sm:$0xff]
    %v553 = vld [vmem:[#allocation7 + $0x4e0] sm:$0xff]
    %v554 = vld [vmem:[#allocation7 + $0x4e8] sm:$0xff]
    %v555 = vld [vmem:[#allocation7 + $0x4f0] sm:$0xff]
    %v556 = vld [vmem:[#allocation7 + $0x4f8] sm:$0xff]
    %v557 = vld [vmem:[#allocation7 + $0x500] sm:$0xff]
    %v558 = vld [vmem:[#allocation7 + $0x508] sm:$0xff]
    %v559 = vld [vmem:[#allocation7 + $0x510] sm:$0xff]
    %v560 = vld [vmem:[#allocation7 + $0x518] sm:$0xff]
    %v561 = vld [vmem:[#allocation7 + $0x520] sm:$0xff]
    %v562 = vld [vmem:[#allocation7 + $0x528] sm:$0xff]
    %v563 = vld [vmem:[#allocation7 + $0x530] sm:$0xff]
    %v564 = vld [vmem:[#allocation7 + $0x538] sm:$0xff]
    %v565 = vld [vmem:[#allocation7 + $0x540] sm:$0xff]
    %v566 = vld [vmem:[#allocation7 + $0x548] sm:$0xff]
    %v567 = vld [vmem:[#allocation7 + $0x550] sm:$0xff]
    %v568 = vld [vmem:[#allocation7 + $0x558] sm:$0xff]
    %v569 = vld [vmem:[#allocation7 + $0x560] sm:$0xff]
    %v570 = vld [vmem:[#allocation7 + $0x568] sm:$0xff]
    %v571 = vld [vmem:[#allocation7 + $0x570] sm:$0xff]
    %v572 = vld [vmem:[#allocation7 + $0x578] sm:$0xff]
    %v573 = vld [vmem:[#allocation7 + $0x580] sm:$0xff]
    %v574 = vld [vmem:[#allocation7 + $0x588] sm:$0xff]
    %v575 = vld [vmem:[#allocation7 + $0x590] sm:$0xff]
    %v576 = vld [vmem:[#allocation7 + $0x598] sm:$0xff]
    %v577 = vld [vmem:[#allocation7 + $0x5a0] sm:$0xff]
    %v578 = vld [vmem:[#allocation7 + $0x5a8] sm:$0xff]
    %v579 = vld [vmem:[#allocation7 + $0x5b0] sm:$0xff]
    %v580 = vld [vmem:[#allocation7 + $0x5b8] sm:$0xff]
    %v581 = vld [vmem:[#allocation7 + $0x5c0] sm:$0xff]
    %v582 = vld [vmem:[#allocation7 + $0x5c8] sm:$0xff]
    %v583 = vld [vmem:[#allocation7 + $0x5d0] sm:$0xff]
    %v584 = vld [vmem:[#allocation7 + $0x5d8] sm:$0xff]
    %v585 = vld [vmem:[#allocation7 + $0x5e0] sm:$0xff]
    %v586 = vld [vmem:[#allocation7 + $0x5e8] sm:$0xff]
    %v587 = vld [vmem:[#allocation7 + $0x5f0] sm:$0xff]
    %v588 = vld [vmem:[#allocation7 + $0x5f8] sm:$0xff]
    %s589 = scalar_lea.vmem [#allocation7], 1536
    %v590 = vld [vmem:[%s589] sm:$0xff]
    %v591 = vld [vmem:[%s589 + $0x8] sm:$0xff]
    %v592 = vld [vmem:[%s589 + $0x10] sm:$0xff]
    %v593 = vld [vmem:[%s589 + $0x18] sm:$0xff]
    %v594 = vld [vmem:[%s589 + $0x20] sm:$0xff]
    %v595 = vld [vmem:[%s589 + $0x28] sm:$0xff]
    %v596 = vld [vmem:[%s589 + $0x30] sm:$0xff]
    %v597 = vld [vmem:[%s589 + $0x38] sm:$0xff]
    %v598 = vld [vmem:[%s589 + $0x40] sm:$0xff]
    %v599 = vld [vmem:[%s589 + $0x48] sm:$0xff]
    %v600 = vld [vmem:[%s589 + $0x50] sm:$0xff]
    %v601 = vld [vmem:[%s589 + $0x58] sm:$0xff]
    %v602 = vld [vmem:[%s589 + $0x60] sm:$0xff]
    %v603 = vld [vmem:[%s589 + $0x68] sm:$0xff]
    %v604 = vld [vmem:[%s589 + $0x70] sm:$0xff]
    %v605 = vld [vmem:[%s589 + $0x78] sm:$0xff]
    %v606 = vld [vmem:[%s589 + $0x80] sm:$0xff]
    %v607 = vld [vmem:[%s589 + $0x88] sm:$0xff]
    %v608 = vld [vmem:[%s589 + $0x90] sm:$0xff]
    %v609 = vld [vmem:[%s589 + $0x98] sm:$0xff]
    %v610 = vld [vmem:[%s589 + $0xa0] sm:$0xff]
    %v611 = vld [vmem:[%s589 + $0xa8] sm:$0xff]
    %v612 = vld [vmem:[%s589 + $0xb0] sm:$0xff]
    %v613 = vld [vmem:[%s589 + $0xb8] sm:$0xff]
    %v614 = vld [vmem:[%s589 + $0xc0] sm:$0xff]
    %v615 = vld [vmem:[%s589 + $0xc8] sm:$0xff]
    %v616 = vld [vmem:[%s589 + $0xd0] sm:$0xff]
    %v617 = vld [vmem:[%s589 + $0xd8] sm:$0xff]
    %v618 = vld [vmem:[%s589 + $0xe0] sm:$0xff]
    %v619 = vld [vmem:[%s589 + $0xe8] sm:$0xff]
    %v620 = vld [vmem:[%s589 + $0xf0] sm:$0xff]
    %v621 = vld [vmem:[%s589 + $0xf8] sm:$0xff]
    %v622 = vld [vmem:[%s589 + $0x100] sm:$0xff]
    %v623 = vld [vmem:[%s589 + $0x108] sm:$0xff]
    %v624 = vld [vmem:[%s589 + $0x110] sm:$0xff]
    %v625 = vld [vmem:[%s589 + $0x118] sm:$0xff]
    %v626 = vld [vmem:[%s589 + $0x120] sm:$0xff]
    %v627 = vld [vmem:[%s589 + $0x128] sm:$0xff]
    %v628 = vld [vmem:[%s589 + $0x130] sm:$0xff]
    %v629 = vld [vmem:[%s589 + $0x138] sm:$0xff]
    %v630 = vld [vmem:[%s589 + $0x140] sm:$0xff]
    %v631 = vld [vmem:[%s589 + $0x148] sm:$0xff]
    %v632 = vld [vmem:[%s589 + $0x150] sm:$0xff]
    %v633 = vld [vmem:[%s589 + $0x158] sm:$0xff]
    %v634 = vld [vmem:[%s589 + $0x160] sm:$0xff]
    %v635 = vld [vmem:[%s589 + $0x168] sm:$0xff]
    %v636 = vld [vmem:[%s589 + $0x170] sm:$0xff]
    %v637 = vld [vmem:[%s589 + $0x178] sm:$0xff]
    %v638 = vld [vmem:[%s589 + $0x180] sm:$0xff]
    %v639 = vld [vmem:[%s589 + $0x188] sm:$0xff]
    %v640 = vld [vmem:[%s589 + $0x190] sm:$0xff]
    %v641 = vld [vmem:[%s589 + $0x198] sm:$0xff]
    %v642 = vld [vmem:[%s589 + $0x1a0] sm:$0xff]
    %v643 = vld [vmem:[%s589 + $0x1a8] sm:$0xff]
    %v644 = vld [vmem:[%s589 + $0x1b0] sm:$0xff]
    %v645 = vld [vmem:[%s589 + $0x1b8] sm:$0xff]
    %v646 = vld [vmem:[%s589 + $0x1c0] sm:$0xff]
    %v647 = vld [vmem:[%s589 + $0x1c8] sm:$0xff]
    %v648 = vld [vmem:[%s589 + $0x1d0] sm:$0xff]
    %v649 = vld [vmem:[%s589 + $0x1d8] sm:$0xff]
    %v650 = vld [vmem:[%s589 + $0x1e0] sm:$0xff]
    %v651 = vld [vmem:[%s589 + $0x1e8] sm:$0xff]
    %v652 = vld [vmem:[%s589 + $0x1f0] sm:$0xff]
    %v653 = vld [vmem:[%s589 + $0x1f8] sm:$0xff]
    %v654 = vld [vmem:[%s589 + $0x200] sm:$0xff]
    %v655 = vld [vmem:[%s589 + $0x208] sm:$0xff]
    %v656 = vld [vmem:[%s589 + $0x210] sm:$0xff]
    %v657 = vld [vmem:[%s589 + $0x218] sm:$0xff]
    %v658 = vld [vmem:[%s589 + $0x220] sm:$0xff]
    %v659 = vld [vmem:[%s589 + $0x228] sm:$0xff]
    %v660 = vld [vmem:[%s589 + $0x230] sm:$0xff]
    %v661 = vld [vmem:[%s589 + $0x238] sm:$0xff]
    %v662 = vld [vmem:[%s589 + $0x240] sm:$0xff]
    %v663 = vld [vmem:[%s589 + $0x248] sm:$0xff]
    %v664 = vld [vmem:[%s589 + $0x250] sm:$0xff]
    %v665 = vld [vmem:[%s589 + $0x258] sm:$0xff]
    %v666 = vld [vmem:[%s589 + $0x260] sm:$0xff]
    %v667 = vld [vmem:[%s589 + $0x268] sm:$0xff]
    %v668 = vld [vmem:[%s589 + $0x270] sm:$0xff]
    %v669 = vld [vmem:[%s589 + $0x278] sm:$0xff]
    %v670 = vld [vmem:[%s589 + $0x280] sm:$0xff]
    %v671 = vld [vmem:[%s589 + $0x288] sm:$0xff]
    %v672 = vld [vmem:[%s589 + $0x290] sm:$0xff]
    %v673 = vld [vmem:[%s589 + $0x298] sm:$0xff]
    %v674 = vld [vmem:[%s589 + $0x2a0] sm:$0xff]
    %v675 = vld [vmem:[%s589 + $0x2a8] sm:$0xff]
    %v676 = vld [vmem:[%s589 + $0x2b0] sm:$0xff]
    %v677 = vld [vmem:[%s589 + $0x2b8] sm:$0xff]
    %v678 = vld [vmem:[%s589 + $0x2c0] sm:$0xff]
    %v679 = vld [vmem:[%s589 + $0x2c8] sm:$0xff]
    %v680 = vld [vmem:[%s589 + $0x2d0] sm:$0xff]
    %v681 = vld [vmem:[%s589 + $0x2d8] sm:$0xff]
    %v682 = vld [vmem:[%s589 + $0x2e0] sm:$0xff]
    %v683 = vld [vmem:[%s589 + $0x2e8] sm:$0xff]
    %v684 = vld [vmem:[%s589 + $0x2f0] sm:$0xff]
    %v685 = vld [vmem:[%s589 + $0x2f8] sm:$0xff]
    %v686 = vld [vmem:[%s589 + $0x300] sm:$0xff]
    %v687 = vld [vmem:[%s589 + $0x308] sm:$0xff]
    %v688 = vld [vmem:[%s589 + $0x310] sm:$0xff]
    %v689 = vld [vmem:[%s589 + $0x318] sm:$0xff]
    %v690 = vld [vmem:[%s589 + $0x320] sm:$0xff]
    %v691 = vld [vmem:[%s589 + $0x328] sm:$0xff]
    %v692 = vld [vmem:[%s589 + $0x330] sm:$0xff]
    %v693 = vld [vmem:[%s589 + $0x338] sm:$0xff]
    %v694 = vld [vmem:[%s589 + $0x340] sm:$0xff]
    %v695 = vld [vmem:[%s589 + $0x348] sm:$0xff]
    %v696 = vld [vmem:[%s589 + $0x350] sm:$0xff]
    %v697 = vld [vmem:[%s589 + $0x358] sm:$0xff]
    %v698 = vld [vmem:[%s589 + $0x360] sm:$0xff]
    %v699 = vld [vmem:[%s589 + $0x368] sm:$0xff]
    %v700 = vld [vmem:[%s589 + $0x370] sm:$0xff]
    %v701 = vld [vmem:[%s589 + $0x378] sm:$0xff]
    %v702 = vld [vmem:[%s589 + $0x380] sm:$0xff]
    %v703 = vld [vmem:[%s589 + $0x388] sm:$0xff]
    %v704 = vld [vmem:[%s589 + $0x390] sm:$0xff]
    %v705 = vld [vmem:[%s589 + $0x398] sm:$0xff]
    %v706 = vld [vmem:[%s589 + $0x3a0] sm:$0xff]
    %v707 = vld [vmem:[%s589 + $0x3a8] sm:$0xff]
    %v708 = vld [vmem:[%s589 + $0x3b0] sm:$0xff]
    %v709 = vld [vmem:[%s589 + $0x3b8] sm:$0xff]
    %v710 = vld [vmem:[%s589 + $0x3c0] sm:$0xff]
    %v711 = vld [vmem:[%s589 + $0x3c8] sm:$0xff]
    %v712 = vld [vmem:[%s589 + $0x3d0] sm:$0xff]
    %v713 = vld [vmem:[%s589 + $0x3d8] sm:$0xff]
    %v714 = vld [vmem:[%s589 + $0x3e0] sm:$0xff]
    %v715 = vld [vmem:[%s589 + $0x3e8] sm:$0xff]
    %v716 = vld [vmem:[%s589 + $0x3f0] sm:$0xff]
    %v717 = vld [vmem:[%s589 + $0x3f8] sm:$0xff]
    %v718 = vld [vmem:[%s589 + $0x400] sm:$0xff]
    %v719 = vld [vmem:[%s589 + $0x408] sm:$0xff]
    %v720 = vld [vmem:[%s589 + $0x410] sm:$0xff]
    %v721 = vld [vmem:[%s589 + $0x418] sm:$0xff]
    %v722 = vld [vmem:[%s589 + $0x420] sm:$0xff]
    %v723 = vld [vmem:[%s589 + $0x428] sm:$0xff]
    %v724 = vld [vmem:[%s589 + $0x430] sm:$0xff]
    %v725 = vld [vmem:[%s589 + $0x438] sm:$0xff]
    %v726 = vld [vmem:[%s589 + $0x440] sm:$0xff]
    %v727 = vld [vmem:[%s589 + $0x448] sm:$0xff]
    %v728 = vld [vmem:[%s589 + $0x450] sm:$0xff]
    %v729 = vld [vmem:[%s589 + $0x458] sm:$0xff]
    %v730 = vld [vmem:[%s589 + $0x460] sm:$0xff]
    %v731 = vld [vmem:[%s589 + $0x468] sm:$0xff]
    %v732 = vld [vmem:[%s589 + $0x470] sm:$0xff]
    %v733 = vld [vmem:[%s589 + $0x478] sm:$0xff]
    %v734 = vld [vmem:[%s589 + $0x480] sm:$0xff]
    %v735 = vld [vmem:[%s589 + $0x488] sm:$0xff]
    %v736 = vld [vmem:[%s589 + $0x490] sm:$0xff]
    %v737 = vld [vmem:[%s589 + $0x498] sm:$0xff]
    %v738 = vld [vmem:[%s589 + $0x4a0] sm:$0xff]
    %v739 = vld [vmem:[%s589 + $0x4a8] sm:$0xff]
    %v740 = vld [vmem:[%s589 + $0x4b0] sm:$0xff]
    %v741 = vld [vmem:[%s589 + $0x4b8] sm:$0xff]
    %v742 = vld [vmem:[%s589 + $0x4c0] sm:$0xff]
    %v743 = vld [vmem:[%s589 + $0x4c8] sm:$0xff]
    %v744 = vld [vmem:[%s589 + $0x4d0] sm:$0xff]
    %v745 = vld [vmem:[%s589 + $0x4d8] sm:$0xff]
    %v746 = vld [vmem:[%s589 + $0x4e0] sm:$0xff]
    %v747 = vld [vmem:[%s589 + $0x4e8] sm:$0xff]
    %v748 = vld [vmem:[%s589 + $0x4f0] sm:$0xff]
    %v749 = vld [vmem:[%s589 + $0x4f8] sm:$0xff]
    %v750 = vld [vmem:[%s589 + $0x500] sm:$0xff]
    %v751 = vld [vmem:[%s589 + $0x508] sm:$0xff]
    %v752 = vld [vmem:[%s589 + $0x510] sm:$0xff]
    %v753 = vld [vmem:[%s589 + $0x518] sm:$0xff]
    %v754 = vld [vmem:[%s589 + $0x520] sm:$0xff]
    %v755 = vld [vmem:[%s589 + $0x528] sm:$0xff]
    %v756 = vld [vmem:[%s589 + $0x530] sm:$0xff]
    %v757 = vld [vmem:[%s589 + $0x538] sm:$0xff]
    %v758 = vld [vmem:[%s589 + $0x540] sm:$0xff]
    %v759 = vld [vmem:[%s589 + $0x548] sm:$0xff]
    %v760 = vld [vmem:[%s589 + $0x550] sm:$0xff]
    %v761 = vld [vmem:[%s589 + $0x558] sm:$0xff]
    %v762 = vld [vmem:[%s589 + $0x560] sm:$0xff]
    %v763 = vld [vmem:[%s589 + $0x568] sm:$0xff]
    %v764 = vld [vmem:[%s589 + $0x570] sm:$0xff]
    %v765 = vld [vmem:[%s589 + $0x578] sm:$0xff]
    %v766 = vld [vmem:[%s589 + $0x580] sm:$0xff]
    %v767 = vld [vmem:[%s589 + $0x588] sm:$0xff]
    %v768 = vld [vmem:[%s589 + $0x590] sm:$0xff]
    %v769 = vld [vmem:[%s589 + $0x598] sm:$0xff]
    %v770 = vld [vmem:[%s589 + $0x5a0] sm:$0xff]
    %v771 = vld [vmem:[%s589 + $0x5a8] sm:$0xff]
    %v772 = vld [vmem:[%s589 + $0x5b0] sm:$0xff]
    %v773 = vld [vmem:[%s589 + $0x5b8] sm:$0xff]
    %v774 = vld [vmem:[%s589 + $0x5c0] sm:$0xff]
    %v775 = vld [vmem:[%s589 + $0x5c8] sm:$0xff]
    %v776 = vld [vmem:[%s589 + $0x5d0] sm:$0xff]
    %v777 = vld [vmem:[%s589 + $0x5d8] sm:$0xff]
    %v778 = vld [vmem:[%s589 + $0x5e0] sm:$0xff]
    %v779 = vld [vmem:[%s589 + $0x5e8] sm:$0xff]
    %v780 = vld [vmem:[%s589 + $0x5f0] sm:$0xff]
    %v781 = vld [vmem:[%s589 + $0x5f8] sm:$0xff]
    %v783 = vshrl.u32 %v391, 16
    %v786 = vshrl.u32 %v392, 16
    %v789 = vshrl.u32 %v393, 16
    %v792 = vshrl.u32 %v394, 16
    %v795 = vshrl.u32 %v395, 16
    %v798 = vshrl.u32 %v396, 16
    %v998 = vunpack.c.l.b16 %v590
    %v999 = vunpack.c.h.b16 %v590
    %v1000 = vunpack.c.l.b16 %v591
    %v1001 = vunpack.c.h.b16 %v591
    %v1002 = vunpack.c.l.b16 %v592
    %v1003 = vunpack.c.h.b16 %v592
    %v1004 = vunpack.c.l.b16 %v593
    %v1005 = vunpack.c.h.b16 %v593
    %v1006 = vunpack.c.l.b16 %v594
    %v1007 = vunpack.c.h.b16 %v594
    %v1008 = vunpack.c.l.b16 %v595
    %v1009 = vunpack.c.h.b16 %v595
    %v1010 = vunpack.c.l.b16 %v596
    %v1011 = vunpack.c.h.b16 %v596
    %v1012 = vunpack.c.l.b16 %v597
    %v1013 = vunpack.c.h.b16 %v597
    %v1014 = vunpack.c.l.b16 %v598
    %v1015 = vunpack.c.h.b16 %v598
    %v1016 = vunpack.c.l.b16 %v599
    %v1017 = vunpack.c.h.b16 %v599
    %v1018 = vunpack.c.l.b16 %v600
    %v1019 = vunpack.c.h.b16 %v600
    %v1020 = vunpack.c.l.b16 %v601
    %v1021 = vunpack.c.h.b16 %v601
    %v1022 = vunpack.c.l.b16 %v602
    %v1023 = vunpack.c.h.b16 %v602
    %v1024 = vunpack.c.l.b16 %v603
    %v1025 = vunpack.c.h.b16 %v603
    %v1026 = vunpack.c.l.b16 %v604
    %v1027 = vunpack.c.h.b16 %v604
    %v1028 = vunpack.c.l.b16 %v605
    %v1029 = vunpack.c.h.b16 %v605
    %v1030 = vunpack.c.l.b16 %v606
    %v1031 = vunpack.c.h.b16 %v606
    %v1032 = vunpack.c.l.b16 %v607
    %v1033 = vunpack.c.h.b16 %v607
    %v1034 = vunpack.c.l.b16 %v608
    %v1035 = vunpack.c.h.b16 %v608
    %v1036 = vunpack.c.l.b16 %v609
    %v1037 = vunpack.c.h.b16 %v609
    %v1038 = vunpack.c.l.b16 %v610
    %v1039 = vunpack.c.h.b16 %v610
    %v1040 = vunpack.c.l.b16 %v611
    %v1041 = vunpack.c.h.b16 %v611
    %v1042 = vunpack.c.l.b16 %v612
    %v1043 = vunpack.c.h.b16 %v612
    %v1044 = vunpack.c.l.b16 %v613
    %v1045 = vunpack.c.h.b16 %v613
    %v1046 = vunpack.c.l.b16 %v614
    %v1047 = vunpack.c.h.b16 %v614
    %v1048 = vunpack.c.l.b16 %v615
    %v1049 = vunpack.c.h.b16 %v615
    %v1050 = vunpack.c.l.b16 %v616
    %v1051 = vunpack.c.h.b16 %v616
    %v1052 = vunpack.c.l.b16 %v617
    %v1053 = vunpack.c.h.b16 %v617
    %v1054 = vunpack.c.l.b16 %v618
    %v1055 = vunpack.c.h.b16 %v618
    %v1056 = vunpack.c.l.b16 %v619
    %v1057 = vunpack.c.h.b16 %v619
    %v1058 = vunpack.c.l.b16 %v620
    %v1059 = vunpack.c.h.b16 %v620
    %v1060 = vunpack.c.l.b16 %v621
    %v1061 = vunpack.c.h.b16 %v621
    %v1062 = vunpack.c.l.b16 %v622
    %v1063 = vunpack.c.h.b16 %v622
    %v1064 = vunpack.c.l.b16 %v623
    %v1065 = vunpack.c.h.b16 %v623
    %v1066 = vunpack.c.l.b16 %v624
    %v1067 = vunpack.c.h.b16 %v624
    %v1068 = vunpack.c.l.b16 %v625
    %v1069 = vunpack.c.h.b16 %v625
    %v1070 = vunpack.c.l.b16 %v626
    %v1071 = vunpack.c.h.b16 %v626
    %v1072 = vunpack.c.l.b16 %v627
    %v1073 = vunpack.c.h.b16 %v627
    %v1074 = vunpack.c.l.b16 %v628
    %v1075 = vunpack.c.h.b16 %v628
    %v1076 = vunpack.c.l.b16 %v629
    %v1077 = vunpack.c.h.b16 %v629
    %v1078 = vunpack.c.l.b16 %v630
    %v1079 = vunpack.c.h.b16 %v630
    %v1080 = vunpack.c.l.b16 %v631
    %v1081 = vunpack.c.h.b16 %v631
    %v1082 = vunpack.c.l.b16 %v632
    %v1083 = vunpack.c.h.b16 %v632
    %v1084 = vunpack.c.l.b16 %v633
    %v1085 = vunpack.c.h.b16 %v633
    %v1086 = vunpack.c.l.b16 %v634
    %v1087 = vunpack.c.h.b16 %v634
    %v1088 = vunpack.c.l.b16 %v635
    %v1089 = vunpack.c.h.b16 %v635
    %v1090 = vunpack.c.l.b16 %v636
    %v1091 = vunpack.c.h.b16 %v636
    %v1092 = vunpack.c.l.b16 %v637
    %v1093 = vunpack.c.h.b16 %v637
    %v1094 = vunpack.c.l.b16 %v638
    %v1095 = vunpack.c.h.b16 %v638
    %v1096 = vunpack.c.l.b16 %v639
    %v1097 = vunpack.c.h.b16 %v639
    %v1098 = vunpack.c.l.b16 %v640
    %v1099 = vunpack.c.h.b16 %v640
    %v1100 = vunpack.c.l.b16 %v641
    %v1101 = vunpack.c.h.b16 %v641
    %v1102 = vunpack.c.l.b16 %v642
    %v1103 = vunpack.c.h.b16 %v642
    %v1104 = vunpack.c.l.b16 %v643
    %v1105 = vunpack.c.h.b16 %v643
    %v1106 = vunpack.c.l.b16 %v644
    %v1107 = vunpack.c.h.b16 %v644
    %v1108 = vunpack.c.l.b16 %v645
    %v1109 = vunpack.c.h.b16 %v645
    %v1110 = vunpack.c.l.b16 %v646
    %v1111 = vunpack.c.h.b16 %v646
    %v1112 = vunpack.c.l.b16 %v647
    %v1113 = vunpack.c.h.b16 %v647
    %v1114 = vunpack.c.l.b16 %v648
    %v1115 = vunpack.c.h.b16 %v648
    %v1116 = vunpack.c.l.b16 %v649
    %v1117 = vunpack.c.h.b16 %v649
    %v1118 = vunpack.c.l.b16 %v650
    %v1119 = vunpack.c.h.b16 %v650
    %v1120 = vunpack.c.l.b16 %v651
    %v1121 = vunpack.c.h.b16 %v651
    %v1122 = vunpack.c.l.b16 %v652
    %v1123 = vunpack.c.h.b16 %v652
    %v1124 = vunpack.c.l.b16 %v653
    %v1125 = vunpack.c.h.b16 %v653
    %v1126 = vunpack.c.l.b16 %v654
    %v1127 = vunpack.c.h.b16 %v654
    %v1128 = vunpack.c.l.b16 %v655
    %v1129 = vunpack.c.h.b16 %v655
    %v1130 = vunpack.c.l.b16 %v656
    %v1131 = vunpack.c.h.b16 %v656
    %v1132 = vunpack.c.l.b16 %v657
    %v1133 = vunpack.c.h.b16 %v657
    %v1134 = vunpack.c.l.b16 %v658
    %v1135 = vunpack.c.h.b16 %v658
    %v1136 = vunpack.c.l.b16 %v659
    %v1137 = vunpack.c.h.b16 %v659
    %v1138 = vunpack.c.l.b16 %v660
    %v1139 = vunpack.c.h.b16 %v660
    %v1140 = vunpack.c.l.b16 %v661
    %v1141 = vunpack.c.h.b16 %v661
    %v1142 = vunpack.c.l.b16 %v662
    %v1143 = vunpack.c.h.b16 %v662
    %v1144 = vunpack.c.l.b16 %v663
    %v1145 = vunpack.c.h.b16 %v663
    %v1146 = vunpack.c.l.b16 %v664
    %v1147 = vunpack.c.h.b16 %v664
    %v1148 = vunpack.c.l.b16 %v665
    %v1149 = vunpack.c.h.b16 %v665
    %v1150 = vunpack.c.l.b16 %v666
    %v1151 = vunpack.c.h.b16 %v666
    %v1152 = vunpack.c.l.b16 %v667
    %v1153 = vunpack.c.h.b16 %v667
    %v1154 = vunpack.c.l.b16 %v668
    %v1155 = vunpack.c.h.b16 %v668
    %v1156 = vunpack.c.l.b16 %v669
    %v1157 = vunpack.c.h.b16 %v669
    %v1158 = vunpack.c.l.b16 %v670
    %v1159 = vunpack.c.h.b16 %v670
    %v1160 = vunpack.c.l.b16 %v671
    %v1161 = vunpack.c.h.b16 %v671
    %v1162 = vunpack.c.l.b16 %v672
    %v1163 = vunpack.c.h.b16 %v672
    %v1164 = vunpack.c.l.b16 %v673
    %v1165 = vunpack.c.h.b16 %v673
    %v1166 = vunpack.c.l.b16 %v674
    %v1167 = vunpack.c.h.b16 %v674
    %v1168 = vunpack.c.l.b16 %v675
    %v1169 = vunpack.c.h.b16 %v675
    %v1170 = vunpack.c.l.b16 %v676
    %v1171 = vunpack.c.h.b16 %v676
    %v1172 = vunpack.c.l.b16 %v677
    %v1173 = vunpack.c.h.b16 %v677
    %v1174 = vunpack.c.l.b16 %v678
    %v1175 = vunpack.c.h.b16 %v678
    %v1176 = vunpack.c.l.b16 %v679
    %v1177 = vunpack.c.h.b16 %v679
    %v1178 = vunpack.c.l.b16 %v680
    %v1179 = vunpack.c.h.b16 %v680
    %v1180 = vunpack.c.l.b16 %v681
    %v1181 = vunpack.c.h.b16 %v681
    %v1182 = vunpack.c.l.b16 %v682
    %v1183 = vunpack.c.h.b16 %v682
    %v1184 = vunpack.c.l.b16 %v683
    %v1185 = vunpack.c.h.b16 %v683
    %v1186 = vunpack.c.l.b16 %v684
    %v1187 = vunpack.c.h.b16 %v684
    %v1188 = vunpack.c.l.b16 %v685
    %v1189 = vunpack.c.h.b16 %v685
    %v1190 = vunpack.c.l.b16 %v686
    %v1191 = vunpack.c.h.b16 %v686
    %v1192 = vunpack.c.l.b16 %v687
    %v1193 = vunpack.c.h.b16 %v687
    %v1194 = vunpack.c.l.b16 %v688
    %v1195 = vunpack.c.h.b16 %v688
    %v1196 = vunpack.c.l.b16 %v689
    %v1197 = vunpack.c.h.b16 %v689
    %v1198 = vunpack.c.l.b16 %v690
    %v1199 = vunpack.c.h.b16 %v690
    %v1200 = vunpack.c.l.b16 %v691
    %v1201 = vunpack.c.h.b16 %v691
    %v1202 = vunpack.c.l.b16 %v692
    %v1203 = vunpack.c.h.b16 %v692
    %v1204 = vunpack.c.l.b16 %v693
    %v1205 = vunpack.c.h.b16 %v693
    %v1206 = vunpack.c.l.b16 %v694
    %v1207 = vunpack.c.h.b16 %v694
    %v1208 = vunpack.c.l.b16 %v695
    %v1209 = vunpack.c.h.b16 %v695
    %v1210 = vunpack.c.l.b16 %v696
    %v1211 = vunpack.c.h.b16 %v696
    %v1212 = vunpack.c.l.b16 %v697
    %v1213 = vunpack.c.h.b16 %v697
    %v1214 = vunpack.c.l.b16 %v698
    %v1215 = vunpack.c.h.b16 %v698
    %v1216 = vunpack.c.l.b16 %v699
    %v1217 = vunpack.c.h.b16 %v699
    %v1218 = vunpack.c.l.b16 %v700
    %v1219 = vunpack.c.h.b16 %v700
    %v1220 = vunpack.c.l.b16 %v701
    %v1221 = vunpack.c.h.b16 %v701
    %v1222 = vunpack.c.l.b16 %v702
    %v1223 = vunpack.c.h.b16 %v702
    %v1224 = vunpack.c.l.b16 %v703
    %v1225 = vunpack.c.h.b16 %v703
    %v1226 = vunpack.c.l.b16 %v704
    %v1227 = vunpack.c.h.b16 %v704
    %v1228 = vunpack.c.l.b16 %v705
    %v1229 = vunpack.c.h.b16 %v705
    %v1230 = vunpack.c.l.b16 %v706
    %v1231 = vunpack.c.h.b16 %v706
    %v1232 = vunpack.c.l.b16 %v707
    %v1233 = vunpack.c.h.b16 %v707
    %v1234 = vunpack.c.l.b16 %v708
    %v1235 = vunpack.c.h.b16 %v708
    %v1236 = vunpack.c.l.b16 %v709
    %v1237 = vunpack.c.h.b16 %v709
    %v1238 = vunpack.c.l.b16 %v710
    %v1239 = vunpack.c.h.b16 %v710
    %v1240 = vunpack.c.l.b16 %v711
    %v1241 = vunpack.c.h.b16 %v711
    %v1242 = vunpack.c.l.b16 %v712
    %v1243 = vunpack.c.h.b16 %v712
    %v1244 = vunpack.c.l.b16 %v713
    %v1245 = vunpack.c.h.b16 %v713
    %v1246 = vunpack.c.l.b16 %v714
    %v1247 = vunpack.c.h.b16 %v714
    %v1248 = vunpack.c.l.b16 %v715
    %v1249 = vunpack.c.h.b16 %v715
    %v1250 = vunpack.c.l.b16 %v716
    %v1251 = vunpack.c.h.b16 %v716
    %v1252 = vunpack.c.l.b16 %v717
    %v1253 = vunpack.c.h.b16 %v717
    %v1254 = vunpack.c.l.b16 %v718
    %v1255 = vunpack.c.h.b16 %v718
    %v1256 = vunpack.c.l.b16 %v719
    %v1257 = vunpack.c.h.b16 %v719
    %v1258 = vunpack.c.l.b16 %v720
    %v1259 = vunpack.c.h.b16 %v720
    %v1260 = vunpack.c.l.b16 %v721
    %v1261 = vunpack.c.h.b16 %v721
    %v1262 = vunpack.c.l.b16 %v722
    %v1263 = vunpack.c.h.b16 %v722
    %v1264 = vunpack.c.l.b16 %v723
    %v1265 = vunpack.c.h.b16 %v723
    %v1266 = vunpack.c.l.b16 %v724
    %v1267 = vunpack.c.h.b16 %v724
    %v1268 = vunpack.c.l.b16 %v725
    %v1269 = vunpack.c.h.b16 %v725
    %v1270 = vunpack.c.l.b16 %v726
    %v1271 = vunpack.c.h.b16 %v726
    %v1272 = vunpack.c.l.b16 %v727
    %v1273 = vunpack.c.h.b16 %v727
    %v1274 = vunpack.c.l.b16 %v728
    %v1275 = vunpack.c.h.b16 %v728
    %v1276 = vunpack.c.l.b16 %v729
    %v1277 = vunpack.c.h.b16 %v729
    %v1278 = vunpack.c.l.b16 %v730
    %v1279 = vunpack.c.h.b16 %v730
    %v1280 = vunpack.c.l.b16 %v731
    %v1281 = vunpack.c.h.b16 %v731
    %v1282 = vunpack.c.l.b16 %v732
    %v1283 = vunpack.c.h.b16 %v732
    %v1284 = vunpack.c.l.b16 %v733
    %v1285 = vunpack.c.h.b16 %v733
    %v1286 = vunpack.c.l.b16 %v734
    %v1287 = vunpack.c.h.b16 %v734
    %v1288 = vunpack.c.l.b16 %v735
    %v1289 = vunpack.c.h.b16 %v735
    %v1290 = vunpack.c.l.b16 %v736
    %v1291 = vunpack.c.h.b16 %v736
    %v1292 = vunpack.c.l.b16 %v737
    %v1293 = vunpack.c.h.b16 %v737
    %v1294 = vunpack.c.l.b16 %v738
    %v1295 = vunpack.c.h.b16 %v738
    %v1296 = vunpack.c.l.b16 %v739
    %v1297 = vunpack.c.h.b16 %v739
    %v1298 = vunpack.c.l.b16 %v740
    %v1299 = vunpack.c.h.b16 %v740
    %v1300 = vunpack.c.l.b16 %v741
    %v1301 = vunpack.c.h.b16 %v741
    %v1302 = vunpack.c.l.b16 %v742
    %v1303 = vunpack.c.h.b16 %v742
    %v1304 = vunpack.c.l.b16 %v743
    %v1305 = vunpack.c.h.b16 %v743
    %v1306 = vunpack.c.l.b16 %v744
    %v1307 = vunpack.c.h.b16 %v744
    %v1308 = vunpack.c.l.b16 %v745
    %v1309 = vunpack.c.h.b16 %v745
    %v1310 = vunpack.c.l.b16 %v746
    %v1311 = vunpack.c.h.b16 %v746
    %v1312 = vunpack.c.l.b16 %v747
    %v1313 = vunpack.c.h.b16 %v747
    %v1314 = vunpack.c.l.b16 %v748
    %v1315 = vunpack.c.h.b16 %v748
    %v1316 = vunpack.c.l.b16 %v749
    %v1317 = vunpack.c.h.b16 %v749
    %v1318 = vunpack.c.l.b16 %v750
    %v1319 = vunpack.c.h.b16 %v750
    %v1320 = vunpack.c.l.b16 %v751
    %v1321 = vunpack.c.h.b16 %v751
    %v1322 = vunpack.c.l.b16 %v752
    %v1323 = vunpack.c.h.b16 %v752
    %v1324 = vunpack.c.l.b16 %v753
    %v1325 = vunpack.c.h.b16 %v753
    %v1326 = vunpack.c.l.b16 %v754
    %v1327 = vunpack.c.h.b16 %v754
    %v1328 = vunpack.c.l.b16 %v755
    %v1329 = vunpack.c.h.b16 %v755
    %v1330 = vunpack.c.l.b16 %v756
    %v1331 = vunpack.c.h.b16 %v756
    %v1332 = vunpack.c.l.b16 %v757
    %v1333 = vunpack.c.h.b16 %v757
    %v1334 = vunpack.c.l.b16 %v758
    %v1335 = vunpack.c.h.b16 %v758
    %v1336 = vunpack.c.l.b16 %v759
    %v1337 = vunpack.c.h.b16 %v759
    %v1338 = vunpack.c.l.b16 %v760
    %v1339 = vunpack.c.h.b16 %v760
    %v1340 = vunpack.c.l.b16 %v761
    %v1341 = vunpack.c.h.b16 %v761
    %v1342 = vunpack.c.l.b16 %v762
    %v1343 = vunpack.c.h.b16 %v762
    %v1344 = vunpack.c.l.b16 %v763
    %v1345 = vunpack.c.h.b16 %v763
    %v1346 = vunpack.c.l.b16 %v764
    %v1347 = vunpack.c.h.b16 %v764
    %v1348 = vunpack.c.l.b16 %v765
    %v1349 = vunpack.c.h.b16 %v765
    %v1350 = vunpack.c.l.b16 %v766
    %v1351 = vunpack.c.h.b16 %v766
    %v1352 = vunpack.c.l.b16 %v767
    %v1353 = vunpack.c.h.b16 %v767
    %v1354 = vunpack.c.l.b16 %v768
    %v1355 = vunpack.c.h.b16 %v768
    %v1356 = vunpack.c.l.b16 %v769
    %v1357 = vunpack.c.h.b16 %v769
    %v1358 = vunpack.c.l.b16 %v770
    %v1359 = vunpack.c.h.b16 %v770
    %v1360 = vunpack.c.l.b16 %v771
    %v1361 = vunpack.c.h.b16 %v771
    %v1362 = vunpack.c.l.b16 %v772
    %v1363 = vunpack.c.h.b16 %v772
    %v1364 = vunpack.c.l.b16 %v773
    %v1365 = vunpack.c.h.b16 %v773
    %v1366 = vunpack.c.l.b16 %v774
    %v1367 = vunpack.c.h.b16 %v774
    %v1368 = vunpack.c.l.b16 %v775
    %v1369 = vunpack.c.h.b16 %v775
    %v1370 = vunpack.c.l.b16 %v776
    %v1371 = vunpack.c.h.b16 %v776
    %v1372 = vunpack.c.l.b16 %v777
    %v1373 = vunpack.c.h.b16 %v777
    %v1374 = vunpack.c.l.b16 %v778
    %v1375 = vunpack.c.h.b16 %v778
    %v1376 = vunpack.c.l.b16 %v779
    %v1377 = vunpack.c.h.b16 %v779
    %v1378 = vunpack.c.l.b16 %v780
    %v1379 = vunpack.c.h.b16 %v780
    %v1380 = vunpack.c.l.b16 %v781
    %v1381 = vunpack.c.h.b16 %v781
    %v1382 = vpack.c.b16 %v1002, %v998
    %v1383 = vpack.c.b16 %v1003, %v999
    %v1384 = vpack.c.b16 %v1004, %v1000
    %v1385 = vpack.c.b16 %v1005, %v1001
    %v1386 = vpack.c.b16 %v1010, %v1006
    %v1387 = vpack.c.b16 %v1011, %v1007
    %v1388 = vpack.c.b16 %v1012, %v1008
    %v1389 = vpack.c.b16 %v1013, %v1009
    %v1390 = vpack.c.b16 %v1018, %v1014
    %v1391 = vpack.c.b16 %v1019, %v1015
    %v1392 = vpack.c.b16 %v1020, %v1016
    %v1393 = vpack.c.b16 %v1021, %v1017
    %v1394 = vpack.c.b16 %v1026, %v1022
    %v1395 = vpack.c.b16 %v1027, %v1023
    %v1396 = vpack.c.b16 %v1028, %v1024
    %v1397 = vpack.c.b16 %v1029, %v1025
    %v1398 = vpack.c.b16 %v1034, %v1030
    %v1399 = vpack.c.b16 %v1035, %v1031
    %v1400 = vpack.c.b16 %v1036, %v1032
    %v1401 = vpack.c.b16 %v1037, %v1033
    %v1402 = vpack.c.b16 %v1042, %v1038
    %v1403 = vpack.c.b16 %v1043, %v1039
    %v1404 = vpack.c.b16 %v1044, %v1040
    %v1405 = vpack.c.b16 %v1045, %v1041
    %v1406 = vpack.c.b16 %v1050, %v1046
    %v1407 = vpack.c.b16 %v1051, %v1047
    %v1408 = vpack.c.b16 %v1052, %v1048
    %v1409 = vpack.c.b16 %v1053, %v1049
    %v1410 = vpack.c.b16 %v1058, %v1054
    %v1411 = vpack.c.b16 %v1059, %v1055
    %v1412 = vpack.c.b16 %v1060, %v1056
    %v1413 = vpack.c.b16 %v1061, %v1057
    %v1414 = vpack.c.b16 %v1066, %v1062
    %v1415 = vpack.c.b16 %v1067, %v1063
    %v1416 = vpack.c.b16 %v1068, %v1064
    %v1417 = vpack.c.b16 %v1069, %v1065
    %v1418 = vpack.c.b16 %v1074, %v1070
    %v1419 = vpack.c.b16 %v1075, %v1071
    %v1420 = vpack.c.b16 %v1076, %v1072
    %v1421 = vpack.c.b16 %v1077, %v1073
    %v1422 = vpack.c.b16 %v1082, %v1078
    %v1423 = vpack.c.b16 %v1083, %v1079
    %v1424 = vpack.c.b16 %v1084, %v1080
    %v1425 = vpack.c.b16 %v1085, %v1081
    %v1426 = vpack.c.b16 %v1090, %v1086
    %v1427 = vpack.c.b16 %v1091, %v1087
    %v1428 = vpack.c.b16 %v1092, %v1088
    %v1429 = vpack.c.b16 %v1093, %v1089
    %v1430 = vpack.c.b16 %v1098, %v1094
    %v1431 = vpack.c.b16 %v1099, %v1095
    %v1432 = vpack.c.b16 %v1100, %v1096
    %v1433 = vpack.c.b16 %v1101, %v1097
    %v1434 = vpack.c.b16 %v1106, %v1102
    %v1435 = vpack.c.b16 %v1107, %v1103
    %v1436 = vpack.c.b16 %v1108, %v1104
    %v1437 = vpack.c.b16 %v1109, %v1105
    %v1438 = vpack.c.b16 %v1114, %v1110
    %v1439 = vpack.c.b16 %v1115, %v1111
    %v1440 = vpack.c.b16 %v1116, %v1112
    %v1441 = vpack.c.b16 %v1117, %v1113
    %v1442 = vpack.c.b16 %v1122, %v1118
    %v1443 = vpack.c.b16 %v1123, %v1119
    %v1444 = vpack.c.b16 %v1124, %v1120
    %v1445 = vpack.c.b16 %v1125, %v1121
    %v1446 = vpack.c.b16 %v1130, %v1126
    %v1447 = vpack.c.b16 %v1131, %v1127
    %v1448 = vpack.c.b16 %v1132, %v1128
    %v1449 = vpack.c.b16 %v1133, %v1129
    %v1450 = vpack.c.b16 %v1138, %v1134
    %v1451 = vpack.c.b16 %v1139, %v1135
    %v1452 = vpack.c.b16 %v1140, %v1136
    %v1453 = vpack.c.b16 %v1141, %v1137
    %v1454 = vpack.c.b16 %v1146, %v1142
    %v1455 = vpack.c.b16 %v1147, %v1143
    %v1456 = vpack.c.b16 %v1148, %v1144
    %v1457 = vpack.c.b16 %v1149, %v1145
    %v1458 = vpack.c.b16 %v1154, %v1150
    %v1459 = vpack.c.b16 %v1155, %v1151
    %v1460 = vpack.c.b16 %v1156, %v1152
    %v1461 = vpack.c.b16 %v1157, %v1153
    %v1462 = vpack.c.b16 %v1162, %v1158
    %v1463 = vpack.c.b16 %v1163, %v1159
    %v1464 = vpack.c.b16 %v1164, %v1160
    %v1465 = vpack.c.b16 %v1165, %v1161
    %v1466 = vpack.c.b16 %v1170, %v1166
    %v1467 = vpack.c.b16 %v1171, %v1167
    %v1468 = vpack.c.b16 %v1172, %v1168
    %v1469 = vpack.c.b16 %v1173, %v1169
    %v1470 = vpack.c.b16 %v1178, %v1174
    %v1471 = vpack.c.b16 %v1179, %v1175
    %v1472 = vpack.c.b16 %v1180, %v1176
    %v1473 = vpack.c.b16 %v1181, %v1177
    %v1474 = vpack.c.b16 %v1186, %v1182
    %v1475 = vpack.c.b16 %v1187, %v1183
    %v1476 = vpack.c.b16 %v1188, %v1184
    %v1477 = vpack.c.b16 %v1189, %v1185
    %v1478 = vpack.c.b16 %v1194, %v1190
    %v1479 = vpack.c.b16 %v1195, %v1191
    %v1480 = vpack.c.b16 %v1196, %v1192
    %v1481 = vpack.c.b16 %v1197, %v1193
    %v1482 = vpack.c.b16 %v1202, %v1198
    %v1483 = vpack.c.b16 %v1203, %v1199
    %v1484 = vpack.c.b16 %v1204, %v1200
    %v1485 = vpack.c.b16 %v1205, %v1201
    %v1486 = vpack.c.b16 %v1210, %v1206
    %v1487 = vpack.c.b16 %v1211, %v1207
    %v1488 = vpack.c.b16 %v1212, %v1208
    %v1489 = vpack.c.b16 %v1213, %v1209
    %v1490 = vpack.c.b16 %v1218, %v1214
    %v1491 = vpack.c.b16 %v1219, %v1215
    %v1492 = vpack.c.b16 %v1220, %v1216
    %v1493 = vpack.c.b16 %v1221, %v1217
    %v1494 = vpack.c.b16 %v1226, %v1222
    %v1495 = vpack.c.b16 %v1227, %v1223
    %v1496 = vpack.c.b16 %v1228, %v1224
    %v1497 = vpack.c.b16 %v1229, %v1225
    %v1498 = vpack.c.b16 %v1234, %v1230
    %v1499 = vpack.c.b16 %v1235, %v1231
    %v1500 = vpack.c.b16 %v1236, %v1232
    %v1501 = vpack.c.b16 %v1237, %v1233
    %v1502 = vpack.c.b16 %v1242, %v1238
    %v1503 = vpack.c.b16 %v1243, %v1239
    %v1504 = vpack.c.b16 %v1244, %v1240
    %v1505 = vpack.c.b16 %v1245, %v1241
    %v1506 = vpack.c.b16 %v1250, %v1246
    %v1507 = vpack.c.b16 %v1251, %v1247
    %v1508 = vpack.c.b16 %v1252, %v1248
    %v1509 = vpack.c.b16 %v1253, %v1249
    %v1510 = vpack.c.b16 %v1258, %v1254
    %v1511 = vpack.c.b16 %v1259, %v1255
    %v1512 = vpack.c.b16 %v1260, %v1256
    %v1513 = vpack.c.b16 %v1261, %v1257
    %v1514 = vpack.c.b16 %v1266, %v1262
    %v1515 = vpack.c.b16 %v1267, %v1263
    %v1516 = vpack.c.b16 %v1268, %v1264
    %v1517 = vpack.c.b16 %v1269, %v1265
    %v1518 = vpack.c.b16 %v1274, %v1270
    %v1519 = vpack.c.b16 %v1275, %v1271
    %v1520 = vpack.c.b16 %v1276, %v1272
    %v1521 = vpack.c.b16 %v1277, %v1273
    %v1522 = vpack.c.b16 %v1282, %v1278
    %v1523 = vpack.c.b16 %v1283, %v1279
    %v1524 = vpack.c.b16 %v1284, %v1280
    %v1525 = vpack.c.b16 %v1285, %v1281
    %v1526 = vpack.c.b16 %v1290, %v1286
    %v1527 = vpack.c.b16 %v1291, %v1287
    %v1528 = vpack.c.b16 %v1292, %v1288
    %v1529 = vpack.c.b16 %v1293, %v1289
    %v1530 = vpack.c.b16 %v1298, %v1294
    %v1531 = vpack.c.b16 %v1299, %v1295
    %v1532 = vpack.c.b16 %v1300, %v1296
    %v1533 = vpack.c.b16 %v1301, %v1297
    %v1534 = vpack.c.b16 %v1306, %v1302
    %v1535 = vpack.c.b16 %v1307, %v1303
    %v1536 = vpack.c.b16 %v1308, %v1304
    %v1537 = vpack.c.b16 %v1309, %v1305
    %v1538 = vpack.c.b16 %v1314, %v1310
    %v1539 = vpack.c.b16 %v1315, %v1311
    %v1540 = vpack.c.b16 %v1316, %v1312
    %v1541 = vpack.c.b16 %v1317, %v1313
    %v1542 = vpack.c.b16 %v1322, %v1318
    %v1543 = vpack.c.b16 %v1323, %v1319
    %v1544 = vpack.c.b16 %v1324, %v1320
    %v1545 = vpack.c.b16 %v1325, %v1321
    %v1546 = vpack.c.b16 %v1330, %v1326
    %v1547 = vpack.c.b16 %v1331, %v1327
    %v1548 = vpack.c.b16 %v1332, %v1328
    %v1549 = vpack.c.b16 %v1333, %v1329
    %v1550 = vpack.c.b16 %v1338, %v1334
    %v1551 = vpack.c.b16 %v1339, %v1335
    %v1552 = vpack.c.b16 %v1340, %v1336
    %v1553 = vpack.c.b16 %v1341, %v1337
    %v1554 = vpack.c.b16 %v1346, %v1342
    %v1555 = vpack.c.b16 %v1347, %v1343
    %v1556 = vpack.c.b16 %v1348, %v1344
    %v1557 = vpack.c.b16 %v1349, %v1345
    %v1558 = vpack.c.b16 %v1354, %v1350
    %v1559 = vpack.c.b16 %v1355, %v1351
    %v1560 = vpack.c.b16 %v1356, %v1352
    %v1561 = vpack.c.b16 %v1357, %v1353
    %v1562 = vpack.c.b16 %v1362, %v1358
    %v1563 = vpack.c.b16 %v1363, %v1359
    %v1564 = vpack.c.b16 %v1364, %v1360
    %v1565 = vpack.c.b16 %v1365, %v1361
    %v1566 = vpack.c.b16 %v1370, %v1366
    %v1567 = vpack.c.b16 %v1371, %v1367
    %v1568 = vpack.c.b16 %v1372, %v1368
    %v1569 = vpack.c.b16 %v1373, %v1369
    %v1570 = vpack.c.b16 %v1378, %v1374
    %v1571 = vpack.c.b16 %v1379, %v1375
    %v1572 = vpack.c.b16 %v1380, %v1376
    %v1573 = vpack.c.b16 %v1381, %v1377
    %1766 = vmatprep.subr.bf16.mxu0 %v1411
    %1767 = vmatpush1.bf16.msra.mxu0 %v1410
    %1768 = vmatprep.subr.bf16.mxu0 %v1407
    %1769 = vmatpush1.bf16.msra.mxu0 %v1406
    %1770 = vmatprep.subr.bf16.mxu0 %v1403
    %1771 = vmatpush1.bf16.msra.mxu0 %v1402
    %1772 = vmatprep.subr.bf16.mxu0 %v1399
    %1773 = vmatpush1.bf16.msra.mxu0 %v1398
    %1774 = vmatprep.subr.bf16.mxu0 %v1395
    %1775 = vmatpush1.bf16.msra.mxu0 %v1394
    %1776 = vmatprep.subr.bf16.mxu0 %v1391
    %1777 = vmatpush1.bf16.msra.mxu0 %v1390
    %1778 = vmatprep.subr.bf16.mxu0 %v1387
    %1779 = vmatpush1.bf16.msra.mxu0 %v1386
    %1780 = vmatprep.subr.bf16.mxu0 %v1383
    %1781 = vmatpush1.bf16.msra.mxu0 %v1382
    %1782 = vmatprep.subr.bf16.mxu0 %v1443
    %1783 = vmatpush2.bf16.msra.mxu0 %v1442
    %1784 = vmatprep.subr.bf16.mxu0 %v1439
    %1785 = vmatpush2.bf16.msra.mxu0 %v1438
    %1786 = vmatprep.subr.bf16.mxu0 %v1435
    %1787 = vmatpush2.bf16.msra.mxu0 %v1434
    %1788 = vmatprep.subr.bf16.mxu0 %v1431
    %1789 = vmatpush2.bf16.msra.mxu0 %v1430
    %1790 = vmatprep.subr.bf16.mxu0 %v1427
    %1791 = vmatpush2.bf16.msra.mxu0 %v1426
    %1792 = vmatprep.subr.bf16.mxu0 %v1423
    %1793 = vmatpush2.bf16.msra.mxu0 %v1422
    %1794 = vmatprep.subr.bf16.mxu0 %v1419
    %1795 = vmatpush2.bf16.msra.mxu0 %v1418
    %1796 = vmatprep.subr.bf16.mxu0 %v1415
    %1797 = vmatpush2.bf16.msra.mxu0 %v1414
    %1798 = vmatprep.mubr.bf16.mxu0 %v786
    %1799 = vmatmul.mubr.bf16.gmra.mxu0 %v783
    %v1800 = vpop.f32.mrf.mxu0
    %v1801 = vadd.f32 0.0, %v1800
    %v1802 = vpop.f32.mrf.mxu0
    %v1803 = vadd.f32 0.0, %v1802
    %v1804 = vpop.f32.mrf.mxu0
    %v1805 = vpop.f32.mrf.mxu0
    %1806 = vdwg.mxu0
    %1807 = vmatprep.subr.bf16.mxu0 %v1475
    %1808 = vmatpush1.bf16.msra.mxu0 %v1474
    %1809 = vmatprep.subr.bf16.mxu0 %v1471
    %1810 = vmatpush1.bf16.msra.mxu0 %v1470
    %1811 = vmatprep.subr.bf16.mxu0 %v1467
    %1812 = vmatpush1.bf16.msra.mxu0 %v1466
    %1813 = vmatprep.subr.bf16.mxu0 %v1463
    %1814 = vmatpush1.bf16.msra.mxu0 %v1462
    %1815 = vmatprep.subr.bf16.mxu0 %v1459
    %1816 = vmatpush1.bf16.msra.mxu0 %v1458
    %1817 = vmatprep.subr.bf16.mxu0 %v1455
    %1818 = vmatpush1.bf16.msra.mxu0 %v1454
    %1819 = vmatprep.subr.bf16.mxu0 %v1451
    %1820 = vmatpush1.bf16.msra.mxu0 %v1450
    %1821 = vmatprep.subr.bf16.mxu0 %v1447
    %1822 = vmatpush1.bf16.msra.mxu0 %v1446
    %1823 = vmatprep.subr.bf16.mxu0 %v1507
    %1824 = vmatpush2.bf16.msra.mxu0 %v1506
    %1825 = vmatprep.subr.bf16.mxu0 %v1503
    %1826 = vmatpush2.bf16.msra.mxu0 %v1502
    %1827 = vmatprep.subr.bf16.mxu0 %v1499
    %1828 = vmatpush2.bf16.msra.mxu0 %v1498
    %1829 = vmatprep.subr.bf16.mxu0 %v1495
    %1830 = vmatpush2.bf16.msra.mxu0 %v1494
    %1831 = vmatprep.subr.bf16.mxu0 %v1491
    %1832 = vmatpush2.bf16.msra.mxu0 %v1490
    %1833 = vmatprep.subr.bf16.mxu0 %v1487
    %1834 = vmatpush2.bf16.msra.mxu0 %v1486
    %1835 = vmatprep.subr.bf16.mxu0 %v1483
    %1836 = vmatpush2.bf16.msra.mxu0 %v1482
    %1837 = vmatprep.subr.bf16.mxu0 %v1479
    %1838 = vmatpush2.bf16.msra.mxu0 %v1478
    %1839 = vmatprep.mubr.bf16.mxu0 %v792
    %1840 = vmatmul.mubr.bf16.gmra.mxu0 %v789
    %v1841 = vpop.f32.mrf.mxu0
    %v1842 = vadd.f32 %v1801, %v1841
    %v1843 = vpop.f32.mrf.mxu0
    %v1844 = vadd.f32 %v1803, %v1843
    %v1845 = vpop.f32.mrf.mxu0
    %v1846 = vpop.f32.mrf.mxu0
    %1847 = vdwg.mxu0
    %1848 = vmatprep.subr.bf16.mxu0 %v1539
    %1849 = vmatpush1.bf16.msra.mxu0 %v1538
    %1850 = vmatprep.subr.bf16.mxu0 %v1535
    %1851 = vmatpush1.bf16.msra.mxu0 %v1534
    %1852 = vmatprep.subr.bf16.mxu0 %v1531
    %1853 = vmatpush1.bf16.msra.mxu0 %v1530
    %1854 = vmatprep.subr.bf16.mxu0 %v1527
    %1855 = vmatpush1.bf16.msra.mxu0 %v1526
    %1856 = vmatprep.subr.bf16.mxu0 %v1523
    %1857 = vmatpush1.bf16.msra.mxu0 %v1522
    %1858 = vmatprep.subr.bf16.mxu0 %v1519
    %1859 = vmatpush1.bf16.msra.mxu0 %v1518
    %1860 = vmatprep.subr.bf16.mxu0 %v1515
    %1861 = vmatpush1.bf16.msra.mxu0 %v1514
    %1862 = vmatprep.subr.bf16.mxu0 %v1511
    %1863 = vmatpush1.bf16.msra.mxu0 %v1510
    %1864 = vmatprep.subr.bf16.mxu0 %v1571
    %1865 = vmatpush2.bf16.msra.mxu0 %v1570
    %1866 = vmatprep.subr.bf16.mxu0 %v1567
    %1867 = vmatpush2.bf16.msra.mxu0 %v1566
    %1868 = vmatprep.subr.bf16.mxu0 %v1563
    %1869 = vmatpush2.bf16.msra.mxu0 %v1562
    %1870 = vmatprep.subr.bf16.mxu0 %v1559
    %1871 = vmatpush2.bf16.msra.mxu0 %v1558
    %1872 = vmatprep.subr.bf16.mxu0 %v1555
    %1873 = vmatpush2.bf16.msra.mxu0 %v1554
    %1874 = vmatprep.subr.bf16.mxu0 %v1551
    %1875 = vmatpush2.bf16.msra.mxu0 %v1550
    %1876 = vmatprep.subr.bf16.mxu0 %v1547
    %1877 = vmatpush2.bf16.msra.mxu0 %v1546
    %1878 = vmatprep.subr.bf16.mxu0 %v1543
    %1879 = vmatpush2.bf16.msra.mxu0 %v1542
    %1880 = vmatprep.mubr.bf16.mxu0 %v798
    %1881 = vmatmul.mubr.bf16.gmra.mxu0 %v795
    %v1882 = vpop.f32.mrf.mxu0
    %v1883 = vadd.f32 %v1842, %v1882
    %v1884 = vpop.f32.mrf.mxu0
    %v1885 = vadd.f32 %v1844, %v1884
    %v1886 = vpop.f32.mrf.mxu0
    %v1887 = vpop.f32.mrf.mxu0
    %1888 = vdwg.mxu0
    %1889 = vmatprep.subr.bf16.mxu0 %v1413
    %1890 = vmatpush1.bf16.msra.mxu0 %v1412
    %1891 = vmatprep.subr.bf16.mxu0 %v1409
    %1892 = vmatpush1.bf16.msra.mxu0 %v1408
    %1893 = vmatprep.subr.bf16.mxu0 %v1405
    %1894 = vmatpush1.bf16.msra.mxu0 %v1404
    %1895 = vmatprep.subr.bf16.mxu0 %v1401
    %1896 = vmatpush1.bf16.msra.mxu0 %v1400
    %1897 = vmatprep.subr.bf16.mxu0 %v1397
    %1898 = vmatpush1.bf16.msra.mxu0 %v1396
    %1899 = vmatprep.subr.bf16.mxu0 %v1393
    %1900 = vmatpush1.bf16.msra.mxu0 %v1392
    %1901 = vmatprep.subr.bf16.mxu0 %v1389
    %1902 = vmatpush1.bf16.msra.mxu0 %v1388
    %1903 = vmatprep.subr.bf16.mxu0 %v1385
    %1904 = vmatpush1.bf16.msra.mxu0 %v1384
    %1905 = vmatprep.subr.bf16.mxu0 %v1445
    %1906 = vmatpush2.bf16.msra.mxu0 %v1444
    %1907 = vmatprep.subr.bf16.mxu0 %v1441
    %1908 = vmatpush2.bf16.msra.mxu0 %v1440
    %1909 = vmatprep.subr.bf16.mxu0 %v1437
    %1910 = vmatpush2.bf16.msra.mxu0 %v1436
    %1911 = vmatprep.subr.bf16.mxu0 %v1433
    %1912 = vmatpush2.bf16.msra.mxu0 %v1432
    %1913 = vmatprep.subr.bf16.mxu0 %v1429
    %1914 = vmatpush2.bf16.msra.mxu0 %v1428
    %1915 = vmatprep.subr.bf16.mxu0 %v1425
    %1916 = vmatpush2.bf16.msra.mxu0 %v1424
    %1917 = vmatprep.subr.bf16.mxu0 %v1421
    %1918 = vmatpush2.bf16.msra.mxu0 %v1420
    %1919 = vmatprep.subr.bf16.mxu0 %v1417
    %1920 = vmatpush2.bf16.msra.mxu0 %v1416
    %1921 = vmatprep.mubr.bf16.mxu0 %v786
    %1922 = vmatmul.mubr.bf16.gmra.mxu0 %v783
    %v1923 = vpop.f32.mrf.mxu0
    %v1924 = vadd.f32 0.0, %v1923
    %v1925 = vpop.f32.mrf.mxu0
    %v1926 = vadd.f32 0.0, %v1925
    %v1927 = vpop.f32.mrf.mxu0
    %v1928 = vpop.f32.mrf.mxu0
    %1929 = vdwg.mxu0
    %1930 = vmatprep.subr.bf16.mxu0 %v1477
    %1931 = vmatpush1.bf16.msra.mxu0 %v1476
    %1932 = vmatprep.subr.bf16.mxu0 %v1473
    %1933 = vmatpush1.bf16.msra.mxu0 %v1472
    %1934 = vmatprep.subr.bf16.mxu0 %v1469
    %1935 = vmatpush1.bf16.msra.mxu0 %v1468
    %1936 = vmatprep.subr.bf16.mxu0 %v1465
    %1937 = vmatpush1.bf16.msra.mxu0 %v1464
    %1938 = vmatprep.subr.bf16.mxu0 %v1461
    %1939 = vmatpush1.bf16.msra.mxu0 %v1460
    %1940 = vmatprep.subr.bf16.mxu0 %v1457
    %1941 = vmatpush1.bf16.msra.mxu0 %v1456
    %1942 = vmatprep.subr.bf16.mxu0 %v1453
    %1943 = vmatpush1.bf16.msra.mxu0 %v1452
    %1944 = vmatprep.subr.bf16.mxu0 %v1449
    %1945 = vmatpush1.bf16.msra.mxu0 %v1448
    %1946 = vmatprep.subr.bf16.mxu0 %v1509
    %1947 = vmatpush2.bf16.msra.mxu0 %v1508
    %1948 = vmatprep.subr.bf16.mxu0 %v1505
    %1949 = vmatpush2.bf16.msra.mxu0 %v1504
    %1950 = vmatprep.subr.bf16.mxu0 %v1501
    %1951 = vmatpush2.bf16.msra.mxu0 %v1500
    %1952 = vmatprep.subr.bf16.mxu0 %v1497
    %1953 = vmatpush2.bf16.msra.mxu0 %v1496
    %1954 = vmatprep.subr.bf16.mxu0 %v1493
    %1955 = vmatpush2.bf16.msra.mxu0 %v1492
    %1956 = vmatprep.subr.bf16.mxu0 %v1489
    %1957 = vmatpush2.bf16.msra.mxu0 %v1488
    %1958 = vmatprep.subr.bf16.mxu0 %v1485
    %1959 = vmatpush2.bf16.msra.mxu0 %v1484
    %1960 = vmatprep.subr.bf16.mxu0 %v1481
    %1961 = vmatpush2.bf16.msra.mxu0 %v1480
    %1962 = vmatprep.mubr.bf16.mxu0 %v792
    %1963 = vmatmul.mubr.bf16.gmra.mxu0 %v789
    %v1964 = vpop.f32.mrf.mxu0
    %v1965 = vadd.f32 %v1924, %v1964
    %v1966 = vpop.f32.mrf.mxu0
    %v1967 = vadd.f32 %v1926, %v1966
    %v1968 = vpop.f32.mrf.mxu0
    %v1969 = vpop.f32.mrf.mxu0
    %1970 = vdwg.mxu0
    %1971 = vmatprep.subr.bf16.mxu0 %v1541
    %1972 = vmatpush1.bf16.msra.mxu0 %v1540
    %1973 = vmatprep.subr.bf16.mxu0 %v1537
    %1974 = vmatpush1.bf16.msra.mxu0 %v1536
    %1975 = vmatprep.subr.bf16.mxu0 %v1533
    %1976 = vmatpush1.bf16.msra.mxu0 %v1532
    %1977 = vmatprep.subr.bf16.mxu0 %v1529
    %1978 = vmatpush1.bf16.msra.mxu0 %v1528
    %1979 = vmatprep.subr.bf16.mxu0 %v1525
    %1980 = vmatpush1.bf16.msra.mxu0 %v1524
    %1981 = vmatprep.subr.bf16.mxu0 %v1521
    %1982 = vmatpush1.bf16.msra.mxu0 %v1520
    %1983 = vmatprep.subr.bf16.mxu0 %v1517
    %1984 = vmatpush1.bf16.msra.mxu0 %v1516
    %1985 = vmatprep.subr.bf16.mxu0 %v1513
    %1986 = vmatpush1.bf16.msra.mxu0 %v1512
    %1987 = vmatprep.subr.bf16.mxu0 %v1573
    %1988 = vmatpush2.bf16.msra.mxu0 %v1572
    %1989 = vmatprep.subr.bf16.mxu0 %v1569
    %1990 = vmatpush2.bf16.msra.mxu0 %v1568
    %1991 = vmatprep.subr.bf16.mxu0 %v1565
    %1992 = vmatpush2.bf16.msra.mxu0 %v1564
    %1993 = vmatprep.subr.bf16.mxu0 %v1561
    %1994 = vmatpush2.bf16.msra.mxu0 %v1560
    %1995 = vmatprep.subr.bf16.mxu0 %v1557
    %1996 = vmatpush2.bf16.msra.mxu0 %v1556
    %1997 = vmatprep.subr.bf16.mxu0 %v1553
    %1998 = vmatpush2.bf16.msra.mxu0 %v1552
    %1999 = vmatprep.subr.bf16.mxu0 %v1549
    %2000 = vmatpush2.bf16.msra.mxu0 %v1548
    %2001 = vmatprep.subr.bf16.mxu0 %v1545
    %2002 = vmatpush2.bf16.msra.mxu0 %v1544
    %2003 = vmatprep.mubr.bf16.mxu0 %v798
    %2004 = vmatmul.mubr.bf16.gmra.mxu0 %v795
    %v2005 = vpop.f32.mrf.mxu0
    %v2006 = vadd.f32 %v1965, %v2005
    %v2007 = vpop.f32.mrf.mxu0
    %v2008 = vadd.f32 %v1967, %v2007
    %v2009 = vpop.f32.mrf.mxu0
    %v2010 = vpop.f32.mrf.mxu0
    %2011 = vdwg.mxu0
    %v2204 = vunpack.c.l.b16 %v397
    %v2205 = vunpack.c.h.b16 %v397
    %v2206 = vunpack.c.l.b16 %v398
    %v2207 = vunpack.c.h.b16 %v398
    %v2208 = vunpack.c.l.b16 %v399
    %v2209 = vunpack.c.h.b16 %v399
    %v2210 = vunpack.c.l.b16 %v400
    %v2211 = vunpack.c.h.b16 %v400
    %v2212 = vunpack.c.l.b16 %v401
    %v2213 = vunpack.c.h.b16 %v401
    %v2214 = vunpack.c.l.b16 %v402
    %v2215 = vunpack.c.h.b16 %v402
    %v2216 = vunpack.c.l.b16 %v403
    %v2217 = vunpack.c.h.b16 %v403
    %v2218 = vunpack.c.l.b16 %v404
    %v2219 = vunpack.c.h.b16 %v404
    %v2220 = vunpack.c.l.b16 %v405
    %v2221 = vunpack.c.h.b16 %v405
    %v2222 = vunpack.c.l.b16 %v406
    %v2223 = vunpack.c.h.b16 %v406
    %v2224 = vunpack.c.l.b16 %v407
    %v2225 = vunpack.c.h.b16 %v407
    %v2226 = vunpack.c.l.b16 %v408
    %v2227 = vunpack.c.h.b16 %v408
    %v2228 = vunpack.c.l.b16 %v409
    %v2229 = vunpack.c.h.b16 %v409
    %v2230 = vunpack.c.l.b16 %v410
    %v2231 = vunpack.c.h.b16 %v410
    %v2232 = vunpack.c.l.b16 %v411
    %v2233 = vunpack.c.h.b16 %v411
    %v2234 = vunpack.c.l.b16 %v412
    %v2235 = vunpack.c.h.b16 %v412
    %v2236 = vunpack.c.l.b16 %v413
    %v2237 = vunpack.c.h.b16 %v413
    %v2238 = vunpack.c.l.b16 %v414
    %v2239 = vunpack.c.h.b16 %v414
    %v2240 = vunpack.c.l.b16 %v415
    %v2241 = vunpack.c.h.b16 %v415
    %v2242 = vunpack.c.l.b16 %v416
    %v2243 = vunpack.c.h.b16 %v416
    %v2244 = vunpack.c.l.b16 %v417
    %v2245 = vunpack.c.h.b16 %v417
    %v2246 = vunpack.c.l.b16 %v418
    %v2247 = vunpack.c.h.b16 %v418
    %v2248 = vunpack.c.l.b16 %v419
    %v2249 = vunpack.c.h.b16 %v419
    %v2250 = vunpack.c.l.b16 %v420
    %v2251 = vunpack.c.h.b16 %v420
    %v2252 = vunpack.c.l.b16 %v421
    %v2253 = vunpack.c.h.b16 %v421
    %v2254 = vunpack.c.l.b16 %v422
    %v2255 = vunpack.c.h.b16 %v422
    %v2256 = vunpack.c.l.b16 %v423
    %v2257 = vunpack.c.h.b16 %v423
    %v2258 = vunpack.c.l.b16 %v424
    %v2259 = vunpack.c.h.b16 %v424
    %v2260 = vunpack.c.l.b16 %v425
    %v2261 = vunpack.c.h.b16 %v425
    %v2262 = vunpack.c.l.b16 %v426
    %v2263 = vunpack.c.h.b16 %v426
    %v2264 = vunpack.c.l.b16 %v427
    %v2265 = vunpack.c.h.b16 %v427
    %v2266 = vunpack.c.l.b16 %v428
    %v2267 = vunpack.c.h.b16 %v428
    %v2268 = vunpack.c.l.b16 %v429
    %v2269 = vunpack.c.h.b16 %v429
    %v2270 = vunpack.c.l.b16 %v430
    %v2271 = vunpack.c.h.b16 %v430
    %v2272 = vunpack.c.l.b16 %v431
    %v2273 = vunpack.c.h.b16 %v431
    %v2274 = vunpack.c.l.b16 %v432
    %v2275 = vunpack.c.h.b16 %v432
    %v2276 = vunpack.c.l.b16 %v433
    %v2277 = vunpack.c.h.b16 %v433
    %v2278 = vunpack.c.l.b16 %v434
    %v2279 = vunpack.c.h.b16 %v434
    %v2280 = vunpack.c.l.b16 %v435
    %v2281 = vunpack.c.h.b16 %v435
    %v2282 = vunpack.c.l.b16 %v436
    %v2283 = vunpack.c.h.b16 %v436
    %v2284 = vunpack.c.l.b16 %v437
    %v2285 = vunpack.c.h.b16 %v437
    %v2286 = vunpack.c.l.b16 %v438
    %v2287 = vunpack.c.h.b16 %v438
    %v2288 = vunpack.c.l.b16 %v439
    %v2289 = vunpack.c.h.b16 %v439
    %v2290 = vunpack.c.l.b16 %v440
    %v2291 = vunpack.c.h.b16 %v440
    %v2292 = vunpack.c.l.b16 %v441
    %v2293 = vunpack.c.h.b16 %v441
    %v2294 = vunpack.c.l.b16 %v442
    %v2295 = vunpack.c.h.b16 %v442
    %v2296 = vunpack.c.l.b16 %v443
    %v2297 = vunpack.c.h.b16 %v443
    %v2298 = vunpack.c.l.b16 %v444
    %v2299 = vunpack.c.h.b16 %v444
    %v2300 = vunpack.c.l.b16 %v445
    %v2301 = vunpack.c.h.b16 %v445
    %v2302 = vunpack.c.l.b16 %v446
    %v2303 = vunpack.c.h.b16 %v446
    %v2304 = vunpack.c.l.b16 %v447
    %v2305 = vunpack.c.h.b16 %v447
    %v2306 = vunpack.c.l.b16 %v448
    %v2307 = vunpack.c.h.b16 %v448
    %v2308 = vunpack.c.l.b16 %v449
    %v2309 = vunpack.c.h.b16 %v449
    %v2310 = vunpack.c.l.b16 %v450
    %v2311 = vunpack.c.h.b16 %v450
    %v2312 = vunpack.c.l.b16 %v451
    %v2313 = vunpack.c.h.b16 %v451
    %v2314 = vunpack.c.l.b16 %v452
    %v2315 = vunpack.c.h.b16 %v452
    %v2316 = vunpack.c.l.b16 %v453
    %v2317 = vunpack.c.h.b16 %v453
    %v2318 = vunpack.c.l.b16 %v454
    %v2319 = vunpack.c.h.b16 %v454
    %v2320 = vunpack.c.l.b16 %v455
    %v2321 = vunpack.c.h.b16 %v455
    %v2322 = vunpack.c.l.b16 %v456
    %v2323 = vunpack.c.h.b16 %v456
    %v2324 = vunpack.c.l.b16 %v457
    %v2325 = vunpack.c.h.b16 %v457
    %v2326 = vunpack.c.l.b16 %v458
    %v2327 = vunpack.c.h.b16 %v458
    %v2328 = vunpack.c.l.b16 %v459
    %v2329 = vunpack.c.h.b16 %v459
    %v2330 = vunpack.c.l.b16 %v460
    %v2331 = vunpack.c.h.b16 %v460
    %v2332 = vunpack.c.l.b16 %v461
    %v2333 = vunpack.c.h.b16 %v461
    %v2334 = vunpack.c.l.b16 %v462
    %v2335 = vunpack.c.h.b16 %v462
    %v2336 = vunpack.c.l.b16 %v463
    %v2337 = vunpack.c.h.b16 %v463
    %v2338 = vunpack.c.l.b16 %v464
    %v2339 = vunpack.c.h.b16 %v464
    %v2340 = vunpack.c.l.b16 %v465
    %v2341 = vunpack.c.h.b16 %v465
    %v2342 = vunpack.c.l.b16 %v466
    %v2343 = vunpack.c.h.b16 %v466
    %v2344 = vunpack.c.l.b16 %v467
    %v2345 = vunpack.c.h.b16 %v467
    %v2346 = vunpack.c.l.b16 %v468
    %v2347 = vunpack.c.h.b16 %v468
    %v2348 = vunpack.c.l.b16 %v469
    %v2349 = vunpack.c.h.b16 %v469
    %v2350 = vunpack.c.l.b16 %v470
    %v2351 = vunpack.c.h.b16 %v470
    %v2352 = vunpack.c.l.b16 %v471
    %v2353 = vunpack.c.h.b16 %v471
    %v2354 = vunpack.c.l.b16 %v472
    %v2355 = vunpack.c.h.b16 %v472
    %v2356 = vunpack.c.l.b16 %v473
    %v2357 = vunpack.c.h.b16 %v473
    %v2358 = vunpack.c.l.b16 %v474
    %v2359 = vunpack.c.h.b16 %v474
    %v2360 = vunpack.c.l.b16 %v475
    %v2361 = vunpack.c.h.b16 %v475
    %v2362 = vunpack.c.l.b16 %v476
    %v2363 = vunpack.c.h.b16 %v476
    %v2364 = vunpack.c.l.b16 %v477
    %v2365 = vunpack.c.h.b16 %v477
    %v2366 = vunpack.c.l.b16 %v478
    %v2367 = vunpack.c.h.b16 %v478
    %v2368 = vunpack.c.l.b16 %v479
    %v2369 = vunpack.c.h.b16 %v479
    %v2370 = vunpack.c.l.b16 %v480
    %v2371 = vunpack.c.h.b16 %v480
    %v2372 = vunpack.c.l.b16 %v481
    %v2373 = vunpack.c.h.b16 %v481
    %v2374 = vunpack.c.l.b16 %v482
    %v2375 = vunpack.c.h.b16 %v482
    %v2376 = vunpack.c.l.b16 %v483
    %v2377 = vunpack.c.h.b16 %v483
    %v2378 = vunpack.c.l.b16 %v484
    %v2379 = vunpack.c.h.b16 %v484
    %v2380 = vunpack.c.l.b16 %v485
    %v2381 = vunpack.c.h.b16 %v485
    %v2382 = vunpack.c.l.b16 %v486
    %v2383 = vunpack.c.h.b16 %v486
    %v2384 = vunpack.c.l.b16 %v487
    %v2385 = vunpack.c.h.b16 %v487
    %v2386 = vunpack.c.l.b16 %v488
    %v2387 = vunpack.c.h.b16 %v488
    %v2388 = vunpack.c.l.b16 %v489
    %v2389 = vunpack.c.h.b16 %v489
    %v2390 = vunpack.c.l.b16 %v490
    %v2391 = vunpack.c.h.b16 %v490
    %v2392 = vunpack.c.l.b16 %v491
    %v2393 = vunpack.c.h.b16 %v491
    %v2394 = vunpack.c.l.b16 %v492
    %v2395 = vunpack.c.h.b16 %v492
    %v2396 = vunpack.c.l.b16 %v493
    %v2397 = vunpack.c.h.b16 %v493
    %v2398 = vunpack.c.l.b16 %v494
    %v2399 = vunpack.c.h.b16 %v494
    %v2400 = vunpack.c.l.b16 %v495
    %v2401 = vunpack.c.h.b16 %v495
    %v2402 = vunpack.c.l.b16 %v496
    %v2403 = vunpack.c.h.b16 %v496
    %v2404 = vunpack.c.l.b16 %v497
    %v2405 = vunpack.c.h.b16 %v497
    %v2406 = vunpack.c.l.b16 %v498
    %v2407 = vunpack.c.h.b16 %v498
    %v2408 = vunpack.c.l.b16 %v499
    %v2409 = vunpack.c.h.b16 %v499
    %v2410 = vunpack.c.l.b16 %v500
    %v2411 = vunpack.c.h.b16 %v500
    %v2412 = vunpack.c.l.b16 %v501
    %v2413 = vunpack.c.h.b16 %v501
    %v2414 = vunpack.c.l.b16 %v502
    %v2415 = vunpack.c.h.b16 %v502
    %v2416 = vunpack.c.l.b16 %v503
    %v2417 = vunpack.c.h.b16 %v503
    %v2418 = vunpack.c.l.b16 %v504
    %v2419 = vunpack.c.h.b16 %v504
    %v2420 = vunpack.c.l.b16 %v505
    %v2421 = vunpack.c.h.b16 %v505
    %v2422 = vunpack.c.l.b16 %v506
    %v2423 = vunpack.c.h.b16 %v506
    %v2424 = vunpack.c.l.b16 %v507
    %v2425 = vunpack.c.h.b16 %v507
    %v2426 = vunpack.c.l.b16 %v508
    %v2427 = vunpack.c.h.b16 %v508
    %v2428 = vunpack.c.l.b16 %v509
    %v2429 = vunpack.c.h.b16 %v509
    %v2430 = vunpack.c.l.b16 %v510
    %v2431 = vunpack.c.h.b16 %v510
    %v2432 = vunpack.c.l.b16 %v511
    %v2433 = vunpack.c.h.b16 %v511
    %v2434 = vunpack.c.l.b16 %v512
    %v2435 = vunpack.c.h.b16 %v512
    %v2436 = vunpack.c.l.b16 %v513
    %v2437 = vunpack.c.h.b16 %v513
    %v2438 = vunpack.c.l.b16 %v514
    %v2439 = vunpack.c.h.b16 %v514
    %v2440 = vunpack.c.l.b16 %v515
    %v2441 = vunpack.c.h.b16 %v515
    %v2442 = vunpack.c.l.b16 %v516
    %v2443 = vunpack.c.h.b16 %v516
    %v2444 = vunpack.c.l.b16 %v517
    %v2445 = vunpack.c.h.b16 %v517
    %v2446 = vunpack.c.l.b16 %v518
    %v2447 = vunpack.c.h.b16 %v518
    %v2448 = vunpack.c.l.b16 %v519
    %v2449 = vunpack.c.h.b16 %v519
    %v2450 = vunpack.c.l.b16 %v520
    %v2451 = vunpack.c.h.b16 %v520
    %v2452 = vunpack.c.l.b16 %v521
    %v2453 = vunpack.c.h.b16 %v521
    %v2454 = vunpack.c.l.b16 %v522
    %v2455 = vunpack.c.h.b16 %v522
    %v2456 = vunpack.c.l.b16 %v523
    %v2457 = vunpack.c.h.b16 %v523
    %v2458 = vunpack.c.l.b16 %v524
    %v2459 = vunpack.c.h.b16 %v524
    %v2460 = vunpack.c.l.b16 %v525
    %v2461 = vunpack.c.h.b16 %v525
    %v2462 = vunpack.c.l.b16 %v526
    %v2463 = vunpack.c.h.b16 %v526
    %v2464 = vunpack.c.l.b16 %v527
    %v2465 = vunpack.c.h.b16 %v527
    %v2466 = vunpack.c.l.b16 %v528
    %v2467 = vunpack.c.h.b16 %v528
    %v2468 = vunpack.c.l.b16 %v529
    %v2469 = vunpack.c.h.b16 %v529
    %v2470 = vunpack.c.l.b16 %v530
    %v2471 = vunpack.c.h.b16 %v530
    %v2472 = vunpack.c.l.b16 %v531
    %v2473 = vunpack.c.h.b16 %v531
    %v2474 = vunpack.c.l.b16 %v532
    %v2475 = vunpack.c.h.b16 %v532
    %v2476 = vunpack.c.l.b16 %v533
    %v2477 = vunpack.c.h.b16 %v533
    %v2478 = vunpack.c.l.b16 %v534
    %v2479 = vunpack.c.h.b16 %v534
    %v2480 = vunpack.c.l.b16 %v535
    %v2481 = vunpack.c.h.b16 %v535
    %v2482 = vunpack.c.l.b16 %v536
    %v2483 = vunpack.c.h.b16 %v536
    %v2484 = vunpack.c.l.b16 %v537
    %v2485 = vunpack.c.h.b16 %v537
    %v2486 = vunpack.c.l.b16 %v538
    %v2487 = vunpack.c.h.b16 %v538
    %v2488 = vunpack.c.l.b16 %v539
    %v2489 = vunpack.c.h.b16 %v539
    %v2490 = vunpack.c.l.b16 %v540
    %v2491 = vunpack.c.h.b16 %v540
    %v2492 = vunpack.c.l.b16 %v541
    %v2493 = vunpack.c.h.b16 %v541
    %v2494 = vunpack.c.l.b16 %v542
    %v2495 = vunpack.c.h.b16 %v542
    %v2496 = vunpack.c.l.b16 %v543
    %v2497 = vunpack.c.h.b16 %v543
    %v2498 = vunpack.c.l.b16 %v544
    %v2499 = vunpack.c.h.b16 %v544
    %v2500 = vunpack.c.l.b16 %v545
    %v2501 = vunpack.c.h.b16 %v545
    %v2502 = vunpack.c.l.b16 %v546
    %v2503 = vunpack.c.h.b16 %v546
    %v2504 = vunpack.c.l.b16 %v547
    %v2505 = vunpack.c.h.b16 %v547
    %v2506 = vunpack.c.l.b16 %v548
    %v2507 = vunpack.c.h.b16 %v548
    %v2508 = vunpack.c.l.b16 %v549
    %v2509 = vunpack.c.h.b16 %v549
    %v2510 = vunpack.c.l.b16 %v550
    %v2511 = vunpack.c.h.b16 %v550
    %v2512 = vunpack.c.l.b16 %v551
    %v2513 = vunpack.c.h.b16 %v551
    %v2514 = vunpack.c.l.b16 %v552
    %v2515 = vunpack.c.h.b16 %v552
    %v2516 = vunpack.c.l.b16 %v553
    %v2517 = vunpack.c.h.b16 %v553
    %v2518 = vunpack.c.l.b16 %v554
    %v2519 = vunpack.c.h.b16 %v554
    %v2520 = vunpack.c.l.b16 %v555
    %v2521 = vunpack.c.h.b16 %v555
    %v2522 = vunpack.c.l.b16 %v556
    %v2523 = vunpack.c.h.b16 %v556
    %v2524 = vunpack.c.l.b16 %v557
    %v2525 = vunpack.c.h.b16 %v557
    %v2526 = vunpack.c.l.b16 %v558
    %v2527 = vunpack.c.h.b16 %v558
    %v2528 = vunpack.c.l.b16 %v559
    %v2529 = vunpack.c.h.b16 %v559
    %v2530 = vunpack.c.l.b16 %v560
    %v2531 = vunpack.c.h.b16 %v560
    %v2532 = vunpack.c.l.b16 %v561
    %v2533 = vunpack.c.h.b16 %v561
    %v2534 = vunpack.c.l.b16 %v562
    %v2535 = vunpack.c.h.b16 %v562
    %v2536 = vunpack.c.l.b16 %v563
    %v2537 = vunpack.c.h.b16 %v563
    %v2538 = vunpack.c.l.b16 %v564
    %v2539 = vunpack.c.h.b16 %v564
    %v2540 = vunpack.c.l.b16 %v565
    %v2541 = vunpack.c.h.b16 %v565
    %v2542 = vunpack.c.l.b16 %v566
    %v2543 = vunpack.c.h.b16 %v566
    %v2544 = vunpack.c.l.b16 %v567
    %v2545 = vunpack.c.h.b16 %v567
    %v2546 = vunpack.c.l.b16 %v568
    %v2547 = vunpack.c.h.b16 %v568
    %v2548 = vunpack.c.l.b16 %v569
    %v2549 = vunpack.c.h.b16 %v569
    %v2550 = vunpack.c.l.b16 %v570
    %v2551 = vunpack.c.h.b16 %v570
    %v2552 = vunpack.c.l.b16 %v571
    %v2553 = vunpack.c.h.b16 %v571
    %v2554 = vunpack.c.l.b16 %v572
    %v2555 = vunpack.c.h.b16 %v572
    %v2556 = vunpack.c.l.b16 %v573
    %v2557 = vunpack.c.h.b16 %v573
    %v2558 = vunpack.c.l.b16 %v574
    %v2559 = vunpack.c.h.b16 %v574
    %v2560 = vunpack.c.l.b16 %v575
    %v2561 = vunpack.c.h.b16 %v575
    %v2562 = vunpack.c.l.b16 %v576
    %v2563 = vunpack.c.h.b16 %v576
    %v2564 = vunpack.c.l.b16 %v577
    %v2565 = vunpack.c.h.b16 %v577
    %v2566 = vunpack.c.l.b16 %v578
    %v2567 = vunpack.c.h.b16 %v578
    %v2568 = vunpack.c.l.b16 %v579
    %v2569 = vunpack.c.h.b16 %v579
    %v2570 = vunpack.c.l.b16 %v580
    %v2571 = vunpack.c.h.b16 %v580
    %v2572 = vunpack.c.l.b16 %v581
    %v2573 = vunpack.c.h.b16 %v581
    %v2574 = vunpack.c.l.b16 %v582
    %v2575 = vunpack.c.h.b16 %v582
    %v2576 = vunpack.c.l.b16 %v583
    %v2577 = vunpack.c.h.b16 %v583
    %v2578 = vunpack.c.l.b16 %v584
    %v2579 = vunpack.c.h.b16 %v584
    %v2580 = vunpack.c.l.b16 %v585
    %v2581 = vunpack.c.h.b16 %v585
    %v2582 = vunpack.c.l.b16 %v586
    %v2583 = vunpack.c.h.b16 %v586
    %v2584 = vunpack.c.l.b16 %v587
    %v2585 = vunpack.c.h.b16 %v587
    %v2586 = vunpack.c.l.b16 %v588
    %v2587 = vunpack.c.h.b16 %v588
    %v2588 = vpack.c.b16 %v2208, %v2204
    %v2589 = vpack.c.b16 %v2209, %v2205
    %v2590 = vpack.c.b16 %v2210, %v2206
    %v2591 = vpack.c.b16 %v2211, %v2207
    %v2592 = vpack.c.b16 %v2216, %v2212
    %v2593 = vpack.c.b16 %v2217, %v2213
    %v2594 = vpack.c.b16 %v2218, %v2214
    %v2595 = vpack.c.b16 %v2219, %v2215
    %v2596 = vpack.c.b16 %v2224, %v2220
    %v2597 = vpack.c.b16 %v2225, %v2221
    %v2598 = vpack.c.b16 %v2226, %v2222
    %v2599 = vpack.c.b16 %v2227, %v2223
    %v2600 = vpack.c.b16 %v2232, %v2228
    %v2601 = vpack.c.b16 %v2233, %v2229
    %v2602 = vpack.c.b16 %v2234, %v2230
    %v2603 = vpack.c.b16 %v2235, %v2231
    %v2604 = vpack.c.b16 %v2240, %v2236
    %v2605 = vpack.c.b16 %v2241, %v2237
    %v2606 = vpack.c.b16 %v2242, %v2238
    %v2607 = vpack.c.b16 %v2243, %v2239
    %v2608 = vpack.c.b16 %v2248, %v2244
    %v2609 = vpack.c.b16 %v2249, %v2245
    %v2610 = vpack.c.b16 %v2250, %v2246
    %v2611 = vpack.c.b16 %v2251, %v2247
    %v2612 = vpack.c.b16 %v2256, %v2252
    %v2613 = vpack.c.b16 %v2257, %v2253
    %v2614 = vpack.c.b16 %v2258, %v2254
    %v2615 = vpack.c.b16 %v2259, %v2255
    %v2616 = vpack.c.b16 %v2264, %v2260
    %v2617 = vpack.c.b16 %v2265, %v2261
    %v2618 = vpack.c.b16 %v2266, %v2262
    %v2619 = vpack.c.b16 %v2267, %v2263
    %v2620 = vpack.c.b16 %v2272, %v2268
    %v2621 = vpack.c.b16 %v2273, %v2269
    %v2622 = vpack.c.b16 %v2274, %v2270
    %v2623 = vpack.c.b16 %v2275, %v2271
    %v2624 = vpack.c.b16 %v2280, %v2276
    %v2625 = vpack.c.b16 %v2281, %v2277
    %v2626 = vpack.c.b16 %v2282, %v2278
    %v2627 = vpack.c.b16 %v2283, %v2279
    %v2628 = vpack.c.b16 %v2288, %v2284
    %v2629 = vpack.c.b16 %v2289, %v2285
    %v2630 = vpack.c.b16 %v2290, %v2286
    %v2631 = vpack.c.b16 %v2291, %v2287
    %v2632 = vpack.c.b16 %v2296, %v2292
    %v2633 = vpack.c.b16 %v2297, %v2293
    %v2634 = vpack.c.b16 %v2298, %v2294
    %v2635 = vpack.c.b16 %v2299, %v2295
    %v2636 = vpack.c.b16 %v2304, %v2300
    %v2637 = vpack.c.b16 %v2305, %v2301
    %v2638 = vpack.c.b16 %v2306, %v2302
    %v2639 = vpack.c.b16 %v2307, %v2303
    %v2640 = vpack.c.b16 %v2312, %v2308
    %v2641 = vpack.c.b16 %v2313, %v2309
    %v2642 = vpack.c.b16 %v2314, %v2310
    %v2643 = vpack.c.b16 %v2315, %v2311
    %v2644 = vpack.c.b16 %v2320, %v2316
    %v2645 = vpack.c.b16 %v2321, %v2317
    %v2646 = vpack.c.b16 %v2322, %v2318
    %v2647 = vpack.c.b16 %v2323, %v2319
    %v2648 = vpack.c.b16 %v2328, %v2324
    %v2649 = vpack.c.b16 %v2329, %v2325
    %v2650 = vpack.c.b16 %v2330, %v2326
    %v2651 = vpack.c.b16 %v2331, %v2327
    %v2652 = vpack.c.b16 %v2336, %v2332
    %v2653 = vpack.c.b16 %v2337, %v2333
    %v2654 = vpack.c.b16 %v2338, %v2334
    %v2655 = vpack.c.b16 %v2339, %v2335
    %v2656 = vpack.c.b16 %v2344, %v2340
    %v2657 = vpack.c.b16 %v2345, %v2341
    %v2658 = vpack.c.b16 %v2346, %v2342
    %v2659 = vpack.c.b16 %v2347, %v2343
    %v2660 = vpack.c.b16 %v2352, %v2348
    %v2661 = vpack.c.b16 %v2353, %v2349
    %v2662 = vpack.c.b16 %v2354, %v2350
    %v2663 = vpack.c.b16 %v2355, %v2351
    %v2664 = vpack.c.b16 %v2360, %v2356
    %v2665 = vpack.c.b16 %v2361, %v2357
    %v2666 = vpack.c.b16 %v2362, %v2358
    %v2667 = vpack.c.b16 %v2363, %v2359
    %v2668 = vpack.c.b16 %v2368, %v2364
    %v2669 = vpack.c.b16 %v2369, %v2365
    %v2670 = vpack.c.b16 %v2370, %v2366
    %v2671 = vpack.c.b16 %v2371, %v2367
    %v2672 = vpack.c.b16 %v2376, %v2372
    %v2673 = vpack.c.b16 %v2377, %v2373
    %v2674 = vpack.c.b16 %v2378, %v2374
    %v2675 = vpack.c.b16 %v2379, %v2375
    %v2676 = vpack.c.b16 %v2384, %v2380
    %v2677 = vpack.c.b16 %v2385, %v2381
    %v2678 = vpack.c.b16 %v2386, %v2382
    %v2679 = vpack.c.b16 %v2387, %v2383
    %v2680 = vpack.c.b16 %v2392, %v2388
    %v2681 = vpack.c.b16 %v2393, %v2389
    %v2682 = vpack.c.b16 %v2394, %v2390
    %v2683 = vpack.c.b16 %v2395, %v2391
    %v2684 = vpack.c.b16 %v2400, %v2396
    %v2685 = vpack.c.b16 %v2401, %v2397
    %v2686 = vpack.c.b16 %v2402, %v2398
    %v2687 = vpack.c.b16 %v2403, %v2399
    %v2688 = vpack.c.b16 %v2408, %v2404
    %v2689 = vpack.c.b16 %v2409, %v2405
    %v2690 = vpack.c.b16 %v2410, %v2406
    %v2691 = vpack.c.b16 %v2411, %v2407
    %v2692 = vpack.c.b16 %v2416, %v2412
    %v2693 = vpack.c.b16 %v2417, %v2413
    %v2694 = vpack.c.b16 %v2418, %v2414
    %v2695 = vpack.c.b16 %v2419, %v2415
    %v2696 = vpack.c.b16 %v2424, %v2420
    %v2697 = vpack.c.b16 %v2425, %v2421
    %v2698 = vpack.c.b16 %v2426, %v2422
    %v2699 = vpack.c.b16 %v2427, %v2423
    %v2700 = vpack.c.b16 %v2432, %v2428
    %v2701 = vpack.c.b16 %v2433, %v2429
    %v2702 = vpack.c.b16 %v2434, %v2430
    %v2703 = vpack.c.b16 %v2435, %v2431
    %v2704 = vpack.c.b16 %v2440, %v2436
    %v2705 = vpack.c.b16 %v2441, %v2437
    %v2706 = vpack.c.b16 %v2442, %v2438
    %v2707 = vpack.c.b16 %v2443, %v2439
    %v2708 = vpack.c.b16 %v2448, %v2444
    %v2709 = vpack.c.b16 %v2449, %v2445
    %v2710 = vpack.c.b16 %v2450, %v2446
    %v2711 = vpack.c.b16 %v2451, %v2447
    %v2712 = vpack.c.b16 %v2456, %v2452
    %v2713 = vpack.c.b16 %v2457, %v2453
    %v2714 = vpack.c.b16 %v2458, %v2454
    %v2715 = vpack.c.b16 %v2459, %v2455
    %v2716 = vpack.c.b16 %v2464, %v2460
    %v2717 = vpack.c.b16 %v2465, %v2461
    %v2718 = vpack.c.b16 %v2466, %v2462
    %v2719 = vpack.c.b16 %v2467, %v2463
    %v2720 = vpack.c.b16 %v2472, %v2468
    %v2721 = vpack.c.b16 %v2473, %v2469
    %v2722 = vpack.c.b16 %v2474, %v2470
    %v2723 = vpack.c.b16 %v2475, %v2471
    %v2724 = vpack.c.b16 %v2480, %v2476
    %v2725 = vpack.c.b16 %v2481, %v2477
    %v2726 = vpack.c.b16 %v2482, %v2478
    %v2727 = vpack.c.b16 %v2483, %v2479
    %v2728 = vpack.c.b16 %v2488, %v2484
    %v2729 = vpack.c.b16 %v2489, %v2485
    %v2730 = vpack.c.b16 %v2490, %v2486
    %v2731 = vpack.c.b16 %v2491, %v2487
    %v2732 = vpack.c.b16 %v2496, %v2492
    %v2733 = vpack.c.b16 %v2497, %v2493
    %v2734 = vpack.c.b16 %v2498, %v2494
    %v2735 = vpack.c.b16 %v2499, %v2495
    %v2736 = vpack.c.b16 %v2504, %v2500
    %v2737 = vpack.c.b16 %v2505, %v2501
    %v2738 = vpack.c.b16 %v2506, %v2502
    %v2739 = vpack.c.b16 %v2507, %v2503
    %v2740 = vpack.c.b16 %v2512, %v2508
    %v2741 = vpack.c.b16 %v2513, %v2509
    %v2742 = vpack.c.b16 %v2514, %v2510
    %v2743 = vpack.c.b16 %v2515, %v2511
    %v2744 = vpack.c.b16 %v2520, %v2516
    %v2745 = vpack.c.b16 %v2521, %v2517
    %v2746 = vpack.c.b16 %v2522, %v2518
    %v2747 = vpack.c.b16 %v2523, %v2519
    %v2748 = vpack.c.b16 %v2528, %v2524
    %v2749 = vpack.c.b16 %v2529, %v2525
    %v2750 = vpack.c.b16 %v2530, %v2526
    %v2751 = vpack.c.b16 %v2531, %v2527
    %v2752 = vpack.c.b16 %v2536, %v2532
    %v2753 = vpack.c.b16 %v2537, %v2533
    %v2754 = vpack.c.b16 %v2538, %v2534
    %v2755 = vpack.c.b16 %v2539, %v2535
    %v2756 = vpack.c.b16 %v2544, %v2540
    %v2757 = vpack.c.b16 %v2545, %v2541
    %v2758 = vpack.c.b16 %v2546, %v2542
    %v2759 = vpack.c.b16 %v2547, %v2543
    %v2760 = vpack.c.b16 %v2552, %v2548
    %v2761 = vpack.c.b16 %v2553, %v2549
    %v2762 = vpack.c.b16 %v2554, %v2550
    %v2763 = vpack.c.b16 %v2555, %v2551
    %v2764 = vpack.c.b16 %v2560, %v2556
    %v2765 = vpack.c.b16 %v2561, %v2557
    %v2766 = vpack.c.b16 %v2562, %v2558
    %v2767 = vpack.c.b16 %v2563, %v2559
    %v2768 = vpack.c.b16 %v2568, %v2564
    %v2769 = vpack.c.b16 %v2569, %v2565
    %v2770 = vpack.c.b16 %v2570, %v2566
    %v2771 = vpack.c.b16 %v2571, %v2567
    %v2772 = vpack.c.b16 %v2576, %v2572
    %v2773 = vpack.c.b16 %v2577, %v2573
    %v2774 = vpack.c.b16 %v2578, %v2574
    %v2775 = vpack.c.b16 %v2579, %v2575
    %v2776 = vpack.c.b16 %v2584, %v2580
    %v2777 = vpack.c.b16 %v2585, %v2581
    %v2778 = vpack.c.b16 %v2586, %v2582
    %v2779 = vpack.c.b16 %v2587, %v2583
    %2972 = vmatprep.subr.bf16.mxu0 %v2617
    %2973 = vmatpush1.bf16.msra.mxu0 %v2616
    %2974 = vmatprep.subr.bf16.mxu0 %v2613
    %2975 = vmatpush1.bf16.msra.mxu0 %v2612
    %2976 = vmatprep.subr.bf16.mxu0 %v2609
    %2977 = vmatpush1.bf16.msra.mxu0 %v2608
    %2978 = vmatprep.subr.bf16.mxu0 %v2605
    %2979 = vmatpush1.bf16.msra.mxu0 %v2604
    %2980 = vmatprep.subr.bf16.mxu0 %v2601
    %2981 = vmatpush1.bf16.msra.mxu0 %v2600
    %2982 = vmatprep.subr.bf16.mxu0 %v2597
    %2983 = vmatpush1.bf16.msra.mxu0 %v2596
    %2984 = vmatprep.subr.bf16.mxu0 %v2593
    %2985 = vmatpush1.bf16.msra.mxu0 %v2592
    %2986 = vmatprep.subr.bf16.mxu0 %v2589
    %2987 = vmatpush1.bf16.msra.mxu0 %v2588
    %2988 = vmatprep.subr.bf16.mxu0 %v2649
    %2989 = vmatpush2.bf16.msra.mxu0 %v2648
    %2990 = vmatprep.subr.bf16.mxu0 %v2645
    %2991 = vmatpush2.bf16.msra.mxu0 %v2644
    %2992 = vmatprep.subr.bf16.mxu0 %v2641
    %2993 = vmatpush2.bf16.msra.mxu0 %v2640
    %2994 = vmatprep.subr.bf16.mxu0 %v2637
    %2995 = vmatpush2.bf16.msra.mxu0 %v2636
    %2996 = vmatprep.subr.bf16.mxu0 %v2633
    %2997 = vmatpush2.bf16.msra.mxu0 %v2632
    %2998 = vmatprep.subr.bf16.mxu0 %v2629
    %2999 = vmatpush2.bf16.msra.mxu0 %v2628
    %3000 = vmatprep.subr.bf16.mxu0 %v2625
    %3001 = vmatpush2.bf16.msra.mxu0 %v2624
    %3002 = vmatprep.subr.bf16.mxu0 %v2621
    %3003 = vmatpush2.bf16.msra.mxu0 %v2620
    %3004 = vmatprep.mubr.bf16.mxu0 %v392
    %3005 = vmatmul.mubr.bf16.gmra.mxu0 %v391
    %v3006 = vpop.f32.mrf.mxu0
    %v3007 = vadd.f32 %v1883, %v3006
    %v3008 = vpop.f32.mrf.mxu0
    %v3009 = vadd.f32 %v1885, %v3008
    %v3010 = vpop.f32.mrf.mxu0
    %v3011 = vpop.f32.mrf.mxu0
    %3012 = vdwg.mxu0
    %3013 = vmatprep.subr.bf16.mxu0 %v2681
    %3014 = vmatpush1.bf16.msra.mxu0 %v2680
    %3015 = vmatprep.subr.bf16.mxu0 %v2677
    %3016 = vmatpush1.bf16.msra.mxu0 %v2676
    %3017 = vmatprep.subr.bf16.mxu0 %v2673
    %3018 = vmatpush1.bf16.msra.mxu0 %v2672
    %3019 = vmatprep.subr.bf16.mxu0 %v2669
    %3020 = vmatpush1.bf16.msra.mxu0 %v2668
    %3021 = vmatprep.subr.bf16.mxu0 %v2665
    %3022 = vmatpush1.bf16.msra.mxu0 %v2664
    %3023 = vmatprep.subr.bf16.mxu0 %v2661
    %3024 = vmatpush1.bf16.msra.mxu0 %v2660
    %3025 = vmatprep.subr.bf16.mxu0 %v2657
    %3026 = vmatpush1.bf16.msra.mxu0 %v2656
    %3027 = vmatprep.subr.bf16.mxu0 %v2653
    %3028 = vmatpush1.bf16.msra.mxu0 %v2652
    %3029 = vmatprep.subr.bf16.mxu0 %v2713
    %3030 = vmatpush2.bf16.msra.mxu0 %v2712
    %3031 = vmatprep.subr.bf16.mxu0 %v2709
    %3032 = vmatpush2.bf16.msra.mxu0 %v2708
    %3033 = vmatprep.subr.bf16.mxu0 %v2705
    %3034 = vmatpush2.bf16.msra.mxu0 %v2704
    %3035 = vmatprep.subr.bf16.mxu0 %v2701
    %3036 = vmatpush2.bf16.msra.mxu0 %v2700
    %3037 = vmatprep.subr.bf16.mxu0 %v2697
    %3038 = vmatpush2.bf16.msra.mxu0 %v2696
    %3039 = vmatprep.subr.bf16.mxu0 %v2693
    %3040 = vmatpush2.bf16.msra.mxu0 %v2692
    %3041 = vmatprep.subr.bf16.mxu0 %v2689
    %3042 = vmatpush2.bf16.msra.mxu0 %v2688
    %3043 = vmatprep.subr.bf16.mxu0 %v2685
    %3044 = vmatpush2.bf16.msra.mxu0 %v2684
    %3045 = vmatprep.mubr.bf16.mxu0 %v394
    %3046 = vmatmul.mubr.bf16.gmra.mxu0 %v393
    %v3047 = vpop.f32.mrf.mxu0
    %v3048 = vadd.f32 %v3007, %v3047
    %v3049 = vpop.f32.mrf.mxu0
    %v3050 = vadd.f32 %v3009, %v3049
    %v3051 = vpop.f32.mrf.mxu0
    %v3052 = vpop.f32.mrf.mxu0
    %3053 = vdwg.mxu0
    %3054 = vmatprep.subr.bf16.mxu0 %v2745
    %3055 = vmatpush1.bf16.msra.mxu0 %v2744
    %3056 = vmatprep.subr.bf16.mxu0 %v2741
    %3057 = vmatpush1.bf16.msra.mxu0 %v2740
    %3058 = vmatprep.subr.bf16.mxu0 %v2737
    %3059 = vmatpush1.bf16.msra.mxu0 %v2736
    %3060 = vmatprep.subr.bf16.mxu0 %v2733
    %3061 = vmatpush1.bf16.msra.mxu0 %v2732
    %3062 = vmatprep.subr.bf16.mxu0 %v2729
    %3063 = vmatpush1.bf16.msra.mxu0 %v2728
    %3064 = vmatprep.subr.bf16.mxu0 %v2725
    %3065 = vmatpush1.bf16.msra.mxu0 %v2724
    %3066 = vmatprep.subr.bf16.mxu0 %v2721
    %3067 = vmatpush1.bf16.msra.mxu0 %v2720
    %3068 = vmatprep.subr.bf16.mxu0 %v2717
    %3069 = vmatpush1.bf16.msra.mxu0 %v2716
    %3070 = vmatprep.subr.bf16.mxu0 %v2777
    %3071 = vmatpush2.bf16.msra.mxu0 %v2776
    %3072 = vmatprep.subr.bf16.mxu0 %v2773
    %3073 = vmatpush2.bf16.msra.mxu0 %v2772
    %3074 = vmatprep.subr.bf16.mxu0 %v2769
    %3075 = vmatpush2.bf16.msra.mxu0 %v2768
    %3076 = vmatprep.subr.bf16.mxu0 %v2765
    %3077 = vmatpush2.bf16.msra.mxu0 %v2764
    %3078 = vmatprep.subr.bf16.mxu0 %v2761
    %3079 = vmatpush2.bf16.msra.mxu0 %v2760
    %3080 = vmatprep.subr.bf16.mxu0 %v2757
    %3081 = vmatpush2.bf16.msra.mxu0 %v2756
    %3082 = vmatprep.subr.bf16.mxu0 %v2753
    %3083 = vmatpush2.bf16.msra.mxu0 %v2752
    %3084 = vmatprep.subr.bf16.mxu0 %v2749
    %3085 = vmatpush2.bf16.msra.mxu0 %v2748
    %3086 = vmatprep.mubr.bf16.mxu0 %v396
    %3087 = vmatmul.mubr.bf16.gmra.mxu0 %v395
    %v3088 = vpop.f32.mrf.mxu0
    %v3089 = vadd.f32 %v3048, %v3088
    %v3090 = vpop.f32.mrf.mxu0
    %v3091 = vadd.f32 %v3050, %v3090
    %v3092 = vpop.f32.mrf.mxu0
    %v3093 = vpop.f32.mrf.mxu0
    %3094 = vdwg.mxu0
    %3095 = vmatprep.subr.bf16.mxu0 %v2619
    %3096 = vmatpush1.bf16.msra.mxu0 %v2618
    %3097 = vmatprep.subr.bf16.mxu0 %v2615
    %3098 = vmatpush1.bf16.msra.mxu0 %v2614
    %3099 = vmatprep.subr.bf16.mxu0 %v2611
    %3100 = vmatpush1.bf16.msra.mxu0 %v2610
    %3101 = vmatprep.subr.bf16.mxu0 %v2607
    %3102 = vmatpush1.bf16.msra.mxu0 %v2606
    %3103 = vmatprep.subr.bf16.mxu0 %v2603
    %3104 = vmatpush1.bf16.msra.mxu0 %v2602
    %3105 = vmatprep.subr.bf16.mxu0 %v2599
    %3106 = vmatpush1.bf16.msra.mxu0 %v2598
    %3107 = vmatprep.subr.bf16.mxu0 %v2595
    %3108 = vmatpush1.bf16.msra.mxu0 %v2594
    %3109 = vmatprep.subr.bf16.mxu0 %v2591
    %3110 = vmatpush1.bf16.msra.mxu0 %v2590
    %3111 = vmatprep.subr.bf16.mxu0 %v2651
    %3112 = vmatpush2.bf16.msra.mxu0 %v2650
    %3113 = vmatprep.subr.bf16.mxu0 %v2647
    %3114 = vmatpush2.bf16.msra.mxu0 %v2646
    %3115 = vmatprep.subr.bf16.mxu0 %v2643
    %3116 = vmatpush2.bf16.msra.mxu0 %v2642
    %3117 = vmatprep.subr.bf16.mxu0 %v2639
    %3118 = vmatpush2.bf16.msra.mxu0 %v2638
    %3119 = vmatprep.subr.bf16.mxu0 %v2635
    %3120 = vmatpush2.bf16.msra.mxu0 %v2634
    %3121 = vmatprep.subr.bf16.mxu0 %v2631
    %3122 = vmatpush2.bf16.msra.mxu0 %v2630
    %3123 = vmatprep.subr.bf16.mxu0 %v2627
    %3124 = vmatpush2.bf16.msra.mxu0 %v2626
    %3125 = vmatprep.subr.bf16.mxu0 %v2623
    %3126 = vmatpush2.bf16.msra.mxu0 %v2622
    %3127 = vmatprep.mubr.bf16.mxu0 %v392
    %3128 = vmatmul.mubr.bf16.gmra.mxu0 %v391
    %v3129 = vpop.f32.mrf.mxu0
    %v3130 = vadd.f32 %v2006, %v3129
    %v3131 = vpop.f32.mrf.mxu0
    %v3132 = vadd.f32 %v2008, %v3131
    %v3133 = vpop.f32.mrf.mxu0
    %v3134 = vpop.f32.mrf.mxu0
    %3135 = vdwg.mxu0
    %3136 = vmatprep.subr.bf16.mxu0 %v2683
    %3137 = vmatpush1.bf16.msra.mxu0 %v2682
    %3138 = vmatprep.subr.bf16.mxu0 %v2679
    %3139 = vmatpush1.bf16.msra.mxu0 %v2678
    %3140 = vmatprep.subr.bf16.mxu0 %v2675
    %3141 = vmatpush1.bf16.msra.mxu0 %v2674
    %3142 = vmatprep.subr.bf16.mxu0 %v2671
    %3143 = vmatpush1.bf16.msra.mxu0 %v2670
    %3144 = vmatprep.subr.bf16.mxu0 %v2667
    %3145 = vmatpush1.bf16.msra.mxu0 %v2666
    %3146 = vmatprep.subr.bf16.mxu0 %v2663
    %3147 = vmatpush1.bf16.msra.mxu0 %v2662
    %3148 = vmatprep.subr.bf16.mxu0 %v2659
    %3149 = vmatpush1.bf16.msra.mxu0 %v2658
    %3150 = vmatprep.subr.bf16.mxu0 %v2655
    %3151 = vmatpush1.bf16.msra.mxu0 %v2654
    %3152 = vmatprep.subr.bf16.mxu0 %v2715
    %3153 = vmatpush2.bf16.msra.mxu0 %v2714
    %3154 = vmatprep.subr.bf16.mxu0 %v2711
    %3155 = vmatpush2.bf16.msra.mxu0 %v2710
    %3156 = vmatprep.subr.bf16.mxu0 %v2707
    %3157 = vmatpush2.bf16.msra.mxu0 %v2706
    %3158 = vmatprep.subr.bf16.mxu0 %v2703
    %3159 = vmatpush2.bf16.msra.mxu0 %v2702
    %3160 = vmatprep.subr.bf16.mxu0 %v2699
    %3161 = vmatpush2.bf16.msra.mxu0 %v2698
    %3162 = vmatprep.subr.bf16.mxu0 %v2695
    %3163 = vmatpush2.bf16.msra.mxu0 %v2694
    %3164 = vmatprep.subr.bf16.mxu0 %v2691
    %3165 = vmatpush2.bf16.msra.mxu0 %v2690
    %3166 = vmatprep.subr.bf16.mxu0 %v2687
    %3167 = vmatpush2.bf16.msra.mxu0 %v2686
    %3168 = vmatprep.mubr.bf16.mxu0 %v394
    %3169 = vmatmul.mubr.bf16.gmra.mxu0 %v393
    %v3170 = vpop.f32.mrf.mxu0
    %v3171 = vadd.f32 %v3130, %v3170
    %v3172 = vpop.f32.mrf.mxu0
    %v3173 = vadd.f32 %v3132, %v3172
    %v3174 = vpop.f32.mrf.mxu0
    %v3175 = vpop.f32.mrf.mxu0
    %3176 = vdwg.mxu0
    %3177 = vmatprep.subr.bf16.mxu0 %v2747
    %3178 = vmatpush1.bf16.msra.mxu0 %v2746
    %3179 = vmatprep.subr.bf16.mxu0 %v2743
    %3180 = vmatpush1.bf16.msra.mxu0 %v2742
    %3181 = vmatprep.subr.bf16.mxu0 %v2739
    %3182 = vmatpush1.bf16.msra.mxu0 %v2738
    %3183 = vmatprep.subr.bf16.mxu0 %v2735
    %3184 = vmatpush1.bf16.msra.mxu0 %v2734
    %3185 = vmatprep.subr.bf16.mxu0 %v2731
    %3186 = vmatpush1.bf16.msra.mxu0 %v2730
    %3187 = vmatprep.subr.bf16.mxu0 %v2727
    %3188 = vmatpush1.bf16.msra.mxu0 %v2726
    %3189 = vmatprep.subr.bf16.mxu0 %v2723
    %3190 = vmatpush1.bf16.msra.mxu0 %v2722
    %3191 = vmatprep.subr.bf16.mxu0 %v2719
    %3192 = vmatpush1.bf16.msra.mxu0 %v2718
    %3193 = vmatprep.subr.bf16.mxu0 %v2779
    %3194 = vmatpush2.bf16.msra.mxu0 %v2778
    %3195 = vmatprep.subr.bf16.mxu0 %v2775
    %3196 = vmatpush2.bf16.msra.mxu0 %v2774
    %3197 = vmatprep.subr.bf16.mxu0 %v2771
    %3198 = vmatpush2.bf16.msra.mxu0 %v2770
    %3199 = vmatprep.subr.bf16.mxu0 %v2767
    %3200 = vmatpush2.bf16.msra.mxu0 %v2766
    %3201 = vmatprep.subr.bf16.mxu0 %v2763
    %3202 = vmatpush2.bf16.msra.mxu0 %v2762
    %3203 = vmatprep.subr.bf16.mxu0 %v2759
    %3204 = vmatpush2.bf16.msra.mxu0 %v2758
    %3205 = vmatprep.subr.bf16.mxu0 %v2755
    %3206 = vmatpush2.bf16.msra.mxu0 %v2754
    %3207 = vmatprep.subr.bf16.mxu0 %v2751
    %3208 = vmatpush2.bf16.msra.mxu0 %v2750
    %3209 = vmatprep.mubr.bf16.mxu0 %v396
    %3210 = vmatmul.mubr.bf16.gmra.mxu0 %v395
    %v3211 = vpop.f32.mrf.mxu0
    %v3212 = vadd.f32 %v3171, %v3211
    %v3213 = vpop.f32.mrf.mxu0
    %v3214 = vadd.f32 %v3173, %v3213
    %v3215 = vpop.f32.mrf.mxu0
    %v3216 = vpop.f32.mrf.mxu0
    %3217 = vdwg.mxu0
    %s3218 = scalar_lea.vmem [#allocation7], 3072
    %v3219 = vld [vmem:[%s3218] sm:$0xff]
    %v3220 = vld [vmem:[%s3218 + $0x8] sm:$0xff]
    %v3221 = vld [vmem:[%s3218 + $0x10] sm:$0xff]
    %v3222 = vld [vmem:[%s3218 + $0x18] sm:$0xff]
    %v3223 = vld [vmem:[%s3218 + $0x20] sm:$0xff]
    %v3224 = vld [vmem:[%s3218 + $0x28] sm:$0xff]
    %v3225 = vld [vmem:[%s3218 + $0x30] sm:$0xff]
    %v3226 = vld [vmem:[%s3218 + $0x38] sm:$0xff]
    %v3227 = vld [vmem:[%s3218 + $0x40] sm:$0xff]
    %v3228 = vld [vmem:[%s3218 + $0x48] sm:$0xff]
    %v3229 = vld [vmem:[%s3218 + $0x50] sm:$0xff]
    %v3230 = vld [vmem:[%s3218 + $0x58] sm:$0xff]
    %v3231 = vld [vmem:[%s3218 + $0x60] sm:$0xff]
    %v3232 = vld [vmem:[%s3218 + $0x68] sm:$0xff]
    %v3233 = vld [vmem:[%s3218 + $0x70] sm:$0xff]
    %v3234 = vld [vmem:[%s3218 + $0x78] sm:$0xff]
    %v3235 = vld [vmem:[%s3218 + $0x80] sm:$0xff]
    %v3236 = vld [vmem:[%s3218 + $0x88] sm:$0xff]
    %v3237 = vld [vmem:[%s3218 + $0x90] sm:$0xff]
    %v3238 = vld [vmem:[%s3218 + $0x98] sm:$0xff]
    %v3239 = vld [vmem:[%s3218 + $0xa0] sm:$0xff]
    %v3240 = vld [vmem:[%s3218 + $0xa8] sm:$0xff]
    %v3241 = vld [vmem:[%s3218 + $0xb0] sm:$0xff]
    %v3242 = vld [vmem:[%s3218 + $0xb8] sm:$0xff]
    %v3243 = vld [vmem:[%s3218 + $0xc0] sm:$0xff]
    %v3244 = vld [vmem:[%s3218 + $0xc8] sm:$0xff]
    %v3245 = vld [vmem:[%s3218 + $0xd0] sm:$0xff]
    %v3246 = vld [vmem:[%s3218 + $0xd8] sm:$0xff]
    %v3247 = vld [vmem:[%s3218 + $0xe0] sm:$0xff]
    %v3248 = vld [vmem:[%s3218 + $0xe8] sm:$0xff]
    %v3249 = vld [vmem:[%s3218 + $0xf0] sm:$0xff]
    %v3250 = vld [vmem:[%s3218 + $0xf8] sm:$0xff]
    %v3251 = vld [vmem:[%s3218 + $0x100] sm:$0xff]
    %v3252 = vld [vmem:[%s3218 + $0x108] sm:$0xff]
    %v3253 = vld [vmem:[%s3218 + $0x110] sm:$0xff]
    %v3254 = vld [vmem:[%s3218 + $0x118] sm:$0xff]
    %v3255 = vld [vmem:[%s3218 + $0x120] sm:$0xff]
    %v3256 = vld [vmem:[%s3218 + $0x128] sm:$0xff]
    %v3257 = vld [vmem:[%s3218 + $0x130] sm:$0xff]
    %v3258 = vld [vmem:[%s3218 + $0x138] sm:$0xff]
    %v3259 = vld [vmem:[%s3218 + $0x140] sm:$0xff]
    %v3260 = vld [vmem:[%s3218 + $0x148] sm:$0xff]
    %v3261 = vld [vmem:[%s3218 + $0x150] sm:$0xff]
    %v3262 = vld [vmem:[%s3218 + $0x158] sm:$0xff]
    %v3263 = vld [vmem:[%s3218 + $0x160] sm:$0xff]
    %v3264 = vld [vmem:[%s3218 + $0x168] sm:$0xff]
    %v3265 = vld [vmem:[%s3218 + $0x170] sm:$0xff]
    %v3266 = vld [vmem:[%s3218 + $0x178] sm:$0xff]
    %v3267 = vld [vmem:[%s3218 + $0x180] sm:$0xff]
    %v3268 = vld [vmem:[%s3218 + $0x188] sm:$0xff]
    %v3269 = vld [vmem:[%s3218 + $0x190] sm:$0xff]
    %v3270 = vld [vmem:[%s3218 + $0x198] sm:$0xff]
    %v3271 = vld [vmem:[%s3218 + $0x1a0] sm:$0xff]
    %v3272 = vld [vmem:[%s3218 + $0x1a8] sm:$0xff]
    %v3273 = vld [vmem:[%s3218 + $0x1b0] sm:$0xff]
    %v3274 = vld [vmem:[%s3218 + $0x1b8] sm:$0xff]
    %v3275 = vld [vmem:[%s3218 + $0x1c0] sm:$0xff]
    %v3276 = vld [vmem:[%s3218 + $0x1c8] sm:$0xff]
    %v3277 = vld [vmem:[%s3218 + $0x1d0] sm:$0xff]
    %v3278 = vld [vmem:[%s3218 + $0x1d8] sm:$0xff]
    %v3279 = vld [vmem:[%s3218 + $0x1e0] sm:$0xff]
    %v3280 = vld [vmem:[%s3218 + $0x1e8] sm:$0xff]
    %v3281 = vld [vmem:[%s3218 + $0x1f0] sm:$0xff]
    %v3282 = vld [vmem:[%s3218 + $0x1f8] sm:$0xff]
    %v3283 = vld [vmem:[%s3218 + $0x200] sm:$0xff]
    %v3284 = vld [vmem:[%s3218 + $0x208] sm:$0xff]
    %v3285 = vld [vmem:[%s3218 + $0x210] sm:$0xff]
    %v3286 = vld [vmem:[%s3218 + $0x218] sm:$0xff]
    %v3287 = vld [vmem:[%s3218 + $0x220] sm:$0xff]
    %v3288 = vld [vmem:[%s3218 + $0x228] sm:$0xff]
    %v3289 = vld [vmem:[%s3218 + $0x230] sm:$0xff]
    %v3290 = vld [vmem:[%s3218 + $0x238] sm:$0xff]
    %v3291 = vld [vmem:[%s3218 + $0x240] sm:$0xff]
    %v3292 = vld [vmem:[%s3218 + $0x248] sm:$0xff]
    %v3293 = vld [vmem:[%s3218 + $0x250] sm:$0xff]
    %v3294 = vld [vmem:[%s3218 + $0x258] sm:$0xff]
    %v3295 = vld [vmem:[%s3218 + $0x260] sm:$0xff]
    %v3296 = vld [vmem:[%s3218 + $0x268] sm:$0xff]
    %v3297 = vld [vmem:[%s3218 + $0x270] sm:$0xff]
    %v3298 = vld [vmem:[%s3218 + $0x278] sm:$0xff]
    %v3299 = vld [vmem:[%s3218 + $0x280] sm:$0xff]
    %v3300 = vld [vmem:[%s3218 + $0x288] sm:$0xff]
    %v3301 = vld [vmem:[%s3218 + $0x290] sm:$0xff]
    %v3302 = vld [vmem:[%s3218 + $0x298] sm:$0xff]
    %v3303 = vld [vmem:[%s3218 + $0x2a0] sm:$0xff]
    %v3304 = vld [vmem:[%s3218 + $0x2a8] sm:$0xff]
    %v3305 = vld [vmem:[%s3218 + $0x2b0] sm:$0xff]
    %v3306 = vld [vmem:[%s3218 + $0x2b8] sm:$0xff]
    %v3307 = vld [vmem:[%s3218 + $0x2c0] sm:$0xff]
    %v3308 = vld [vmem:[%s3218 + $0x2c8] sm:$0xff]
    %v3309 = vld [vmem:[%s3218 + $0x2d0] sm:$0xff]
    %v3310 = vld [vmem:[%s3218 + $0x2d8] sm:$0xff]
    %v3311 = vld [vmem:[%s3218 + $0x2e0] sm:$0xff]
    %v3312 = vld [vmem:[%s3218 + $0x2e8] sm:$0xff]
    %v3313 = vld [vmem:[%s3218 + $0x2f0] sm:$0xff]
    %v3314 = vld [vmem:[%s3218 + $0x2f8] sm:$0xff]
    %v3315 = vld [vmem:[%s3218 + $0x300] sm:$0xff]
    %v3316 = vld [vmem:[%s3218 + $0x308] sm:$0xff]
    %v3317 = vld [vmem:[%s3218 + $0x310] sm:$0xff]
    %v3318 = vld [vmem:[%s3218 + $0x318] sm:$0xff]
    %v3319 = vld [vmem:[%s3218 + $0x320] sm:$0xff]
    %v3320 = vld [vmem:[%s3218 + $0x328] sm:$0xff]
    %v3321 = vld [vmem:[%s3218 + $0x330] sm:$0xff]
    %v3322 = vld [vmem:[%s3218 + $0x338] sm:$0xff]
    %v3323 = vld [vmem:[%s3218 + $0x340] sm:$0xff]
    %v3324 = vld [vmem:[%s3218 + $0x348] sm:$0xff]
    %v3325 = vld [vmem:[%s3218 + $0x350] sm:$0xff]
    %v3326 = vld [vmem:[%s3218 + $0x358] sm:$0xff]
    %v3327 = vld [vmem:[%s3218 + $0x360] sm:$0xff]
    %v3328 = vld [vmem:[%s3218 + $0x368] sm:$0xff]
    %v3329 = vld [vmem:[%s3218 + $0x370] sm:$0xff]
    %v3330 = vld [vmem:[%s3218 + $0x378] sm:$0xff]
    %v3331 = vld [vmem:[%s3218 + $0x380] sm:$0xff]
    %v3332 = vld [vmem:[%s3218 + $0x388] sm:$0xff]
    %v3333 = vld [vmem:[%s3218 + $0x390] sm:$0xff]
    %v3334 = vld [vmem:[%s3218 + $0x398] sm:$0xff]
    %v3335 = vld [vmem:[%s3218 + $0x3a0] sm:$0xff]
    %v3336 = vld [vmem:[%s3218 + $0x3a8] sm:$0xff]
    %v3337 = vld [vmem:[%s3218 + $0x3b0] sm:$0xff]
    %v3338 = vld [vmem:[%s3218 + $0x3b8] sm:$0xff]
    %v3339 = vld [vmem:[%s3218 + $0x3c0] sm:$0xff]
    %v3340 = vld [vmem:[%s3218 + $0x3c8] sm:$0xff]
    %v3341 = vld [vmem:[%s3218 + $0x3d0] sm:$0xff]
    %v3342 = vld [vmem:[%s3218 + $0x3d8] sm:$0xff]
    %v3343 = vld [vmem:[%s3218 + $0x3e0] sm:$0xff]
    %v3344 = vld [vmem:[%s3218 + $0x3e8] sm:$0xff]
    %v3345 = vld [vmem:[%s3218 + $0x3f0] sm:$0xff]
    %v3346 = vld [vmem:[%s3218 + $0x3f8] sm:$0xff]
    %v3347 = vld [vmem:[%s3218 + $0x400] sm:$0xff]
    %v3348 = vld [vmem:[%s3218 + $0x408] sm:$0xff]
    %v3349 = vld [vmem:[%s3218 + $0x410] sm:$0xff]
    %v3350 = vld [vmem:[%s3218 + $0x418] sm:$0xff]
    %v3351 = vld [vmem:[%s3218 + $0x420] sm:$0xff]
    %v3352 = vld [vmem:[%s3218 + $0x428] sm:$0xff]
    %v3353 = vld [vmem:[%s3218 + $0x430] sm:$0xff]
    %v3354 = vld [vmem:[%s3218 + $0x438] sm:$0xff]
    %v3355 = vld [vmem:[%s3218 + $0x440] sm:$0xff]
    %v3356 = vld [vmem:[%s3218 + $0x448] sm:$0xff]
    %v3357 = vld [vmem:[%s3218 + $0x450] sm:$0xff]
    %v3358 = vld [vmem:[%s3218 + $0x458] sm:$0xff]
    %v3359 = vld [vmem:[%s3218 + $0x460] sm:$0xff]
    %v3360 = vld [vmem:[%s3218 + $0x468] sm:$0xff]
    %v3361 = vld [vmem:[%s3218 + $0x470] sm:$0xff]
    %v3362 = vld [vmem:[%s3218 + $0x478] sm:$0xff]
    %v3363 = vld [vmem:[%s3218 + $0x480] sm:$0xff]
    %v3364 = vld [vmem:[%s3218 + $0x488] sm:$0xff]
    %v3365 = vld [vmem:[%s3218 + $0x490] sm:$0xff]
    %v3366 = vld [vmem:[%s3218 + $0x498] sm:$0xff]
    %v3367 = vld [vmem:[%s3218 + $0x4a0] sm:$0xff]
    %v3368 = vld [vmem:[%s3218 + $0x4a8] sm:$0xff]
    %v3369 = vld [vmem:[%s3218 + $0x4b0] sm:$0xff]
    %v3370 = vld [vmem:[%s3218 + $0x4b8] sm:$0xff]
    %v3371 = vld [vmem:[%s3218 + $0x4c0] sm:$0xff]
    %v3372 = vld [vmem:[%s3218 + $0x4c8] sm:$0xff]
    %v3373 = vld [vmem:[%s3218 + $0x4d0] sm:$0xff]
    %v3374 = vld [vmem:[%s3218 + $0x4d8] sm:$0xff]
    %v3375 = vld [vmem:[%s3218 + $0x4e0] sm:$0xff]
    %v3376 = vld [vmem:[%s3218 + $0x4e8] sm:$0xff]
    %v3377 = vld [vmem:[%s3218 + $0x4f0] sm:$0xff]
    %v3378 = vld [vmem:[%s3218 + $0x4f8] sm:$0xff]
    %v3379 = vld [vmem:[%s3218 + $0x500] sm:$0xff]
    %v3380 = vld [vmem:[%s3218 + $0x508] sm:$0xff]
    %v3381 = vld [vmem:[%s3218 + $0x510] sm:$0xff]
    %v3382 = vld [vmem:[%s3218 + $0x518] sm:$0xff]
    %v3383 = vld [vmem:[%s3218 + $0x520] sm:$0xff]
    %v3384 = vld [vmem:[%s3218 + $0x528] sm:$0xff]
    %v3385 = vld [vmem:[%s3218 + $0x530] sm:$0xff]
    %v3386 = vld [vmem:[%s3218 + $0x538] sm:$0xff]
    %v3387 = vld [vmem:[%s3218 + $0x540] sm:$0xff]
    %v3388 = vld [vmem:[%s3218 + $0x548] sm:$0xff]
    %v3389 = vld [vmem:[%s3218 + $0x550] sm:$0xff]
    %v3390 = vld [vmem:[%s3218 + $0x558] sm:$0xff]
    %v3391 = vld [vmem:[%s3218 + $0x560] sm:$0xff]
    %v3392 = vld [vmem:[%s3218 + $0x568] sm:$0xff]
    %v3393 = vld [vmem:[%s3218 + $0x570] sm:$0xff]
    %v3394 = vld [vmem:[%s3218 + $0x578] sm:$0xff]
    %v3395 = vld [vmem:[%s3218 + $0x580] sm:$0xff]
    %v3396 = vld [vmem:[%s3218 + $0x588] sm:$0xff]
    %v3397 = vld [vmem:[%s3218 + $0x590] sm:$0xff]
    %v3398 = vld [vmem:[%s3218 + $0x598] sm:$0xff]
    %v3399 = vld [vmem:[%s3218 + $0x5a0] sm:$0xff]
    %v3400 = vld [vmem:[%s3218 + $0x5a8] sm:$0xff]
    %v3401 = vld [vmem:[%s3218 + $0x5b0] sm:$0xff]
    %v3402 = vld [vmem:[%s3218 + $0x5b8] sm:$0xff]
    %v3403 = vld [vmem:[%s3218 + $0x5c0] sm:$0xff]
    %v3404 = vld [vmem:[%s3218 + $0x5c8] sm:$0xff]
    %v3405 = vld [vmem:[%s3218 + $0x5d0] sm:$0xff]
    %v3406 = vld [vmem:[%s3218 + $0x5d8] sm:$0xff]
    %v3407 = vld [vmem:[%s3218 + $0x5e0] sm:$0xff]
    %v3408 = vld [vmem:[%s3218 + $0x5e8] sm:$0xff]
    %v3409 = vld [vmem:[%s3218 + $0x5f0] sm:$0xff]
    %v3410 = vld [vmem:[%s3218 + $0x5f8] sm:$0xff]
    %v3417 = vrot.slane %v391, 1
    %v3418 = vrot.slane %v392, 1
    %v3419 = vrot.slane %v393, 1
    %v3420 = vrot.slane %v394, 1
    %v3421 = vrot.slane %v395, 1
    %v3422 = vrot.slane %v396, 1
    %v3621 = vunpack.c.l.b16 %v3219
    %v3622 = vunpack.c.h.b16 %v3219
    %v3623 = vunpack.c.l.b16 %v3220
    %v3624 = vunpack.c.h.b16 %v3220
    %v3625 = vunpack.c.l.b16 %v3221
    %v3626 = vunpack.c.h.b16 %v3221
    %v3627 = vunpack.c.l.b16 %v3222
    %v3628 = vunpack.c.h.b16 %v3222
    %v3629 = vunpack.c.l.b16 %v3223
    %v3630 = vunpack.c.h.b16 %v3223
    %v3631 = vunpack.c.l.b16 %v3224
    %v3632 = vunpack.c.h.b16 %v3224
    %v3633 = vunpack.c.l.b16 %v3225
    %v3634 = vunpack.c.h.b16 %v3225
    %v3635 = vunpack.c.l.b16 %v3226
    %v3636 = vunpack.c.h.b16 %v3226
    %v3637 = vunpack.c.l.b16 %v3227
    %v3638 = vunpack.c.h.b16 %v3227
    %v3639 = vunpack.c.l.b16 %v3228
    %v3640 = vunpack.c.h.b16 %v3228
    %v3641 = vunpack.c.l.b16 %v3229
    %v3642 = vunpack.c.h.b16 %v3229
    %v3643 = vunpack.c.l.b16 %v3230
    %v3644 = vunpack.c.h.b16 %v3230
    %v3645 = vunpack.c.l.b16 %v3231
    %v3646 = vunpack.c.h.b16 %v3231
    %v3647 = vunpack.c.l.b16 %v3232
    %v3648 = vunpack.c.h.b16 %v3232
    %v3649 = vunpack.c.l.b16 %v3233
    %v3650 = vunpack.c.h.b16 %v3233
    %v3651 = vunpack.c.l.b16 %v3234
    %v3652 = vunpack.c.h.b16 %v3234
    %v3653 = vunpack.c.l.b16 %v3235
    %v3654 = vunpack.c.h.b16 %v3235
    %v3655 = vunpack.c.l.b16 %v3236
    %v3656 = vunpack.c.h.b16 %v3236
    %v3657 = vunpack.c.l.b16 %v3237
    %v3658 = vunpack.c.h.b16 %v3237
    %v3659 = vunpack.c.l.b16 %v3238
    %v3660 = vunpack.c.h.b16 %v3238
    %v3661 = vunpack.c.l.b16 %v3239
    %v3662 = vunpack.c.h.b16 %v3239
    %v3663 = vunpack.c.l.b16 %v3240
    %v3664 = vunpack.c.h.b16 %v3240
    %v3665 = vunpack.c.l.b16 %v3241
    %v3666 = vunpack.c.h.b16 %v3241
    %v3667 = vunpack.c.l.b16 %v3242
    %v3668 = vunpack.c.h.b16 %v3242
    %v3669 = vunpack.c.l.b16 %v3243
    %v3670 = vunpack.c.h.b16 %v3243
    %v3671 = vunpack.c.l.b16 %v3244
    %v3672 = vunpack.c.h.b16 %v3244
    %v3673 = vunpack.c.l.b16 %v3245
    %v3674 = vunpack.c.h.b16 %v3245
    %v3675 = vunpack.c.l.b16 %v3246
    %v3676 = vunpack.c.h.b16 %v3246
    %v3677 = vunpack.c.l.b16 %v3247
    %v3678 = vunpack.c.h.b16 %v3247
    %v3679 = vunpack.c.l.b16 %v3248
    %v3680 = vunpack.c.h.b16 %v3248
    %v3681 = vunpack.c.l.b16 %v3249
    %v3682 = vunpack.c.h.b16 %v3249
    %v3683 = vunpack.c.l.b16 %v3250
    %v3684 = vunpack.c.h.b16 %v3250
    %v3685 = vunpack.c.l.b16 %v3251
    %v3686 = vunpack.c.h.b16 %v3251
    %v3687 = vunpack.c.l.b16 %v3252
    %v3688 = vunpack.c.h.b16 %v3252
    %v3689 = vunpack.c.l.b16 %v3253
    %v3690 = vunpack.c.h.b16 %v3253
    %v3691 = vunpack.c.l.b16 %v3254
    %v3692 = vunpack.c.h.b16 %v3254
    %v3693 = vunpack.c.l.b16 %v3255
    %v3694 = vunpack.c.h.b16 %v3255
    %v3695 = vunpack.c.l.b16 %v3256
    %v3696 = vunpack.c.h.b16 %v3256
    %v3697 = vunpack.c.l.b16 %v3257
    %v3698 = vunpack.c.h.b16 %v3257
    %v3699 = vunpack.c.l.b16 %v3258
    %v3700 = vunpack.c.h.b16 %v3258
    %v3701 = vunpack.c.l.b16 %v3259
    %v3702 = vunpack.c.h.b16 %v3259
    %v3703 = vunpack.c.l.b16 %v3260
    %v3704 = vunpack.c.h.b16 %v3260
    %v3705 = vunpack.c.l.b16 %v3261
    %v3706 = vunpack.c.h.b16 %v3261
    %v3707 = vunpack.c.l.b16 %v3262
    %v3708 = vunpack.c.h.b16 %v3262
    %v3709 = vunpack.c.l.b16 %v3263
    %v3710 = vunpack.c.h.b16 %v3263
    %v3711 = vunpack.c.l.b16 %v3264
    %v3712 = vunpack.c.h.b16 %v3264
    %v3713 = vunpack.c.l.b16 %v3265
    %v3714 = vunpack.c.h.b16 %v3265
    %v3715 = vunpack.c.l.b16 %v3266
    %v3716 = vunpack.c.h.b16 %v3266
    %v3717 = vunpack.c.l.b16 %v3267
    %v3718 = vunpack.c.h.b16 %v3267
    %v3719 = vunpack.c.l.b16 %v3268
    %v3720 = vunpack.c.h.b16 %v3268
    %v3721 = vunpack.c.l.b16 %v3269
    %v3722 = vunpack.c.h.b16 %v3269
    %v3723 = vunpack.c.l.b16 %v3270
    %v3724 = vunpack.c.h.b16 %v3270
    %v3725 = vunpack.c.l.b16 %v3271
    %v3726 = vunpack.c.h.b16 %v3271
    %v3727 = vunpack.c.l.b16 %v3272
    %v3728 = vunpack.c.h.b16 %v3272
    %v3729 = vunpack.c.l.b16 %v3273
    %v3730 = vunpack.c.h.b16 %v3273
    %v3731 = vunpack.c.l.b16 %v3274
    %v3732 = vunpack.c.h.b16 %v3274
    %v3733 = vunpack.c.l.b16 %v3275
    %v3734 = vunpack.c.h.b16 %v3275
    %v3735 = vunpack.c.l.b16 %v3276
    %v3736 = vunpack.c.h.b16 %v3276
    %v3737 = vunpack.c.l.b16 %v3277
    %v3738 = vunpack.c.h.b16 %v3277
    %v3739 = vunpack.c.l.b16 %v3278
    %v3740 = vunpack.c.h.b16 %v3278
    %v3741 = vunpack.c.l.b16 %v3279
    %v3742 = vunpack.c.h.b16 %v3279
    %v3743 = vunpack.c.l.b16 %v3280
    %v3744 = vunpack.c.h.b16 %v3280
    %v3745 = vunpack.c.l.b16 %v3281
    %v3746 = vunpack.c.h.b16 %v3281
    %v3747 = vunpack.c.l.b16 %v3282
    %v3748 = vunpack.c.h.b16 %v3282
    %v3749 = vunpack.c.l.b16 %v3283
    %v3750 = vunpack.c.h.b16 %v3283
    %v3751 = vunpack.c.l.b16 %v3284
    %v3752 = vunpack.c.h.b16 %v3284
    %v3753 = vunpack.c.l.b16 %v3285
    %v3754 = vunpack.c.h.b16 %v3285
    %v3755 = vunpack.c.l.b16 %v3286
    %v3756 = vunpack.c.h.b16 %v3286
    %v3757 = vunpack.c.l.b16 %v3287
    %v3758 = vunpack.c.h.b16 %v3287
    %v3759 = vunpack.c.l.b16 %v3288
    %v3760 = vunpack.c.h.b16 %v3288
    %v3761 = vunpack.c.l.b16 %v3289
    %v3762 = vunpack.c.h.b16 %v3289
    %v3763 = vunpack.c.l.b16 %v3290
    %v3764 = vunpack.c.h.b16 %v3290
    %v3765 = vunpack.c.l.b16 %v3291
    %v3766 = vunpack.c.h.b16 %v3291
    %v3767 = vunpack.c.l.b16 %v3292
    %v3768 = vunpack.c.h.b16 %v3292
    %v3769 = vunpack.c.l.b16 %v3293
    %v3770 = vunpack.c.h.b16 %v3293
    %v3771 = vunpack.c.l.b16 %v3294
    %v3772 = vunpack.c.h.b16 %v3294
    %v3773 = vunpack.c.l.b16 %v3295
    %v3774 = vunpack.c.h.b16 %v3295
    %v3775 = vunpack.c.l.b16 %v3296
    %v3776 = vunpack.c.h.b16 %v3296
    %v3777 = vunpack.c.l.b16 %v3297
    %v3778 = vunpack.c.h.b16 %v3297
    %v3779 = vunpack.c.l.b16 %v3298
    %v3780 = vunpack.c.h.b16 %v3298
    %v3781 = vunpack.c.l.b16 %v3299
    %v3782 = vunpack.c.h.b16 %v3299
    %v3783 = vunpack.c.l.b16 %v3300
    %v3784 = vunpack.c.h.b16 %v3300
    %v3785 = vunpack.c.l.b16 %v3301
    %v3786 = vunpack.c.h.b16 %v3301
    %v3787 = vunpack.c.l.b16 %v3302
    %v3788 = vunpack.c.h.b16 %v3302
    %v3789 = vunpack.c.l.b16 %v3303
    %v3790 = vunpack.c.h.b16 %v3303
    %v3791 = vunpack.c.l.b16 %v3304
    %v3792 = vunpack.c.h.b16 %v3304
    %v3793 = vunpack.c.l.b16 %v3305
    %v3794 = vunpack.c.h.b16 %v3305
    %v3795 = vunpack.c.l.b16 %v3306
    %v3796 = vunpack.c.h.b16 %v3306
    %v3797 = vunpack.c.l.b16 %v3307
    %v3798 = vunpack.c.h.b16 %v3307
    %v3799 = vunpack.c.l.b16 %v3308
    %v3800 = vunpack.c.h.b16 %v3308
    %v3801 = vunpack.c.l.b16 %v3309
    %v3802 = vunpack.c.h.b16 %v3309
    %v3803 = vunpack.c.l.b16 %v3310
    %v3804 = vunpack.c.h.b16 %v3310
    %v3805 = vunpack.c.l.b16 %v3311
    %v3806 = vunpack.c.h.b16 %v3311
    %v3807 = vunpack.c.l.b16 %v3312
    %v3808 = vunpack.c.h.b16 %v3312
    %v3809 = vunpack.c.l.b16 %v3313
    %v3810 = vunpack.c.h.b16 %v3313
    %v3811 = vunpack.c.l.b16 %v3314
    %v3812 = vunpack.c.h.b16 %v3314
    %v3813 = vunpack.c.l.b16 %v3315
    %v3814 = vunpack.c.h.b16 %v3315
    %v3815 = vunpack.c.l.b16 %v3316
    %v3816 = vunpack.c.h.b16 %v3316
    %v3817 = vunpack.c.l.b16 %v3317
    %v3818 = vunpack.c.h.b16 %v3317
    %v3819 = vunpack.c.l.b16 %v3318
    %v3820 = vunpack.c.h.b16 %v3318
    %v3821 = vunpack.c.l.b16 %v3319
    %v3822 = vunpack.c.h.b16 %v3319
    %v3823 = vunpack.c.l.b16 %v3320
    %v3824 = vunpack.c.h.b16 %v3320
    %v3825 = vunpack.c.l.b16 %v3321
    %v3826 = vunpack.c.h.b16 %v3321
    %v3827 = vunpack.c.l.b16 %v3322
    %v3828 = vunpack.c.h.b16 %v3322
    %v3829 = vunpack.c.l.b16 %v3323
    %v3830 = vunpack.c.h.b16 %v3323
    %v3831 = vunpack.c.l.b16 %v3324
    %v3832 = vunpack.c.h.b16 %v3324
    %v3833 = vunpack.c.l.b16 %v3325
    %v3834 = vunpack.c.h.b16 %v3325
    %v3835 = vunpack.c.l.b16 %v3326
    %v3836 = vunpack.c.h.b16 %v3326
    %v3837 = vunpack.c.l.b16 %v3327
    %v3838 = vunpack.c.h.b16 %v3327
    %v3839 = vunpack.c.l.b16 %v3328
    %v3840 = vunpack.c.h.b16 %v3328
    %v3841 = vunpack.c.l.b16 %v3329
    %v3842 = vunpack.c.h.b16 %v3329
    %v3843 = vunpack.c.l.b16 %v3330
    %v3844 = vunpack.c.h.b16 %v3330
    %v3845 = vunpack.c.l.b16 %v3331
    %v3846 = vunpack.c.h.b16 %v3331
    %v3847 = vunpack.c.l.b16 %v3332
    %v3848 = vunpack.c.h.b16 %v3332
    %v3849 = vunpack.c.l.b16 %v3333
    %v3850 = vunpack.c.h.b16 %v3333
    %v3851 = vunpack.c.l.b16 %v3334
    %v3852 = vunpack.c.h.b16 %v3334
    %v3853 = vunpack.c.l.b16 %v3335
    %v3854 = vunpack.c.h.b16 %v3335
    %v3855 = vunpack.c.l.b16 %v3336
    %v3856 = vunpack.c.h.b16 %v3336
    %v3857 = vunpack.c.l.b16 %v3337
    %v3858 = vunpack.c.h.b16 %v3337
    %v3859 = vunpack.c.l.b16 %v3338
    %v3860 = vunpack.c.h.b16 %v3338
    %v3861 = vunpack.c.l.b16 %v3339
    %v3862 = vunpack.c.h.b16 %v3339
    %v3863 = vunpack.c.l.b16 %v3340
    %v3864 = vunpack.c.h.b16 %v3340
    %v3865 = vunpack.c.l.b16 %v3341
    %v3866 = vunpack.c.h.b16 %v3341
    %v3867 = vunpack.c.l.b16 %v3342
    %v3868 = vunpack.c.h.b16 %v3342
    %v3869 = vunpack.c.l.b16 %v3343
    %v3870 = vunpack.c.h.b16 %v3343
    %v3871 = vunpack.c.l.b16 %v3344
    %v3872 = vunpack.c.h.b16 %v3344
    %v3873 = vunpack.c.l.b16 %v3345
    %v3874 = vunpack.c.h.b16 %v3345
    %v3875 = vunpack.c.l.b16 %v3346
    %v3876 = vunpack.c.h.b16 %v3346
    %v3877 = vunpack.c.l.b16 %v3347
    %v3878 = vunpack.c.h.b16 %v3347
    %v3879 = vunpack.c.l.b16 %v3348
    %v3880 = vunpack.c.h.b16 %v3348
    %v3881 = vunpack.c.l.b16 %v3349
    %v3882 = vunpack.c.h.b16 %v3349
    %v3883 = vunpack.c.l.b16 %v3350
    %v3884 = vunpack.c.h.b16 %v3350
    %v3885 = vunpack.c.l.b16 %v3351
    %v3886 = vunpack.c.h.b16 %v3351
    %v3887 = vunpack.c.l.b16 %v3352
    %v3888 = vunpack.c.h.b16 %v3352
    %v3889 = vunpack.c.l.b16 %v3353
    %v3890 = vunpack.c.h.b16 %v3353
    %v3891 = vunpack.c.l.b16 %v3354
    %v3892 = vunpack.c.h.b16 %v3354
    %v3893 = vunpack.c.l.b16 %v3355
    %v3894 = vunpack.c.h.b16 %v3355
    %v3895 = vunpack.c.l.b16 %v3356
    %v3896 = vunpack.c.h.b16 %v3356
    %v3897 = vunpack.c.l.b16 %v3357
    %v3898 = vunpack.c.h.b16 %v3357
    %v3899 = vunpack.c.l.b16 %v3358
    %v3900 = vunpack.c.h.b16 %v3358
    %v3901 = vunpack.c.l.b16 %v3359
    %v3902 = vunpack.c.h.b16 %v3359
    %v3903 = vunpack.c.l.b16 %v3360
    %v3904 = vunpack.c.h.b16 %v3360
    %v3905 = vunpack.c.l.b16 %v3361
    %v3906 = vunpack.c.h.b16 %v3361
    %v3907 = vunpack.c.l.b16 %v3362
    %v3908 = vunpack.c.h.b16 %v3362
    %v3909 = vunpack.c.l.b16 %v3363
    %v3910 = vunpack.c.h.b16 %v3363
    %v3911 = vunpack.c.l.b16 %v3364
    %v3912 = vunpack.c.h.b16 %v3364
    %v3913 = vunpack.c.l.b16 %v3365
    %v3914 = vunpack.c.h.b16 %v3365
    %v3915 = vunpack.c.l.b16 %v3366
    %v3916 = vunpack.c.h.b16 %v3366
    %v3917 = vunpack.c.l.b16 %v3367
    %v3918 = vunpack.c.h.b16 %v3367
    %v3919 = vunpack.c.l.b16 %v3368
    %v3920 = vunpack.c.h.b16 %v3368
    %v3921 = vunpack.c.l.b16 %v3369
    %v3922 = vunpack.c.h.b16 %v3369
    %v3923 = vunpack.c.l.b16 %v3370
    %v3924 = vunpack.c.h.b16 %v3370
    %v3925 = vunpack.c.l.b16 %v3371
    %v3926 = vunpack.c.h.b16 %v3371
    %v3927 = vunpack.c.l.b16 %v3372
    %v3928 = vunpack.c.h.b16 %v3372
    %v3929 = vunpack.c.l.b16 %v3373
    %v3930 = vunpack.c.h.b16 %v3373
    %v3931 = vunpack.c.l.b16 %v3374
    %v3932 = vunpack.c.h.b16 %v3374
    %v3933 = vunpack.c.l.b16 %v3375
    %v3934 = vunpack.c.h.b16 %v3375
    %v3935 = vunpack.c.l.b16 %v3376
    %v3936 = vunpack.c.h.b16 %v3376
    %v3937 = vunpack.c.l.b16 %v3377
    %v3938 = vunpack.c.h.b16 %v3377
    %v3939 = vunpack.c.l.b16 %v3378
    %v3940 = vunpack.c.h.b16 %v3378
    %v3941 = vunpack.c.l.b16 %v3379
    %v3942 = vunpack.c.h.b16 %v3379
    %v3943 = vunpack.c.l.b16 %v3380
    %v3944 = vunpack.c.h.b16 %v3380
    %v3945 = vunpack.c.l.b16 %v3381
    %v3946 = vunpack.c.h.b16 %v3381
    %v3947 = vunpack.c.l.b16 %v3382
    %v3948 = vunpack.c.h.b16 %v3382
    %v3949 = vunpack.c.l.b16 %v3383
    %v3950 = vunpack.c.h.b16 %v3383
    %v3951 = vunpack.c.l.b16 %v3384
    %v3952 = vunpack.c.h.b16 %v3384
    %v3953 = vunpack.c.l.b16 %v3385
    %v3954 = vunpack.c.h.b16 %v3385
    %v3955 = vunpack.c.l.b16 %v3386
    %v3956 = vunpack.c.h.b16 %v3386
    %v3957 = vunpack.c.l.b16 %v3387
    %v3958 = vunpack.c.h.b16 %v3387
    %v3959 = vunpack.c.l.b16 %v3388
    %v3960 = vunpack.c.h.b16 %v3388
    %v3961 = vunpack.c.l.b16 %v3389
    %v3962 = vunpack.c.h.b16 %v3389
    %v3963 = vunpack.c.l.b16 %v3390
    %v3964 = vunpack.c.h.b16 %v3390
    %v3965 = vunpack.c.l.b16 %v3391
    %v3966 = vunpack.c.h.b16 %v3391
    %v3967 = vunpack.c.l.b16 %v3392
    %v3968 = vunpack.c.h.b16 %v3392
    %v3969 = vunpack.c.l.b16 %v3393
    %v3970 = vunpack.c.h.b16 %v3393
    %v3971 = vunpack.c.l.b16 %v3394
    %v3972 = vunpack.c.h.b16 %v3394
    %v3973 = vunpack.c.l.b16 %v3395
    %v3974 = vunpack.c.h.b16 %v3395
    %v3975 = vunpack.c.l.b16 %v3396
    %v3976 = vunpack.c.h.b16 %v3396
    %v3977 = vunpack.c.l.b16 %v3397
    %v3978 = vunpack.c.h.b16 %v3397
    %v3979 = vunpack.c.l.b16 %v3398
    %v3980 = vunpack.c.h.b16 %v3398
    %v3981 = vunpack.c.l.b16 %v3399
    %v3982 = vunpack.c.h.b16 %v3399
    %v3983 = vunpack.c.l.b16 %v3400
    %v3984 = vunpack.c.h.b16 %v3400
    %v3985 = vunpack.c.l.b16 %v3401
    %v3986 = vunpack.c.h.b16 %v3401
    %v3987 = vunpack.c.l.b16 %v3402
    %v3988 = vunpack.c.h.b16 %v3402
    %v3989 = vunpack.c.l.b16 %v3403
    %v3990 = vunpack.c.h.b16 %v3403
    %v3991 = vunpack.c.l.b16 %v3404
    %v3992 = vunpack.c.h.b16 %v3404
    %v3993 = vunpack.c.l.b16 %v3405
    %v3994 = vunpack.c.h.b16 %v3405
    %v3995 = vunpack.c.l.b16 %v3406
    %v3996 = vunpack.c.h.b16 %v3406
    %v3997 = vunpack.c.l.b16 %v3407
    %v3998 = vunpack.c.h.b16 %v3407
    %v3999 = vunpack.c.l.b16 %v3408
    %v4000 = vunpack.c.h.b16 %v3408
    %v4001 = vunpack.c.l.b16 %v3409
    %v4002 = vunpack.c.h.b16 %v3409
    %v4003 = vunpack.c.l.b16 %v3410
    %v4004 = vunpack.c.h.b16 %v3410
    %v4005 = vpack.c.b16 %v3625, %v3621
    %v4006 = vpack.c.b16 %v3626, %v3622
    %v4007 = vpack.c.b16 %v3627, %v3623
    %v4008 = vpack.c.b16 %v3628, %v3624
    %v4009 = vpack.c.b16 %v3633, %v3629
    %v4010 = vpack.c.b16 %v3634, %v3630
    %v4011 = vpack.c.b16 %v3635, %v3631
    %v4012 = vpack.c.b16 %v3636, %v3632
    %v4013 = vpack.c.b16 %v3641, %v3637
    %v4014 = vpack.c.b16 %v3642, %v3638
    %v4015 = vpack.c.b16 %v3643, %v3639
    %v4016 = vpack.c.b16 %v3644, %v3640
    %v4017 = vpack.c.b16 %v3649, %v3645
    %v4018 = vpack.c.b16 %v3650, %v3646
    %v4019 = vpack.c.b16 %v3651, %v3647
    %v4020 = vpack.c.b16 %v3652, %v3648
    %v4021 = vpack.c.b16 %v3657, %v3653
    %v4022 = vpack.c.b16 %v3658, %v3654
    %v4023 = vpack.c.b16 %v3659, %v3655
    %v4024 = vpack.c.b16 %v3660, %v3656
    %v4025 = vpack.c.b16 %v3665, %v3661
    %v4026 = vpack.c.b16 %v3666, %v3662
    %v4027 = vpack.c.b16 %v3667, %v3663
    %v4028 = vpack.c.b16 %v3668, %v3664
    %v4029 = vpack.c.b16 %v3673, %v3669
    %v4030 = vpack.c.b16 %v3674, %v3670
    %v4031 = vpack.c.b16 %v3675, %v3671
    %v4032 = vpack.c.b16 %v3676, %v3672
    %v4033 = vpack.c.b16 %v3681, %v3677
    %v4034 = vpack.c.b16 %v3682, %v3678
    %v4035 = vpack.c.b16 %v3683, %v3679
    %v4036 = vpack.c.b16 %v3684, %v3680
    %v4037 = vpack.c.b16 %v3689, %v3685
    %v4038 = vpack.c.b16 %v3690, %v3686
    %v4039 = vpack.c.b16 %v3691, %v3687
    %v4040 = vpack.c.b16 %v3692, %v3688
    %v4041 = vpack.c.b16 %v3697, %v3693
    %v4042 = vpack.c.b16 %v3698, %v3694
    %v4043 = vpack.c.b16 %v3699, %v3695
    %v4044 = vpack.c.b16 %v3700, %v3696
    %v4045 = vpack.c.b16 %v3705, %v3701
    %v4046 = vpack.c.b16 %v3706, %v3702
    %v4047 = vpack.c.b16 %v3707, %v3703
    %v4048 = vpack.c.b16 %v3708, %v3704
    %v4049 = vpack.c.b16 %v3713, %v3709
    %v4050 = vpack.c.b16 %v3714, %v3710
    %v4051 = vpack.c.b16 %v3715, %v3711
    %v4052 = vpack.c.b16 %v3716, %v3712
    %v4053 = vpack.c.b16 %v3721, %v3717
    %v4054 = vpack.c.b16 %v3722, %v3718
    %v4055 = vpack.c.b16 %v3723, %v3719
    %v4056 = vpack.c.b16 %v3724, %v3720
    %v4057 = vpack.c.b16 %v3729, %v3725
    %v4058 = vpack.c.b16 %v3730, %v3726
    %v4059 = vpack.c.b16 %v3731, %v3727
    %v4060 = vpack.c.b16 %v3732, %v3728
    %v4061 = vpack.c.b16 %v3737, %v3733
    %v4062 = vpack.c.b16 %v3738, %v3734
    %v4063 = vpack.c.b16 %v3739, %v3735
    %v4064 = vpack.c.b16 %v3740, %v3736
    %v4065 = vpack.c.b16 %v3745, %v3741
    %v4066 = vpack.c.b16 %v3746, %v3742
    %v4067 = vpack.c.b16 %v3747, %v3743
    %v4068 = vpack.c.b16 %v3748, %v3744
    %v4069 = vpack.c.b16 %v3753, %v3749
    %v4070 = vpack.c.b16 %v3754, %v3750
    %v4071 = vpack.c.b16 %v3755, %v3751
    %v4072 = vpack.c.b16 %v3756, %v3752
    %v4073 = vpack.c.b16 %v3761, %v3757
    %v4074 = vpack.c.b16 %v3762, %v3758
    %v4075 = vpack.c.b16 %v3763, %v3759
    %v4076 = vpack.c.b16 %v3764, %v3760
    %v4077 = vpack.c.b16 %v3769, %v3765
    %v4078 = vpack.c.b16 %v3770, %v3766
    %v4079 = vpack.c.b16 %v3771, %v3767
    %v4080 = vpack.c.b16 %v3772, %v3768
    %v4081 = vpack.c.b16 %v3777, %v3773
    %v4082 = vpack.c.b16 %v3778, %v3774
    %v4083 = vpack.c.b16 %v3779, %v3775
    %v4084 = vpack.c.b16 %v3780, %v3776
    %v4085 = vpack.c.b16 %v3785, %v3781
    %v4086 = vpack.c.b16 %v3786, %v3782
    %v4087 = vpack.c.b16 %v3787, %v3783
    %v4088 = vpack.c.b16 %v3788, %v3784
    %v4089 = vpack.c.b16 %v3793, %v3789
    %v4090 = vpack.c.b16 %v3794, %v3790
    %v4091 = vpack.c.b16 %v3795, %v3791
    %v4092 = vpack.c.b16 %v3796, %v3792
    %v4093 = vpack.c.b16 %v3801, %v3797
    %v4094 = vpack.c.b16 %v3802, %v3798
    %v4095 = vpack.c.b16 %v3803, %v3799
    %v4096 = vpack.c.b16 %v3804, %v3800
    %v4097 = vpack.c.b16 %v3809, %v3805
    %v4098 = vpack.c.b16 %v3810, %v3806
    %v4099 = vpack.c.b16 %v3811, %v3807
    %v4100 = vpack.c.b16 %v3812, %v3808
    %v4101 = vpack.c.b16 %v3817, %v3813
    %v4102 = vpack.c.b16 %v3818, %v3814
    %v4103 = vpack.c.b16 %v3819, %v3815
    %v4104 = vpack.c.b16 %v3820, %v3816
    %v4105 = vpack.c.b16 %v3825, %v3821
    %v4106 = vpack.c.b16 %v3826, %v3822
    %v4107 = vpack.c.b16 %v3827, %v3823
    %v4108 = vpack.c.b16 %v3828, %v3824
    %v4109 = vpack.c.b16 %v3833, %v3829
    %v4110 = vpack.c.b16 %v3834, %v3830
    %v4111 = vpack.c.b16 %v3835, %v3831
    %v4112 = vpack.c.b16 %v3836, %v3832
    %v4113 = vpack.c.b16 %v3841, %v3837
    %v4114 = vpack.c.b16 %v3842, %v3838
    %v4115 = vpack.c.b16 %v3843, %v3839
    %v4116 = vpack.c.b16 %v3844, %v3840
    %v4117 = vpack.c.b16 %v3849, %v3845
    %v4118 = vpack.c.b16 %v3850, %v3846
    %v4119 = vpack.c.b16 %v3851, %v3847
    %v4120 = vpack.c.b16 %v3852, %v3848
    %v4121 = vpack.c.b16 %v3857, %v3853
    %v4122 = vpack.c.b16 %v3858, %v3854
    %v4123 = vpack.c.b16 %v3859, %v3855
    %v4124 = vpack.c.b16 %v3860, %v3856
    %v4125 = vpack.c.b16 %v3865, %v3861
    %v4126 = vpack.c.b16 %v3866, %v3862
    %v4127 = vpack.c.b16 %v3867, %v3863
    %v4128 = vpack.c.b16 %v3868, %v3864
    %v4129 = vpack.c.b16 %v3873, %v3869
    %v4130 = vpack.c.b16 %v3874, %v3870
    %v4131 = vpack.c.b16 %v3875, %v3871
    %v4132 = vpack.c.b16 %v3876, %v3872
    %v4133 = vpack.c.b16 %v3881, %v3877
    %v4134 = vpack.c.b16 %v3882, %v3878
    %v4135 = vpack.c.b16 %v3883, %v3879
    %v4136 = vpack.c.b16 %v3884, %v3880
    %v4137 = vpack.c.b16 %v3889, %v3885
    %v4138 = vpack.c.b16 %v3890, %v3886
    %v4139 = vpack.c.b16 %v3891, %v3887
    %v4140 = vpack.c.b16 %v3892, %v3888
    %v4141 = vpack.c.b16 %v3897, %v3893
    %v4142 = vpack.c.b16 %v3898, %v3894
    %v4143 = vpack.c.b16 %v3899, %v3895
    %v4144 = vpack.c.b16 %v3900, %v3896
    %v4145 = vpack.c.b16 %v3905, %v3901
    %v4146 = vpack.c.b16 %v3906, %v3902
    %v4147 = vpack.c.b16 %v3907, %v3903
    %v4148 = vpack.c.b16 %v3908, %v3904
    %v4149 = vpack.c.b16 %v3913, %v3909
    %v4150 = vpack.c.b16 %v3914, %v3910
    %v4151 = vpack.c.b16 %v3915, %v3911
    %v4152 = vpack.c.b16 %v3916, %v3912
    %v4153 = vpack.c.b16 %v3921, %v3917
    %v4154 = vpack.c.b16 %v3922, %v3918
    %v4155 = vpack.c.b16 %v3923, %v3919
    %v4156 = vpack.c.b16 %v3924, %v3920
    %v4157 = vpack.c.b16 %v3929, %v3925
    %v4158 = vpack.c.b16 %v3930, %v3926
    %v4159 = vpack.c.b16 %v3931, %v3927
    %v4160 = vpack.c.b16 %v3932, %v3928
    %v4161 = vpack.c.b16 %v3937, %v3933
    %v4162 = vpack.c.b16 %v3938, %v3934
    %v4163 = vpack.c.b16 %v3939, %v3935
    %v4164 = vpack.c.b16 %v3940, %v3936
    %v4165 = vpack.c.b16 %v3945, %v3941
    %v4166 = vpack.c.b16 %v3946, %v3942
    %v4167 = vpack.c.b16 %v3947, %v3943
    %v4168 = vpack.c.b16 %v3948, %v3944
    %v4169 = vpack.c.b16 %v3953, %v3949
    %v4170 = vpack.c.b16 %v3954, %v3950
    %v4171 = vpack.c.b16 %v3955, %v3951
    %v4172 = vpack.c.b16 %v3956, %v3952
    %v4173 = vpack.c.b16 %v3961, %v3957
    %v4174 = vpack.c.b16 %v3962, %v3958
    %v4175 = vpack.c.b16 %v3963, %v3959
    %v4176 = vpack.c.b16 %v3964, %v3960
    %v4177 = vpack.c.b16 %v3969, %v3965
    %v4178 = vpack.c.b16 %v3970, %v3966
    %v4179 = vpack.c.b16 %v3971, %v3967
    %v4180 = vpack.c.b16 %v3972, %v3968
    %v4181 = vpack.c.b16 %v3977, %v3973
    %v4182 = vpack.c.b16 %v3978, %v3974
    %v4183 = vpack.c.b16 %v3979, %v3975
    %v4184 = vpack.c.b16 %v3980, %v3976
    %v4185 = vpack.c.b16 %v3985, %v3981
    %v4186 = vpack.c.b16 %v3986, %v3982
    %v4187 = vpack.c.b16 %v3987, %v3983
    %v4188 = vpack.c.b16 %v3988, %v3984
    %v4189 = vpack.c.b16 %v3993, %v3989
    %v4190 = vpack.c.b16 %v3994, %v3990
    %v4191 = vpack.c.b16 %v3995, %v3991
    %v4192 = vpack.c.b16 %v3996, %v3992
    %v4193 = vpack.c.b16 %v4001, %v3997
    %v4194 = vpack.c.b16 %v4002, %v3998
    %v4195 = vpack.c.b16 %v4003, %v3999
    %v4196 = vpack.c.b16 %v4004, %v4000
    %4389 = vmatprep.subr.bf16.mxu0 %v4034
    %4390 = vmatpush1.bf16.msra.mxu0 %v4033
    %4391 = vmatprep.subr.bf16.mxu0 %v4030
    %4392 = vmatpush1.bf16.msra.mxu0 %v4029
    %4393 = vmatprep.subr.bf16.mxu0 %v4026
    %4394 = vmatpush1.bf16.msra.mxu0 %v4025
    %4395 = vmatprep.subr.bf16.mxu0 %v4022
    %4396 = vmatpush1.bf16.msra.mxu0 %v4021
    %4397 = vmatprep.subr.bf16.mxu0 %v4018
    %4398 = vmatpush1.bf16.msra.mxu0 %v4017
    %4399 = vmatprep.subr.bf16.mxu0 %v4014
    %4400 = vmatpush1.bf16.msra.mxu0 %v4013
    %4401 = vmatprep.subr.bf16.mxu0 %v4010
    %4402 = vmatpush1.bf16.msra.mxu0 %v4009
    %4403 = vmatprep.subr.bf16.mxu0 %v4006
    %4404 = vmatpush1.bf16.msra.mxu0 %v4005
    %4405 = vmatprep.subr.bf16.mxu0 %v4066
    %4406 = vmatpush2.bf16.msra.mxu0 %v4065
    %4407 = vmatprep.subr.bf16.mxu0 %v4062
    %4408 = vmatpush2.bf16.msra.mxu0 %v4061
    %4409 = vmatprep.subr.bf16.mxu0 %v4058
    %4410 = vmatpush2.bf16.msra.mxu0 %v4057
    %4411 = vmatprep.subr.bf16.mxu0 %v4054
    %4412 = vmatpush2.bf16.msra.mxu0 %v4053
    %4413 = vmatprep.subr.bf16.mxu0 %v4050
    %4414 = vmatpush2.bf16.msra.mxu0 %v4049
    %4415 = vmatprep.subr.bf16.mxu0 %v4046
    %4416 = vmatpush2.bf16.msra.mxu0 %v4045
    %4417 = vmatprep.subr.bf16.mxu0 %v4042
    %4418 = vmatpush2.bf16.msra.mxu0 %v4041
    %4419 = vmatprep.subr.bf16.mxu0 %v4038
    %4420 = vmatpush2.bf16.msra.mxu0 %v4037
    %4421 = vmatprep.mubr.bf16.mxu0 %v3418
    %4422 = vmatmul.mubr.bf16.gmra.mxu0 %v3417
    %v4423 = vpop.f32.mrf.mxu0
    %v4424 = vadd.f32 0.0, %v4423
    %v4425 = vpop.f32.mrf.mxu0
    %v4426 = vadd.f32 0.0, %v4425
    %v4427 = vpop.f32.mrf.mxu0
    %v4428 = vpop.f32.mrf.mxu0
    %4429 = vdwg.mxu0
    %4430 = vmatprep.subr.bf16.mxu0 %v4098
    %4431 = vmatpush1.bf16.msra.mxu0 %v4097
    %4432 = vmatprep.subr.bf16.mxu0 %v4094
    %4433 = vmatpush1.bf16.msra.mxu0 %v4093
    %4434 = vmatprep.subr.bf16.mxu0 %v4090
    %4435 = vmatpush1.bf16.msra.mxu0 %v4089
    %4436 = vmatprep.subr.bf16.mxu0 %v4086
    %4437 = vmatpush1.bf16.msra.mxu0 %v4085
    %4438 = vmatprep.subr.bf16.mxu0 %v4082
    %4439 = vmatpush1.bf16.msra.mxu0 %v4081
    %4440 = vmatprep.subr.bf16.mxu0 %v4078
    %4441 = vmatpush1.bf16.msra.mxu0 %v4077
    %4442 = vmatprep.subr.bf16.mxu0 %v4074
    %4443 = vmatpush1.bf16.msra.mxu0 %v4073
    %4444 = vmatprep.subr.bf16.mxu0 %v4070
    %4445 = vmatpush1.bf16.msra.mxu0 %v4069
    %4446 = vmatprep.subr.bf16.mxu0 %v4130
    %4447 = vmatpush2.bf16.msra.mxu0 %v4129
    %4448 = vmatprep.subr.bf16.mxu0 %v4126
    %4449 = vmatpush2.bf16.msra.mxu0 %v4125
    %4450 = vmatprep.subr.bf16.mxu0 %v4122
    %4451 = vmatpush2.bf16.msra.mxu0 %v4121
    %4452 = vmatprep.subr.bf16.mxu0 %v4118
    %4453 = vmatpush2.bf16.msra.mxu0 %v4117
    %4454 = vmatprep.subr.bf16.mxu0 %v4114
    %4455 = vmatpush2.bf16.msra.mxu0 %v4113
    %4456 = vmatprep.subr.bf16.mxu0 %v4110
    %4457 = vmatpush2.bf16.msra.mxu0 %v4109
    %4458 = vmatprep.subr.bf16.mxu0 %v4106
    %4459 = vmatpush2.bf16.msra.mxu0 %v4105
    %4460 = vmatprep.subr.bf16.mxu0 %v4102
    %4461 = vmatpush2.bf16.msra.mxu0 %v4101
    %4462 = vmatprep.mubr.bf16.mxu0 %v3420
    %4463 = vmatmul.mubr.bf16.gmra.mxu0 %v3419
    %v4464 = vpop.f32.mrf.mxu0
    %v4465 = vadd.f32 %v4424, %v4464
    %v4466 = vpop.f32.mrf.mxu0
    %v4467 = vadd.f32 %v4426, %v4466
    %v4468 = vpop.f32.mrf.mxu0
    %v4469 = vpop.f32.mrf.mxu0
    %4470 = vdwg.mxu0
    %4471 = vmatprep.subr.bf16.mxu0 %v4162
    %4472 = vmatpush1.bf16.msra.mxu0 %v4161
    %4473 = vmatprep.subr.bf16.mxu0 %v4158
    %4474 = vmatpush1.bf16.msra.mxu0 %v4157
    %4475 = vmatprep.subr.bf16.mxu0 %v4154
    %4476 = vmatpush1.bf16.msra.mxu0 %v4153
    %4477 = vmatprep.subr.bf16.mxu0 %v4150
    %4478 = vmatpush1.bf16.msra.mxu0 %v4149
    %4479 = vmatprep.subr.bf16.mxu0 %v4146
    %4480 = vmatpush1.bf16.msra.mxu0 %v4145
    %4481 = vmatprep.subr.bf16.mxu0 %v4142
    %4482 = vmatpush1.bf16.msra.mxu0 %v4141
    %4483 = vmatprep.subr.bf16.mxu0 %v4138
    %4484 = vmatpush1.bf16.msra.mxu0 %v4137
    %4485 = vmatprep.subr.bf16.mxu0 %v4134
    %4486 = vmatpush1.bf16.msra.mxu0 %v4133
    %4487 = vmatprep.subr.bf16.mxu0 %v4194
    %4488 = vmatpush2.bf16.msra.mxu0 %v4193
    %4489 = vmatprep.subr.bf16.mxu0 %v4190
    %4490 = vmatpush2.bf16.msra.mxu0 %v4189
    %4491 = vmatprep.subr.bf16.mxu0 %v4186
    %4492 = vmatpush2.bf16.msra.mxu0 %v4185
    %4493 = vmatprep.subr.bf16.mxu0 %v4182
    %4494 = vmatpush2.bf16.msra.mxu0 %v4181
    %4495 = vmatprep.subr.bf16.mxu0 %v4178
    %4496 = vmatpush2.bf16.msra.mxu0 %v4177
    %4497 = vmatprep.subr.bf16.mxu0 %v4174
    %4498 = vmatpush2.bf16.msra.mxu0 %v4173
    %4499 = vmatprep.subr.bf16.mxu0 %v4170
    %4500 = vmatpush2.bf16.msra.mxu0 %v4169
    %4501 = vmatprep.subr.bf16.mxu0 %v4166
    %4502 = vmatpush2.bf16.msra.mxu0 %v4165
    %4503 = vmatprep.mubr.bf16.mxu0 %v3422
    %4504 = vmatmul.mubr.bf16.gmra.mxu0 %v3421
    %v4505 = vpop.f32.mrf.mxu0
    %v4506 = vadd.f32 %v4465, %v4505
    %v4507 = vpop.f32.mrf.mxu0
    %v4508 = vadd.f32 %v4467, %v4507
    %v4509 = vpop.f32.mrf.mxu0
    %v4510 = vpop.f32.mrf.mxu0
    %4511 = vdwg.mxu0
    %4512 = vmatprep.subr.bf16.mxu0 %v4036
    %4513 = vmatpush1.bf16.msra.mxu0 %v4035
    %4514 = vmatprep.subr.bf16.mxu0 %v4032
    %4515 = vmatpush1.bf16.msra.mxu0 %v4031
    %4516 = vmatprep.subr.bf16.mxu0 %v4028
    %4517 = vmatpush1.bf16.msra.mxu0 %v4027
    %4518 = vmatprep.subr.bf16.mxu0 %v4024
    %4519 = vmatpush1.bf16.msra.mxu0 %v4023
    %4520 = vmatprep.subr.bf16.mxu0 %v4020
    %4521 = vmatpush1.bf16.msra.mxu0 %v4019
    %4522 = vmatprep.subr.bf16.mxu0 %v4016
    %4523 = vmatpush1.bf16.msra.mxu0 %v4015
    %4524 = vmatprep.subr.bf16.mxu0 %v4012
    %4525 = vmatpush1.bf16.msra.mxu0 %v4011
    %4526 = vmatprep.subr.bf16.mxu0 %v4008
    %4527 = vmatpush1.bf16.msra.mxu0 %v4007
    %4528 = vmatprep.subr.bf16.mxu0 %v4068
    %4529 = vmatpush2.bf16.msra.mxu0 %v4067
    %4530 = vmatprep.subr.bf16.mxu0 %v4064
    %4531 = vmatpush2.bf16.msra.mxu0 %v4063
    %4532 = vmatprep.subr.bf16.mxu0 %v4060
    %4533 = vmatpush2.bf16.msra.mxu0 %v4059
    %4534 = vmatprep.subr.bf16.mxu0 %v4056
    %4535 = vmatpush2.bf16.msra.mxu0 %v4055
    %4536 = vmatprep.subr.bf16.mxu0 %v4052
    %4537 = vmatpush2.bf16.msra.mxu0 %v4051
    %4538 = vmatprep.subr.bf16.mxu0 %v4048
    %4539 = vmatpush2.bf16.msra.mxu0 %v4047
    %4540 = vmatprep.subr.bf16.mxu0 %v4044
    %4541 = vmatpush2.bf16.msra.mxu0 %v4043
    %4542 = vmatprep.subr.bf16.mxu0 %v4040
    %4543 = vmatpush2.bf16.msra.mxu0 %v4039
    %4544 = vmatprep.mubr.bf16.mxu0 %v3418
    %4545 = vmatmul.mubr.bf16.gmra.mxu0 %v3417
    %v4546 = vpop.f32.mrf.mxu0
    %v4547 = vadd.f32 0.0, %v4546
    %v4548 = vpop.f32.mrf.mxu0
    %v4549 = vadd.f32 0.0, %v4548
    %v4550 = vpop.f32.mrf.mxu0
    %v4551 = vpop.f32.mrf.mxu0
    %4552 = vdwg.mxu0
    %4553 = vmatprep.subr.bf16.mxu0 %v4100
    %4554 = vmatpush1.bf16.msra.mxu0 %v4099
    %4555 = vmatprep.subr.bf16.mxu0 %v4096
    %4556 = vmatpush1.bf16.msra.mxu0 %v4095
    %4557 = vmatprep.subr.bf16.mxu0 %v4092
    %4558 = vmatpush1.bf16.msra.mxu0 %v4091
    %4559 = vmatprep.subr.bf16.mxu0 %v4088
    %4560 = vmatpush1.bf16.msra.mxu0 %v4087
    %4561 = vmatprep.subr.bf16.mxu0 %v4084
    %4562 = vmatpush1.bf16.msra.mxu0 %v4083
    %4563 = vmatprep.subr.bf16.mxu0 %v4080
    %4564 = vmatpush1.bf16.msra.mxu0 %v4079
    %4565 = vmatprep.subr.bf16.mxu0 %v4076
    %4566 = vmatpush1.bf16.msra.mxu0 %v4075
    %4567 = vmatprep.subr.bf16.mxu0 %v4072
    %4568 = vmatpush1.bf16.msra.mxu0 %v4071
    %4569 = vmatprep.subr.bf16.mxu0 %v4132
    %4570 = vmatpush2.bf16.msra.mxu0 %v4131
    %4571 = vmatprep.subr.bf16.mxu0 %v4128
    %4572 = vmatpush2.bf16.msra.mxu0 %v4127
    %4573 = vmatprep.subr.bf16.mxu0 %v4124
    %4574 = vmatpush2.bf16.msra.mxu0 %v4123
    %4575 = vmatprep.subr.bf16.mxu0 %v4120
    %4576 = vmatpush2.bf16.msra.mxu0 %v4119
    %4577 = vmatprep.subr.bf16.mxu0 %v4116
    %4578 = vmatpush2.bf16.msra.mxu0 %v4115
    %4579 = vmatprep.subr.bf16.mxu0 %v4112
    %4580 = vmatpush2.bf16.msra.mxu0 %v4111
    %4581 = vmatprep.subr.bf16.mxu0 %v4108
    %4582 = vmatpush2.bf16.msra.mxu0 %v4107
    %4583 = vmatprep.subr.bf16.mxu0 %v4104
    %4584 = vmatpush2.bf16.msra.mxu0 %v4103
    %4585 = vmatprep.mubr.bf16.mxu0 %v3420
    %4586 = vmatmul.mubr.bf16.gmra.mxu0 %v3419
    %v4587 = vpop.f32.mrf.mxu0
    %v4588 = vadd.f32 %v4547, %v4587
    %v4589 = vpop.f32.mrf.mxu0
    %v4590 = vadd.f32 %v4549, %v4589
    %v4591 = vpop.f32.mrf.mxu0
    %v4592 = vpop.f32.mrf.mxu0
    %4593 = vdwg.mxu0
    %4594 = vmatprep.subr.bf16.mxu0 %v4164
    %4595 = vmatpush1.bf16.msra.mxu0 %v4163
    %4596 = vmatprep.subr.bf16.mxu0 %v4160
    %4597 = vmatpush1.bf16.msra.mxu0 %v4159
    %4598 = vmatprep.subr.bf16.mxu0 %v4156
    %4599 = vmatpush1.bf16.msra.mxu0 %v4155
    %4600 = vmatprep.subr.bf16.mxu0 %v4152
    %4601 = vmatpush1.bf16.msra.mxu0 %v4151
    %4602 = vmatprep.subr.bf16.mxu0 %v4148
    %4603 = vmatpush1.bf16.msra.mxu0 %v4147
    %4604 = vmatprep.subr.bf16.mxu0 %v4144
    %4605 = vmatpush1.bf16.msra.mxu0 %v4143
    %4606 = vmatprep.subr.bf16.mxu0 %v4140
    %4607 = vmatpush1.bf16.msra.mxu0 %v4139
    %4608 = vmatprep.subr.bf16.mxu0 %v4136
    %4609 = vmatpush1.bf16.msra.mxu0 %v4135
    %4610 = vmatprep.subr.bf16.mxu0 %v4196
    %4611 = vmatpush2.bf16.msra.mxu0 %v4195
    %4612 = vmatprep.subr.bf16.mxu0 %v4192
    %4613 = vmatpush2.bf16.msra.mxu0 %v4191
    %4614 = vmatprep.subr.bf16.mxu0 %v4188
    %4615 = vmatpush2.bf16.msra.mxu0 %v4187
    %4616 = vmatprep.subr.bf16.mxu0 %v4184
    %4617 = vmatpush2.bf16.msra.mxu0 %v4183
    %4618 = vmatprep.subr.bf16.mxu0 %v4180
    %4619 = vmatpush2.bf16.msra.mxu0 %v4179
    %4620 = vmatprep.subr.bf16.mxu0 %v4176
    %4621 = vmatpush2.bf16.msra.mxu0 %v4175
    %4622 = vmatprep.subr.bf16.mxu0 %v4172
    %4623 = vmatpush2.bf16.msra.mxu0 %v4171
    %4624 = vmatprep.subr.bf16.mxu0 %v4168
    %4625 = vmatpush2.bf16.msra.mxu0 %v4167
    %4626 = vmatprep.mubr.bf16.mxu0 %v3422
    %4627 = vmatmul.mubr.bf16.gmra.mxu0 %v3421
    %v4628 = vpop.f32.mrf.mxu0
    %v4629 = vadd.f32 %v4588, %v4628
    %v4630 = vpop.f32.mrf.mxu0
    %v4631 = vadd.f32 %v4590, %v4630
    %v4632 = vpop.f32.mrf.mxu0
    %v4633 = vpop.f32.mrf.mxu0
    %4634 = vdwg.mxu0
    %v4635 = vadd.f32 %v3089, %v4506
    %v4636 = vadd.f32 %v3091, %v4508
    %v4637 = vadd.f32 %v3212, %v4629
    %v4638 = vadd.f32 %v3214, %v4631
    %s4639 = scalar_lea.vmem [#allocation7], 4608
    %v4640 = vld [vmem:[%s4639] sm:$0xff]
    %v4641 = vld [vmem:[%s4639 + $0x8] sm:$0xff]
    %v4642 = vld [vmem:[%s4639 + $0x10] sm:$0xff]
    %v4643 = vld [vmem:[%s4639 + $0x18] sm:$0xff]
    %v4644 = vld [vmem:[%s4639 + $0x20] sm:$0xff]
    %v4645 = vld [vmem:[%s4639 + $0x28] sm:$0xff]
    %v4646 = vld [vmem:[%s4639 + $0x30] sm:$0xff]
    %v4647 = vld [vmem:[%s4639 + $0x38] sm:$0xff]
    %v4648 = vld [vmem:[%s4639 + $0x40] sm:$0xff]
    %v4649 = vld [vmem:[%s4639 + $0x48] sm:$0xff]
    %v4650 = vld [vmem:[%s4639 + $0x50] sm:$0xff]
    %v4651 = vld [vmem:[%s4639 + $0x58] sm:$0xff]
    %v4652 = vld [vmem:[%s4639 + $0x60] sm:$0xff]
    %v4653 = vld [vmem:[%s4639 + $0x68] sm:$0xff]
    %v4654 = vld [vmem:[%s4639 + $0x70] sm:$0xff]
    %v4655 = vld [vmem:[%s4639 + $0x78] sm:$0xff]
    %v4656 = vld [vmem:[%s4639 + $0x80] sm:$0xff]
    %v4657 = vld [vmem:[%s4639 + $0x88] sm:$0xff]
    %v4658 = vld [vmem:[%s4639 + $0x90] sm:$0xff]
    %v4659 = vld [vmem:[%s4639 + $0x98] sm:$0xff]
    %v4660 = vld [vmem:[%s4639 + $0xa0] sm:$0xff]
    %v4661 = vld [vmem:[%s4639 + $0xa8] sm:$0xff]
    %v4662 = vld [vmem:[%s4639 + $0xb0] sm:$0xff]
    %v4663 = vld [vmem:[%s4639 + $0xb8] sm:$0xff]
    %v4664 = vld [vmem:[%s4639 + $0xc0] sm:$0xff]
    %v4665 = vld [vmem:[%s4639 + $0xc8] sm:$0xff]
    %v4666 = vld [vmem:[%s4639 + $0xd0] sm:$0xff]
    %v4667 = vld [vmem:[%s4639 + $0xd8] sm:$0xff]
    %v4668 = vld [vmem:[%s4639 + $0xe0] sm:$0xff]
    %v4669 = vld [vmem:[%s4639 + $0xe8] sm:$0xff]
    %v4670 = vld [vmem:[%s4639 + $0xf0] sm:$0xff]
    %v4671 = vld [vmem:[%s4639 + $0xf8] sm:$0xff]
    %v4672 = vld [vmem:[%s4639 + $0x100] sm:$0xff]
    %v4673 = vld [vmem:[%s4639 + $0x108] sm:$0xff]
    %v4674 = vld [vmem:[%s4639 + $0x110] sm:$0xff]
    %v4675 = vld [vmem:[%s4639 + $0x118] sm:$0xff]
    %v4676 = vld [vmem:[%s4639 + $0x120] sm:$0xff]
    %v4677 = vld [vmem:[%s4639 + $0x128] sm:$0xff]
    %v4678 = vld [vmem:[%s4639 + $0x130] sm:$0xff]
    %v4679 = vld [vmem:[%s4639 + $0x138] sm:$0xff]
    %v4680 = vld [vmem:[%s4639 + $0x140] sm:$0xff]
    %v4681 = vld [vmem:[%s4639 + $0x148] sm:$0xff]
    %v4682 = vld [vmem:[%s4639 + $0x150] sm:$0xff]
    %v4683 = vld [vmem:[%s4639 + $0x158] sm:$0xff]
    %v4684 = vld [vmem:[%s4639 + $0x160] sm:$0xff]
    %v4685 = vld [vmem:[%s4639 + $0x168] sm:$0xff]
    %v4686 = vld [vmem:[%s4639 + $0x170] sm:$0xff]
    %v4687 = vld [vmem:[%s4639 + $0x178] sm:$0xff]
    %v4688 = vld [vmem:[%s4639 + $0x180] sm:$0xff]
    %v4689 = vld [vmem:[%s4639 + $0x188] sm:$0xff]
    %v4690 = vld [vmem:[%s4639 + $0x190] sm:$0xff]
    %v4691 = vld [vmem:[%s4639 + $0x198] sm:$0xff]
    %v4692 = vld [vmem:[%s4639 + $0x1a0] sm:$0xff]
    %v4693 = vld [vmem:[%s4639 + $0x1a8] sm:$0xff]
    %v4694 = vld [vmem:[%s4639 + $0x1b0] sm:$0xff]
    %v4695 = vld [vmem:[%s4639 + $0x1b8] sm:$0xff]
    %v4696 = vld [vmem:[%s4639 + $0x1c0] sm:$0xff]
    %v4697 = vld [vmem:[%s4639 + $0x1c8] sm:$0xff]
    %v4698 = vld [vmem:[%s4639 + $0x1d0] sm:$0xff]
    %v4699 = vld [vmem:[%s4639 + $0x1d8] sm:$0xff]
    %v4700 = vld [vmem:[%s4639 + $0x1e0] sm:$0xff]
    %v4701 = vld [vmem:[%s4639 + $0x1e8] sm:$0xff]
    %v4702 = vld [vmem:[%s4639 + $0x1f0] sm:$0xff]
    %v4703 = vld [vmem:[%s4639 + $0x1f8] sm:$0xff]
    %v4704 = vld [vmem:[%s4639 + $0x200] sm:$0xff]
    %v4705 = vld [vmem:[%s4639 + $0x208] sm:$0xff]
    %v4706 = vld [vmem:[%s4639 + $0x210] sm:$0xff]
    %v4707 = vld [vmem:[%s4639 + $0x218] sm:$0xff]
    %v4708 = vld [vmem:[%s4639 + $0x220] sm:$0xff]
    %v4709 = vld [vmem:[%s4639 + $0x228] sm:$0xff]
    %v4710 = vld [vmem:[%s4639 + $0x230] sm:$0xff]
    %v4711 = vld [vmem:[%s4639 + $0x238] sm:$0xff]
    %v4712 = vld [vmem:[%s4639 + $0x240] sm:$0xff]
    %v4713 = vld [vmem:[%s4639 + $0x248] sm:$0xff]
    %v4714 = vld [vmem:[%s4639 + $0x250] sm:$0xff]
    %v4715 = vld [vmem:[%s4639 + $0x258] sm:$0xff]
    %v4716 = vld [vmem:[%s4639 + $0x260] sm:$0xff]
    %v4717 = vld [vmem:[%s4639 + $0x268] sm:$0xff]
    %v4718 = vld [vmem:[%s4639 + $0x270] sm:$0xff]
    %v4719 = vld [vmem:[%s4639 + $0x278] sm:$0xff]
    %v4720 = vld [vmem:[%s4639 + $0x280] sm:$0xff]
    %v4721 = vld [vmem:[%s4639 + $0x288] sm:$0xff]
    %v4722 = vld [vmem:[%s4639 + $0x290] sm:$0xff]
    %v4723 = vld [vmem:[%s4639 + $0x298] sm:$0xff]
    %v4724 = vld [vmem:[%s4639 + $0x2a0] sm:$0xff]
    %v4725 = vld [vmem:[%s4639 + $0x2a8] sm:$0xff]
    %v4726 = vld [vmem:[%s4639 + $0x2b0] sm:$0xff]
    %v4727 = vld [vmem:[%s4639 + $0x2b8] sm:$0xff]
    %v4728 = vld [vmem:[%s4639 + $0x2c0] sm:$0xff]
    %v4729 = vld [vmem:[%s4639 + $0x2c8] sm:$0xff]
    %v4730 = vld [vmem:[%s4639 + $0x2d0] sm:$0xff]
    %v4731 = vld [vmem:[%s4639 + $0x2d8] sm:$0xff]
    %v4732 = vld [vmem:[%s4639 + $0x2e0] sm:$0xff]
    %v4733 = vld [vmem:[%s4639 + $0x2e8] sm:$0xff]
    %v4734 = vld [vmem:[%s4639 + $0x2f0] sm:$0xff]
    %v4735 = vld [vmem:[%s4639 + $0x2f8] sm:$0xff]
    %v4736 = vld [vmem:[%s4639 + $0x300] sm:$0xff]
    %v4737 = vld [vmem:[%s4639 + $0x308] sm:$0xff]
    %v4738 = vld [vmem:[%s4639 + $0x310] sm:$0xff]
    %v4739 = vld [vmem:[%s4639 + $0x318] sm:$0xff]
    %v4740 = vld [vmem:[%s4639 + $0x320] sm:$0xff]
    %v4741 = vld [vmem:[%s4639 + $0x328] sm:$0xff]
    %v4742 = vld [vmem:[%s4639 + $0x330] sm:$0xff]
    %v4743 = vld [vmem:[%s4639 + $0x338] sm:$0xff]
    %v4744 = vld [vmem:[%s4639 + $0x340] sm:$0xff]
    %v4745 = vld [vmem:[%s4639 + $0x348] sm:$0xff]
    %v4746 = vld [vmem:[%s4639 + $0x350] sm:$0xff]
    %v4747 = vld [vmem:[%s4639 + $0x358] sm:$0xff]
    %v4748 = vld [vmem:[%s4639 + $0x360] sm:$0xff]
    %v4749 = vld [vmem:[%s4639 + $0x368] sm:$0xff]
    %v4750 = vld [vmem:[%s4639 + $0x370] sm:$0xff]
    %v4751 = vld [vmem:[%s4639 + $0x378] sm:$0xff]
    %v4752 = vld [vmem:[%s4639 + $0x380] sm:$0xff]
    %v4753 = vld [vmem:[%s4639 + $0x388] sm:$0xff]
    %v4754 = vld [vmem:[%s4639 + $0x390] sm:$0xff]
    %v4755 = vld [vmem:[%s4639 + $0x398] sm:$0xff]
    %v4756 = vld [vmem:[%s4639 + $0x3a0] sm:$0xff]
    %v4757 = vld [vmem:[%s4639 + $0x3a8] sm:$0xff]
    %v4758 = vld [vmem:[%s4639 + $0x3b0] sm:$0xff]
    %v4759 = vld [vmem:[%s4639 + $0x3b8] sm:$0xff]
    %v4760 = vld [vmem:[%s4639 + $0x3c0] sm:$0xff]
    %v4761 = vld [vmem:[%s4639 + $0x3c8] sm:$0xff]
    %v4762 = vld [vmem:[%s4639 + $0x3d0] sm:$0xff]
    %v4763 = vld [vmem:[%s4639 + $0x3d8] sm:$0xff]
    %v4764 = vld [vmem:[%s4639 + $0x3e0] sm:$0xff]
    %v4765 = vld [vmem:[%s4639 + $0x3e8] sm:$0xff]
    %v4766 = vld [vmem:[%s4639 + $0x3f0] sm:$0xff]
    %v4767 = vld [vmem:[%s4639 + $0x3f8] sm:$0xff]
    %v4768 = vld [vmem:[%s4639 + $0x400] sm:$0xff]
    %v4769 = vld [vmem:[%s4639 + $0x408] sm:$0xff]
    %v4770 = vld [vmem:[%s4639 + $0x410] sm:$0xff]
    %v4771 = vld [vmem:[%s4639 + $0x418] sm:$0xff]
    %v4772 = vld [vmem:[%s4639 + $0x420] sm:$0xff]
    %v4773 = vld [vmem:[%s4639 + $0x428] sm:$0xff]
    %v4774 = vld [vmem:[%s4639 + $0x430] sm:$0xff]
    %v4775 = vld [vmem:[%s4639 + $0x438] sm:$0xff]
    %v4776 = vld [vmem:[%s4639 + $0x440] sm:$0xff]
    %v4777 = vld [vmem:[%s4639 + $0x448] sm:$0xff]
    %v4778 = vld [vmem:[%s4639 + $0x450] sm:$0xff]
    %v4779 = vld [vmem:[%s4639 + $0x458] sm:$0xff]
    %v4780 = vld [vmem:[%s4639 + $0x460] sm:$0xff]
    %v4781 = vld [vmem:[%s4639 + $0x468] sm:$0xff]
    %v4782 = vld [vmem:[%s4639 + $0x470] sm:$0xff]
    %v4783 = vld [vmem:[%s4639 + $0x478] sm:$0xff]
    %v4784 = vld [vmem:[%s4639 + $0x480] sm:$0xff]
    %v4785 = vld [vmem:[%s4639 + $0x488] sm:$0xff]
    %v4786 = vld [vmem:[%s4639 + $0x490] sm:$0xff]
    %v4787 = vld [vmem:[%s4639 + $0x498] sm:$0xff]
    %v4788 = vld [vmem:[%s4639 + $0x4a0] sm:$0xff]
    %v4789 = vld [vmem:[%s4639 + $0x4a8] sm:$0xff]
    %v4790 = vld [vmem:[%s4639 + $0x4b0] sm:$0xff]
    %v4791 = vld [vmem:[%s4639 + $0x4b8] sm:$0xff]
    %v4792 = vld [vmem:[%s4639 + $0x4c0] sm:$0xff]
    %v4793 = vld [vmem:[%s4639 + $0x4c8] sm:$0xff]
    %v4794 = vld [vmem:[%s4639 + $0x4d0] sm:$0xff]
    %v4795 = vld [vmem:[%s4639 + $0x4d8] sm:$0xff]
    %v4796 = vld [vmem:[%s4639 + $0x4e0] sm:$0xff]
    %v4797 = vld [vmem:[%s4639 + $0x4e8] sm:$0xff]
    %v4798 = vld [vmem:[%s4639 + $0x4f0] sm:$0xff]
    %v4799 = vld [vmem:[%s4639 + $0x4f8] sm:$0xff]
    %v4800 = vld [vmem:[%s4639 + $0x500] sm:$0xff]
    %v4801 = vld [vmem:[%s4639 + $0x508] sm:$0xff]
    %v4802 = vld [vmem:[%s4639 + $0x510] sm:$0xff]
    %v4803 = vld [vmem:[%s4639 + $0x518] sm:$0xff]
    %v4804 = vld [vmem:[%s4639 + $0x520] sm:$0xff]
    %v4805 = vld [vmem:[%s4639 + $0x528] sm:$0xff]
    %v4806 = vld [vmem:[%s4639 + $0x530] sm:$0xff]
    %v4807 = vld [vmem:[%s4639 + $0x538] sm:$0xff]
    %v4808 = vld [vmem:[%s4639 + $0x540] sm:$0xff]
    %v4809 = vld [vmem:[%s4639 + $0x548] sm:$0xff]
    %v4810 = vld [vmem:[%s4639 + $0x550] sm:$0xff]
    %v4811 = vld [vmem:[%s4639 + $0x558] sm:$0xff]
    %v4812 = vld [vmem:[%s4639 + $0x560] sm:$0xff]
    %v4813 = vld [vmem:[%s4639 + $0x568] sm:$0xff]
    %v4814 = vld [vmem:[%s4639 + $0x570] sm:$0xff]
    %v4815 = vld [vmem:[%s4639 + $0x578] sm:$0xff]
    %v4816 = vld [vmem:[%s4639 + $0x580] sm:$0xff]
    %v4817 = vld [vmem:[%s4639 + $0x588] sm:$0xff]
    %v4818 = vld [vmem:[%s4639 + $0x590] sm:$0xff]
    %v4819 = vld [vmem:[%s4639 + $0x598] sm:$0xff]
    %v4820 = vld [vmem:[%s4639 + $0x5a0] sm:$0xff]
    %v4821 = vld [vmem:[%s4639 + $0x5a8] sm:$0xff]
    %v4822 = vld [vmem:[%s4639 + $0x5b0] sm:$0xff]
    %v4823 = vld [vmem:[%s4639 + $0x5b8] sm:$0xff]
    %v4824 = vld [vmem:[%s4639 + $0x5c0] sm:$0xff]
    %v4825 = vld [vmem:[%s4639 + $0x5c8] sm:$0xff]
    %v4826 = vld [vmem:[%s4639 + $0x5d0] sm:$0xff]
    %v4827 = vld [vmem:[%s4639 + $0x5d8] sm:$0xff]
    %v4828 = vld [vmem:[%s4639 + $0x5e0] sm:$0xff]
    %v4829 = vld [vmem:[%s4639 + $0x5e8] sm:$0xff]
    %v4830 = vld [vmem:[%s4639 + $0x5f0] sm:$0xff]
    %v4831 = vld [vmem:[%s4639 + $0x5f8] sm:$0xff]
    %v4832 = vrot.slane %v783, 1
    %v4833 = vrot.slane %v786, 1
    %v4834 = vrot.slane %v789, 1
    %v4835 = vrot.slane %v792, 1
    %v4836 = vrot.slane %v795, 1
    %v4837 = vrot.slane %v798, 1
    %v5036 = vunpack.c.l.b16 %v4640
    %v5037 = vunpack.c.h.b16 %v4640
    %v5038 = vunpack.c.l.b16 %v4641
    %v5039 = vunpack.c.h.b16 %v4641
    %v5040 = vunpack.c.l.b16 %v4642
    %v5041 = vunpack.c.h.b16 %v4642
    %v5042 = vunpack.c.l.b16 %v4643
    %v5043 = vunpack.c.h.b16 %v4643
    %v5044 = vunpack.c.l.b16 %v4644
    %v5045 = vunpack.c.h.b16 %v4644
    %v5046 = vunpack.c.l.b16 %v4645
    %v5047 = vunpack.c.h.b16 %v4645
    %v5048 = vunpack.c.l.b16 %v4646
    %v5049 = vunpack.c.h.b16 %v4646
    %v5050 = vunpack.c.l.b16 %v4647
    %v5051 = vunpack.c.h.b16 %v4647
    %v5052 = vunpack.c.l.b16 %v4648
    %v5053 = vunpack.c.h.b16 %v4648
    %v5054 = vunpack.c.l.b16 %v4649
    %v5055 = vunpack.c.h.b16 %v4649
    %v5056 = vunpack.c.l.b16 %v4650
    %v5057 = vunpack.c.h.b16 %v4650
    %v5058 = vunpack.c.l.b16 %v4651
    %v5059 = vunpack.c.h.b16 %v4651
    %v5060 = vunpack.c.l.b16 %v4652
    %v5061 = vunpack.c.h.b16 %v4652
    %v5062 = vunpack.c.l.b16 %v4653
    %v5063 = vunpack.c.h.b16 %v4653
    %v5064 = vunpack.c.l.b16 %v4654
    %v5065 = vunpack.c.h.b16 %v4654
    %v5066 = vunpack.c.l.b16 %v4655
    %v5067 = vunpack.c.h.b16 %v4655
    %v5068 = vunpack.c.l.b16 %v4656
    %v5069 = vunpack.c.h.b16 %v4656
    %v5070 = vunpack.c.l.b16 %v4657
    %v5071 = vunpack.c.h.b16 %v4657
    %v5072 = vunpack.c.l.b16 %v4658
    %v5073 = vunpack.c.h.b16 %v4658
    %v5074 = vunpack.c.l.b16 %v4659
    %v5075 = vunpack.c.h.b16 %v4659
    %v5076 = vunpack.c.l.b16 %v4660
    %v5077 = vunpack.c.h.b16 %v4660
    %v5078 = vunpack.c.l.b16 %v4661
    %v5079 = vunpack.c.h.b16 %v4661
    %v5080 = vunpack.c.l.b16 %v4662
    %v5081 = vunpack.c.h.b16 %v4662
    %v5082 = vunpack.c.l.b16 %v4663
    %v5083 = vunpack.c.h.b16 %v4663
    %v5084 = vunpack.c.l.b16 %v4664
    %v5085 = vunpack.c.h.b16 %v4664
    %v5086 = vunpack.c.l.b16 %v4665
    %v5087 = vunpack.c.h.b16 %v4665
    %v5088 = vunpack.c.l.b16 %v4666
    %v5089 = vunpack.c.h.b16 %v4666
    %v5090 = vunpack.c.l.b16 %v4667
    %v5091 = vunpack.c.h.b16 %v4667
    %v5092 = vunpack.c.l.b16 %v4668
    %v5093 = vunpack.c.h.b16 %v4668
    %v5094 = vunpack.c.l.b16 %v4669
    %v5095 = vunpack.c.h.b16 %v4669
    %v5096 = vunpack.c.l.b16 %v4670
    %v5097 = vunpack.c.h.b16 %v4670
    %v5098 = vunpack.c.l.b16 %v4671
    %v5099 = vunpack.c.h.b16 %v4671
    %v5100 = vunpack.c.l.b16 %v4672
    %v5101 = vunpack.c.h.b16 %v4672
    %v5102 = vunpack.c.l.b16 %v4673
    %v5103 = vunpack.c.h.b16 %v4673
    %v5104 = vunpack.c.l.b16 %v4674
    %v5105 = vunpack.c.h.b16 %v4674
    %v5106 = vunpack.c.l.b16 %v4675
    %v5107 = vunpack.c.h.b16 %v4675
    %v5108 = vunpack.c.l.b16 %v4676
    %v5109 = vunpack.c.h.b16 %v4676
    %v5110 = vunpack.c.l.b16 %v4677
    %v5111 = vunpack.c.h.b16 %v4677
    %v5112 = vunpack.c.l.b16 %v4678
    %v5113 = vunpack.c.h.b16 %v4678
    %v5114 = vunpack.c.l.b16 %v4679
    %v5115 = vunpack.c.h.b16 %v4679
    %v5116 = vunpack.c.l.b16 %v4680
    %v5117 = vunpack.c.h.b16 %v4680
    %v5118 = vunpack.c.l.b16 %v4681
    %v5119 = vunpack.c.h.b16 %v4681
    %v5120 = vunpack.c.l.b16 %v4682
    %v5121 = vunpack.c.h.b16 %v4682
    %v5122 = vunpack.c.l.b16 %v4683
    %v5123 = vunpack.c.h.b16 %v4683
    %v5124 = vunpack.c.l.b16 %v4684
    %v5125 = vunpack.c.h.b16 %v4684
    %v5126 = vunpack.c.l.b16 %v4685
    %v5127 = vunpack.c.h.b16 %v4685
    %v5128 = vunpack.c.l.b16 %v4686
    %v5129 = vunpack.c.h.b16 %v4686
    %v5130 = vunpack.c.l.b16 %v4687
    %v5131 = vunpack.c.h.b16 %v4687
    %v5132 = vunpack.c.l.b16 %v4688
    %v5133 = vunpack.c.h.b16 %v4688
    %v5134 = vunpack.c.l.b16 %v4689
    %v5135 = vunpack.c.h.b16 %v4689
    %v5136 = vunpack.c.l.b16 %v4690
    %v5137 = vunpack.c.h.b16 %v4690
    %v5138 = vunpack.c.l.b16 %v4691
    %v5139 = vunpack.c.h.b16 %v4691
    %v5140 = vunpack.c.l.b16 %v4692
    %v5141 = vunpack.c.h.b16 %v4692
    %v5142 = vunpack.c.l.b16 %v4693
    %v5143 = vunpack.c.h.b16 %v4693
    %v5144 = vunpack.c.l.b16 %v4694
    %v5145 = vunpack.c.h.b16 %v4694
    %v5146 = vunpack.c.l.b16 %v4695
    %v5147 = vunpack.c.h.b16 %v4695
    %v5148 = vunpack.c.l.b16 %v4696
    %v5149 = vunpack.c.h.b16 %v4696
    %v5150 = vunpack.c.l.b16 %v4697
    %v5151 = vunpack.c.h.b16 %v4697
    %v5152 = vunpack.c.l.b16 %v4698
    %v5153 = vunpack.c.h.b16 %v4698
    %v5154 = vunpack.c.l.b16 %v4699
    %v5155 = vunpack.c.h.b16 %v4699
    %v5156 = vunpack.c.l.b16 %v4700
    %v5157 = vunpack.c.h.b16 %v4700
    %v5158 = vunpack.c.l.b16 %v4701
    %v5159 = vunpack.c.h.b16 %v4701
    %v5160 = vunpack.c.l.b16 %v4702
    %v5161 = vunpack.c.h.b16 %v4702
    %v5162 = vunpack.c.l.b16 %v4703
    %v5163 = vunpack.c.h.b16 %v4703
    %v5164 = vunpack.c.l.b16 %v4704
    %v5165 = vunpack.c.h.b16 %v4704
    %v5166 = vunpack.c.l.b16 %v4705
    %v5167 = vunpack.c.h.b16 %v4705
    %v5168 = vunpack.c.l.b16 %v4706
    %v5169 = vunpack.c.h.b16 %v4706
    %v5170 = vunpack.c.l.b16 %v4707
    %v5171 = vunpack.c.h.b16 %v4707
    %v5172 = vunpack.c.l.b16 %v4708
    %v5173 = vunpack.c.h.b16 %v4708
    %v5174 = vunpack.c.l.b16 %v4709
    %v5175 = vunpack.c.h.b16 %v4709
    %v5176 = vunpack.c.l.b16 %v4710
    %v5177 = vunpack.c.h.b16 %v4710
    %v5178 = vunpack.c.l.b16 %v4711
    %v5179 = vunpack.c.h.b16 %v4711
    %v5180 = vunpack.c.l.b16 %v4712
    %v5181 = vunpack.c.h.b16 %v4712
    %v5182 = vunpack.c.l.b16 %v4713
    %v5183 = vunpack.c.h.b16 %v4713
    %v5184 = vunpack.c.l.b16 %v4714
    %v5185 = vunpack.c.h.b16 %v4714
    %v5186 = vunpack.c.l.b16 %v4715
    %v5187 = vunpack.c.h.b16 %v4715
    %v5188 = vunpack.c.l.b16 %v4716
    %v5189 = vunpack.c.h.b16 %v4716
    %v5190 = vunpack.c.l.b16 %v4717
    %v5191 = vunpack.c.h.b16 %v4717
    %v5192 = vunpack.c.l.b16 %v4718
    %v5193 = vunpack.c.h.b16 %v4718
    %v5194 = vunpack.c.l.b16 %v4719
    %v5195 = vunpack.c.h.b16 %v4719
    %v5196 = vunpack.c.l.b16 %v4720
    %v5197 = vunpack.c.h.b16 %v4720
    %v5198 = vunpack.c.l.b16 %v4721
    %v5199 = vunpack.c.h.b16 %v4721
    %v5200 = vunpack.c.l.b16 %v4722
    %v5201 = vunpack.c.h.b16 %v4722
    %v5202 = vunpack.c.l.b16 %v4723
    %v5203 = vunpack.c.h.b16 %v4723
    %v5204 = vunpack.c.l.b16 %v4724
    %v5205 = vunpack.c.h.b16 %v4724
    %v5206 = vunpack.c.l.b16 %v4725
    %v5207 = vunpack.c.h.b16 %v4725
    %v5208 = vunpack.c.l.b16 %v4726
    %v5209 = vunpack.c.h.b16 %v4726
    %v5210 = vunpack.c.l.b16 %v4727
    %v5211 = vunpack.c.h.b16 %v4727
    %v5212 = vunpack.c.l.b16 %v4728
    %v5213 = vunpack.c.h.b16 %v4728
    %v5214 = vunpack.c.l.b16 %v4729
    %v5215 = vunpack.c.h.b16 %v4729
    %v5216 = vunpack.c.l.b16 %v4730
    %v5217 = vunpack.c.h.b16 %v4730
    %v5218 = vunpack.c.l.b16 %v4731
    %v5219 = vunpack.c.h.b16 %v4731
    %v5220 = vunpack.c.l.b16 %v4732
    %v5221 = vunpack.c.h.b16 %v4732
    %v5222 = vunpack.c.l.b16 %v4733
    %v5223 = vunpack.c.h.b16 %v4733
    %v5224 = vunpack.c.l.b16 %v4734
    %v5225 = vunpack.c.h.b16 %v4734
    %v5226 = vunpack.c.l.b16 %v4735
    %v5227 = vunpack.c.h.b16 %v4735
    %v5228 = vunpack.c.l.b16 %v4736
    %v5229 = vunpack.c.h.b16 %v4736
    %v5230 = vunpack.c.l.b16 %v4737
    %v5231 = vunpack.c.h.b16 %v4737
    %v5232 = vunpack.c.l.b16 %v4738
    %v5233 = vunpack.c.h.b16 %v4738
    %v5234 = vunpack.c.l.b16 %v4739
    %v5235 = vunpack.c.h.b16 %v4739
    %v5236 = vunpack.c.l.b16 %v4740
    %v5237 = vunpack.c.h.b16 %v4740
    %v5238 = vunpack.c.l.b16 %v4741
    %v5239 = vunpack.c.h.b16 %v4741
    %v5240 = vunpack.c.l.b16 %v4742
    %v5241 = vunpack.c.h.b16 %v4742
    %v5242 = vunpack.c.l.b16 %v4743
    %v5243 = vunpack.c.h.b16 %v4743
    %v5244 = vunpack.c.l.b16 %v4744
    %v5245 = vunpack.c.h.b16 %v4744
    %v5246 = vunpack.c.l.b16 %v4745
    %v5247 = vunpack.c.h.b16 %v4745
    %v5248 = vunpack.c.l.b16 %v4746
    %v5249 = vunpack.c.h.b16 %v4746
    %v5250 = vunpack.c.l.b16 %v4747
    %v5251 = vunpack.c.h.b16 %v4747
    %v5252 = vunpack.c.l.b16 %v4748
    %v5253 = vunpack.c.h.b16 %v4748
    %v5254 = vunpack.c.l.b16 %v4749
    %v5255 = vunpack.c.h.b16 %v4749
    %v5256 = vunpack.c.l.b16 %v4750
    %v5257 = vunpack.c.h.b16 %v4750
    %v5258 = vunpack.c.l.b16 %v4751
    %v5259 = vunpack.c.h.b16 %v4751
    %v5260 = vunpack.c.l.b16 %v4752
    %v5261 = vunpack.c.h.b16 %v4752
    %v5262 = vunpack.c.l.b16 %v4753
    %v5263 = vunpack.c.h.b16 %v4753
    %v5264 = vunpack.c.l.b16 %v4754
    %v5265 = vunpack.c.h.b16 %v4754
    %v5266 = vunpack.c.l.b16 %v4755
    %v5267 = vunpack.c.h.b16 %v4755
    %v5268 = vunpack.c.l.b16 %v4756
    %v5269 = vunpack.c.h.b16 %v4756
    %v5270 = vunpack.c.l.b16 %v4757
    %v5271 = vunpack.c.h.b16 %v4757
    %v5272 = vunpack.c.l.b16 %v4758
    %v5273 = vunpack.c.h.b16 %v4758
    %v5274 = vunpack.c.l.b16 %v4759
    %v5275 = vunpack.c.h.b16 %v4759
    %v5276 = vunpack.c.l.b16 %v4760
    %v5277 = vunpack.c.h.b16 %v4760
    %v5278 = vunpack.c.l.b16 %v4761
    %v5279 = vunpack.c.h.b16 %v4761
    %v5280 = vunpack.c.l.b16 %v4762
    %v5281 = vunpack.c.h.b16 %v4762
    %v5282 = vunpack.c.l.b16 %v4763
    %v5283 = vunpack.c.h.b16 %v4763
    %v5284 = vunpack.c.l.b16 %v4764
    %v5285 = vunpack.c.h.b16 %v4764
    %v5286 = vunpack.c.l.b16 %v4765
    %v5287 = vunpack.c.h.b16 %v4765
    %v5288 = vunpack.c.l.b16 %v4766
    %v5289 = vunpack.c.h.b16 %v4766
    %v5290 = vunpack.c.l.b16 %v4767
    %v5291 = vunpack.c.h.b16 %v4767
    %v5292 = vunpack.c.l.b16 %v4768
    %v5293 = vunpack.c.h.b16 %v4768
    %v5294 = vunpack.c.l.b16 %v4769
    %v5295 = vunpack.c.h.b16 %v4769
    %v5296 = vunpack.c.l.b16 %v4770
    %v5297 = vunpack.c.h.b16 %v4770
    %v5298 = vunpack.c.l.b16 %v4771
    %v5299 = vunpack.c.h.b16 %v4771
    %v5300 = vunpack.c.l.b16 %v4772
    %v5301 = vunpack.c.h.b16 %v4772
    %v5302 = vunpack.c.l.b16 %v4773
    %v5303 = vunpack.c.h.b16 %v4773
    %v5304 = vunpack.c.l.b16 %v4774
    %v5305 = vunpack.c.h.b16 %v4774
    %v5306 = vunpack.c.l.b16 %v4775
    %v5307 = vunpack.c.h.b16 %v4775
    %v5308 = vunpack.c.l.b16 %v4776
    %v5309 = vunpack.c.h.b16 %v4776
    %v5310 = vunpack.c.l.b16 %v4777
    %v5311 = vunpack.c.h.b16 %v4777
    %v5312 = vunpack.c.l.b16 %v4778
    %v5313 = vunpack.c.h.b16 %v4778
    %v5314 = vunpack.c.l.b16 %v4779
    %v5315 = vunpack.c.h.b16 %v4779
    %v5316 = vunpack.c.l.b16 %v4780
    %v5317 = vunpack.c.h.b16 %v4780
    %v5318 = vunpack.c.l.b16 %v4781
    %v5319 = vunpack.c.h.b16 %v4781
    %v5320 = vunpack.c.l.b16 %v4782
    %v5321 = vunpack.c.h.b16 %v4782
    %v5322 = vunpack.c.l.b16 %v4783
    %v5323 = vunpack.c.h.b16 %v4783
    %v5324 = vunpack.c.l.b16 %v4784
    %v5325 = vunpack.c.h.b16 %v4784
    %v5326 = vunpack.c.l.b16 %v4785
    %v5327 = vunpack.c.h.b16 %v4785
    %v5328 = vunpack.c.l.b16 %v4786
    %v5329 = vunpack.c.h.b16 %v4786
    %v5330 = vunpack.c.l.b16 %v4787
    %v5331 = vunpack.c.h.b16 %v4787
    %v5332 = vunpack.c.l.b16 %v4788
    %v5333 = vunpack.c.h.b16 %v4788
    %v5334 = vunpack.c.l.b16 %v4789
    %v5335 = vunpack.c.h.b16 %v4789
    %v5336 = vunpack.c.l.b16 %v4790
    %v5337 = vunpack.c.h.b16 %v4790
    %v5338 = vunpack.c.l.b16 %v4791
    %v5339 = vunpack.c.h.b16 %v4791
    %v5340 = vunpack.c.l.b16 %v4792
    %v5341 = vunpack.c.h.b16 %v4792
    %v5342 = vunpack.c.l.b16 %v4793
    %v5343 = vunpack.c.h.b16 %v4793
    %v5344 = vunpack.c.l.b16 %v4794
    %v5345 = vunpack.c.h.b16 %v4794
    %v5346 = vunpack.c.l.b16 %v4795
    %v5347 = vunpack.c.h.b16 %v4795
    %v5348 = vunpack.c.l.b16 %v4796
    %v5349 = vunpack.c.h.b16 %v4796
    %v5350 = vunpack.c.l.b16 %v4797
    %v5351 = vunpack.c.h.b16 %v4797
    %v5352 = vunpack.c.l.b16 %v4798
    %v5353 = vunpack.c.h.b16 %v4798
    %v5354 = vunpack.c.l.b16 %v4799
    %v5355 = vunpack.c.h.b16 %v4799
    %v5356 = vunpack.c.l.b16 %v4800
    %v5357 = vunpack.c.h.b16 %v4800
    %v5358 = vunpack.c.l.b16 %v4801
    %v5359 = vunpack.c.h.b16 %v4801
    %v5360 = vunpack.c.l.b16 %v4802
    %v5361 = vunpack.c.h.b16 %v4802
    %v5362 = vunpack.c.l.b16 %v4803
    %v5363 = vunpack.c.h.b16 %v4803
    %v5364 = vunpack.c.l.b16 %v4804
    %v5365 = vunpack.c.h.b16 %v4804
    %v5366 = vunpack.c.l.b16 %v4805
    %v5367 = vunpack.c.h.b16 %v4805
    %v5368 = vunpack.c.l.b16 %v4806
    %v5369 = vunpack.c.h.b16 %v4806
    %v5370 = vunpack.c.l.b16 %v4807
    %v5371 = vunpack.c.h.b16 %v4807
    %v5372 = vunpack.c.l.b16 %v4808
    %v5373 = vunpack.c.h.b16 %v4808
    %v5374 = vunpack.c.l.b16 %v4809
    %v5375 = vunpack.c.h.b16 %v4809
    %v5376 = vunpack.c.l.b16 %v4810
    %v5377 = vunpack.c.h.b16 %v4810
    %v5378 = vunpack.c.l.b16 %v4811
    %v5379 = vunpack.c.h.b16 %v4811
    %v5380 = vunpack.c.l.b16 %v4812
    %v5381 = vunpack.c.h.b16 %v4812
    %v5382 = vunpack.c.l.b16 %v4813
    %v5383 = vunpack.c.h.b16 %v4813
    %v5384 = vunpack.c.l.b16 %v4814
    %v5385 = vunpack.c.h.b16 %v4814
    %v5386 = vunpack.c.l.b16 %v4815
    %v5387 = vunpack.c.h.b16 %v4815
    %v5388 = vunpack.c.l.b16 %v4816
    %v5389 = vunpack.c.h.b16 %v4816
    %v5390 = vunpack.c.l.b16 %v4817
    %v5391 = vunpack.c.h.b16 %v4817
    %v5392 = vunpack.c.l.b16 %v4818
    %v5393 = vunpack.c.h.b16 %v4818
    %v5394 = vunpack.c.l.b16 %v4819
    %v5395 = vunpack.c.h.b16 %v4819
    %v5396 = vunpack.c.l.b16 %v4820
    %v5397 = vunpack.c.h.b16 %v4820
    %v5398 = vunpack.c.l.b16 %v4821
    %v5399 = vunpack.c.h.b16 %v4821
    %v5400 = vunpack.c.l.b16 %v4822
    %v5401 = vunpack.c.h.b16 %v4822
    %v5402 = vunpack.c.l.b16 %v4823
    %v5403 = vunpack.c.h.b16 %v4823
    %v5404 = vunpack.c.l.b16 %v4824
    %v5405 = vunpack.c.h.b16 %v4824
    %v5406 = vunpack.c.l.b16 %v4825
    %v5407 = vunpack.c.h.b16 %v4825
    %v5408 = vunpack.c.l.b16 %v4826
    %v5409 = vunpack.c.h.b16 %v4826
    %v5410 = vunpack.c.l.b16 %v4827
    %v5411 = vunpack.c.h.b16 %v4827
    %v5412 = vunpack.c.l.b16 %v4828
    %v5413 = vunpack.c.h.b16 %v4828
    %v5414 = vunpack.c.l.b16 %v4829
    %v5415 = vunpack.c.h.b16 %v4829
    %v5416 = vunpack.c.l.b16 %v4830
    %v5417 = vunpack.c.h.b16 %v4830
    %v5418 = vunpack.c.l.b16 %v4831
    %v5419 = vunpack.c.h.b16 %v4831
    %v5420 = vpack.c.b16 %v5040, %v5036
    %v5421 = vpack.c.b16 %v5041, %v5037
    %v5422 = vpack.c.b16 %v5042, %v5038
    %v5423 = vpack.c.b16 %v5043, %v5039
    %v5424 = vpack.c.b16 %v5048, %v5044
    %v5425 = vpack.c.b16 %v5049, %v5045
    %v5426 = vpack.c.b16 %v5050, %v5046
    %v5427 = vpack.c.b16 %v5051, %v5047
    %v5428 = vpack.c.b16 %v5056, %v5052
    %v5429 = vpack.c.b16 %v5057, %v5053
    %v5430 = vpack.c.b16 %v5058, %v5054
    %v5431 = vpack.c.b16 %v5059, %v5055
    %v5432 = vpack.c.b16 %v5064, %v5060
    %v5433 = vpack.c.b16 %v5065, %v5061
    %v5434 = vpack.c.b16 %v5066, %v5062
    %v5435 = vpack.c.b16 %v5067, %v5063
    %v5436 = vpack.c.b16 %v5072, %v5068
    %v5437 = vpack.c.b16 %v5073, %v5069
    %v5438 = vpack.c.b16 %v5074, %v5070
    %v5439 = vpack.c.b16 %v5075, %v5071
    %v5440 = vpack.c.b16 %v5080, %v5076
    %v5441 = vpack.c.b16 %v5081, %v5077
    %v5442 = vpack.c.b16 %v5082, %v5078
    %v5443 = vpack.c.b16 %v5083, %v5079
    %v5444 = vpack.c.b16 %v5088, %v5084
    %v5445 = vpack.c.b16 %v5089, %v5085
    %v5446 = vpack.c.b16 %v5090, %v5086
    %v5447 = vpack.c.b16 %v5091, %v5087
    %v5448 = vpack.c.b16 %v5096, %v5092
    %v5449 = vpack.c.b16 %v5097, %v5093
    %v5450 = vpack.c.b16 %v5098, %v5094
    %v5451 = vpack.c.b16 %v5099, %v5095
    %v5452 = vpack.c.b16 %v5104, %v5100
    %v5453 = vpack.c.b16 %v5105, %v5101
    %v5454 = vpack.c.b16 %v5106, %v5102
    %v5455 = vpack.c.b16 %v5107, %v5103
    %v5456 = vpack.c.b16 %v5112, %v5108
    %v5457 = vpack.c.b16 %v5113, %v5109
    %v5458 = vpack.c.b16 %v5114, %v5110
    %v5459 = vpack.c.b16 %v5115, %v5111
    %v5460 = vpack.c.b16 %v5120, %v5116
    %v5461 = vpack.c.b16 %v5121, %v5117
    %v5462 = vpack.c.b16 %v5122, %v5118
    %v5463 = vpack.c.b16 %v5123, %v5119
    %v5464 = vpack.c.b16 %v5128, %v5124
    %v5465 = vpack.c.b16 %v5129, %v5125
    %v5466 = vpack.c.b16 %v5130, %v5126
    %v5467 = vpack.c.b16 %v5131, %v5127
    %v5468 = vpack.c.b16 %v5136, %v5132
    %v5469 = vpack.c.b16 %v5137, %v5133
    %v5470 = vpack.c.b16 %v5138, %v5134
    %v5471 = vpack.c.b16 %v5139, %v5135
    %v5472 = vpack.c.b16 %v5144, %v5140
    %v5473 = vpack.c.b16 %v5145, %v5141
    %v5474 = vpack.c.b16 %v5146, %v5142
    %v5475 = vpack.c.b16 %v5147, %v5143
    %v5476 = vpack.c.b16 %v5152, %v5148
    %v5477 = vpack.c.b16 %v5153, %v5149
    %v5478 = vpack.c.b16 %v5154, %v5150
    %v5479 = vpack.c.b16 %v5155, %v5151
    %v5480 = vpack.c.b16 %v5160, %v5156
    %v5481 = vpack.c.b16 %v5161, %v5157
    %v5482 = vpack.c.b16 %v5162, %v5158
    %v5483 = vpack.c.b16 %v5163, %v5159
    %v5484 = vpack.c.b16 %v5168, %v5164
    %v5485 = vpack.c.b16 %v5169, %v5165
    %v5486 = vpack.c.b16 %v5170, %v5166
    %v5487 = vpack.c.b16 %v5171, %v5167
    %v5488 = vpack.c.b16 %v5176, %v5172
    %v5489 = vpack.c.b16 %v5177, %v5173
    %v5490 = vpack.c.b16 %v5178, %v5174
    %v5491 = vpack.c.b16 %v5179, %v5175
    %v5492 = vpack.c.b16 %v5184, %v5180
    %v5493 = vpack.c.b16 %v5185, %v5181
    %v5494 = vpack.c.b16 %v5186, %v5182
    %v5495 = vpack.c.b16 %v5187, %v5183
    %v5496 = vpack.c.b16 %v5192, %v5188
    %v5497 = vpack.c.b16 %v5193, %v5189
    %v5498 = vpack.c.b16 %v5194, %v5190
    %v5499 = vpack.c.b16 %v5195, %v5191
    %v5500 = vpack.c.b16 %v5200, %v5196
    %v5501 = vpack.c.b16 %v5201, %v5197
    %v5502 = vpack.c.b16 %v5202, %v5198
    %v5503 = vpack.c.b16 %v5203, %v5199
    %v5504 = vpack.c.b16 %v5208, %v5204
    %v5505 = vpack.c.b16 %v5209, %v5205
    %v5506 = vpack.c.b16 %v5210, %v5206
    %v5507 = vpack.c.b16 %v5211, %v5207
    %v5508 = vpack.c.b16 %v5216, %v5212
    %v5509 = vpack.c.b16 %v5217, %v5213
    %v5510 = vpack.c.b16 %v5218, %v5214
    %v5511 = vpack.c.b16 %v5219, %v5215
    %v5512 = vpack.c.b16 %v5224, %v5220
    %v5513 = vpack.c.b16 %v5225, %v5221
    %v5514 = vpack.c.b16 %v5226, %v5222
    %v5515 = vpack.c.b16 %v5227, %v5223
    %v5516 = vpack.c.b16 %v5232, %v5228
    %v5517 = vpack.c.b16 %v5233, %v5229
    %v5518 = vpack.c.b16 %v5234, %v5230
    %v5519 = vpack.c.b16 %v5235, %v5231
    %v5520 = vpack.c.b16 %v5240, %v5236
    %v5521 = vpack.c.b16 %v5241, %v5237
    %v5522 = vpack.c.b16 %v5242, %v5238
    %v5523 = vpack.c.b16 %v5243, %v5239
    %v5524 = vpack.c.b16 %v5248, %v5244
    %v5525 = vpack.c.b16 %v5249, %v5245
    %v5526 = vpack.c.b16 %v5250, %v5246
    %v5527 = vpack.c.b16 %v5251, %v5247
    %v5528 = vpack.c.b16 %v5256, %v5252
    %v5529 = vpack.c.b16 %v5257, %v5253
    %v5530 = vpack.c.b16 %v5258, %v5254
    %v5531 = vpack.c.b16 %v5259, %v5255
    %v5532 = vpack.c.b16 %v5264, %v5260
    %v5533 = vpack.c.b16 %v5265, %v5261
    %v5534 = vpack.c.b16 %v5266, %v5262
    %v5535 = vpack.c.b16 %v5267, %v5263
    %v5536 = vpack.c.b16 %v5272, %v5268
    %v5537 = vpack.c.b16 %v5273, %v5269
    %v5538 = vpack.c.b16 %v5274, %v5270
    %v5539 = vpack.c.b16 %v5275, %v5271
    %v5540 = vpack.c.b16 %v5280, %v5276
    %v5541 = vpack.c.b16 %v5281, %v5277
    %v5542 = vpack.c.b16 %v5282, %v5278
    %v5543 = vpack.c.b16 %v5283, %v5279
    %v5544 = vpack.c.b16 %v5288, %v5284
    %v5545 = vpack.c.b16 %v5289, %v5285
    %v5546 = vpack.c.b16 %v5290, %v5286
    %v5547 = vpack.c.b16 %v5291, %v5287
    %v5548 = vpack.c.b16 %v5296, %v5292
    %v5549 = vpack.c.b16 %v5297, %v5293
    %v5550 = vpack.c.b16 %v5298, %v5294
    %v5551 = vpack.c.b16 %v5299, %v5295
    %v5552 = vpack.c.b16 %v5304, %v5300
    %v5553 = vpack.c.b16 %v5305, %v5301
    %v5554 = vpack.c.b16 %v5306, %v5302
    %v5555 = vpack.c.b16 %v5307, %v5303
    %v5556 = vpack.c.b16 %v5312, %v5308
    %v5557 = vpack.c.b16 %v5313, %v5309
    %v5558 = vpack.c.b16 %v5314, %v5310
    %v5559 = vpack.c.b16 %v5315, %v5311
    %v5560 = vpack.c.b16 %v5320, %v5316
    %v5561 = vpack.c.b16 %v5321, %v5317
    %v5562 = vpack.c.b16 %v5322, %v5318
    %v5563 = vpack.c.b16 %v5323, %v5319
    %v5564 = vpack.c.b16 %v5328, %v5324
    %v5565 = vpack.c.b16 %v5329, %v5325
    %v5566 = vpack.c.b16 %v5330, %v5326
    %v5567 = vpack.c.b16 %v5331, %v5327
    %v5568 = vpack.c.b16 %v5336, %v5332
    %v5569 = vpack.c.b16 %v5337, %v5333
    %v5570 = vpack.c.b16 %v5338, %v5334
    %v5571 = vpack.c.b16 %v5339, %v5335
    %v5572 = vpack.c.b16 %v5344, %v5340
    %v5573 = vpack.c.b16 %v5345, %v5341
    %v5574 = vpack.c.b16 %v5346, %v5342
    %v5575 = vpack.c.b16 %v5347, %v5343
    %v5576 = vpack.c.b16 %v5352, %v5348
    %v5577 = vpack.c.b16 %v5353, %v5349
    %v5578 = vpack.c.b16 %v5354, %v5350
    %v5579 = vpack.c.b16 %v5355, %v5351
    %v5580 = vpack.c.b16 %v5360, %v5356
    %v5581 = vpack.c.b16 %v5361, %v5357
    %v5582 = vpack.c.b16 %v5362, %v5358
    %v5583 = vpack.c.b16 %v5363, %v5359
    %v5584 = vpack.c.b16 %v5368, %v5364
    %v5585 = vpack.c.b16 %v5369, %v5365
    %v5586 = vpack.c.b16 %v5370, %v5366
    %v5587 = vpack.c.b16 %v5371, %v5367
    %v5588 = vpack.c.b16 %v5376, %v5372
    %v5589 = vpack.c.b16 %v5377, %v5373
    %v5590 = vpack.c.b16 %v5378, %v5374
    %v5591 = vpack.c.b16 %v5379, %v5375
    %v5592 = vpack.c.b16 %v5384, %v5380
    %v5593 = vpack.c.b16 %v5385, %v5381
    %v5594 = vpack.c.b16 %v5386, %v5382
    %v5595 = vpack.c.b16 %v5387, %v5383
    %v5596 = vpack.c.b16 %v5392, %v5388
    %v5597 = vpack.c.b16 %v5393, %v5389
    %v5598 = vpack.c.b16 %v5394, %v5390
    %v5599 = vpack.c.b16 %v5395, %v5391
    %v5600 = vpack.c.b16 %v5400, %v5396
    %v5601 = vpack.c.b16 %v5401, %v5397
    %v5602 = vpack.c.b16 %v5402, %v5398
    %v5603 = vpack.c.b16 %v5403, %v5399
    %v5604 = vpack.c.b16 %v5408, %v5404
    %v5605 = vpack.c.b16 %v5409, %v5405
    %v5606 = vpack.c.b16 %v5410, %v5406
    %v5607 = vpack.c.b16 %v5411, %v5407
    %v5608 = vpack.c.b16 %v5416, %v5412
    %v5609 = vpack.c.b16 %v5417, %v5413
    %v5610 = vpack.c.b16 %v5418, %v5414
    %v5611 = vpack.c.b16 %v5419, %v5415
    %5804 = vmatprep.subr.bf16.mxu0 %v5449
    %5805 = vmatpush1.bf16.msra.mxu0 %v5448
    %5806 = vmatprep.subr.bf16.mxu0 %v5445
    %5807 = vmatpush1.bf16.msra.mxu0 %v5444
    %5808 = vmatprep.subr.bf16.mxu0 %v5441
    %5809 = vmatpush1.bf16.msra.mxu0 %v5440
    %5810 = vmatprep.subr.bf16.mxu0 %v5437
    %5811 = vmatpush1.bf16.msra.mxu0 %v5436
    %5812 = vmatprep.subr.bf16.mxu0 %v5433
    %5813 = vmatpush1.bf16.msra.mxu0 %v5432
    %5814 = vmatprep.subr.bf16.mxu0 %v5429
    %5815 = vmatpush1.bf16.msra.mxu0 %v5428
    %5816 = vmatprep.subr.bf16.mxu0 %v5425
    %5817 = vmatpush1.bf16.msra.mxu0 %v5424
    %5818 = vmatprep.subr.bf16.mxu0 %v5421
    %5819 = vmatpush1.bf16.msra.mxu0 %v5420
    %5820 = vmatprep.subr.bf16.mxu0 %v5481
    %5821 = vmatpush2.bf16.msra.mxu0 %v5480
    %5822 = vmatprep.subr.bf16.mxu0 %v5477
    %5823 = vmatpush2.bf16.msra.mxu0 %v5476
    %5824 = vmatprep.subr.bf16.mxu0 %v5473
    %5825 = vmatpush2.bf16.msra.mxu0 %v5472
    %5826 = vmatprep.subr.bf16.mxu0 %v5469
    %5827 = vmatpush2.bf16.msra.mxu0 %v5468
    %5828 = vmatprep.subr.bf16.mxu0 %v5465
    %5829 = vmatpush2.bf16.msra.mxu0 %v5464
    %5830 = vmatprep.subr.bf16.mxu0 %v5461
    %5831 = vmatpush2.bf16.msra.mxu0 %v5460
    %5832 = vmatprep.subr.bf16.mxu0 %v5457
    %5833 = vmatpush2.bf16.msra.mxu0 %v5456
    %5834 = vmatprep.subr.bf16.mxu0 %v5453
    %5835 = vmatpush2.bf16.msra.mxu0 %v5452
    %5836 = vmatprep.mubr.bf16.mxu0 %v4833
    %5837 = vmatmul.mubr.bf16.gmra.mxu0 %v4832
    %v5838 = vpop.f32.mrf.mxu0
    %v5839 = vadd.f32 0.0, %v5838
    %v5840 = vpop.f32.mrf.mxu0
    %v5841 = vadd.f32 0.0, %v5840
    %v5842 = vpop.f32.mrf.mxu0
    %v5843 = vpop.f32.mrf.mxu0
    %5844 = vdwg.mxu0
    %5845 = vmatprep.subr.bf16.mxu0 %v5513
    %5846 = vmatpush1.bf16.msra.mxu0 %v5512
    %5847 = vmatprep.subr.bf16.mxu0 %v5509
    %5848 = vmatpush1.bf16.msra.mxu0 %v5508
    %5849 = vmatprep.subr.bf16.mxu0 %v5505
    %5850 = vmatpush1.bf16.msra.mxu0 %v5504
    %5851 = vmatprep.subr.bf16.mxu0 %v5501
    %5852 = vmatpush1.bf16.msra.mxu0 %v5500
    %5853 = vmatprep.subr.bf16.mxu0 %v5497
    %5854 = vmatpush1.bf16.msra.mxu0 %v5496
    %5855 = vmatprep.subr.bf16.mxu0 %v5493
    %5856 = vmatpush1.bf16.msra.mxu0 %v5492
    %5857 = vmatprep.subr.bf16.mxu0 %v5489
    %5858 = vmatpush1.bf16.msra.mxu0 %v5488
    %5859 = vmatprep.subr.bf16.mxu0 %v5485
    %5860 = vmatpush1.bf16.msra.mxu0 %v5484
    %5861 = vmatprep.subr.bf16.mxu0 %v5545
    %5862 = vmatpush2.bf16.msra.mxu0 %v5544
    %5863 = vmatprep.subr.bf16.mxu0 %v5541
    %5864 = vmatpush2.bf16.msra.mxu0 %v5540
    %5865 = vmatprep.subr.bf16.mxu0 %v5537
    %5866 = vmatpush2.bf16.msra.mxu0 %v5536
    %5867 = vmatprep.subr.bf16.mxu0 %v5533
    %5868 = vmatpush2.bf16.msra.mxu0 %v5532
    %5869 = vmatprep.subr.bf16.mxu0 %v5529
    %5870 = vmatpush2.bf16.msra.mxu0 %v5528
    %5871 = vmatprep.subr.bf16.mxu0 %v5525
    %5872 = vmatpush2.bf16.msra.mxu0 %v5524
    %5873 = vmatprep.subr.bf16.mxu0 %v5521
    %5874 = vmatpush2.bf16.msra.mxu0 %v5520
    %5875 = vmatprep.subr.bf16.mxu0 %v5517
    %5876 = vmatpush2.bf16.msra.mxu0 %v5516
    %5877 = vmatprep.mubr.bf16.mxu0 %v4835
    %5878 = vmatmul.mubr.bf16.gmra.mxu0 %v4834
    %v5879 = vpop.f32.mrf.mxu0
    %v5880 = vadd.f32 %v5839, %v5879
    %v5881 = vpop.f32.mrf.mxu0
    %v5882 = vadd.f32 %v5841, %v5881
    %v5883 = vpop.f32.mrf.mxu0
    %v5884 = vpop.f32.mrf.mxu0
    %5885 = vdwg.mxu0
    %5886 = vmatprep.subr.bf16.mxu0 %v5577
    %5887 = vmatpush1.bf16.msra.mxu0 %v5576
    %5888 = vmatprep.subr.bf16.mxu0 %v5573
    %5889 = vmatpush1.bf16.msra.mxu0 %v5572
    %5890 = vmatprep.subr.bf16.mxu0 %v5569
    %5891 = vmatpush1.bf16.msra.mxu0 %v5568
    %5892 = vmatprep.subr.bf16.mxu0 %v5565
    %5893 = vmatpush1.bf16.msra.mxu0 %v5564
    %5894 = vmatprep.subr.bf16.mxu0 %v5561
    %5895 = vmatpush1.bf16.msra.mxu0 %v5560
    %5896 = vmatprep.subr.bf16.mxu0 %v5557
    %5897 = vmatpush1.bf16.msra.mxu0 %v5556
    %5898 = vmatprep.subr.bf16.mxu0 %v5553
    %5899 = vmatpush1.bf16.msra.mxu0 %v5552
    %5900 = vmatprep.subr.bf16.mxu0 %v5549
    %5901 = vmatpush1.bf16.msra.mxu0 %v5548
    %5902 = vmatprep.subr.bf16.mxu0 %v5609
    %5903 = vmatpush2.bf16.msra.mxu0 %v5608
    %5904 = vmatprep.subr.bf16.mxu0 %v5605
    %5905 = vmatpush2.bf16.msra.mxu0 %v5604
    %5906 = vmatprep.subr.bf16.mxu0 %v5601
    %5907 = vmatpush2.bf16.msra.mxu0 %v5600
    %5908 = vmatprep.subr.bf16.mxu0 %v5597
    %5909 = vmatpush2.bf16.msra.mxu0 %v5596
    %5910 = vmatprep.subr.bf16.mxu0 %v5593
    %5911 = vmatpush2.bf16.msra.mxu0 %v5592
    %5912 = vmatprep.subr.bf16.mxu0 %v5589
    %5913 = vmatpush2.bf16.msra.mxu0 %v5588
    %5914 = vmatprep.subr.bf16.mxu0 %v5585
    %5915 = vmatpush2.bf16.msra.mxu0 %v5584
    %5916 = vmatprep.subr.bf16.mxu0 %v5581
    %5917 = vmatpush2.bf16.msra.mxu0 %v5580
    %5918 = vmatprep.mubr.bf16.mxu0 %v4837
    %5919 = vmatmul.mubr.bf16.gmra.mxu0 %v4836
    %v5920 = vpop.f32.mrf.mxu0
    %v5921 = vadd.f32 %v5880, %v5920
    %v5922 = vpop.f32.mrf.mxu0
    %v5923 = vadd.f32 %v5882, %v5922
    %v5924 = vpop.f32.mrf.mxu0
    %v5925 = vpop.f32.mrf.mxu0
    %5926 = vdwg.mxu0
    %5927 = vmatprep.subr.bf16.mxu0 %v5451
    %5928 = vmatpush1.bf16.msra.mxu0 %v5450
    %5929 = vmatprep.subr.bf16.mxu0 %v5447
    %5930 = vmatpush1.bf16.msra.mxu0 %v5446
    %5931 = vmatprep.subr.bf16.mxu0 %v5443
    %5932 = vmatpush1.bf16.msra.mxu0 %v5442
    %5933 = vmatprep.subr.bf16.mxu0 %v5439
    %5934 = vmatpush1.bf16.msra.mxu0 %v5438
    %5935 = vmatprep.subr.bf16.mxu0 %v5435
    %5936 = vmatpush1.bf16.msra.mxu0 %v5434
    %5937 = vmatprep.subr.bf16.mxu0 %v5431
    %5938 = vmatpush1.bf16.msra.mxu0 %v5430
    %5939 = vmatprep.subr.bf16.mxu0 %v5427
    %5940 = vmatpush1.bf16.msra.mxu0 %v5426
    %5941 = vmatprep.subr.bf16.mxu0 %v5423
    %5942 = vmatpush1.bf16.msra.mxu0 %v5422
    %5943 = vmatprep.subr.bf16.mxu0 %v5483
    %5944 = vmatpush2.bf16.msra.mxu0 %v5482
    %5945 = vmatprep.subr.bf16.mxu0 %v5479
    %5946 = vmatpush2.bf16.msra.mxu0 %v5478
    %5947 = vmatprep.subr.bf16.mxu0 %v5475
    %5948 = vmatpush2.bf16.msra.mxu0 %v5474
    %5949 = vmatprep.subr.bf16.mxu0 %v5471
    %5950 = vmatpush2.bf16.msra.mxu0 %v5470
    %5951 = vmatprep.subr.bf16.mxu0 %v5467
    %5952 = vmatpush2.bf16.msra.mxu0 %v5466
    %5953 = vmatprep.subr.bf16.mxu0 %v5463
    %5954 = vmatpush2.bf16.msra.mxu0 %v5462
    %5955 = vmatprep.subr.bf16.mxu0 %v5459
    %5956 = vmatpush2.bf16.msra.mxu0 %v5458
    %5957 = vmatprep.subr.bf16.mxu0 %v5455
    %5958 = vmatpush2.bf16.msra.mxu0 %v5454
    %5959 = vmatprep.mubr.bf16.mxu0 %v4833
    %5960 = vmatmul.mubr.bf16.gmra.mxu0 %v4832
    %v5961 = vpop.f32.mrf.mxu0
    %v5962 = vadd.f32 0.0, %v5961
    %v5963 = vpop.f32.mrf.mxu0
    %v5964 = vadd.f32 0.0, %v5963
    %v5965 = vpop.f32.mrf.mxu0
    %v5966 = vpop.f32.mrf.mxu0
    %5967 = vdwg.mxu0
    %5968 = vmatprep.subr.bf16.mxu0 %v5515
    %5969 = vmatpush1.bf16.msra.mxu0 %v5514
    %5970 = vmatprep.subr.bf16.mxu0 %v5511
    %5971 = vmatpush1.bf16.msra.mxu0 %v5510
    %5972 = vmatprep.subr.bf16.mxu0 %v5507
    %5973 = vmatpush1.bf16.msra.mxu0 %v5506
    %5974 = vmatprep.subr.bf16.mxu0 %v5503
    %5975 = vmatpush1.bf16.msra.mxu0 %v5502
    %5976 = vmatprep.subr.bf16.mxu0 %v5499
    %5977 = vmatpush1.bf16.msra.mxu0 %v5498
    %5978 = vmatprep.subr.bf16.mxu0 %v5495
    %5979 = vmatpush1.bf16.msra.mxu0 %v5494
    %5980 = vmatprep.subr.bf16.mxu0 %v5491
    %5981 = vmatpush1.bf16.msra.mxu0 %v5490
    %5982 = vmatprep.subr.bf16.mxu0 %v5487
    %5983 = vmatpush1.bf16.msra.mxu0 %v5486
    %5984 = vmatprep.subr.bf16.mxu0 %v5547
    %5985 = vmatpush2.bf16.msra.mxu0 %v5546
    %5986 = vmatprep.subr.bf16.mxu0 %v5543
    %5987 = vmatpush2.bf16.msra.mxu0 %v5542
    %5988 = vmatprep.subr.bf16.mxu0 %v5539
    %5989 = vmatpush2.bf16.msra.mxu0 %v5538
    %5990 = vmatprep.subr.bf16.mxu0 %v5535
    %5991 = vmatpush2.bf16.msra.mxu0 %v5534
    %5992 = vmatprep.subr.bf16.mxu0 %v5531
    %5993 = vmatpush2.bf16.msra.mxu0 %v5530
    %5994 = vmatprep.subr.bf16.mxu0 %v5527
    %5995 = vmatpush2.bf16.msra.mxu0 %v5526
    %5996 = vmatprep.subr.bf16.mxu0 %v5523
    %5997 = vmatpush2.bf16.msra.mxu0 %v5522
    %5998 = vmatprep.subr.bf16.mxu0 %v5519
    %5999 = vmatpush2.bf16.msra.mxu0 %v5518
    %6000 = vmatprep.mubr.bf16.mxu0 %v4835
    %6001 = vmatmul.mubr.bf16.gmra.mxu0 %v4834
    %v6002 = vpop.f32.mrf.mxu0
    %v6003 = vadd.f32 %v5962, %v6002
    %v6004 = vpop.f32.mrf.mxu0
    %v6005 = vadd.f32 %v5964, %v6004
    %v6006 = vpop.f32.mrf.mxu0
    %v6007 = vpop.f32.mrf.mxu0
    %6008 = vdwg.mxu0
    %6009 = vmatprep.subr.bf16.mxu0 %v5579
    %6010 = vmatpush1.bf16.msra.mxu0 %v5578
    %6011 = vmatprep.subr.bf16.mxu0 %v5575
    %6012 = vmatpush1.bf16.msra.mxu0 %v5574
    %6013 = vmatprep.subr.bf16.mxu0 %v5571
    %6014 = vmatpush1.bf16.msra.mxu0 %v5570
    %6015 = vmatprep.subr.bf16.mxu0 %v5567
    %6016 = vmatpush1.bf16.msra.mxu0 %v5566
    %6017 = vmatprep.subr.bf16.mxu0 %v5563
    %6018 = vmatpush1.bf16.msra.mxu0 %v5562
    %6019 = vmatprep.subr.bf16.mxu0 %v5559
    %6020 = vmatpush1.bf16.msra.mxu0 %v5558
    %6021 = vmatprep.subr.bf16.mxu0 %v5555
    %6022 = vmatpush1.bf16.msra.mxu0 %v5554
    %6023 = vmatprep.subr.bf16.mxu0 %v5551
    %6024 = vmatpush1.bf16.msra.mxu0 %v5550
    %6025 = vmatprep.subr.bf16.mxu0 %v5611
    %6026 = vmatpush2.bf16.msra.mxu0 %v5610
    %6027 = vmatprep.subr.bf16.mxu0 %v5607
    %6028 = vmatpush2.bf16.msra.mxu0 %v5606
    %6029 = vmatprep.subr.bf16.mxu0 %v5603
    %6030 = vmatpush2.bf16.msra.mxu0 %v5602
    %6031 = vmatprep.subr.bf16.mxu0 %v5599
    %6032 = vmatpush2.bf16.msra.mxu0 %v5598
    %6033 = vmatprep.subr.bf16.mxu0 %v5595
    %6034 = vmatpush2.bf16.msra.mxu0 %v5594
    %6035 = vmatprep.subr.bf16.mxu0 %v5591
    %6036 = vmatpush2.bf16.msra.mxu0 %v5590
    %6037 = vmatprep.subr.bf16.mxu0 %v5587
    %6038 = vmatpush2.bf16.msra.mxu0 %v5586
    %6039 = vmatprep.subr.bf16.mxu0 %v5583
    %6040 = vmatpush2.bf16.msra.mxu0 %v5582
    %6041 = vmatprep.mubr.bf16.mxu0 %v4837
    %6042 = vmatmul.mubr.bf16.gmra.mxu0 %v4836
    %v6043 = vpop.f32.mrf.mxu0
    %v6044 = vadd.f32 %v6003, %v6043
    %v6045 = vpop.f32.mrf.mxu0
    %v6046 = vadd.f32 %v6005, %v6045
    %v6047 = vpop.f32.mrf.mxu0
    %v6048 = vpop.f32.mrf.mxu0
    %6049 = vdwg.mxu0
    %v6050 = vadd.f32 %v4635, %v5921
    %v6051 = vadd.f32 %v4636, %v5923
    %v6052 = vadd.f32 %v4637, %v6044
    %v6053 = vadd.f32 %v4638, %v6046
    %s6054 = scalar_lea.vmem [#allocation7], 6144
    %v6055 = vld [vmem:[%s6054] sm:$0xff]
    %v6056 = vld [vmem:[%s6054 + $0x8] sm:$0xff]
    %v6057 = vld [vmem:[%s6054 + $0x10] sm:$0xff]
    %v6058 = vld [vmem:[%s6054 + $0x18] sm:$0xff]
    %v6059 = vld [vmem:[%s6054 + $0x20] sm:$0xff]
    %v6060 = vld [vmem:[%s6054 + $0x28] sm:$0xff]
    %v6061 = vld [vmem:[%s6054 + $0x30] sm:$0xff]
    %v6062 = vld [vmem:[%s6054 + $0x38] sm:$0xff]
    %v6063 = vld [vmem:[%s6054 + $0x40] sm:$0xff]
    %v6064 = vld [vmem:[%s6054 + $0x48] sm:$0xff]
    %v6065 = vld [vmem:[%s6054 + $0x50] sm:$0xff]
    %v6066 = vld [vmem:[%s6054 + $0x58] sm:$0xff]
    %v6067 = vld [vmem:[%s6054 + $0x60] sm:$0xff]
    %v6068 = vld [vmem:[%s6054 + $0x68] sm:$0xff]
    %v6069 = vld [vmem:[%s6054 + $0x70] sm:$0xff]
    %v6070 = vld [vmem:[%s6054 + $0x78] sm:$0xff]
    %v6071 = vld [vmem:[%s6054 + $0x80] sm:$0xff]
    %v6072 = vld [vmem:[%s6054 + $0x88] sm:$0xff]
    %v6073 = vld [vmem:[%s6054 + $0x90] sm:$0xff]
    %v6074 = vld [vmem:[%s6054 + $0x98] sm:$0xff]
    %v6075 = vld [vmem:[%s6054 + $0xa0] sm:$0xff]
    %v6076 = vld [vmem:[%s6054 + $0xa8] sm:$0xff]
    %v6077 = vld [vmem:[%s6054 + $0xb0] sm:$0xff]
    %v6078 = vld [vmem:[%s6054 + $0xb8] sm:$0xff]
    %v6079 = vld [vmem:[%s6054 + $0xc0] sm:$0xff]
    %v6080 = vld [vmem:[%s6054 + $0xc8] sm:$0xff]
    %v6081 = vld [vmem:[%s6054 + $0xd0] sm:$0xff]
    %v6082 = vld [vmem:[%s6054 + $0xd8] sm:$0xff]
    %v6083 = vld [vmem:[%s6054 + $0xe0] sm:$0xff]
    %v6084 = vld [vmem:[%s6054 + $0xe8] sm:$0xff]
    %v6085 = vld [vmem:[%s6054 + $0xf0] sm:$0xff]
    %v6086 = vld [vmem:[%s6054 + $0xf8] sm:$0xff]
    %v6087 = vld [vmem:[%s6054 + $0x100] sm:$0xff]
    %v6088 = vld [vmem:[%s6054 + $0x108] sm:$0xff]
    %v6089 = vld [vmem:[%s6054 + $0x110] sm:$0xff]
    %v6090 = vld [vmem:[%s6054 + $0x118] sm:$0xff]
    %v6091 = vld [vmem:[%s6054 + $0x120] sm:$0xff]
    %v6092 = vld [vmem:[%s6054 + $0x128] sm:$0xff]
    %v6093 = vld [vmem:[%s6054 + $0x130] sm:$0xff]
    %v6094 = vld [vmem:[%s6054 + $0x138] sm:$0xff]
    %v6095 = vld [vmem:[%s6054 + $0x140] sm:$0xff]
    %v6096 = vld [vmem:[%s6054 + $0x148] sm:$0xff]
    %v6097 = vld [vmem:[%s6054 + $0x150] sm:$0xff]
    %v6098 = vld [vmem:[%s6054 + $0x158] sm:$0xff]
    %v6099 = vld [vmem:[%s6054 + $0x160] sm:$0xff]
    %v6100 = vld [vmem:[%s6054 + $0x168] sm:$0xff]
    %v6101 = vld [vmem:[%s6054 + $0x170] sm:$0xff]
    %v6102 = vld [vmem:[%s6054 + $0x178] sm:$0xff]
    %v6103 = vld [vmem:[%s6054 + $0x180] sm:$0xff]
    %v6104 = vld [vmem:[%s6054 + $0x188] sm:$0xff]
    %v6105 = vld [vmem:[%s6054 + $0x190] sm:$0xff]
    %v6106 = vld [vmem:[%s6054 + $0x198] sm:$0xff]
    %v6107 = vld [vmem:[%s6054 + $0x1a0] sm:$0xff]
    %v6108 = vld [vmem:[%s6054 + $0x1a8] sm:$0xff]
    %v6109 = vld [vmem:[%s6054 + $0x1b0] sm:$0xff]
    %v6110 = vld [vmem:[%s6054 + $0x1b8] sm:$0xff]
    %v6111 = vld [vmem:[%s6054 + $0x1c0] sm:$0xff]
    %v6112 = vld [vmem:[%s6054 + $0x1c8] sm:$0xff]
    %v6113 = vld [vmem:[%s6054 + $0x1d0] sm:$0xff]
    %v6114 = vld [vmem:[%s6054 + $0x1d8] sm:$0xff]
    %v6115 = vld [vmem:[%s6054 + $0x1e0] sm:$0xff]
    %v6116 = vld [vmem:[%s6054 + $0x1e8] sm:$0xff]
    %v6117 = vld [vmem:[%s6054 + $0x1f0] sm:$0xff]
    %v6118 = vld [vmem:[%s6054 + $0x1f8] sm:$0xff]
    %v6119 = vld [vmem:[%s6054 + $0x200] sm:$0xff]
    %v6120 = vld [vmem:[%s6054 + $0x208] sm:$0xff]
    %v6121 = vld [vmem:[%s6054 + $0x210] sm:$0xff]
    %v6122 = vld [vmem:[%s6054 + $0x218] sm:$0xff]
    %v6123 = vld [vmem:[%s6054 + $0x220] sm:$0xff]
    %v6124 = vld [vmem:[%s6054 + $0x228] sm:$0xff]
    %v6125 = vld [vmem:[%s6054 + $0x230] sm:$0xff]
    %v6126 = vld [vmem:[%s6054 + $0x238] sm:$0xff]
    %v6127 = vld [vmem:[%s6054 + $0x240] sm:$0xff]
    %v6128 = vld [vmem:[%s6054 + $0x248] sm:$0xff]
    %v6129 = vld [vmem:[%s6054 + $0x250] sm:$0xff]
    %v6130 = vld [vmem:[%s6054 + $0x258] sm:$0xff]
    %v6131 = vld [vmem:[%s6054 + $0x260] sm:$0xff]
    %v6132 = vld [vmem:[%s6054 + $0x268] sm:$0xff]
    %v6133 = vld [vmem:[%s6054 + $0x270] sm:$0xff]
    %v6134 = vld [vmem:[%s6054 + $0x278] sm:$0xff]
    %v6135 = vld [vmem:[%s6054 + $0x280] sm:$0xff]
    %v6136 = vld [vmem:[%s6054 + $0x288] sm:$0xff]
    %v6137 = vld [vmem:[%s6054 + $0x290] sm:$0xff]
    %v6138 = vld [vmem:[%s6054 + $0x298] sm:$0xff]
    %v6139 = vld [vmem:[%s6054 + $0x2a0] sm:$0xff]
    %v6140 = vld [vmem:[%s6054 + $0x2a8] sm:$0xff]
    %v6141 = vld [vmem:[%s6054 + $0x2b0] sm:$0xff]
    %v6142 = vld [vmem:[%s6054 + $0x2b8] sm:$0xff]
    %v6143 = vld [vmem:[%s6054 + $0x2c0] sm:$0xff]
    %v6144 = vld [vmem:[%s6054 + $0x2c8] sm:$0xff]
    %v6145 = vld [vmem:[%s6054 + $0x2d0] sm:$0xff]
    %v6146 = vld [vmem:[%s6054 + $0x2d8] sm:$0xff]
    %v6147 = vld [vmem:[%s6054 + $0x2e0] sm:$0xff]
    %v6148 = vld [vmem:[%s6054 + $0x2e8] sm:$0xff]
    %v6149 = vld [vmem:[%s6054 + $0x2f0] sm:$0xff]
    %v6150 = vld [vmem:[%s6054 + $0x2f8] sm:$0xff]
    %v6151 = vld [vmem:[%s6054 + $0x300] sm:$0xff]
    %v6152 = vld [vmem:[%s6054 + $0x308] sm:$0xff]
    %v6153 = vld [vmem:[%s6054 + $0x310] sm:$0xff]
    %v6154 = vld [vmem:[%s6054 + $0x318] sm:$0xff]
    %v6155 = vld [vmem:[%s6054 + $0x320] sm:$0xff]
    %v6156 = vld [vmem:[%s6054 + $0x328] sm:$0xff]
    %v6157 = vld [vmem:[%s6054 + $0x330] sm:$0xff]
    %v6158 = vld [vmem:[%s6054 + $0x338] sm:$0xff]
    %v6159 = vld [vmem:[%s6054 + $0x340] sm:$0xff]
    %v6160 = vld [vmem:[%s6054 + $0x348] sm:$0xff]
    %v6161 = vld [vmem:[%s6054 + $0x350] sm:$0xff]
    %v6162 = vld [vmem:[%s6054 + $0x358] sm:$0xff]
    %v6163 = vld [vmem:[%s6054 + $0x360] sm:$0xff]
    %v6164 = vld [vmem:[%s6054 + $0x368] sm:$0xff]
    %v6165 = vld [vmem:[%s6054 + $0x370] sm:$0xff]
    %v6166 = vld [vmem:[%s6054 + $0x378] sm:$0xff]
    %v6167 = vld [vmem:[%s6054 + $0x380] sm:$0xff]
    %v6168 = vld [vmem:[%s6054 + $0x388] sm:$0xff]
    %v6169 = vld [vmem:[%s6054 + $0x390] sm:$0xff]
    %v6170 = vld [vmem:[%s6054 + $0x398] sm:$0xff]
    %v6171 = vld [vmem:[%s6054 + $0x3a0] sm:$0xff]
    %v6172 = vld [vmem:[%s6054 + $0x3a8] sm:$0xff]
    %v6173 = vld [vmem:[%s6054 + $0x3b0] sm:$0xff]
    %v6174 = vld [vmem:[%s6054 + $0x3b8] sm:$0xff]
    %v6175 = vld [vmem:[%s6054 + $0x3c0] sm:$0xff]
    %v6176 = vld [vmem:[%s6054 + $0x3c8] sm:$0xff]
    %v6177 = vld [vmem:[%s6054 + $0x3d0] sm:$0xff]
    %v6178 = vld [vmem:[%s6054 + $0x3d8] sm:$0xff]
    %v6179 = vld [vmem:[%s6054 + $0x3e0] sm:$0xff]
    %v6180 = vld [vmem:[%s6054 + $0x3e8] sm:$0xff]
    %v6181 = vld [vmem:[%s6054 + $0x3f0] sm:$0xff]
    %v6182 = vld [vmem:[%s6054 + $0x3f8] sm:$0xff]
    %v6183 = vld [vmem:[%s6054 + $0x400] sm:$0xff]
    %v6184 = vld [vmem:[%s6054 + $0x408] sm:$0xff]
    %v6185 = vld [vmem:[%s6054 + $0x410] sm:$0xff]
    %v6186 = vld [vmem:[%s6054 + $0x418] sm:$0xff]
    %v6187 = vld [vmem:[%s6054 + $0x420] sm:$0xff]
    %v6188 = vld [vmem:[%s6054 + $0x428] sm:$0xff]
    %v6189 = vld [vmem:[%s6054 + $0x430] sm:$0xff]
    %v6190 = vld [vmem:[%s6054 + $0x438] sm:$0xff]
    %v6191 = vld [vmem:[%s6054 + $0x440] sm:$0xff]
    %v6192 = vld [vmem:[%s6054 + $0x448] sm:$0xff]
    %v6193 = vld [vmem:[%s6054 + $0x450] sm:$0xff]
    %v6194 = vld [vmem:[%s6054 + $0x458] sm:$0xff]
    %v6195 = vld [vmem:[%s6054 + $0x460] sm:$0xff]
    %v6196 = vld [vmem:[%s6054 + $0x468] sm:$0xff]
    %v6197 = vld [vmem:[%s6054 + $0x470] sm:$0xff]
    %v6198 = vld [vmem:[%s6054 + $0x478] sm:$0xff]
    %v6199 = vld [vmem:[%s6054 + $0x480] sm:$0xff]
    %v6200 = vld [vmem:[%s6054 + $0x488] sm:$0xff]
    %v6201 = vld [vmem:[%s6054 + $0x490] sm:$0xff]
    %v6202 = vld [vmem:[%s6054 + $0x498] sm:$0xff]
    %v6203 = vld [vmem:[%s6054 + $0x4a0] sm:$0xff]
    %v6204 = vld [vmem:[%s6054 + $0x4a8] sm:$0xff]
    %v6205 = vld [vmem:[%s6054 + $0x4b0] sm:$0xff]
    %v6206 = vld [vmem:[%s6054 + $0x4b8] sm:$0xff]
    %v6207 = vld [vmem:[%s6054 + $0x4c0] sm:$0xff]
    %v6208 = vld [vmem:[%s6054 + $0x4c8] sm:$0xff]
    %v6209 = vld [vmem:[%s6054 + $0x4d0] sm:$0xff]
    %v6210 = vld [vmem:[%s6054 + $0x4d8] sm:$0xff]
    %v6211 = vld [vmem:[%s6054 + $0x4e0] sm:$0xff]
    %v6212 = vld [vmem:[%s6054 + $0x4e8] sm:$0xff]
    %v6213 = vld [vmem:[%s6054 + $0x4f0] sm:$0xff]
    %v6214 = vld [vmem:[%s6054 + $0x4f8] sm:$0xff]
    %v6215 = vld [vmem:[%s6054 + $0x500] sm:$0xff]
    %v6216 = vld [vmem:[%s6054 + $0x508] sm:$0xff]
    %v6217 = vld [vmem:[%s6054 + $0x510] sm:$0xff]
    %v6218 = vld [vmem:[%s6054 + $0x518] sm:$0xff]
    %v6219 = vld [vmem:[%s6054 + $0x520] sm:$0xff]
    %v6220 = vld [vmem:[%s6054 + $0x528] sm:$0xff]
    %v6221 = vld [vmem:[%s6054 + $0x530] sm:$0xff]
    %v6222 = vld [vmem:[%s6054 + $0x538] sm:$0xff]
    %v6223 = vld [vmem:[%s6054 + $0x540] sm:$0xff]
    %v6224 = vld [vmem:[%s6054 + $0x548] sm:$0xff]
    %v6225 = vld [vmem:[%s6054 + $0x550] sm:$0xff]
    %v6226 = vld [vmem:[%s6054 + $0x558] sm:$0xff]
    %v6227 = vld [vmem:[%s6054 + $0x560] sm:$0xff]
    %v6228 = vld [vmem:[%s6054 + $0x568] sm:$0xff]
    %v6229 = vld [vmem:[%s6054 + $0x570] sm:$0xff]
    %v6230 = vld [vmem:[%s6054 + $0x578] sm:$0xff]
    %v6231 = vld [vmem:[%s6054 + $0x580] sm:$0xff]
    %v6232 = vld [vmem:[%s6054 + $0x588] sm:$0xff]
    %v6233 = vld [vmem:[%s6054 + $0x590] sm:$0xff]
    %v6234 = vld [vmem:[%s6054 + $0x598] sm:$0xff]
    %v6235 = vld [vmem:[%s6054 + $0x5a0] sm:$0xff]
    %v6236 = vld [vmem:[%s6054 + $0x5a8] sm:$0xff]
    %v6237 = vld [vmem:[%s6054 + $0x5b0] sm:$0xff]
    %v6238 = vld [vmem:[%s6054 + $0x5b8] sm:$0xff]
    %v6239 = vld [vmem:[%s6054 + $0x5c0] sm:$0xff]
    %v6240 = vld [vmem:[%s6054 + $0x5c8] sm:$0xff]
    %v6241 = vld [vmem:[%s6054 + $0x5d0] sm:$0xff]
    %v6242 = vld [vmem:[%s6054 + $0x5d8] sm:$0xff]
    %v6243 = vld [vmem:[%s6054 + $0x5e0] sm:$0xff]
    %v6244 = vld [vmem:[%s6054 + $0x5e8] sm:$0xff]
    %v6245 = vld [vmem:[%s6054 + $0x5f0] sm:$0xff]
    %v6246 = vld [vmem:[%s6054 + $0x5f8] sm:$0xff]
    %v6247 = vrot.slane %v391, 2
    %v6248 = vrot.slane %v392, 2
    %v6249 = vrot.slane %v393, 2
    %v6250 = vrot.slane %v394, 2
    %v6251 = vrot.slane %v395, 2
    %v6252 = vrot.slane %v396, 2
    %v6451 = vunpack.c.l.b16 %v6055
    %v6452 = vunpack.c.h.b16 %v6055
    %v6453 = vunpack.c.l.b16 %v6056
    %v6454 = vunpack.c.h.b16 %v6056
    %v6455 = vunpack.c.l.b16 %v6057
    %v6456 = vunpack.c.h.b16 %v6057
    %v6457 = vunpack.c.l.b16 %v6058
    %v6458 = vunpack.c.h.b16 %v6058
    %v6459 = vunpack.c.l.b16 %v6059
    %v6460 = vunpack.c.h.b16 %v6059
    %v6461 = vunpack.c.l.b16 %v6060
    %v6462 = vunpack.c.h.b16 %v6060
    %v6463 = vunpack.c.l.b16 %v6061
    %v6464 = vunpack.c.h.b16 %v6061
    %v6465 = vunpack.c.l.b16 %v6062
    %v6466 = vunpack.c.h.b16 %v6062
    %v6467 = vunpack.c.l.b16 %v6063
    %v6468 = vunpack.c.h.b16 %v6063
    %v6469 = vunpack.c.l.b16 %v6064
    %v6470 = vunpack.c.h.b16 %v6064
    %v6471 = vunpack.c.l.b16 %v6065
    %v6472 = vunpack.c.h.b16 %v6065
    %v6473 = vunpack.c.l.b16 %v6066
    %v6474 = vunpack.c.h.b16 %v6066
    %v6475 = vunpack.c.l.b16 %v6067
    %v6476 = vunpack.c.h.b16 %v6067
    %v6477 = vunpack.c.l.b16 %v6068
    %v6478 = vunpack.c.h.b16 %v6068
    %v6479 = vunpack.c.l.b16 %v6069
    %v6480 = vunpack.c.h.b16 %v6069
    %v6481 = vunpack.c.l.b16 %v6070
    %v6482 = vunpack.c.h.b16 %v6070
    %v6483 = vunpack.c.l.b16 %v6071
    %v6484 = vunpack.c.h.b16 %v6071
    %v6485 = vunpack.c.l.b16 %v6072
    %v6486 = vunpack.c.h.b16 %v6072
    %v6487 = vunpack.c.l.b16 %v6073
    %v6488 = vunpack.c.h.b16 %v6073
    %v6489 = vunpack.c.l.b16 %v6074
    %v6490 = vunpack.c.h.b16 %v6074
    %v6491 = vunpack.c.l.b16 %v6075
    %v6492 = vunpack.c.h.b16 %v6075
    %v6493 = vunpack.c.l.b16 %v6076
    %v6494 = vunpack.c.h.b16 %v6076
    %v6495 = vunpack.c.l.b16 %v6077
    %v6496 = vunpack.c.h.b16 %v6077
    %v6497 = vunpack.c.l.b16 %v6078
    %v6498 = vunpack.c.h.b16 %v6078
    %v6499 = vunpack.c.l.b16 %v6079
    %v6500 = vunpack.c.h.b16 %v6079
    %v6501 = vunpack.c.l.b16 %v6080
    %v6502 = vunpack.c.h.b16 %v6080
    %v6503 = vunpack.c.l.b16 %v6081
    %v6504 = vunpack.c.h.b16 %v6081
    %v6505 = vunpack.c.l.b16 %v6082
    %v6506 = vunpack.c.h.b16 %v6082
    %v6507 = vunpack.c.l.b16 %v6083
    %v6508 = vunpack.c.h.b16 %v6083
    %v6509 = vunpack.c.l.b16 %v6084
    %v6510 = vunpack.c.h.b16 %v6084
    %v6511 = vunpack.c.l.b16 %v6085
    %v6512 = vunpack.c.h.b16 %v6085
    %v6513 = vunpack.c.l.b16 %v6086
    %v6514 = vunpack.c.h.b16 %v6086
    %v6515 = vunpack.c.l.b16 %v6087
    %v6516 = vunpack.c.h.b16 %v6087
    %v6517 = vunpack.c.l.b16 %v6088
    %v6518 = vunpack.c.h.b16 %v6088
    %v6519 = vunpack.c.l.b16 %v6089
    %v6520 = vunpack.c.h.b16 %v6089
    %v6521 = vunpack.c.l.b16 %v6090
    %v6522 = vunpack.c.h.b16 %v6090
    %v6523 = vunpack.c.l.b16 %v6091
    %v6524 = vunpack.c.h.b16 %v6091
    %v6525 = vunpack.c.l.b16 %v6092
    %v6526 = vunpack.c.h.b16 %v6092
    %v6527 = vunpack.c.l.b16 %v6093
    %v6528 = vunpack.c.h.b16 %v6093
    %v6529 = vunpack.c.l.b16 %v6094
    %v6530 = vunpack.c.h.b16 %v6094
    %v6531 = vunpack.c.l.b16 %v6095
    %v6532 = vunpack.c.h.b16 %v6095
    %v6533 = vunpack.c.l.b16 %v6096
    %v6534 = vunpack.c.h.b16 %v6096
    %v6535 = vunpack.c.l.b16 %v6097
    %v6536 = vunpack.c.h.b16 %v6097
    %v6537 = vunpack.c.l.b16 %v6098
    %v6538 = vunpack.c.h.b16 %v6098
    %v6539 = vunpack.c.l.b16 %v6099
    %v6540 = vunpack.c.h.b16 %v6099
    %v6541 = vunpack.c.l.b16 %v6100
    %v6542 = vunpack.c.h.b16 %v6100
    %v6543 = vunpack.c.l.b16 %v6101
    %v6544 = vunpack.c.h.b16 %v6101
    %v6545 = vunpack.c.l.b16 %v6102
    %v6546 = vunpack.c.h.b16 %v6102
    %v6547 = vunpack.c.l.b16 %v6103
    %v6548 = vunpack.c.h.b16 %v6103
    %v6549 = vunpack.c.l.b16 %v6104
    %v6550 = vunpack.c.h.b16 %v6104
    %v6551 = vunpack.c.l.b16 %v6105
    %v6552 = vunpack.c.h.b16 %v6105
    %v6553 = vunpack.c.l.b16 %v6106
    %v6554 = vunpack.c.h.b16 %v6106
    %v6555 = vunpack.c.l.b16 %v6107
    %v6556 = vunpack.c.h.b16 %v6107
    %v6557 = vunpack.c.l.b16 %v6108
    %v6558 = vunpack.c.h.b16 %v6108
    %v6559 = vunpack.c.l.b16 %v6109
    %v6560 = vunpack.c.h.b16 %v6109
    %v6561 = vunpack.c.l.b16 %v6110
    %v6562 = vunpack.c.h.b16 %v6110
    %v6563 = vunpack.c.l.b16 %v6111
    %v6564 = vunpack.c.h.b16 %v6111
    %v6565 = vunpack.c.l.b16 %v6112
    %v6566 = vunpack.c.h.b16 %v6112
    %v6567 = vunpack.c.l.b16 %v6113
    %v6568 = vunpack.c.h.b16 %v6113
    %v6569 = vunpack.c.l.b16 %v6114
    %v6570 = vunpack.c.h.b16 %v6114
    %v6571 = vunpack.c.l.b16 %v6115
    %v6572 = vunpack.c.h.b16 %v6115
    %v6573 = vunpack.c.l.b16 %v6116
    %v6574 = vunpack.c.h.b16 %v6116
    %v6575 = vunpack.c.l.b16 %v6117
    %v6576 = vunpack.c.h.b16 %v6117
    %v6577 = vunpack.c.l.b16 %v6118
    %v6578 = vunpack.c.h.b16 %v6118
    %v6579 = vunpack.c.l.b16 %v6119
    %v6580 = vunpack.c.h.b16 %v6119
    %v6581 = vunpack.c.l.b16 %v6120
    %v6582 = vunpack.c.h.b16 %v6120
    %v6583 = vunpack.c.l.b16 %v6121
    %v6584 = vunpack.c.h.b16 %v6121
    %v6585 = vunpack.c.l.b16 %v6122
    %v6586 = vunpack.c.h.b16 %v6122
    %v6587 = vunpack.c.l.b16 %v6123
    %v6588 = vunpack.c.h.b16 %v6123
    %v6589 = vunpack.c.l.b16 %v6124
    %v6590 = vunpack.c.h.b16 %v6124
    %v6591 = vunpack.c.l.b16 %v6125
    %v6592 = vunpack.c.h.b16 %v6125
    %v6593 = vunpack.c.l.b16 %v6126
    %v6594 = vunpack.c.h.b16 %v6126
    %v6595 = vunpack.c.l.b16 %v6127
    %v6596 = vunpack.c.h.b16 %v6127
    %v6597 = vunpack.c.l.b16 %v6128
    %v6598 = vunpack.c.h.b16 %v6128
    %v6599 = vunpack.c.l.b16 %v6129
    %v6600 = vunpack.c.h.b16 %v6129
    %v6601 = vunpack.c.l.b16 %v6130
    %v6602 = vunpack.c.h.b16 %v6130
    %v6603 = vunpack.c.l.b16 %v6131
    %v6604 = vunpack.c.h.b16 %v6131
    %v6605 = vunpack.c.l.b16 %v6132
    %v6606 = vunpack.c.h.b16 %v6132
    %v6607 = vunpack.c.l.b16 %v6133
    %v6608 = vunpack.c.h.b16 %v6133
    %v6609 = vunpack.c.l.b16 %v6134
    %v6610 = vunpack.c.h.b16 %v6134
    %v6611 = vunpack.c.l.b16 %v6135
    %v6612 = vunpack.c.h.b16 %v6135
    %v6613 = vunpack.c.l.b16 %v6136
    %v6614 = vunpack.c.h.b16 %v6136
    %v6615 = vunpack.c.l.b16 %v6137
    %v6616 = vunpack.c.h.b16 %v6137
    %v6617 = vunpack.c.l.b16 %v6138
    %v6618 = vunpack.c.h.b16 %v6138
    %v6619 = vunpack.c.l.b16 %v6139
    %v6620 = vunpack.c.h.b16 %v6139
    %v6621 = vunpack.c.l.b16 %v6140
    %v6622 = vunpack.c.h.b16 %v6140
    %v6623 = vunpack.c.l.b16 %v6141
    %v6624 = vunpack.c.h.b16 %v6141
    %v6625 = vunpack.c.l.b16 %v6142
    %v6626 = vunpack.c.h.b16 %v6142
    %v6627 = vunpack.c.l.b16 %v6143
    %v6628 = vunpack.c.h.b16 %v6143
    %v6629 = vunpack.c.l.b16 %v6144
    %v6630 = vunpack.c.h.b16 %v6144
    %v6631 = vunpack.c.l.b16 %v6145
    %v6632 = vunpack.c.h.b16 %v6145
    %v6633 = vunpack.c.l.b16 %v6146
    %v6634 = vunpack.c.h.b16 %v6146
    %v6635 = vunpack.c.l.b16 %v6147
    %v6636 = vunpack.c.h.b16 %v6147
    %v6637 = vunpack.c.l.b16 %v6148
    %v6638 = vunpack.c.h.b16 %v6148
    %v6639 = vunpack.c.l.b16 %v6149
    %v6640 = vunpack.c.h.b16 %v6149
    %v6641 = vunpack.c.l.b16 %v6150
    %v6642 = vunpack.c.h.b16 %v6150
    %v6643 = vunpack.c.l.b16 %v6151
    %v6644 = vunpack.c.h.b16 %v6151
    %v6645 = vunpack.c.l.b16 %v6152
    %v6646 = vunpack.c.h.b16 %v6152
    %v6647 = vunpack.c.l.b16 %v6153
    %v6648 = vunpack.c.h.b16 %v6153
    %v6649 = vunpack.c.l.b16 %v6154
    %v6650 = vunpack.c.h.b16 %v6154
    %v6651 = vunpack.c.l.b16 %v6155
    %v6652 = vunpack.c.h.b16 %v6155
    %v6653 = vunpack.c.l.b16 %v6156
    %v6654 = vunpack.c.h.b16 %v6156
    %v6655 = vunpack.c.l.b16 %v6157
    %v6656 = vunpack.c.h.b16 %v6157
    %v6657 = vunpack.c.l.b16 %v6158
    %v6658 = vunpack.c.h.b16 %v6158
    %v6659 = vunpack.c.l.b16 %v6159
    %v6660 = vunpack.c.h.b16 %v6159
    %v6661 = vunpack.c.l.b16 %v6160
    %v6662 = vunpack.c.h.b16 %v6160
    %v6663 = vunpack.c.l.b16 %v6161
    %v6664 = vunpack.c.h.b16 %v6161
    %v6665 = vunpack.c.l.b16 %v6162
    %v6666 = vunpack.c.h.b16 %v6162
    %v6667 = vunpack.c.l.b16 %v6163
    %v6668 = vunpack.c.h.b16 %v6163
    %v6669 = vunpack.c.l.b16 %v6164
    %v6670 = vunpack.c.h.b16 %v6164
    %v6671 = vunpack.c.l.b16 %v6165
    %v6672 = vunpack.c.h.b16 %v6165
    %v6673 = vunpack.c.l.b16 %v6166
    %v6674 = vunpack.c.h.b16 %v6166
    %v6675 = vunpack.c.l.b16 %v6167
    %v6676 = vunpack.c.h.b16 %v6167
    %v6677 = vunpack.c.l.b16 %v6168
    %v6678 = vunpack.c.h.b16 %v6168
    %v6679 = vunpack.c.l.b16 %v6169
    %v6680 = vunpack.c.h.b16 %v6169
    %v6681 = vunpack.c.l.b16 %v6170
    %v6682 = vunpack.c.h.b16 %v6170
    %v6683 = vunpack.c.l.b16 %v6171
    %v6684 = vunpack.c.h.b16 %v6171
    %v6685 = vunpack.c.l.b16 %v6172
    %v6686 = vunpack.c.h.b16 %v6172
    %v6687 = vunpack.c.l.b16 %v6173
    %v6688 = vunpack.c.h.b16 %v6173
    %v6689 = vunpack.c.l.b16 %v6174
    %v6690 = vunpack.c.h.b16 %v6174
    %v6691 = vunpack.c.l.b16 %v6175
    %v6692 = vunpack.c.h.b16 %v6175
    %v6693 = vunpack.c.l.b16 %v6176
    %v6694 = vunpack.c.h.b16 %v6176
    %v6695 = vunpack.c.l.b16 %v6177
    %v6696 = vunpack.c.h.b16 %v6177
    %v6697 = vunpack.c.l.b16 %v6178
    %v6698 = vunpack.c.h.b16 %v6178
    %v6699 = vunpack.c.l.b16 %v6179
    %v6700 = vunpack.c.h.b16 %v6179
    %v6701 = vunpack.c.l.b16 %v6180
    %v6702 = vunpack.c.h.b16 %v6180
    %v6703 = vunpack.c.l.b16 %v6181
    %v6704 = vunpack.c.h.b16 %v6181
    %v6705 = vunpack.c.l.b16 %v6182
    %v6706 = vunpack.c.h.b16 %v6182
    %v6707 = vunpack.c.l.b16 %v6183
    %v6708 = vunpack.c.h.b16 %v6183
    %v6709 = vunpack.c.l.b16 %v6184
    %v6710 = vunpack.c.h.b16 %v6184
    %v6711 = vunpack.c.l.b16 %v6185
    %v6712 = vunpack.c.h.b16 %v6185
    %v6713 = vunpack.c.l.b16 %v6186
    %v6714 = vunpack.c.h.b16 %v6186
    %v6715 = vunpack.c.l.b16 %v6187
    %v6716 = vunpack.c.h.b16 %v6187
    %v6717 = vunpack.c.l.b16 %v6188
    %v6718 = vunpack.c.h.b16 %v6188
    %v6719 = vunpack.c.l.b16 %v6189
    %v6720 = vunpack.c.h.b16 %v6189
    %v6721 = vunpack.c.l.b16 %v6190
    %v6722 = vunpack.c.h.b16 %v6190
    %v6723 = vunpack.c.l.b16 %v6191
    %v6724 = vunpack.c.h.b16 %v6191
    %v6725 = vunpack.c.l.b16 %v6192
    %v6726 = vunpack.c.h.b16 %v6192
    %v6727 = vunpack.c.l.b16 %v6193
    %v6728 = vunpack.c.h.b16 %v6193
    %v6729 = vunpack.c.l.b16 %v6194
    %v6730 = vunpack.c.h.b16 %v6194
    %v6731 = vunpack.c.l.b16 %v6195
    %v6732 = vunpack.c.h.b16 %v6195
    %v6733 = vunpack.c.l.b16 %v6196
    %v6734 = vunpack.c.h.b16 %v6196
    %v6735 = vunpack.c.l.b16 %v6197
    %v6736 = vunpack.c.h.b16 %v6197
    %v6737 = vunpack.c.l.b16 %v6198
    %v6738 = vunpack.c.h.b16 %v6198
    %v6739 = vunpack.c.l.b16 %v6199
    %v6740 = vunpack.c.h.b16 %v6199
    %v6741 = vunpack.c.l.b16 %v6200
    %v6742 = vunpack.c.h.b16 %v6200
    %v6743 = vunpack.c.l.b16 %v6201
    %v6744 = vunpack.c.h.b16 %v6201
    %v6745 = vunpack.c.l.b16 %v6202
    %v6746 = vunpack.c.h.b16 %v6202
    %v6747 = vunpack.c.l.b16 %v6203
    %v6748 = vunpack.c.h.b16 %v6203
    %v6749 = vunpack.c.l.b16 %v6204
    %v6750 = vunpack.c.h.b16 %v6204
    %v6751 = vunpack.c.l.b16 %v6205
    %v6752 = vunpack.c.h.b16 %v6205
    %v6753 = vunpack.c.l.b16 %v6206
    %v6754 = vunpack.c.h.b16 %v6206
    %v6755 = vunpack.c.l.b16 %v6207
    %v6756 = vunpack.c.h.b16 %v6207
    %v6757 = vunpack.c.l.b16 %v6208
    %v6758 = vunpack.c.h.b16 %v6208
    %v6759 = vunpack.c.l.b16 %v6209
    %v6760 = vunpack.c.h.b16 %v6209
    %v6761 = vunpack.c.l.b16 %v6210
    %v6762 = vunpack.c.h.b16 %v6210
    %v6763 = vunpack.c.l.b16 %v6211
    %v6764 = vunpack.c.h.b16 %v6211
    %v6765 = vunpack.c.l.b16 %v6212
    %v6766 = vunpack.c.h.b16 %v6212
    %v6767 = vunpack.c.l.b16 %v6213
    %v6768 = vunpack.c.h.b16 %v6213
    %v6769 = vunpack.c.l.b16 %v6214
    %v6770 = vunpack.c.h.b16 %v6214
    %v6771 = vunpack.c.l.b16 %v6215
    %v6772 = vunpack.c.h.b16 %v6215
    %v6773 = vunpack.c.l.b16 %v6216
    %v6774 = vunpack.c.h.b16 %v6216
    %v6775 = vunpack.c.l.b16 %v6217
    %v6776 = vunpack.c.h.b16 %v6217
    %v6777 = vunpack.c.l.b16 %v6218
    %v6778 = vunpack.c.h.b16 %v6218
    %v6779 = vunpack.c.l.b16 %v6219
    %v6780 = vunpack.c.h.b16 %v6219
    %v6781 = vunpack.c.l.b16 %v6220
    %v6782 = vunpack.c.h.b16 %v6220
    %v6783 = vunpack.c.l.b16 %v6221
    %v6784 = vunpack.c.h.b16 %v6221
    %v6785 = vunpack.c.l.b16 %v6222
    %v6786 = vunpack.c.h.b16 %v6222
    %v6787 = vunpack.c.l.b16 %v6223
    %v6788 = vunpack.c.h.b16 %v6223
    %v6789 = vunpack.c.l.b16 %v6224
    %v6790 = vunpack.c.h.b16 %v6224
    %v6791 = vunpack.c.l.b16 %v6225
    %v6792 = vunpack.c.h.b16 %v6225
    %v6793 = vunpack.c.l.b16 %v6226
    %v6794 = vunpack.c.h.b16 %v6226
    %v6795 = vunpack.c.l.b16 %v6227
    %v6796 = vunpack.c.h.b16 %v6227
    %v6797 = vunpack.c.l.b16 %v6228
    %v6798 = vunpack.c.h.b16 %v6228
    %v6799 = vunpack.c.l.b16 %v6229
    %v6800 = vunpack.c.h.b16 %v6229
    %v6801 = vunpack.c.l.b16 %v6230
    %v6802 = vunpack.c.h.b16 %v6230
    %v6803 = vunpack.c.l.b16 %v6231
    %v6804 = vunpack.c.h.b16 %v6231
    %v6805 = vunpack.c.l.b16 %v6232
    %v6806 = vunpack.c.h.b16 %v6232
    %v6807 = vunpack.c.l.b16 %v6233
    %v6808 = vunpack.c.h.b16 %v6233
    %v6809 = vunpack.c.l.b16 %v6234
    %v6810 = vunpack.c.h.b16 %v6234
    %v6811 = vunpack.c.l.b16 %v6235
    %v6812 = vunpack.c.h.b16 %v6235
    %v6813 = vunpack.c.l.b16 %v6236
    %v6814 = vunpack.c.h.b16 %v6236
    %v6815 = vunpack.c.l.b16 %v6237
    %v6816 = vunpack.c.h.b16 %v6237
    %v6817 = vunpack.c.l.b16 %v6238
    %v6818 = vunpack.c.h.b16 %v6238
    %v6819 = vunpack.c.l.b16 %v6239
    %v6820 = vunpack.c.h.b16 %v6239
    %v6821 = vunpack.c.l.b16 %v6240
    %v6822 = vunpack.c.h.b16 %v6240
    %v6823 = vunpack.c.l.b16 %v6241
    %v6824 = vunpack.c.h.b16 %v6241
    %v6825 = vunpack.c.l.b16 %v6242
    %v6826 = vunpack.c.h.b16 %v6242
    %v6827 = vunpack.c.l.b16 %v6243
    %v6828 = vunpack.c.h.b16 %v6243
    %v6829 = vunpack.c.l.b16 %v6244
    %v6830 = vunpack.c.h.b16 %v6244
    %v6831 = vunpack.c.l.b16 %v6245
    %v6832 = vunpack.c.h.b16 %v6245
    %v6833 = vunpack.c.l.b16 %v6246
    %v6834 = vunpack.c.h.b16 %v6246
    %v6835 = vpack.c.b16 %v6455, %v6451
    %v6836 = vpack.c.b16 %v6456, %v6452
    %v6837 = vpack.c.b16 %v6457, %v6453
    %v6838 = vpack.c.b16 %v6458, %v6454
    %v6839 = vpack.c.b16 %v6463, %v6459
    %v6840 = vpack.c.b16 %v6464, %v6460
    %v6841 = vpack.c.b16 %v6465, %v6461
    %v6842 = vpack.c.b16 %v6466, %v6462
    %v6843 = vpack.c.b16 %v6471, %v6467
    %v6844 = vpack.c.b16 %v6472, %v6468
    %v6845 = vpack.c.b16 %v6473, %v6469
    %v6846 = vpack.c.b16 %v6474, %v6470
    %v6847 = vpack.c.b16 %v6479, %v6475
    %v6848 = vpack.c.b16 %v6480, %v6476
    %v6849 = vpack.c.b16 %v6481, %v6477
    %v6850 = vpack.c.b16 %v6482, %v6478
    %v6851 = vpack.c.b16 %v6487, %v6483
    %v6852 = vpack.c.b16 %v6488, %v6484
    %v6853 = vpack.c.b16 %v6489, %v6485
    %v6854 = vpack.c.b16 %v6490, %v6486
    %v6855 = vpack.c.b16 %v6495, %v6491
    %v6856 = vpack.c.b16 %v6496, %v6492
    %v6857 = vpack.c.b16 %v6497, %v6493
    %v6858 = vpack.c.b16 %v6498, %v6494
    %v6859 = vpack.c.b16 %v6503, %v6499
    %v6860 = vpack.c.b16 %v6504, %v6500
    %v6861 = vpack.c.b16 %v6505, %v6501
    %v6862 = vpack.c.b16 %v6506, %v6502
    %v6863 = vpack.c.b16 %v6511, %v6507
    %v6864 = vpack.c.b16 %v6512, %v6508
    %v6865 = vpack.c.b16 %v6513, %v6509
    %v6866 = vpack.c.b16 %v6514, %v6510
    %v6867 = vpack.c.b16 %v6519, %v6515
    %v6868 = vpack.c.b16 %v6520, %v6516
    %v6869 = vpack.c.b16 %v6521, %v6517
    %v6870 = vpack.c.b16 %v6522, %v6518
    %v6871 = vpack.c.b16 %v6527, %v6523
    %v6872 = vpack.c.b16 %v6528, %v6524
    %v6873 = vpack.c.b16 %v6529, %v6525
    %v6874 = vpack.c.b16 %v6530, %v6526
    %v6875 = vpack.c.b16 %v6535, %v6531
    %v6876 = vpack.c.b16 %v6536, %v6532
    %v6877 = vpack.c.b16 %v6537, %v6533
    %v6878 = vpack.c.b16 %v6538, %v6534
    %v6879 = vpack.c.b16 %v6543, %v6539
    %v6880 = vpack.c.b16 %v6544, %v6540
    %v6881 = vpack.c.b16 %v6545, %v6541
    %v6882 = vpack.c.b16 %v6546, %v6542
    %v6883 = vpack.c.b16 %v6551, %v6547
    %v6884 = vpack.c.b16 %v6552, %v6548
    %v6885 = vpack.c.b16 %v6553, %v6549
    %v6886 = vpack.c.b16 %v6554, %v6550
    %v6887 = vpack.c.b16 %v6559, %v6555
    %v6888 = vpack.c.b16 %v6560, %v6556
    %v6889 = vpack.c.b16 %v6561, %v6557
    %v6890 = vpack.c.b16 %v6562, %v6558
    %v6891 = vpack.c.b16 %v6567, %v6563
    %v6892 = vpack.c.b16 %v6568, %v6564
    %v6893 = vpack.c.b16 %v6569, %v6565
    %v6894 = vpack.c.b16 %v6570, %v6566
    %v6895 = vpack.c.b16 %v6575, %v6571
    %v6896 = vpack.c.b16 %v6576, %v6572
    %v6897 = vpack.c.b16 %v6577, %v6573
    %v6898 = vpack.c.b16 %v6578, %v6574
    %v6899 = vpack.c.b16 %v6583, %v6579
    %v6900 = vpack.c.b16 %v6584, %v6580
    %v6901 = vpack.c.b16 %v6585, %v6581
    %v6902 = vpack.c.b16 %v6586, %v6582
    %v6903 = vpack.c.b16 %v6591, %v6587
    %v6904 = vpack.c.b16 %v6592, %v6588
    %v6905 = vpack.c.b16 %v6593, %v6589
    %v6906 = vpack.c.b16 %v6594, %v6590
    %v6907 = vpack.c.b16 %v6599, %v6595
    %v6908 = vpack.c.b16 %v6600, %v6596
    %v6909 = vpack.c.b16 %v6601, %v6597
    %v6910 = vpack.c.b16 %v6602, %v6598
    %v6911 = vpack.c.b16 %v6607, %v6603
    %v6912 = vpack.c.b16 %v6608, %v6604
    %v6913 = vpack.c.b16 %v6609, %v6605
    %v6914 = vpack.c.b16 %v6610, %v6606
    %v6915 = vpack.c.b16 %v6615, %v6611
    %v6916 = vpack.c.b16 %v6616, %v6612
    %v6917 = vpack.c.b16 %v6617, %v6613
    %v6918 = vpack.c.b16 %v6618, %v6614
    %v6919 = vpack.c.b16 %v6623, %v6619
    %v6920 = vpack.c.b16 %v6624, %v6620
    %v6921 = vpack.c.b16 %v6625, %v6621
    %v6922 = vpack.c.b16 %v6626, %v6622
    %v6923 = vpack.c.b16 %v6631, %v6627
    %v6924 = vpack.c.b16 %v6632, %v6628
    %v6925 = vpack.c.b16 %v6633, %v6629
    %v6926 = vpack.c.b16 %v6634, %v6630
    %v6927 = vpack.c.b16 %v6639, %v6635
    %v6928 = vpack.c.b16 %v6640, %v6636
    %v6929 = vpack.c.b16 %v6641, %v6637
    %v6930 = vpack.c.b16 %v6642, %v6638
    %v6931 = vpack.c.b16 %v6647, %v6643
    %v6932 = vpack.c.b16 %v6648, %v6644
    %v6933 = vpack.c.b16 %v6649, %v6645
    %v6934 = vpack.c.b16 %v6650, %v6646
    %v6935 = vpack.c.b16 %v6655, %v6651
    %v6936 = vpack.c.b16 %v6656, %v6652
    %v6937 = vpack.c.b16 %v6657, %v6653
    %v6938 = vpack.c.b16 %v6658, %v6654
    %v6939 = vpack.c.b16 %v6663, %v6659
    %v6940 = vpack.c.b16 %v6664, %v6660
    %v6941 = vpack.c.b16 %v6665, %v6661
    %v6942 = vpack.c.b16 %v6666, %v6662
    %v6943 = vpack.c.b16 %v6671, %v6667
    %v6944 = vpack.c.b16 %v6672, %v6668
    %v6945 = vpack.c.b16 %v6673, %v6669
    %v6946 = vpack.c.b16 %v6674, %v6670
    %v6947 = vpack.c.b16 %v6679, %v6675
    %v6948 = vpack.c.b16 %v6680, %v6676
    %v6949 = vpack.c.b16 %v6681, %v6677
    %v6950 = vpack.c.b16 %v6682, %v6678
    %v6951 = vpack.c.b16 %v6687, %v6683
    %v6952 = vpack.c.b16 %v6688, %v6684
    %v6953 = vpack.c.b16 %v6689, %v6685
    %v6954 = vpack.c.b16 %v6690, %v6686
    %v6955 = vpack.c.b16 %v6695, %v6691
    %v6956 = vpack.c.b16 %v6696, %v6692
    %v6957 = vpack.c.b16 %v6697, %v6693
    %v6958 = vpack.c.b16 %v6698, %v6694
    %v6959 = vpack.c.b16 %v6703, %v6699
    %v6960 = vpack.c.b16 %v6704, %v6700
    %v6961 = vpack.c.b16 %v6705, %v6701
    %v6962 = vpack.c.b16 %v6706, %v6702
    %v6963 = vpack.c.b16 %v6711, %v6707
    %v6964 = vpack.c.b16 %v6712, %v6708
    %v6965 = vpack.c.b16 %v6713, %v6709
    %v6966 = vpack.c.b16 %v6714, %v6710
    %v6967 = vpack.c.b16 %v6719, %v6715
    %v6968 = vpack.c.b16 %v6720, %v6716
    %v6969 = vpack.c.b16 %v6721, %v6717
    %v6970 = vpack.c.b16 %v6722, %v6718
    %v6971 = vpack.c.b16 %v6727, %v6723
    %v6972 = vpack.c.b16 %v6728, %v6724
    %v6973 = vpack.c.b16 %v6729, %v6725
    %v6974 = vpack.c.b16 %v6730, %v6726
    %v6975 = vpack.c.b16 %v6735, %v6731
    %v6976 = vpack.c.b16 %v6736, %v6732
    %v6977 = vpack.c.b16 %v6737, %v6733
    %v6978 = vpack.c.b16 %v6738, %v6734
    %v6979 = vpack.c.b16 %v6743, %v6739
    %v6980 = vpack.c.b16 %v6744, %v6740
    %v6981 = vpack.c.b16 %v6745, %v6741
    %v6982 = vpack.c.b16 %v6746, %v6742
    %v6983 = vpack.c.b16 %v6751, %v6747
    %v6984 = vpack.c.b16 %v6752, %v6748
    %v6985 = vpack.c.b16 %v6753, %v6749
    %v6986 = vpack.c.b16 %v6754, %v6750
    %v6987 = vpack.c.b16 %v6759, %v6755
    %v6988 = vpack.c.b16 %v6760, %v6756
    %v6989 = vpack.c.b16 %v6761, %v6757
    %v6990 = vpack.c.b16 %v6762, %v6758
    %v6991 = vpack.c.b16 %v6767, %v6763
    %v6992 = vpack.c.b16 %v6768, %v6764
    %v6993 = vpack.c.b16 %v6769, %v6765
    %v6994 = vpack.c.b16 %v6770, %v6766
    %v6995 = vpack.c.b16 %v6775, %v6771
    %v6996 = vpack.c.b16 %v6776, %v6772
    %v6997 = vpack.c.b16 %v6777, %v6773
    %v6998 = vpack.c.b16 %v6778, %v6774
    %v6999 = vpack.c.b16 %v6783, %v6779
    %v7000 = vpack.c.b16 %v6784, %v6780
    %v7001 = vpack.c.b16 %v6785, %v6781
    %v7002 = vpack.c.b16 %v6786, %v6782
    %v7003 = vpack.c.b16 %v6791, %v6787
    %v7004 = vpack.c.b16 %v6792, %v6788
    %v7005 = vpack.c.b16 %v6793, %v6789
    %v7006 = vpack.c.b16 %v6794, %v6790
    %v7007 = vpack.c.b16 %v6799, %v6795
    %v7008 = vpack.c.b16 %v6800, %v6796
    %v7009 = vpack.c.b16 %v6801, %v6797
    %v7010 = vpack.c.b16 %v6802, %v6798
    %v7011 = vpack.c.b16 %v6807, %v6803
    %v7012 = vpack.c.b16 %v6808, %v6804
    %v7013 = vpack.c.b16 %v6809, %v6805
    %v7014 = vpack.c.b16 %v6810, %v6806
    %v7015 = vpack.c.b16 %v6815, %v6811
    %v7016 = vpack.c.b16 %v6816, %v6812
    %v7017 = vpack.c.b16 %v6817, %v6813
    %v7018 = vpack.c.b16 %v6818, %v6814
    %v7019 = vpack.c.b16 %v6823, %v6819
    %v7020 = vpack.c.b16 %v6824, %v6820
    %v7021 = vpack.c.b16 %v6825, %v6821
    %v7022 = vpack.c.b16 %v6826, %v6822
    %v7023 = vpack.c.b16 %v6831, %v6827
    %v7024 = vpack.c.b16 %v6832, %v6828
    %v7025 = vpack.c.b16 %v6833, %v6829
    %v7026 = vpack.c.b16 %v6834, %v6830
    %7219 = vmatprep.subr.bf16.mxu0 %v6864
    %7220 = vmatpush1.bf16.msra.mxu0 %v6863
    %7221 = vmatprep.subr.bf16.mxu0 %v6860
    %7222 = vmatpush1.bf16.msra.mxu0 %v6859
    %7223 = vmatprep.subr.bf16.mxu0 %v6856
    %7224 = vmatpush1.bf16.msra.mxu0 %v6855
    %7225 = vmatprep.subr.bf16.mxu0 %v6852
    %7226 = vmatpush1.bf16.msra.mxu0 %v6851
    %7227 = vmatprep.subr.bf16.mxu0 %v6848
    %7228 = vmatpush1.bf16.msra.mxu0 %v6847
    %7229 = vmatprep.subr.bf16.mxu0 %v6844
    %7230 = vmatpush1.bf16.msra.mxu0 %v6843
    %7231 = vmatprep.subr.bf16.mxu0 %v6840
    %7232 = vmatpush1.bf16.msra.mxu0 %v6839
    %7233 = vmatprep.subr.bf16.mxu0 %v6836
    %7234 = vmatpush1.bf16.msra.mxu0 %v6835
    %7235 = vmatprep.subr.bf16.mxu0 %v6896
    %7236 = vmatpush2.bf16.msra.mxu0 %v6895
    %7237 = vmatprep.subr.bf16.mxu0 %v6892
    %7238 = vmatpush2.bf16.msra.mxu0 %v6891
    %7239 = vmatprep.subr.bf16.mxu0 %v6888
    %7240 = vmatpush2.bf16.msra.mxu0 %v6887
    %7241 = vmatprep.subr.bf16.mxu0 %v6884
    %7242 = vmatpush2.bf16.msra.mxu0 %v6883
    %7243 = vmatprep.subr.bf16.mxu0 %v6880
    %7244 = vmatpush2.bf16.msra.mxu0 %v6879
    %7245 = vmatprep.subr.bf16.mxu0 %v6876
    %7246 = vmatpush2.bf16.msra.mxu0 %v6875
    %7247 = vmatprep.subr.bf16.mxu0 %v6872
    %7248 = vmatpush2.bf16.msra.mxu0 %v6871
    %7249 = vmatprep.subr.bf16.mxu0 %v6868
    %7250 = vmatpush2.bf16.msra.mxu0 %v6867
    %7251 = vmatprep.mubr.bf16.mxu0 %v6248
    %7252 = vmatmul.mubr.bf16.gmra.mxu0 %v6247
    %v7253 = vpop.f32.mrf.mxu0
    %v7254 = vadd.f32 0.0, %v7253
    %v7255 = vpop.f32.mrf.mxu0
    %v7256 = vadd.f32 0.0, %v7255
    %v7257 = vpop.f32.mrf.mxu0
    %v7258 = vpop.f32.mrf.mxu0
    %7259 = vdwg.mxu0
    %7260 = vmatprep.subr.bf16.mxu0 %v6928
    %7261 = vmatpush1.bf16.msra.mxu0 %v6927
    %7262 = vmatprep.subr.bf16.mxu0 %v6924
    %7263 = vmatpush1.bf16.msra.mxu0 %v6923
    %7264 = vmatprep.subr.bf16.mxu0 %v6920
    %7265 = vmatpush1.bf16.msra.mxu0 %v6919
    %7266 = vmatprep.subr.bf16.mxu0 %v6916
    %7267 = vmatpush1.bf16.msra.mxu0 %v6915
    %7268 = vmatprep.subr.bf16.mxu0 %v6912
    %7269 = vmatpush1.bf16.msra.mxu0 %v6911
    %7270 = vmatprep.subr.bf16.mxu0 %v6908
    %7271 = vmatpush1.bf16.msra.mxu0 %v6907
    %7272 = vmatprep.subr.bf16.mxu0 %v6904
    %7273 = vmatpush1.bf16.msra.mxu0 %v6903
    %7274 = vmatprep.subr.bf16.mxu0 %v6900
    %7275 = vmatpush1.bf16.msra.mxu0 %v6899
    %7276 = vmatprep.subr.bf16.mxu0 %v6960
    %7277 = vmatpush2.bf16.msra.mxu0 %v6959
    %7278 = vmatprep.subr.bf16.mxu0 %v6956
    %7279 = vmatpush2.bf16.msra.mxu0 %v6955
    %7280 = vmatprep.subr.bf16.mxu0 %v6952
    %7281 = vmatpush2.bf16.msra.mxu0 %v6951
    %7282 = vmatprep.subr.bf16.mxu0 %v6948
    %7283 = vmatpush2.bf16.msra.mxu0 %v6947
    %7284 = vmatprep.subr.bf16.mxu0 %v6944
    %7285 = vmatpush2.bf16.msra.mxu0 %v6943
    %7286 = vmatprep.subr.bf16.mxu0 %v6940
    %7287 = vmatpush2.bf16.msra.mxu0 %v6939
    %7288 = vmatprep.subr.bf16.mxu0 %v6936
    %7289 = vmatpush2.bf16.msra.mxu0 %v6935
    %7290 = vmatprep.subr.bf16.mxu0 %v6932
    %7291 = vmatpush2.bf16.msra.mxu0 %v6931
    %7292 = vmatprep.mubr.bf16.mxu0 %v6250
    %7293 = vmatmul.mubr.bf16.gmra.mxu0 %v6249
    %v7294 = vpop.f32.mrf.mxu0
    %v7295 = vadd.f32 %v7254, %v7294
    %v7296 = vpop.f32.mrf.mxu0
    %v7297 = vadd.f32 %v7256, %v7296
    %v7298 = vpop.f32.mrf.mxu0
    %v7299 = vpop.f32.mrf.mxu0
    %7300 = vdwg.mxu0
    %7301 = vmatprep.subr.bf16.mxu0 %v6992
    %7302 = vmatpush1.bf16.msra.mxu0 %v6991
    %7303 = vmatprep.subr.bf16.mxu0 %v6988
    %7304 = vmatpush1.bf16.msra.mxu0 %v6987
    %7305 = vmatprep.subr.bf16.mxu0 %v6984
    %7306 = vmatpush1.bf16.msra.mxu0 %v6983
    %7307 = vmatprep.subr.bf16.mxu0 %v6980
    %7308 = vmatpush1.bf16.msra.mxu0 %v6979
    %7309 = vmatprep.subr.bf16.mxu0 %v6976
    %7310 = vmatpush1.bf16.msra.mxu0 %v6975
    %7311 = vmatprep.subr.bf16.mxu0 %v6972
    %7312 = vmatpush1.bf16.msra.mxu0 %v6971
    %7313 = vmatprep.subr.bf16.mxu0 %v6968
    %7314 = vmatpush1.bf16.msra.mxu0 %v6967
    %7315 = vmatprep.subr.bf16.mxu0 %v6964
    %7316 = vmatpush1.bf16.msra.mxu0 %v6963
    %7317 = vmatprep.subr.bf16.mxu0 %v7024
    %7318 = vmatpush2.bf16.msra.mxu0 %v7023
    %7319 = vmatprep.subr.bf16.mxu0 %v7020
    %7320 = vmatpush2.bf16.msra.mxu0 %v7019
    %7321 = vmatprep.subr.bf16.mxu0 %v7016
    %7322 = vmatpush2.bf16.msra.mxu0 %v7015
    %7323 = vmatprep.subr.bf16.mxu0 %v7012
    %7324 = vmatpush2.bf16.msra.mxu0 %v7011
    %7325 = vmatprep.subr.bf16.mxu0 %v7008
    %7326 = vmatpush2.bf16.msra.mxu0 %v7007
    %7327 = vmatprep.subr.bf16.mxu0 %v7004
    %7328 = vmatpush2.bf16.msra.mxu0 %v7003
    %7329 = vmatprep.subr.bf16.mxu0 %v7000
    %7330 = vmatpush2.bf16.msra.mxu0 %v6999
    %7331 = vmatprep.subr.bf16.mxu0 %v6996
    %7332 = vmatpush2.bf16.msra.mxu0 %v6995
    %7333 = vmatprep.mubr.bf16.mxu0 %v6252
    %7334 = vmatmul.mubr.bf16.gmra.mxu0 %v6251
    %v7335 = vpop.f32.mrf.mxu0
    %v7336 = vadd.f32 %v7295, %v7335
    %v7337 = vpop.f32.mrf.mxu0
    %v7338 = vadd.f32 %v7297, %v7337
    %v7339 = vpop.f32.mrf.mxu0
    %v7340 = vpop.f32.mrf.mxu0
    %7341 = vdwg.mxu0
    %7342 = vmatprep.subr.bf16.mxu0 %v6866
    %7343 = vmatpush1.bf16.msra.mxu0 %v6865
    %7344 = vmatprep.subr.bf16.mxu0 %v6862
    %7345 = vmatpush1.bf16.msra.mxu0 %v6861
    %7346 = vmatprep.subr.bf16.mxu0 %v6858
    %7347 = vmatpush1.bf16.msra.mxu0 %v6857
    %7348 = vmatprep.subr.bf16.mxu0 %v6854
    %7349 = vmatpush1.bf16.msra.mxu0 %v6853
    %7350 = vmatprep.subr.bf16.mxu0 %v6850
    %7351 = vmatpush1.bf16.msra.mxu0 %v6849
    %7352 = vmatprep.subr.bf16.mxu0 %v6846
    %7353 = vmatpush1.bf16.msra.mxu0 %v6845
    %7354 = vmatprep.subr.bf16.mxu0 %v6842
    %7355 = vmatpush1.bf16.msra.mxu0 %v6841
    %7356 = vmatprep.subr.bf16.mxu0 %v6838
    %7357 = vmatpush1.bf16.msra.mxu0 %v6837
    %7358 = vmatprep.subr.bf16.mxu0 %v6898
    %7359 = vmatpush2.bf16.msra.mxu0 %v6897
    %7360 = vmatprep.subr.bf16.mxu0 %v6894
    %7361 = vmatpush2.bf16.msra.mxu0 %v6893
    %7362 = vmatprep.subr.bf16.mxu0 %v6890
    %7363 = vmatpush2.bf16.msra.mxu0 %v6889
    %7364 = vmatprep.subr.bf16.mxu0 %v6886
    %7365 = vmatpush2.bf16.msra.mxu0 %v6885
    %7366 = vmatprep.subr.bf16.mxu0 %v6882
    %7367 = vmatpush2.bf16.msra.mxu0 %v6881
    %7368 = vmatprep.subr.bf16.mxu0 %v6878
    %7369 = vmatpush2.bf16.msra.mxu0 %v6877
    %7370 = vmatprep.subr.bf16.mxu0 %v6874
    %7371 = vmatpush2.bf16.msra.mxu0 %v6873
    %7372 = vmatprep.subr.bf16.mxu0 %v6870
    %7373 = vmatpush2.bf16.msra.mxu0 %v6869
    %7374 = vmatprep.mubr.bf16.mxu0 %v6248
    %7375 = vmatmul.mubr.bf16.gmra.mxu0 %v6247
    %v7376 = vpop.f32.mrf.mxu0
    %v7377 = vadd.f32 0.0, %v7376
    %v7378 = vpop.f32.mrf.mxu0
    %v7379 = vadd.f32 0.0, %v7378
    %v7380 = vpop.f32.mrf.mxu0
    %v7381 = vpop.f32.mrf.mxu0
    %7382 = vdwg.mxu0
    %7383 = vmatprep.subr.bf16.mxu0 %v6930
    %7384 = vmatpush1.bf16.msra.mxu0 %v6929
    %7385 = vmatprep.subr.bf16.mxu0 %v6926
    %7386 = vmatpush1.bf16.msra.mxu0 %v6925
    %7387 = vmatprep.subr.bf16.mxu0 %v6922
    %7388 = vmatpush1.bf16.msra.mxu0 %v6921
    %7389 = vmatprep.subr.bf16.mxu0 %v6918
    %7390 = vmatpush1.bf16.msra.mxu0 %v6917
    %7391 = vmatprep.subr.bf16.mxu0 %v6914
    %7392 = vmatpush1.bf16.msra.mxu0 %v6913
    %7393 = vmatprep.subr.bf16.mxu0 %v6910
    %7394 = vmatpush1.bf16.msra.mxu0 %v6909
    %7395 = vmatprep.subr.bf16.mxu0 %v6906
    %7396 = vmatpush1.bf16.msra.mxu0 %v6905
    %7397 = vmatprep.subr.bf16.mxu0 %v6902
    %7398 = vmatpush1.bf16.msra.mxu0 %v6901
    %7399 = vmatprep.subr.bf16.mxu0 %v6962
    %7400 = vmatpush2.bf16.msra.mxu0 %v6961
    %7401 = vmatprep.subr.bf16.mxu0 %v6958
    %7402 = vmatpush2.bf16.msra.mxu0 %v6957
    %7403 = vmatprep.subr.bf16.mxu0 %v6954
    %7404 = vmatpush2.bf16.msra.mxu0 %v6953
    %7405 = vmatprep.subr.bf16.mxu0 %v6950
    %7406 = vmatpush2.bf16.msra.mxu0 %v6949
    %7407 = vmatprep.subr.bf16.mxu0 %v6946
    %7408 = vmatpush2.bf16.msra.mxu0 %v6945
    %7409 = vmatprep.subr.bf16.mxu0 %v6942
    %7410 = vmatpush2.bf16.msra.mxu0 %v6941
    %7411 = vmatprep.subr.bf16.mxu0 %v6938
    %7412 = vmatpush2.bf16.msra.mxu0 %v6937
    %7413 = vmatprep.subr.bf16.mxu0 %v6934
    %7414 = vmatpush2.bf16.msra.mxu0 %v6933
    %7415 = vmatprep.mubr.bf16.mxu0 %v6250
    %7416 = vmatmul.mubr.bf16.gmra.mxu0 %v6249
    %v7417 = vpop.f32.mrf.mxu0
    %v7418 = vadd.f32 %v7377, %v7417
    %v7419 = vpop.f32.mrf.mxu0
    %v7420 = vadd.f32 %v7379, %v7419
    %v7421 = vpop.f32.mrf.mxu0
    %v7422 = vpop.f32.mrf.mxu0
    %7423 = vdwg.mxu0
    %7424 = vmatprep.subr.bf16.mxu0 %v6994
    %7425 = vmatpush1.bf16.msra.mxu0 %v6993
    %7426 = vmatprep.subr.bf16.mxu0 %v6990
    %7427 = vmatpush1.bf16.msra.mxu0 %v6989
    %7428 = vmatprep.subr.bf16.mxu0 %v6986
    %7429 = vmatpush1.bf16.msra.mxu0 %v6985
    %7430 = vmatprep.subr.bf16.mxu0 %v6982
    %7431 = vmatpush1.bf16.msra.mxu0 %v6981
    %7432 = vmatprep.subr.bf16.mxu0 %v6978
    %7433 = vmatpush1.bf16.msra.mxu0 %v6977
    %7434 = vmatprep.subr.bf16.mxu0 %v6974
    %7435 = vmatpush1.bf16.msra.mxu0 %v6973
    %7436 = vmatprep.subr.bf16.mxu0 %v6970
    %7437 = vmatpush1.bf16.msra.mxu0 %v6969
    %7438 = vmatprep.subr.bf16.mxu0 %v6966
    %7439 = vmatpush1.bf16.msra.mxu0 %v6965
    %7440 = vmatprep.subr.bf16.mxu0 %v7026
    %7441 = vmatpush2.bf16.msra.mxu0 %v7025
    %7442 = vmatprep.subr.bf16.mxu0 %v7022
    %7443 = vmatpush2.bf16.msra.mxu0 %v7021
    %7444 = vmatprep.subr.bf16.mxu0 %v7018
    %7445 = vmatpush2.bf16.msra.mxu0 %v7017
    %7446 = vmatprep.subr.bf16.mxu0 %v7014
    %7447 = vmatpush2.bf16.msra.mxu0 %v7013
    %7448 = vmatprep.subr.bf16.mxu0 %v7010
    %7449 = vmatpush2.bf16.msra.mxu0 %v7009
    %7450 = vmatprep.subr.bf16.mxu0 %v7006
    %7451 = vmatpush2.bf16.msra.mxu0 %v7005
    %7452 = vmatprep.subr.bf16.mxu0 %v7002
    %7453 = vmatpush2.bf16.msra.mxu0 %v7001
    %7454 = vmatprep.subr.bf16.mxu0 %v6998
    %7455 = vmatpush2.bf16.msra.mxu0 %v6997
    %7456 = vmatprep.mubr.bf16.mxu0 %v6252
    %7457 = vmatmul.mubr.bf16.gmra.mxu0 %v6251
    %v7458 = vpop.f32.mrf.mxu0
    %v7459 = vadd.f32 %v7418, %v7458
    %v7460 = vpop.f32.mrf.mxu0
    %v7461 = vadd.f32 %v7420, %v7460
    %v7462 = vpop.f32.mrf.mxu0
    %v7463 = vpop.f32.mrf.mxu0
    %7464 = vdwg.mxu0
    %v7465 = vadd.f32 %v6050, %v7336
    %v7466 = vadd.f32 %v6051, %v7338
    %v7467 = vadd.f32 %v6052, %v7459
    %v7468 = vadd.f32 %v6053, %v7461
    %v7469 = vld [vmem:[#allocation8] sm:$0xf]
    %v7471 = vlaneseq
    %v7472 = vshrl.u32 %v7471, 7
    %v7473 = vsub.s32 0, %v7472
    %v7474 = vrot.slane %v7469, %v7473
    %v7475 = vlaneseq
    %v7476 = vshrl.u32 %v7475, 7
    %v7477 = vsub.s32 1, %v7476
    %v7478 = vrot.slane %v7469, %v7477
    %v7479 = vlaneseq
    %v7480 = vshrl.u32 %v7479, 7
    %v7481 = vsub.s32 2, %v7480
    %v7482 = vrot.slane %v7469, %v7481
    %v7483 = vlaneseq
    %v7484 = vshrl.u32 %v7483, 7
    %v7485 = vsub.s32 3, %v7484
    %v7486 = vrot.slane %v7469, %v7485
    %v7491 = vadd.f32 %v7465, %v7474
    %v7492 = vadd.f32 %v7466, %v7478
    %v7493 = vadd.f32 %v7467, %v7482
    %v7494 = vadd.f32 %v7468, %v7486
    %v7495 = vmax.f32 %v7491, 0.0
    %v7496 = vmax.f32 %v7492, 0.0
    %v7497 = vmax.f32 %v7493, 0.0
    %v7498 = vmax.f32 %v7494, 0.0
    %v7499 = vpack.c.bf16 %v7495, %v7495
    %v7500 = vpack.c.bf16 %v7496, %v7496
    %v7501 = vpack.c.bf16 %v7497, %v7497
    %v7502 = vpack.c.bf16 %v7498, %v7498
    %v7503 = vld [vmem:[#allocation10] sm:$0xf]
    %v7504 = vld [vmem:[#allocation10 + $0x4] sm:$0xf]
    %v7505 = vld [vmem:[#allocation10 + $0x8] sm:$0xf]
    %v7506 = vld [vmem:[#allocation10 + $0xc] sm:$0xf]
    %v7507 = vld [vmem:[#allocation10 + $0x10] sm:$0xf]
    %v7508 = vld [vmem:[#allocation10 + $0x14] sm:$0xf]
    %v7509 = vld [vmem:[#allocation10 + $0x18] sm:$0xf]
    %v7510 = vld [vmem:[#allocation10 + $0x1c] sm:$0xf]
    %v7511 = vld [vmem:[#allocation10 + $0x20] sm:$0xf]
    %v7512 = vld [vmem:[#allocation10 + $0x24] sm:$0xf]
    %v7513 = vld [vmem:[#allocation10 + $0x28] sm:$0xf]
    %v7514 = vld [vmem:[#allocation10 + $0x2c] sm:$0xf]
    %v7515 = vld [vmem:[#allocation10 + $0x30] sm:$0xf]
    %v7516 = vld [vmem:[#allocation10 + $0x34] sm:$0xf]
    %v7517 = vld [vmem:[#allocation10 + $0x38] sm:$0xf]
    %v7518 = vld [vmem:[#allocation10 + $0x3c] sm:$0xf]
    %v7519 = vld [vmem:[#allocation10 + $0x40] sm:$0xf]
    %v7520 = vld [vmem:[#allocation10 + $0x44] sm:$0xf]
    %v7521 = vld [vmem:[#allocation10 + $0x48] sm:$0xf]
    %v7522 = vld [vmem:[#allocation10 + $0x4c] sm:$0xf]
    %v7523 = vld [vmem:[#allocation10 + $0x50] sm:$0xf]
    %v7524 = vld [vmem:[#allocation10 + $0x54] sm:$0xf]
    %v7525 = vld [vmem:[#allocation10 + $0x58] sm:$0xf]
    %v7526 = vld [vmem:[#allocation10 + $0x5c] sm:$0xf]
    %v7527 = vld [vmem:[#allocation10 + $0x60] sm:$0xf]
    %v7528 = vld [vmem:[#allocation10 + $0x64] sm:$0xf]
    %v7529 = vld [vmem:[#allocation10 + $0x68] sm:$0xf]
    %v7530 = vld [vmem:[#allocation10 + $0x6c] sm:$0xf]
    %v7531 = vld [vmem:[#allocation10 + $0x70] sm:$0xf]
    %v7532 = vld [vmem:[#allocation10 + $0x74] sm:$0xf]
    %v7533 = vld [vmem:[#allocation10 + $0x78] sm:$0xf]
    %v7534 = vld [vmem:[#allocation10 + $0x7c] sm:$0xf]
    %v7535 = vld [vmem:[#allocation10 + $0x80] sm:$0xf]
    %v7536 = vld [vmem:[#allocation10 + $0x84] sm:$0xf]
    %v7537 = vld [vmem:[#allocation10 + $0x88] sm:$0xf]
    %v7538 = vld [vmem:[#allocation10 + $0x8c] sm:$0xf]
    %v7539 = vld [vmem:[#allocation10 + $0x90] sm:$0xf]
    %v7540 = vld [vmem:[#allocation10 + $0x94] sm:$0xf]
    %v7541 = vld [vmem:[#allocation10 + $0x98] sm:$0xf]
    %v7542 = vld [vmem:[#allocation10 + $0x9c] sm:$0xf]
    %v7543 = vld [vmem:[#allocation10 + $0xa0] sm:$0xf]
    %v7544 = vld [vmem:[#allocation10 + $0xa4] sm:$0xf]
    %v7545 = vld [vmem:[#allocation10 + $0xa8] sm:$0xf]
    %v7546 = vld [vmem:[#allocation10 + $0xac] sm:$0xf]
    %v7547 = vld [vmem:[#allocation10 + $0xb0] sm:$0xf]
    %v7548 = vld [vmem:[#allocation10 + $0xb4] sm:$0xf]
    %v7549 = vld [vmem:[#allocation10 + $0xb8] sm:$0xf]
    %v7550 = vld [vmem:[#allocation10 + $0xbc] sm:$0xf]
    %v7551 = vld [vmem:[#allocation10 + $0xc0] sm:$0xf]
    %v7552 = vld [vmem:[#allocation10 + $0xc4] sm:$0xf]
    %v7553 = vld [vmem:[#allocation10 + $0xc8] sm:$0xf]
    %v7554 = vld [vmem:[#allocation10 + $0xcc] sm:$0xf]
    %v7555 = vld [vmem:[#allocation10 + $0xd0] sm:$0xf]
    %v7556 = vld [vmem:[#allocation10 + $0xd4] sm:$0xf]
    %v7557 = vld [vmem:[#allocation10 + $0xd8] sm:$0xf]
    %v7558 = vld [vmem:[#allocation10 + $0xdc] sm:$0xf]
    %v7559 = vld [vmem:[#allocation10 + $0xe0] sm:$0xf]
    %v7560 = vld [vmem:[#allocation10 + $0xe4] sm:$0xf]
    %v7561 = vld [vmem:[#allocation10 + $0xe8] sm:$0xf]
    %v7562 = vld [vmem:[#allocation10 + $0xec] sm:$0xf]
    %v7563 = vld [vmem:[#allocation10 + $0xf0] sm:$0xf]
    %v7564 = vld [vmem:[#allocation10 + $0xf4] sm:$0xf]
    %v7565 = vld [vmem:[#allocation10 + $0xf8] sm:$0xf]
    %v7566 = vld [vmem:[#allocation10 + $0xfc] sm:$0xf]
    %v7567 = vld [vmem:[#allocation11] sm:$0x1]
    %v7632 = vunpack.c.l.b16 %v7503
    %v7633 = vunpack.c.l.b16 %v7504
    %v7634 = vunpack.c.l.b16 %v7505
    %v7635 = vunpack.c.l.b16 %v7506
    %v7636 = vunpack.c.l.b16 %v7507
    %v7637 = vunpack.c.l.b16 %v7508
    %v7638 = vunpack.c.l.b16 %v7509
    %v7639 = vunpack.c.l.b16 %v7510
    %v7640 = vunpack.c.l.b16 %v7511
    %v7641 = vunpack.c.l.b16 %v7512
    %v7642 = vunpack.c.l.b16 %v7513
    %v7643 = vunpack.c.l.b16 %v7514
    %v7644 = vunpack.c.l.b16 %v7515
    %v7645 = vunpack.c.l.b16 %v7516
    %v7646 = vunpack.c.l.b16 %v7517
    %v7647 = vunpack.c.l.b16 %v7518
    %v7648 = vunpack.c.l.b16 %v7519
    %v7649 = vunpack.c.l.b16 %v7520
    %v7650 = vunpack.c.l.b16 %v7521
    %v7651 = vunpack.c.l.b16 %v7522
    %v7652 = vunpack.c.l.b16 %v7523
    %v7653 = vunpack.c.l.b16 %v7524
    %v7654 = vunpack.c.l.b16 %v7525
    %v7655 = vunpack.c.l.b16 %v7526
    %v7656 = vunpack.c.l.b16 %v7527
    %v7657 = vunpack.c.l.b16 %v7528
    %v7658 = vunpack.c.l.b16 %v7529
    %v7659 = vunpack.c.l.b16 %v7530
    %v7660 = vunpack.c.l.b16 %v7531
    %v7661 = vunpack.c.l.b16 %v7532
    %v7662 = vunpack.c.l.b16 %v7533
    %v7663 = vunpack.c.l.b16 %v7534
    %v7664 = vunpack.c.l.b16 %v7535
    %v7665 = vunpack.c.l.b16 %v7536
    %v7666 = vunpack.c.l.b16 %v7537
    %v7667 = vunpack.c.l.b16 %v7538
    %v7668 = vunpack.c.l.b16 %v7539
    %v7669 = vunpack.c.l.b16 %v7540
    %v7670 = vunpack.c.l.b16 %v7541
    %v7671 = vunpack.c.l.b16 %v7542
    %v7672 = vunpack.c.l.b16 %v7543
    %v7673 = vunpack.c.l.b16 %v7544
    %v7674 = vunpack.c.l.b16 %v7545
    %v7675 = vunpack.c.l.b16 %v7546
    %v7676 = vunpack.c.l.b16 %v7547
    %v7677 = vunpack.c.l.b16 %v7548
    %v7678 = vunpack.c.l.b16 %v7549
    %v7679 = vunpack.c.l.b16 %v7550
    %v7680 = vunpack.c.l.b16 %v7551
    %v7681 = vunpack.c.l.b16 %v7552
    %v7682 = vunpack.c.l.b16 %v7553
    %v7683 = vunpack.c.l.b16 %v7554
    %v7684 = vunpack.c.l.b16 %v7555
    %v7685 = vunpack.c.l.b16 %v7556
    %v7686 = vunpack.c.l.b16 %v7557
    %v7687 = vunpack.c.l.b16 %v7558
    %v7688 = vunpack.c.l.b16 %v7559
    %v7689 = vunpack.c.l.b16 %v7560
    %v7690 = vunpack.c.l.b16 %v7561
    %v7691 = vunpack.c.l.b16 %v7562
    %v7692 = vunpack.c.l.b16 %v7563
    %v7693 = vunpack.c.l.b16 %v7564
    %v7694 = vunpack.c.l.b16 %v7565
    %v7695 = vunpack.c.l.b16 %v7566
    %v7696 = vpack.c.b16 %v7633, %v7632
    %v7697 = vpack.c.b16 %v7635, %v7634
    %v7698 = vpack.c.b16 %v7637, %v7636
    %v7699 = vpack.c.b16 %v7639, %v7638
    %v7700 = vpack.c.b16 %v7641, %v7640
    %v7701 = vpack.c.b16 %v7643, %v7642
    %v7702 = vpack.c.b16 %v7645, %v7644
    %v7703 = vpack.c.b16 %v7647, %v7646
    %v7704 = vpack.c.b16 %v7649, %v7648
    %v7705 = vpack.c.b16 %v7651, %v7650
    %v7706 = vpack.c.b16 %v7653, %v7652
    %v7707 = vpack.c.b16 %v7655, %v7654
    %v7708 = vpack.c.b16 %v7657, %v7656
    %v7709 = vpack.c.b16 %v7659, %v7658
    %v7710 = vpack.c.b16 %v7661, %v7660
    %v7711 = vpack.c.b16 %v7663, %v7662
    %v7712 = vpack.c.b16 %v7665, %v7664
    %v7713 = vpack.c.b16 %v7667, %v7666
    %v7714 = vpack.c.b16 %v7669, %v7668
    %v7715 = vpack.c.b16 %v7671, %v7670
    %v7716 = vpack.c.b16 %v7673, %v7672
    %v7717 = vpack.c.b16 %v7675, %v7674
    %v7718 = vpack.c.b16 %v7677, %v7676
    %v7719 = vpack.c.b16 %v7679, %v7678
    %v7720 = vpack.c.b16 %v7681, %v7680
    %v7721 = vpack.c.b16 %v7683, %v7682
    %v7722 = vpack.c.b16 %v7685, %v7684
    %v7723 = vpack.c.b16 %v7687, %v7686
    %v7724 = vpack.c.b16 %v7689, %v7688
    %v7725 = vpack.c.b16 %v7691, %v7690
    %v7726 = vpack.c.b16 %v7693, %v7692
    %v7727 = vpack.c.b16 %v7695, %v7694
    %7760 = vmatprep.subr.bf16.mxu0 0
    %7761 = vmatpush1.bf16.msra.mxu0 %v7703
    %7762 = vmatprep.subr.bf16.mxu0 0
    %7763 = vmatpush1.bf16.msra.mxu0 %v7702
    %7764 = vmatprep.subr.bf16.mxu0 0
    %7765 = vmatpush1.bf16.msra.mxu0 %v7701
    %7766 = vmatprep.subr.bf16.mxu0 0
    %7767 = vmatpush1.bf16.msra.mxu0 %v7700
    %7768 = vmatprep.subr.bf16.mxu0 0
    %7769 = vmatpush1.bf16.msra.mxu0 %v7699
    %7770 = vmatprep.subr.bf16.mxu0 0
    %7771 = vmatpush1.bf16.msra.mxu0 %v7698
    %7772 = vmatprep.subr.bf16.mxu0 0
    %7773 = vmatpush1.bf16.msra.mxu0 %v7697
    %7774 = vmatprep.subr.bf16.mxu0 0
    %7775 = vmatpush1.bf16.msra.mxu0 %v7696
    %7776 = vmatprep.subr.bf16.mxu0 0
    %7777 = vmatpush2.bf16.msra.mxu0 %v7711
    %7778 = vmatprep.subr.bf16.mxu0 0
    %7779 = vmatpush2.bf16.msra.mxu0 %v7710
    %7780 = vmatprep.subr.bf16.mxu0 0
    %7781 = vmatpush2.bf16.msra.mxu0 %v7709
    %7782 = vmatprep.subr.bf16.mxu0 0
    %7783 = vmatpush2.bf16.msra.mxu0 %v7708
    %7784 = vmatprep.subr.bf16.mxu0 0
    %7785 = vmatpush2.bf16.msra.mxu0 %v7707
    %7786 = vmatprep.subr.bf16.mxu0 0
    %7787 = vmatpush2.bf16.msra.mxu0 %v7706
    %7788 = vmatprep.subr.bf16.mxu0 0
    %7789 = vmatpush2.bf16.msra.mxu0 %v7705
    %7790 = vmatprep.subr.bf16.mxu0 0
    %7791 = vmatpush2.bf16.msra.mxu0 %v7704
    %7792 = vmatprep.mubr.bf16.mxu0 %v7500
    %7793 = vmatmul.mubr.bf16.gmra.mxu0 %v7499
    %v7794 = vpop.f32.mrf.mxu0
    %v7795 = vadd.f32 %v7567, %v7794
    %v7796 = vpop.f32.mrf.mxu0
    %v7797 = vpop.f32.mrf.mxu0
    %v7798 = vpop.f32.mrf.mxu0
    %7799 = vdwg.mxu0
    %7800 = vmatprep.subr.bf16.mxu0 0
    %7801 = vmatpush1.bf16.msra.mxu0 %v7719
    %7802 = vmatprep.subr.bf16.mxu0 0
    %7803 = vmatpush1.bf16.msra.mxu0 %v7718
    %7804 = vmatprep.subr.bf16.mxu0 0
    %7805 = vmatpush1.bf16.msra.mxu0 %v7717
    %7806 = vmatprep.subr.bf16.mxu0 0
    %7807 = vmatpush1.bf16.msra.mxu0 %v7716
    %7808 = vmatprep.subr.bf16.mxu0 0
    %7809 = vmatpush1.bf16.msra.mxu0 %v7715
    %7810 = vmatprep.subr.bf16.mxu0 0
    %7811 = vmatpush1.bf16.msra.mxu0 %v7714
    %7812 = vmatprep.subr.bf16.mxu0 0
    %7813 = vmatpush1.bf16.msra.mxu0 %v7713
    %7814 = vmatprep.subr.bf16.mxu0 0
    %7815 = vmatpush1.bf16.msra.mxu0 %v7712
    %7816 = vmatprep.subr.bf16.mxu0 0
    %7817 = vmatpush2.bf16.msra.mxu0 %v7727
    %7818 = vmatprep.subr.bf16.mxu0 0
    %7819 = vmatpush2.bf16.msra.mxu0 %v7726
    %7820 = vmatprep.subr.bf16.mxu0 0
    %7821 = vmatpush2.bf16.msra.mxu0 %v7725
    %7822 = vmatprep.subr.bf16.mxu0 0
    %7823 = vmatpush2.bf16.msra.mxu0 %v7724
    %7824 = vmatprep.subr.bf16.mxu0 0
    %7825 = vmatpush2.bf16.msra.mxu0 %v7723
    %7826 = vmatprep.subr.bf16.mxu0 0
    %7827 = vmatpush2.bf16.msra.mxu0 %v7722
    %7828 = vmatprep.subr.bf16.mxu0 0
    %7829 = vmatpush2.bf16.msra.mxu0 %v7721
    %7830 = vmatprep.subr.bf16.mxu0 0
    %7831 = vmatpush2.bf16.msra.mxu0 %v7720
    %7832 = vmatprep.mubr.bf16.mxu0 %v7502
    %7833 = vmatmul.mubr.bf16.gmra.mxu0 %v7501
    %v7834 = vpop.f32.mrf.mxu0
    %v7835 = vadd.f32 %v7795, %v7834
    %v7836 = vpop.f32.mrf.mxu0
    %v7837 = vpop.f32.mrf.mxu0
    %v7838 = vpop.f32.mrf.mxu0
    %7839 = vdwg.mxu0
    %v7840 = vmax.f32 %v7835, 0.0
    %v7841 = vld [vmem:[%s6] sm:$0xff]
    %v7842 = vld [vmem:[%s6 + $0x8] sm:$0xff]
    %v7843 = vld [vmem:[%s6 + $0x10] sm:$0xff]
    %v7844 = vld [vmem:[%s6 + $0x18] sm:$0xff]
    %v7845 = vld [vmem:[%s6 + $0x20] sm:$0xff]
    %v7846 = vld [vmem:[%s6 + $0x28] sm:$0xff]
    %v7847 = vld [vmem:[%s6 + $0x30] sm:$0xff]
    %v7848 = vld [vmem:[%s6 + $0x38] sm:$0xff]
    %v7849 = vld [vmem:[%s6 + $0x40] sm:$0xff]
    %v7850 = vld [vmem:[%s6 + $0x48] sm:$0xff]
    %v7851 = vld [vmem:[%s6 + $0x50] sm:$0xff]
    %v7852 = vld [vmem:[%s6 + $0x58] sm:$0xff]
    %v7853 = vld [vmem:[%s6 + $0x60] sm:$0xff]
    %v7854 = vld [vmem:[%s6 + $0x68] sm:$0xff]
    %v7855 = vld [vmem:[%s6 + $0x70] sm:$0xff]
    %v7856 = vld [vmem:[%s6 + $0x78] sm:$0xff]
    %v7857 = vld [vmem:[#allocation13] sm:$0x1]
    %7858 = vmatprep.subr.mxu0 0.0
    %7859 = vmatpush1.msra.mxu0 %v7856
    %7860 = vmatprep.subr.mxu0 0.0
    %7861 = vmatpush1.msra.mxu0 %v7855
    %7862 = vmatprep.subr.mxu0 0.0
    %7863 = vmatpush1.msra.mxu0 %v7854
    %7864 = vmatprep.subr.mxu0 0.0
    %7865 = vmatpush1.msra.mxu0 %v7853
    %7866 = vmatprep.subr.mxu0 0.0
    %7867 = vmatpush1.msra.mxu0 %v7852
    %7868 = vmatprep.subr.mxu0 0.0
    %7869 = vmatpush1.msra.mxu0 %v7851
    %7870 = vmatprep.subr.mxu0 0.0
    %7871 = vmatpush1.msra.mxu0 %v7850
    %7872 = vmatprep.subr.mxu0 0.0
    %7873 = vmatpush1.msra.mxu0 %v7849
    %7874 = vmatprep.subr.mxu0 0.0
    %7875 = vmatpush1.msra.mxu0 %v7848
    %7876 = vmatprep.subr.mxu0 0.0
    %7877 = vmatpush1.msra.mxu0 %v7847
    %7878 = vmatprep.subr.mxu0 0.0
    %7879 = vmatpush1.msra.mxu0 %v7846
    %7880 = vmatprep.subr.mxu0 0.0
    %7881 = vmatpush1.msra.mxu0 %v7845
    %7882 = vmatprep.subr.mxu0 0.0
    %7883 = vmatpush1.msra.mxu0 %v7844
    %7884 = vmatprep.subr.mxu0 0.0
    %7885 = vmatpush1.msra.mxu0 %v7843
    %7886 = vmatprep.subr.mxu0 0.0
    %7887 = vmatpush1.msra.mxu0 %v7842
    %7888 = vmatprep.subr.mxu0 0.0
    %7889 = vmatpush1.msra.mxu0 %v7841
    %7890 = vmatprep.subr.mxu0 0.0
    %7891 = vmatpush2.msra.mxu0 0.0
    %7892 = vmatprep.subr.mxu0 0.0
    %7893 = vmatpush2.msra.mxu0 0.0
    %7894 = vmatprep.subr.mxu0 0.0
    %7895 = vmatpush2.msra.mxu0 0.0
    %7896 = vmatprep.subr.mxu0 0.0
    %7897 = vmatpush2.msra.mxu0 0.0
    %7898 = vmatprep.subr.mxu0 0.0
    %7899 = vmatpush2.msra.mxu0 0.0
    %7900 = vmatprep.subr.mxu0 0.0
    %7901 = vmatpush2.msra.mxu0 0.0
    %7902 = vmatprep.subr.mxu0 0.0
    %7903 = vmatpush2.msra.mxu0 0.0
    %7904 = vmatprep.subr.mxu0 0.0
    %7905 = vmatpush2.msra.mxu0 0.0
    %7906 = vmatprep.subr.mxu0 0.0
    %7907 = vmatpush2.msra.mxu0 0.0
    %7908 = vmatprep.subr.mxu0 0.0
    %7909 = vmatpush2.msra.mxu0 0.0
    %7910 = vmatprep.subr.mxu0 0.0
    %7911 = vmatpush2.msra.mxu0 0.0
    %7912 = vmatprep.subr.mxu0 0.0
    %7913 = vmatpush2.msra.mxu0 0.0
    %7914 = vmatprep.subr.mxu0 0.0
    %7915 = vmatpush2.msra.mxu0 0.0
    %7916 = vmatprep.subr.mxu0 0.0
    %7917 = vmatpush2.msra.mxu0 0.0
    %7918 = vmatprep.subr.mxu0 0.0
    %7919 = vmatpush2.msra.mxu0 0.0
    %7920 = vmatprep.subr.mxu0 0.0
    %7921 = vmatpush2.msra.mxu0 0.0
    %7922 = vmatprep.mubr.f32.mxu0 0.0
    %7923 = vmatmul.mubr.f32.gmra.mxu0 %v7840
    %v7924 = vpop.f32.mrf.mxu0
    %v7925 = vadd.f32 %v7857, %v7924
    %v7926 = vpop.f32.mrf.mxu0
    %7927 = vdwg.mxu0
    %v7928 = vmax.f32 %v7925, 0.0
    %v7929 = vld [vmem:[%s8] sm:$0xff]
    %v7930 = vld [vmem:[%s8 + $0x8] sm:$0xff]
    %v7931 = vld [vmem:[%s8 + $0x10] sm:$0xff]
    %v7932 = vld [vmem:[%s8 + $0x18] sm:$0xff]
    %v7933 = vld [vmem:[%s8 + $0x20] sm:$0xff]
    %v7934 = vld [vmem:[%s8 + $0x28] sm:$0xff]
    %v7935 = vld [vmem:[%s8 + $0x30] sm:$0xff]
    %v7936 = vld [vmem:[%s8 + $0x38] sm:$0xff]
    %v7937 = vld [vmem:[#allocation14] sm:$0x1]
    %vm7938 = vcmask 523264
    %v7940 = vsel %vm7938, %v7928, 0
    %7942 = vmatprep.subr.mxu0 0.0
    %7943 = vmatpush1.msra.mxu0 0.0
    %7944 = vmatprep.subr.mxu0 0.0
    %7945 = vmatpush1.msra.mxu0 0.0
    %7946 = vmatprep.subr.mxu0 0.0
    %7947 = vmatpush1.msra.mxu0 0.0
    %7948 = vmatprep.subr.mxu0 0.0
    %7949 = vmatpush1.msra.mxu0 0.0
    %7950 = vmatprep.subr.mxu0 0.0
    %7951 = vmatpush1.msra.mxu0 0.0
    %7952 = vmatprep.subr.mxu0 0.0
    %7953 = vmatpush1.msra.mxu0 0.0
    %7954 = vmatprep.subr.mxu0 0.0
    %7955 = vmatpush1.msra.mxu0 0.0
    %7956 = vmatprep.subr.mxu0 0.0
    %7957 = vmatpush1.msra.mxu0 0.0
    %7958 = vmatprep.subr.mxu0 0.0
    %7959 = vmatpush1.msra.mxu0 %v7936
    %7960 = vmatprep.subr.mxu0 0.0
    %7961 = vmatpush1.msra.mxu0 %v7935
    %7962 = vmatprep.subr.mxu0 0.0
    %7963 = vmatpush1.msra.mxu0 %v7934
    %7964 = vmatprep.subr.mxu0 0.0
    %7965 = vmatpush1.msra.mxu0 %v7933
    %7966 = vmatprep.subr.mxu0 0.0
    %7967 = vmatpush1.msra.mxu0 %v7932
    %7968 = vmatprep.subr.mxu0 0.0
    %7969 = vmatpush1.msra.mxu0 %v7931
    %7970 = vmatprep.subr.mxu0 0.0
    %7971 = vmatpush1.msra.mxu0 %v7930
    %7972 = vmatprep.subr.mxu0 0.0
    %7973 = vmatpush1.msra.mxu0 %v7929
    %7974 = vmatprep.subr.mxu0 0.0
    %7975 = vmatpush2.msra.mxu0 0.0
    %7976 = vmatprep.subr.mxu0 0.0
    %7977 = vmatpush2.msra.mxu0 0.0
    %7978 = vmatprep.subr.mxu0 0.0
    %7979 = vmatpush2.msra.mxu0 0.0
    %7980 = vmatprep.subr.mxu0 0.0
    %7981 = vmatpush2.msra.mxu0 0.0
    %7982 = vmatprep.subr.mxu0 0.0
    %7983 = vmatpush2.msra.mxu0 0.0
    %7984 = vmatprep.subr.mxu0 0.0
    %7985 = vmatpush2.msra.mxu0 0.0
    %7986 = vmatprep.subr.mxu0 0.0
    %7987 = vmatpush2.msra.mxu0 0.0
    %7988 = vmatprep.subr.mxu0 0.0
    %7989 = vmatpush2.msra.mxu0 0.0
    %7990 = vmatprep.subr.mxu0 0.0
    %7991 = vmatpush2.msra.mxu0 0.0
    %7992 = vmatprep.subr.mxu0 0.0
    %7993 = vmatpush2.msra.mxu0 0.0
    %7994 = vmatprep.subr.mxu0 0.0
    %7995 = vmatpush2.msra.mxu0 0.0
    %7996 = vmatprep.subr.mxu0 0.0
    %7997 = vmatpush2.msra.mxu0 0.0
    %7998 = vmatprep.subr.mxu0 0.0
    %7999 = vmatpush2.msra.mxu0 0.0
    %8000 = vmatprep.subr.mxu0 0.0
    %8001 = vmatpush2.msra.mxu0 0.0
    %8002 = vmatprep.subr.mxu0 0.0
    %8003 = vmatpush2.msra.mxu0 0.0
    %8004 = vmatprep.subr.mxu0 0.0
    %8005 = vmatpush2.msra.mxu0 0.0
    %8006 = vmatprep.mubr.f32.mxu0 0.0
    %8007 = vmatmul.mubr.f32.gmra.mxu0 %v7940
    %v8008 = vpop.f32.mrf.mxu0
    %v8009 = vadd.f32 %v7937, %v8008
    %v8010 = vpop.f32.mrf.mxu0
    %8011 = vdwg.mxu0
    %vm8012 = vcmask 147456
    %8013 = vst.msk [vmem:[#allocation16] sm:$0x1] %vm8012, %v8009
    // Predicated region
    $region74: #{bert_only_head.1} parent=1 // pred_check
      _
    $region75: #{bert_only_head.1} parent=1 // pred_check_branch
      %8015 = sbr.rel (0) target = $region77
    $region76: #{bert_only_head.1} parent=1 // pred_region
      %s8017 = ssub.s32 16, 16
      %8018 = vsyncadd [#allocation4], %s8017
      %s8020 = sshll.u32 [#allocation16], 4
      %s8021 = int_to_ptr.vmem [resolvable:$true] %s8020
      %8023 = dma.vmem_to_hbm [thread:$0]  %s8021, 16, %s10, [#allocation4]
    $region77: #{bert_only_head.1} parent=1 // pred_fallthru
      _
    // Predicated region
    $region78: #{bert_only_head.1} parent=1 // pred_check
      _
    $region79: #{bert_only_head.1} parent=1 // pred_check_branch
      %8025 = sbr.rel (0) target = $region81
    $region80: #{bert_only_head.1} parent=1 // pred_region
      %8026 = dma.done [#allocation4], 16
    $region81: #{bert_only_head.1} parent=1 // pred_fallthru
      _
    %8027 = vsyncpa [#allocation3], 1
    %8028 = vsyncpa [#allocation6], 1
    %8029 = vsyncpa [#allocation9], 1
    %8030 = vsyncpa [#allocation12], 1
    %8031 = vsyncpa [#allocation15], 1
    %8032 = vsyncpa [#allocation4], 1

</llo_original>
